<compile_context>
chip_gen: v5e
topology: v5e:2x2
jax: 0.10.0
libtpu: 0.0.40
codegen_flags: <defaults>
</compile_context>

<pallas_src>
import jax
import jax.numpy as jnp
from jax import lax
from jax.experimental import pallas as pl
from jax.experimental.pallas import tpu as pltpu


def _gelu(x):
    # exact (erf) GELU — matches torch.nn.GELU() default
    return 0.5 * x * (1.0 + lax.erf(x * 0.7071067811865476))


def predictor_lg_kernel(x_ref, policy_ref,
                        ln_g_ref, ln_b_ref,
                        w1_ref, b1_ref,
                        w2_ref, b2_ref,
                        w3_ref, b3_ref,
                        w4_ref, b4_ref,
                        out_ref):
    x = x_ref[0].astype(jnp.float32)          # (N, C)
    pol = policy_ref[0].astype(jnp.float32)   # (N, 1)
    N, C = x.shape
    half = C // 2

    # ---- in_conv: LayerNorm (single-pass stats) -> Linear(C,C) -> GELU ----
    inv_c = jnp.float32(1.0 / C)
    mean = jnp.sum(x, axis=-1, keepdims=True) * inv_c
    ex2 = jnp.sum(x * x, axis=-1, keepdims=True) * inv_c
    var = jnp.maximum(ex2 - mean * mean, 0.0)
    xn = (x - mean) * lax.rsqrt(var + 1e-5)
    xn = xn * ln_g_ref[...] + ln_b_ref[...]

    h = jnp.dot(xn.astype(jnp.bfloat16), w1_ref[...],
                preferred_element_type=jnp.float32) + b1_ref[...]
    h = _gelu(h)                               # (N, C) f32

    # ---- local / global feature mixing ----
    local_x = h[:, :half]                                           # (N, C/2)
    global_num = jnp.sum(h[:, half:] * pol, axis=0, keepdims=True)  # (1, C/2)
    global_den = jnp.sum(pol, axis=0, keepdims=True)                # (1, 1)
    global_x = global_num / global_den                              # (1, C/2)

    # concat([local_x, broadcast(global_x)]) @ W2  ==
    #     local_x @ W2[:C/2] + global_x @ W2[C/2:]   (broadcast over N)
    w2_top = w2_ref[:half, :]
    w2_bot = w2_ref[half:, :]
    y = (jnp.dot(local_x.astype(jnp.bfloat16), w2_top,
                 preferred_element_type=jnp.float32)
         + jnp.dot(global_x.astype(jnp.bfloat16), w2_bot,
                   preferred_element_type=jnp.float32)
         + b2_ref[...])
    y = _gelu(y)                                                    # (N, C/2)

    y = _gelu(jnp.dot(y.astype(jnp.bfloat16), w3_ref[...],
                      preferred_element_type=jnp.float32)
              + b3_ref[...])                                        # (N, C/4)

    # ---- final Linear(C/4, 2), computed transposed: (2, N) lane-dense ----
    # logits_t[c, n] = sum_q w4[c, q] * y[n, q]  (contract last dims of both)
    logits_t = lax.dot_general(
        w4_ref[...], y.astype(jnp.bfloat16),
        dimension_numbers=(((1,), (1,)), ((), ())),
        preferred_element_type=jnp.float32) + b4_ref[...]           # (2, N)

    # ---- LogSoftmax over the 2 classes (sublane axis) ----
    l0 = logits_t[0:1, :]
    l1 = logits_t[1:2, :]
    m = jnp.maximum(l0, l1)
    lse = m + jnp.log(jnp.exp(l0 - m) + jnp.exp(l1 - m))            # (1, N)
    out_ref[0] = (logits_t - lse).astype(out_ref.dtype)             # (2, N)


def _weight_spec(shape, single_buffer):
    index_map = lambda b: tuple(0 for _ in shape)
    if single_buffer:
        # constant index map -> no point double-buffering these blocks
        return pl.BlockSpec(shape, index_map, pipeline_mode=pl.Buffered(1))
    return pl.BlockSpec(shape, index_map)


def _build_predictor_call(B, N, C, out_dtype, single_buffer_weights):
    half, quarter = C // 2, C // 4
    wspec = lambda shape: _weight_spec(shape, single_buffer_weights)
    return pl.pallas_call(
        predictor_lg_kernel,
        out_shape=jax.ShapeDtypeStruct((B, 2, N), out_dtype),
        grid_spec=pltpu.PrefetchScalarGridSpec(
            num_scalar_prefetch=0,
            grid=(B,),
            in_specs=[
                pl.BlockSpec((1, N, C), lambda b: (b, 0, 0)),
                pl.BlockSpec((1, N, 1), lambda b: (b, 0, 0)),
                wspec((1, C)), wspec((1, C)),            # LayerNorm gamma, beta
                wspec((C, C)), wspec((1, C)),            # Linear1 (bf16 W)
                wspec((C, half)), wspec((1, half)),      # Linear2 (bf16 W)
                wspec((half, quarter)), wspec((1, quarter)),  # Linear3 (bf16 W)
                wspec((2, quarter)), wspec((2, 1)),      # Linear4 (torch layout)
            ],
            out_specs=pl.BlockSpec((1, 2, N), lambda b: (b, 0, 0)),
        ),
        compiler_params=pltpu.CompilerParams(
            dimension_semantics=("parallel",),
            vmem_limit_bytes=48 * 1024 * 1024),
    )


def predictor_lg(x, policy, params):
    """x: (B, N, C) f32, policy: (B, N, 1) f32 -> (B, N, 2) f32 log-probs."""
    B, N, C = x.shape
    (ln_g, ln_b, w1, b1, w2, b2, w3, b3, w4, b4) = params
    # bf16 weights on the MXU; biases / LN params stay f32.
    args = (x, policy, ln_g, ln_b,
            w1.astype(jnp.bfloat16), b1,
            w2.astype(jnp.bfloat16), b2,
            w3.astype(jnp.bfloat16), b3,
            w4.astype(jnp.bfloat16), b4)
    try:
        out_t = _build_predictor_call(B, N, C, x.dtype, True)(*args)
    except Exception:
        # pipeline_mode=pl.Buffered(1) not supported on this jax version:
        # fall back to default (double-buffered) weight specs.
        out_t = _build_predictor_call(B, N, C, x.dtype, False)(*args)
    # kernel emits (B, 2, N) lane-dense; return module layout (B, N, 2)
    return jnp.transpose(out_t, (0, 2, 1))


def init_params(key, C):
    """Deterministic synthetic parameters.

    w1/w2/w3 stored as (in, out); w4 stored torch-style as (out=2, in=C/4),
    b4 as (2, 1) so the kernel can add it to the transposed logits directly.
    """
    half, quarter = C // 2, C // 4
    ks = jax.random.split(key, 8)
    s = 0.05
    ln_g = jnp.ones((1, C), jnp.float32)
    ln_b = jnp.zeros((1, C), jnp.float32)
    w1 = s * jax.random.normal(ks[0], (C, C), jnp.float32)
    b1 = s * jax.random.normal(ks[1], (1, C), jnp.float32)
    w2 = s * jax.random.normal(ks[2], (C, half), jnp.float32)
    b2 = s * jax.random.normal(ks[3], (1, half), jnp.float32)
    w3 = s * jax.random.normal(ks[4], (half, quarter), jnp.float32)
    b3 = s * jax.random.normal(ks[5], (1, quarter), jnp.float32)
    w4 = s * jax.random.normal(ks[6], (2, quarter), jnp.float32)
    b4 = s * jax.random.normal(ks[7], (2, 1), jnp.float32)
    return (ln_g, ln_b, w1, b1, w2, b2, w3, b3, w4, b4)


def predictor_lg_ref(x, policy, params):
    """Pure-JAX f32 reference mirroring the PyTorch forward."""
    (ln_g, ln_b, w1, b1, w2, b2, w3, b3, w4, b4) = params
    B, N, C = x.shape
    half = C // 2
    mean = jnp.mean(x, axis=-1, keepdims=True)
    var = jnp.mean((x - mean) ** 2, axis=-1, keepdims=True)
    xn = (x - mean) * lax.rsqrt(var + 1e-5) * ln_g + ln_b
    h = _gelu(xn @ w1 + b1)
    local_x = h[:, :, :half]
    global_x = jnp.sum(h[:, :, half:] * policy, axis=1, keepdims=True) / \
        jnp.sum(policy, axis=1, keepdims=True)
    feat = jnp.concatenate(
        [local_x, jnp.broadcast_to(global_x, (B, N, half))], axis=-1)
    y = _gelu(feat @ w2 + b2)
    y = _gelu(y @ w3 + b3)
    logits = jnp.einsum('bnq,cq->bnc', y, w4) + b4.reshape(1, 1, 2)
    return jax.nn.log_softmax(logits, axis=-1)


if __name__ == "__main__":
    # C multiple of 128 so half=C/2 is lane-aligned; N=128 fills the lane axis
    # of the transposed (B, 2, N) output.
    B, N, C = 2, 128, 256
    key = jax.random.PRNGKey(0)
    kx, kp, kw = jax.random.split(key, 3)

    x = jax.random.normal(kx, (B, N, C), jnp.float32)
    # strictly positive "policy" weights (avoids zero denominator)
    policy = jax.random.uniform(kp, (B, N, 1), jnp.float32, 0.5, 1.5)
    params = init_params(kw, C)

    out = jax.block_until_ready(predictor_lg(x, policy, params))
    ref = predictor_lg_ref(x, policy, params)

    assert out.shape == (B, N, 2)
    assert bool(jnp.all(jnp.isfinite(out)))
    max_err = float(jnp.max(jnp.abs(out - ref)))
    # bf16 matmul inputs (f32 accumulate) vs f32 reference
    assert bool(jnp.allclose(out, ref, atol=2e-2, rtol=2e-2)), f"max err {max_err}"
    print("KERNEL_OK")
</pallas_src>

<mosaic_0001>
module attributes {stable_mosaic.version = 11 : i64} {
  func.func @predictor_lg_kernel(%arg0: i32, %arg1: memref<1x128x256xf32, #tpu.memory_space<vmem>>, %arg2: memref<1x128x1xf32, #tpu.memory_space<vmem>>, %arg3: memref<1x256xf32, #tpu.memory_space<vmem>>, %arg4: memref<1x256xf32, #tpu.memory_space<vmem>>, %arg5: memref<256x256xbf16, #tpu.memory_space<vmem>>, %arg6: memref<1x256xf32, #tpu.memory_space<vmem>>, %arg7: memref<256x128xbf16, #tpu.memory_space<vmem>>, %arg8: memref<1x128xf32, #tpu.memory_space<vmem>>, %arg9: memref<128x64xbf16, #tpu.memory_space<vmem>>, %arg10: memref<1x64xf32, #tpu.memory_space<vmem>>, %arg11: memref<2x64xbf16, #tpu.memory_space<vmem>>, %arg12: memref<2x1xf32, #tpu.memory_space<vmem>>, %arg13: memref<1x2x128xf32, #tpu.memory_space<vmem>>) attributes {dimension_semantics = [#tpu.dimension_semantics<parallel>], iteration_bounds = array<i64: 2>, scalar_prefetch = 0 : i64, scratch_operands = 0 : i64, tpu.core_type = #tpu.core_type<tc>, window_params = [{transform_indices = @transform_0, window_bounds = array<i64: 1, 128, 256>}, {transform_indices = @transform_1, window_bounds = array<i64: 1, 128, 1>}, {pipeline_mode = #tpu.pipeline_mode<synchronous>, transform_indices = @transform_2, window_bounds = array<i64: 1, 256>}, {pipeline_mode = #tpu.pipeline_mode<synchronous>, transform_indices = @transform_3, window_bounds = array<i64: 1, 256>}, {pipeline_mode = #tpu.pipeline_mode<synchronous>, transform_indices = @transform_4, window_bounds = array<i64: 256, 256>}, {pipeline_mode = #tpu.pipeline_mode<synchronous>, transform_indices = @transform_5, window_bounds = array<i64: 1, 256>}, {pipeline_mode = #tpu.pipeline_mode<synchronous>, transform_indices = @transform_6, window_bounds = array<i64: 256, 128>}, {pipeline_mode = #tpu.pipeline_mode<synchronous>, transform_indices = @transform_7, window_bounds = array<i64: 1, 128>}, {pipeline_mode = #tpu.pipeline_mode<synchronous>, transform_indices = @transform_8, window_bounds = array<i64: 128, 64>}, {pipeline_mode = #tpu.pipeline_mode<synchronous>, transform_indices = @transform_9, window_bounds = array<i64: 1, 64>}, {pipeline_mode = #tpu.pipeline_mode<synchronous>, transform_indices = @transform_10, window_bounds = array<i64: 2, 64>}, {pipeline_mode = #tpu.pipeline_mode<synchronous>, transform_indices = @transform_11, window_bounds = array<i64: 2, 1>}, {transform_indices = @transform_12, window_bounds = array<i64: 1, 2, 128>}]} {
    %c0 = arith.constant 0 : index
    %c0_0 = arith.constant 0 : index
    %c0_1 = arith.constant 0 : index
    %0 = vector.load %arg1[%c0, %c0_0, %c0_1] : memref<1x128x256xf32, #tpu.memory_space<vmem>>, vector<1x128x256xf32>
    %1 = vector.shape_cast %0 : vector<1x128x256xf32> to vector<128x256xf32>
    %c0_2 = arith.constant 0 : index
    %c0_3 = arith.constant 0 : index
    %c0_4 = arith.constant 0 : index
    %2 = vector.load %arg2[%c0_2, %c0_3, %c0_4] : memref<1x128x1xf32, #tpu.memory_space<vmem>>, vector<1x128x1xf32>
    %3 = vector.shape_cast %2 : vector<1x128x1xf32> to vector<128x1xf32>
    %cst = arith.constant dense<0.000000e+00> : vector<128xf32>
    %4 = vector.multi_reduction <add>, %1, %cst [1] : vector<128x256xf32> to vector<128xf32>
    %5 = vector.shape_cast %4 : vector<128xf32> to vector<128x1xf32>
    %cst_5 = arith.constant 3.906250e-03 : f32
    %6 = vector.broadcast %cst_5 : f32 to vector<128x1xf32>
    %7 = arith.mulf %5, %6 : vector<128x1xf32>
    %8 = arith.mulf %1, %1 : vector<128x256xf32>
    %cst_6 = arith.constant dense<0.000000e+00> : vector<128xf32>
    %9 = vector.multi_reduction <add>, %8, %cst_6 [1] : vector<128x256xf32> to vector<128xf32>
    %10 = vector.shape_cast %9 : vector<128xf32> to vector<128x1xf32>
    %cst_7 = arith.constant 3.906250e-03 : f32
    %11 = vector.broadcast %cst_7 : f32 to vector<128x1xf32>
    %12 = arith.mulf %10, %11 : vector<128x1xf32>
    %13 = arith.mulf %7, %7 : vector<128x1xf32>
    %14 = arith.subf %12, %13 : vector<128x1xf32>
    %cst_8 = arith.constant 0.000000e+00 : f32
    %15 = vector.broadcast %cst_8 : f32 to vector<128x1xf32>
    %16 = arith.maximumf %14, %15 : vector<128x1xf32>
    %17 = vector.broadcast %7 : vector<128x1xf32> to vector<128x256xf32>
    %18 = arith.subf %1, %17 : vector<128x256xf32>
    %cst_9 = arith.constant 9.99999974E-6 : f32
    %19 = vector.broadcast %cst_9 : f32 to vector<128x1xf32>
    %20 = arith.addf %16, %19 : vector<128x1xf32>
    %21 = math.rsqrt %20 : vector<128x1xf32>
    %22 = vector.broadcast %21 : vector<128x1xf32> to vector<128x256xf32>
    %23 = arith.mulf %18, %22 : vector<128x256xf32>
    %c0_10 = arith.constant 0 : index
    %c0_11 = arith.constant 0 : index
    %24 = vector.load %arg3[%c0_10, %c0_11] : memref<1x256xf32, #tpu.memory_space<vmem>>, vector<1x256xf32>
    %25 = vector.broadcast %24 : vector<1x256xf32> to vector<128x256xf32>
    %26 = arith.mulf %23, %25 : vector<128x256xf32>
    %c0_12 = arith.constant 0 : index
    %c0_13 = arith.constant 0 : index
    %27 = vector.load %arg4[%c0_12, %c0_13] : memref<1x256xf32, #tpu.memory_space<vmem>>, vector<1x256xf32>
    %28 = vector.broadcast %27 : vector<1x256xf32> to vector<128x256xf32>
    %29 = arith.addf %26, %28 : vector<128x256xf32>
    %30 = arith.truncf %29 : vector<128x256xf32> to vector<128x256xbf16>
    %c0_14 = arith.constant 0 : index
    %c0_15 = arith.constant 0 : index
    %31 = vector.load %arg5[%c0_14, %c0_15] : memref<256x256xbf16, #tpu.memory_space<vmem>>, vector<256x256xbf16>
    %cst_16 = arith.constant dense<0.000000e+00> : vector<128x256xf32>
    %32 = tpu.matmul %30, %31, %cst_16 {dimension_numbers = #tpu.dot_dimension_numbers<[1], [0], [0], [1], [0, 0, 1, 1], [], []>} : vector<128x256xbf16>, vector<256x256xbf16>, vector<128x256xf32> -> vector<128x256xf32>
    %c0_17 = arith.constant 0 : index
    %c0_18 = arith.constant 0 : index
    %33 = vector.load %arg6[%c0_17, %c0_18] : memref<1x256xf32, #tpu.memory_space<vmem>>, vector<1x256xf32>
    %34 = vector.broadcast %33 : vector<1x256xf32> to vector<128x256xf32>
    %35 = arith.addf %32, %34 : vector<128x256xf32>
    %cst_19 = arith.constant 5.000000e-01 : f32
    %36 = vector.broadcast %cst_19 : f32 to vector<128x256xf32>
    %37 = arith.mulf %36, %35 : vector<128x256xf32>
    %cst_20 = arith.constant 0.707106769 : f32
    %38 = vector.broadcast %cst_20 : f32 to vector<128x256xf32>
    %39 = arith.mulf %35, %38 : vector<128x256xf32>
    %40 = math.erf %39 : vector<128x256xf32>
    %cst_21 = arith.constant 1.000000e+00 : f32
    %41 = vector.broadcast %cst_21 : f32 to vector<128x256xf32>
    %42 = arith.addf %41, %40 : vector<128x256xf32>
    %43 = arith.mulf %37, %42 : vector<128x256xf32>
    %44 = vector.extract_strided_slice %43 {offsets = [0, 0], sizes = [128, 128], strides = [1, 1]} : vector<128x256xf32> to vector<128x128xf32>
    %45 = vector.extract_strided_slice %43 {offsets = [0, 128], sizes = [128, 128], strides = [1, 1]} : vector<128x256xf32> to vector<128x128xf32>
    %46 = vector.broadcast %3 : vector<128x1xf32> to vector<128x128xf32>
    %47 = arith.mulf %45, %46 : vector<128x128xf32>
    %cst_22 = arith.constant dense<0.000000e+00> : vector<128xf32>
    %48 = vector.multi_reduction <add>, %47, %cst_22 [0] : vector<128x128xf32> to vector<128xf32>
    %49 = vector.shape_cast %48 : vector<128xf32> to vector<1x128xf32>
    %cst_23 = arith.constant dense<0.000000e+00> : vector<1xf32>
    %50 = vector.multi_reduction <add>, %3, %cst_23 [0] : vector<128x1xf32> to vector<1xf32>
    %51 = vector.shape_cast %50 : vector<1xf32> to vector<1x1xf32>
    %52 = vector.broadcast %51 : vector<1x1xf32> to vector<1x128xf32>
    %53 = arith.divf %49, %52 : vector<1x128xf32>
    %c0_24 = arith.constant 0 : index
    %c0_25 = arith.constant 0 : index
    %54 = vector.load %arg7[%c0_24, %c0_25] : memref<256x128xbf16, #tpu.memory_space<vmem>>, vector<128x128xbf16>
    %c128 = arith.constant 128 : index
    %c0_26 = arith.constant 0 : index
    %55 = vector.load %arg7[%c128, %c0_26] : memref<256x128xbf16, #tpu.memory_space<vmem>>, vector<128x128xbf16>
    %56 = arith.truncf %44 : vector<128x128xf32> to vector<128x128xbf16>
    %cst_27 = arith.constant dense<0.000000e+00> : vector<128x128xf32>
    %57 = tpu.matmul %56, %54, %cst_27 {dimension_numbers = #tpu.dot_dimension_numbers<[1], [0], [0], [1], [0, 0, 1, 1], [], []>} : vector<128x128xbf16>, vector<128x128xbf16>, vector<128x128xf32> -> vector<128x128xf32>
    %58 = arith.truncf %53 : vector<1x128xf32> to vector<1x128xbf16>
    %cst_28 = arith.constant dense<0.000000e+00> : vector<1x128xf32>
    %59 = tpu.matmul %58, %55, %cst_28 {dimension_numbers = #tpu.dot_dimension_numbers<[1], [0], [0], [1], [0, 0, 1, 1], [], []>} : vector<1x128xbf16>, vector<128x128xbf16>, vector<1x128xf32> -> vector<1x128xf32>
    %60 = vector.broadcast %59 : vector<1x128xf32> to vector<128x128xf32>
    %61 = arith.addf %57, %60 : vector<128x128xf32>
    %c0_29 = arith.constant 0 : index
    %c0_30 = arith.constant 0 : index
    %62 = vector.load %arg8[%c0_29, %c0_30] : memref<1x128xf32, #tpu.memory_space<vmem>>, vector<1x128xf32>
    %63 = vector.broadcast %62 : vector<1x128xf32> to vector<128x128xf32>
    %64 = arith.addf %61, %63 : vector<128x128xf32>
    %cst_31 = arith.constant 5.000000e-01 : f32
    %65 = vector.broadcast %cst_31 : f32 to vector<128x128xf32>
    %66 = arith.mulf %65, %64 : vector<128x128xf32>
    %cst_32 = arith.constant 0.707106769 : f32
    %67 = vector.broadcast %cst_32 : f32 to vector<128x128xf32>
    %68 = arith.mulf %64, %67 : vector<128x128xf32>
    %69 = math.erf %68 : vector<128x128xf32>
    %cst_33 = arith.constant 1.000000e+00 : f32
    %70 = vector.broadcast %cst_33 : f32 to vector<128x128xf32>
    %71 = arith.addf %70, %69 : vector<128x128xf32>
    %72 = arith.mulf %66, %71 : vector<128x128xf32>
    %73 = arith.truncf %72 : vector<128x128xf32> to vector<128x128xbf16>
    %c0_34 = arith.constant 0 : index
    %c0_35 = arith.constant 0 : index
    %74 = vector.load %arg9[%c0_34, %c0_35] : memref<128x64xbf16, #tpu.memory_space<vmem>>, vector<128x64xbf16>
    %cst_36 = arith.constant dense<0.000000e+00> : vector<128x64xf32>
    %75 = tpu.matmul %73, %74, %cst_36 {dimension_numbers = #tpu.dot_dimension_numbers<[1], [0], [0], [1], [0, 0, 1, 1], [], []>} : vector<128x128xbf16>, vector<128x64xbf16>, vector<128x64xf32> -> vector<128x64xf32>
    %c0_37 = arith.constant 0 : index
    %c0_38 = arith.constant 0 : index
    %76 = vector.load %arg10[%c0_37, %c0_38] : memref<1x64xf32, #tpu.memory_space<vmem>>, vector<1x64xf32>
    %77 = vector.broadcast %76 : vector<1x64xf32> to vector<128x64xf32>
    %78 = arith.addf %75, %77 : vector<128x64xf32>
    %cst_39 = arith.constant 5.000000e-01 : f32
    %79 = vector.broadcast %cst_39 : f32 to vector<128x64xf32>
    %80 = arith.mulf %79, %78 : vector<128x64xf32>
    %cst_40 = arith.constant 0.707106769 : f32
    %81 = vector.broadcast %cst_40 : f32 to vector<128x64xf32>
    %82 = arith.mulf %78, %81 : vector<128x64xf32>
    %83 = math.erf %82 : vector<128x64xf32>
    %cst_41 = arith.constant 1.000000e+00 : f32
    %84 = vector.broadcast %cst_41 : f32 to vector<128x64xf32>
    %85 = arith.addf %84, %83 : vector<128x64xf32>
    %86 = arith.mulf %80, %85 : vector<128x64xf32>
    %c0_42 = arith.constant 0 : index
    %c0_43 = arith.constant 0 : index
    %87 = vector.load %arg11[%c0_42, %c0_43] : memref<2x64xbf16, #tpu.memory_space<vmem>>, vector<2x64xbf16>
    %88 = arith.truncf %86 : vector<128x64xf32> to vector<128x64xbf16>
    %cst_44 = arith.constant dense<0.000000e+00> : vector<2x128xf32>
    %89 = tpu.matmul %87, %88, %cst_44 {dimension_numbers = #tpu.dot_dimension_numbers<[1], [1], [0], [0], [0, 0, 1, 0], [], []>} : vector<2x64xbf16>, vector<128x64xbf16>, vector<2x128xf32> -> vector<2x128xf32>
    %c0_45 = arith.constant 0 : index
    %c0_46 = arith.constant 0 : index
    %90 = vector.load %arg12[%c0_45, %c0_46] : memref<2x1xf32, #tpu.memory_space<vmem>>, vector<2x1xf32>
    %91 = vector.broadcast %90 : vector<2x1xf32> to vector<2x128xf32>
    %92 = arith.addf %89, %91 : vector<2x128xf32>
    %93 = vector.extract_strided_slice %92 {offsets = [0, 0], sizes = [1, 128], strides = [1, 1]} : vector<2x128xf32> to vector<1x128xf32>
    %94 = vector.extract_strided_slice %92 {offsets = [1, 0], sizes = [1, 128], strides = [1, 1]} : vector<2x128xf32> to vector<1x128xf32>
    %95 = arith.maximumf %93, %94 : vector<1x128xf32>
    %96 = arith.subf %93, %95 : vector<1x128xf32>
    %97 = math.exp %96 : vector<1x128xf32>
    %98 = arith.subf %94, %95 : vector<1x128xf32>
    %99 = math.exp %98 : vector<1x128xf32>
    %100 = arith.addf %97, %99 : vector<1x128xf32>
    %101 = math.log %100 : vector<1x128xf32>
    %102 = arith.addf %95, %101 : vector<1x128xf32>
    %103 = vector.broadcast %102 : vector<1x128xf32> to vector<2x128xf32>
    %104 = arith.subf %92, %103 : vector<2x128xf32>
    %c0_47 = arith.constant 0 : index
    %c0_48 = arith.constant 0 : index
    %c0_49 = arith.constant 0 : index
    %105 = vector.load %arg13[%c0_47, %c0_48, %c0_49] : memref<1x2x128xf32, #tpu.memory_space<vmem>>, vector<1x2x128xf32>
    %106 = vector.shape_cast %105 : vector<1x2x128xf32> to vector<2x128xf32>
    %107 = vector.shape_cast %104 : vector<2x128xf32> to vector<1x2x128xf32>
    tpu.vector_store %arg13[%c0_47, %c0_48, %c0_49], %107 {strides = array<i32>} : memref<1x2x128xf32, #tpu.memory_space<vmem>>, vector<1x2x128xf32>,
    return
  }
  func.func @transform_0(%arg0: i32) -> (i32, i32, i32) {
    %c0_i32 = arith.constant 0 : i32
    %c0_i32_0 = arith.constant 0 : i32
    %c0_i32_1 = arith.constant 0 : i32
    return %arg0, %c0_i32, %c0_i32_0 : i32, i32, i32
  }
  func.func @transform_1(%arg0: i32) -> (i32, i32, i32) {
    %c0_i32 = arith.constant 0 : i32
    %c0_i32_0 = arith.constant 0 : i32
    %c0_i32_1 = arith.constant 0 : i32
    return %arg0, %c0_i32, %c0_i32_0 : i32, i32, i32
  }
  func.func @transform_2(%arg0: i32) -> (i32, i32) {
    %c0_i32 = arith.constant 0 : i32
    %c0_i32_0 = arith.constant 0 : i32
    %c0_i32_1 = arith.constant 0 : i32
    return %c0_i32, %c0_i32_0 : i32, i32
  }
  func.func @transform_3(%arg0: i32) -> (i32, i32) {
    %c0_i32 = arith.constant 0 : i32
    %c0_i32_0 = arith.constant 0 : i32
    %c0_i32_1 = arith.constant 0 : i32
    return %c0_i32, %c0_i32_0 : i32, i32
  }
  func.func @transform_4(%arg0: i32) -> (i32, i32) {
    %c0_i32 = arith.constant 0 : i32
    %c0_i32_0 = arith.constant 0 : i32
    %c0_i32_1 = arith.constant 0 : i32
    return %c0_i32, %c0_i32_0 : i32, i32
  }
  func.func @transform_5(%arg0: i32) -> (i32, i32) {
    %c0_i32 = arith.constant 0 : i32
    %c0_i32_0 = arith.constant 0 : i32
    %c0_i32_1 = arith.constant 0 : i32
    return %c0_i32, %c0_i32_0 : i32, i32
  }
  func.func @transform_6(%arg0: i32) -> (i32, i32) {
    %c0_i32 = arith.constant 0 : i32
    %c0_i32_0 = arith.constant 0 : i32
    %c0_i32_1 = arith.constant 0 : i32
    return %c0_i32, %c0_i32_0 : i32, i32
  }
  func.func @transform_7(%arg0: i32) -> (i32, i32) {
    %c0_i32 = arith.constant 0 : i32
    %c0_i32_0 = arith.constant 0 : i32
    %c0_i32_1 = arith.constant 0 : i32
    return %c0_i32, %c0_i32_0 : i32, i32
  }
  func.func @transform_8(%arg0: i32) -> (i32, i32) {
    %c0_i32 = arith.constant 0 : i32
    %c0_i32_0 = arith.constant 0 : i32
    %c0_i32_1 = arith.constant 0 : i32
    return %c0_i32, %c0_i32_0 : i32, i32
  }
  func.func @transform_9(%arg0: i32) -> (i32, i32) {
    %c0_i32 = arith.constant 0 : i32
    %c0_i32_0 = arith.constant 0 : i32
    %c0_i32_1 = arith.constant 0 : i32
    return %c0_i32, %c0_i32_0 : i32, i32
  }
  func.func @transform_10(%arg0: i32) -> (i32, i32) {
    %c0_i32 = arith.constant 0 : i32
    %c0_i32_0 = arith.constant 0 : i32
    %c0_i32_1 = arith.constant 0 : i32
    return %c0_i32, %c0_i32_0 : i32, i32
  }
  func.func @transform_11(%arg0: i32) -> (i32, i32) {
    %c0_i32 = arith.constant 0 : i32
    %c0_i32_0 = arith.constant 0 : i32
    %c0_i32_1 = arith.constant 0 : i32
    return %c0_i32, %c0_i32_0 : i32, i32
  }
  func.func @transform_12(%arg0: i32) -> (i32, i32, i32) {
    %c0_i32 = arith.constant 0 : i32
    %c0_i32_0 = arith.constant 0 : i32
    %c0_i32_1 = arith.constant 0 : i32
    return %arg0, %c0_i32, %c0_i32_0 : i32, i32, i32
  }
}

module attributes {stable_mosaic.version = 11 : i64} {
  func.func @predictor_lg_kernel(%arg0: i32, %arg1: memref<1x128x256xf32, #tpu.memory_space<vmem>>, %arg2: memref<1x128x1xf32, #tpu.memory_space<vmem>>, %arg3: memref<1x256xf32, #tpu.memory_space<vmem>>, %arg4: memref<1x256xf32, #tpu.memory_space<vmem>>, %arg5: memref<256x256xbf16, #tpu.memory_space<vmem>>, %arg6: memref<1x256xf32, #tpu.memory_space<vmem>>, %arg7: memref<256x128xbf16, #tpu.memory_space<vmem>>, %arg8: memref<1x128xf32, #tpu.memory_space<vmem>>, %arg9: memref<128x64xbf16, #tpu.memory_space<vmem>>, %arg10: memref<1x64xf32, #tpu.memory_space<vmem>>, %arg11: memref<2x64xbf16, #tpu.memory_space<vmem>>, %arg12: memref<2x1xf32, #tpu.memory_space<vmem>>, %arg13: memref<1x2x128xf32, #tpu.memory_space<vmem>>) attributes {dimension_semantics = [#tpu.dimension_semantics<parallel>], iteration_bounds = array<i64: 2>, scalar_prefetch = 0 : i64, scratch_operands = 0 : i64, tpu.core_type = #tpu.core_type<tc>, window_params = [{transform_indices = @transform_0, window_bounds = array<i64: 1, 128, 256>}, {transform_indices = @transform_1, window_bounds = array<i64: 1, 128, 1>}, {pipeline_mode = #tpu.pipeline_mode<synchronous>, transform_indices = @transform_2, window_bounds = array<i64: 1, 256>}, {pipeline_mode = #tpu.pipeline_mode<synchronous>, transform_indices = @transform_3, window_bounds = array<i64: 1, 256>}, {pipeline_mode = #tpu.pipeline_mode<synchronous>, transform_indices = @transform_4, window_bounds = array<i64: 256, 256>}, {pipeline_mode = #tpu.pipeline_mode<synchronous>, transform_indices = @transform_5, window_bounds = array<i64: 1, 256>}, {pipeline_mode = #tpu.pipeline_mode<synchronous>, transform_indices = @transform_6, window_bounds = array<i64: 256, 128>}, {pipeline_mode = #tpu.pipeline_mode<synchronous>, transform_indices = @transform_7, window_bounds = array<i64: 1, 128>}, {pipeline_mode = #tpu.pipeline_mode<synchronous>, transform_indices = @transform_8, window_bounds = array<i64: 128, 64>}, {pipeline_mode = #tpu.pipeline_mode<synchronous>, transform_indices = @transform_9, window_bounds = array<i64: 1, 64>}, {pipeline_mode = #tpu.pipeline_mode<synchronous>, transform_indices = @transform_10, window_bounds = array<i64: 2, 64>}, {pipeline_mode = #tpu.pipeline_mode<synchronous>, transform_indices = @transform_11, window_bounds = array<i64: 2, 1>}, {transform_indices = @transform_12, window_bounds = array<i64: 1, 2, 128>}]} {
    %c0 = arith.constant 0 : index
    %c0_0 = arith.constant 0 : index
    %c0_1 = arith.constant 0 : index
    %0 = vector.load %arg1[%c0, %c0_0, %c0_1] : memref<1x128x256xf32, #tpu.memory_space<vmem>>, vector<1x128x256xf32>
    %1 = vector.shape_cast %0 : vector<1x128x256xf32> to vector<128x256xf32>
    %c0_2 = arith.constant 0 : index
    %c0_3 = arith.constant 0 : index
    %c0_4 = arith.constant 0 : index
    %2 = vector.load %arg2[%c0_2, %c0_3, %c0_4] : memref<1x128x1xf32, #tpu.memory_space<vmem>>, vector<1x128x1xf32>
    %3 = vector.shape_cast %2 : vector<1x128x1xf32> to vector<128x1xf32>
    %cst = arith.constant dense<0.000000e+00> : vector<128xf32>
    %4 = vector.multi_reduction <add>, %1, %cst [1] : vector<128x256xf32> to vector<128xf32>
    %5 = vector.shape_cast %4 : vector<128xf32> to vector<128x1xf32>
    %cst_5 = arith.constant 3.906250e-03 : f32
    %6 = vector.broadcast %cst_5 : f32 to vector<128x1xf32>
    %7 = arith.mulf %5, %6 : vector<128x1xf32>
    %8 = arith.mulf %1, %1 : vector<128x256xf32>
    %cst_6 = arith.constant dense<0.000000e+00> : vector<128xf32>
    %9 = vector.multi_reduction <add>, %8, %cst_6 [1] : vector<128x256xf32> to vector<128xf32>
    %10 = vector.shape_cast %9 : vector<128xf32> to vector<128x1xf32>
    %cst_7 = arith.constant 3.906250e-03 : f32
    %11 = vector.broadcast %cst_7 : f32 to vector<128x1xf32>
    %12 = arith.mulf %10, %11 : vector<128x1xf32>
    %13 = arith.mulf %7, %7 : vector<128x1xf32>
    %14 = arith.subf %12, %13 : vector<128x1xf32>
    %cst_8 = arith.constant 0.000000e+00 : f32
    %15 = vector.broadcast %cst_8 : f32 to vector<128x1xf32>
    %16 = arith.maximumf %14, %15 : vector<128x1xf32>
    %17 = vector.broadcast %7 : vector<128x1xf32> to vector<128x256xf32>
    %18 = arith.subf %1, %17 : vector<128x256xf32>
    %cst_9 = arith.constant 9.99999974E-6 : f32
    %19 = vector.broadcast %cst_9 : f32 to vector<128x1xf32>
    %20 = arith.addf %16, %19 : vector<128x1xf32>
    %21 = math.rsqrt %20 : vector<128x1xf32>
    %22 = vector.broadcast %21 : vector<128x1xf32> to vector<128x256xf32>
    %23 = arith.mulf %18, %22 : vector<128x256xf32>
    %c0_10 = arith.constant 0 : index
    %c0_11 = arith.constant 0 : index
    %24 = vector.load %arg3[%c0_10, %c0_11] : memref<1x256xf32, #tpu.memory_space<vmem>>, vector<1x256xf32>
    %25 = vector.broadcast %24 : vector<1x256xf32> to vector<128x256xf32>
    %26 = arith.mulf %23, %25 : vector<128x256xf32>
    %c0_12 = arith.constant 0 : index
    %c0_13 = arith.constant 0 : index
    %27 = vector.load %arg4[%c0_12, %c0_13] : memref<1x256xf32, #tpu.memory_space<vmem>>, vector<1x256xf32>
    %28 = vector.broadcast %27 : vector<1x256xf32> to vector<128x256xf32>
    %29 = arith.addf %26, %28 : vector<128x256xf32>
    %30 = arith.truncf %29 : vector<128x256xf32> to vector<128x256xbf16>
    %c0_14 = arith.constant 0 : index
    %c0_15 = arith.constant 0 : index
    %31 = vector.load %arg5[%c0_14, %c0_15] : memref<256x256xbf16, #tpu.memory_space<vmem>>, vector<256x256xbf16>
    %cst_16 = arith.constant dense<0.000000e+00> : vector<128x256xf32>
    %32 = tpu.matmul %30, %31, %cst_16 {dimension_numbers = #tpu.dot_dimension_numbers<[1], [0], [0], [1], [0, 0, 1, 1], [], []>} : vector<128x256xbf16>, vector<256x256xbf16>, vector<128x256xf32> -> vector<128x256xf32>
    %c0_17 = arith.constant 0 : index
    %c0_18 = arith.constant 0 : index
    %33 = vector.load %arg6[%c0_17, %c0_18] : memref<1x256xf32, #tpu.memory_space<vmem>>, vector<1x256xf32>
    %34 = vector.broadcast %33 : vector<1x256xf32> to vector<128x256xf32>
    %35 = arith.addf %32, %34 : vector<128x256xf32>
    %cst_19 = arith.constant 5.000000e-01 : f32
    %36 = vector.broadcast %cst_19 : f32 to vector<128x256xf32>
    %37 = arith.mulf %36, %35 : vector<128x256xf32>
    %cst_20 = arith.constant 0.707106769 : f32
    %38 = vector.broadcast %cst_20 : f32 to vector<128x256xf32>
    %39 = arith.mulf %35, %38 : vector<128x256xf32>
    %40 = math.erf %39 : vector<128x256xf32>
    %cst_21 = arith.constant 1.000000e+00 : f32
    %41 = vector.broadcast %cst_21 : f32 to vector<128x256xf32>
    %42 = arith.addf %41, %40 : vector<128x256xf32>
    %43 = arith.mulf %37, %42 : vector<128x256xf32>
    %44 = vector.extract_strided_slice %43 {offsets = [0, 0], sizes = [128, 128], strides = [1, 1]} : vector<128x256xf32> to vector<128x128xf32>
    %45 = vector.extract_strided_slice %43 {offsets = [0, 128], sizes = [128, 128], strides = [1, 1]} : vector<128x256xf32> to vector<128x128xf32>
    %46 = vector.broadcast %3 : vector<128x1xf32> to vector<128x128xf32>
    %47 = arith.mulf %45, %46 : vector<128x128xf32>
    %cst_22 = arith.constant dense<0.000000e+00> : vector<128xf32>
    %48 = vector.multi_reduction <add>, %47, %cst_22 [0] : vector<128x128xf32> to vector<128xf32>
    %49 = vector.shape_cast %48 : vector<128xf32> to vector<1x128xf32>
    %cst_23 = arith.constant dense<0.000000e+00> : vector<1xf32>
    %50 = vector.multi_reduction <add>, %3, %cst_23 [0] : vector<128x1xf32> to vector<1xf32>
    %51 = vector.shape_cast %50 : vector<1xf32> to vector<1x1xf32>
    %52 = vector.broadcast %51 : vector<1x1xf32> to vector<1x128xf32>
    %53 = arith.divf %49, %52 : vector<1x128xf32>
    %c0_24 = arith.constant 0 : index
    %c0_25 = arith.constant 0 : index
    %54 = vector.load %arg7[%c0_24, %c0_25] : memref<256x128xbf16, #tpu.memory_space<vmem>>, vector<128x128xbf16>
    %c128 = arith.constant 128 : index
    %c0_26 = arith.constant 0 : index
    %55 = vector.load %arg7[%c128, %c0_26] : memref<256x128xbf16, #tpu.memory_space<vmem>>, vector<128x128xbf16>
    %56 = arith.truncf %44 : vector<128x128xf32> to vector<128x128xbf16>
    %cst_27 = arith.constant dense<0.000000e+00> : vector<128x128xf32>
    %57 = tpu.matmul %56, %54, %cst_27 {dimension_numbers = #tpu.dot_dimension_numbers<[1], [0], [0], [1], [0, 0, 1, 1], [], []>} : vector<128x128xbf16>, vector<128x128xbf16>, vector<128x128xf32> -> vector<128x128xf32>
    %58 = arith.truncf %53 : vector<1x128xf32> to vector<1x128xbf16>
    %cst_28 = arith.constant dense<0.000000e+00> : vector<1x128xf32>
    %59 = tpu.matmul %58, %55, %cst_28 {dimension_numbers = #tpu.dot_dimension_numbers<[1], [0], [0], [1], [0, 0, 1, 1], [], []>} : vector<1x128xbf16>, vector<128x128xbf16>, vector<1x128xf32> -> vector<1x128xf32>
    %60 = vector.broadcast %59 : vector<1x128xf32> to vector<128x128xf32>
    %61 = arith.addf %57, %60 : vector<128x128xf32>
    %c0_29 = arith.constant 0 : index
    %c0_30 = arith.constant 0 : index
    %62 = vector.load %arg8[%c0_29, %c0_30] : memref<1x128xf32, #tpu.memory_space<vmem>>, vector<1x128xf32>
    %63 = vector.broadcast %62 : vector<1x128xf32> to vector<128x128xf32>
    %64 = arith.addf %61, %63 : vector<128x128xf32>
    %cst_31 = arith.constant 5.000000e-01 : f32
    %65 = vector.broadcast %cst_31 : f32 to vector<128x128xf32>
    %66 = arith.mulf %65, %64 : vector<128x128xf32>
    %cst_32 = arith.constant 0.707106769 : f32
    %67 = vector.broadcast %cst_32 : f32 to vector<128x128xf32>
    %68 = arith.mulf %64, %67 : vector<128x128xf32>
    %69 = math.erf %68 : vector<128x128xf32>
    %cst_33 = arith.constant 1.000000e+00 : f32
    %70 = vector.broadcast %cst_33 : f32 to vector<128x128xf32>
    %71 = arith.addf %70, %69 : vector<128x128xf32>
    %72 = arith.mulf %66, %71 : vector<128x128xf32>
    %73 = arith.truncf %72 : vector<128x128xf32> to vector<128x128xbf16>
    %c0_34 = arith.constant 0 : index
    %c0_35 = arith.constant 0 : index
    %74 = vector.load %arg9[%c0_34, %c0_35] : memref<128x64xbf16, #tpu.memory_space<vmem>>, vector<128x64xbf16>
    %cst_36 = arith.constant dense<0.000000e+00> : vector<128x64xf32>
    %75 = tpu.matmul %73, %74, %cst_36 {dimension_numbers = #tpu.dot_dimension_numbers<[1], [0], [0], [1], [0, 0, 1, 1], [], []>} : vector<128x128xbf16>, vector<128x64xbf16>, vector<128x64xf32> -> vector<128x64xf32>
    %c0_37 = arith.constant 0 : index
    %c0_38 = arith.constant 0 : index
    %76 = vector.load %arg10[%c0_37, %c0_38] : memref<1x64xf32, #tpu.memory_space<vmem>>, vector<1x64xf32>
    %77 = vector.broadcast %76 : vector<1x64xf32> to vector<128x64xf32>
    %78 = arith.addf %75, %77 : vector<128x64xf32>
    %cst_39 = arith.constant 5.000000e-01 : f32
    %79 = vector.broadcast %cst_39 : f32 to vector<128x64xf32>
    %80 = arith.mulf %79, %78 : vector<128x64xf32>
    %cst_40 = arith.constant 0.707106769 : f32
    %81 = vector.broadcast %cst_40 : f32 to vector<128x64xf32>
    %82 = arith.mulf %78, %81 : vector<128x64xf32>
    %83 = math.erf %82 : vector<128x64xf32>
    %cst_41 = arith.constant 1.000000e+00 : f32
    %84 = vector.broadcast %cst_41 : f32 to vector<128x64xf32>
    %85 = arith.addf %84, %83 : vector<128x64xf32>
    %86 = arith.mulf %80, %85 : vector<128x64xf32>
    %c0_42 = arith.constant 0 : index
    %c0_43 = arith.constant 0 : index
    %87 = vector.load %arg11[%c0_42, %c0_43] : memref<2x64xbf16, #tpu.memory_space<vmem>>, vector<2x64xbf16>
    %88 = arith.truncf %86 : vector<128x64xf32> to vector<128x64xbf16>
    %cst_44 = arith.constant dense<0.000000e+00> : vector<2x128xf32>
    %89 = tpu.matmul %87, %88, %cst_44 {dimension_numbers = #tpu.dot_dimension_numbers<[1], [1], [0], [0], [0, 0, 1, 0], [], []>} : vector<2x64xbf16>, vector<128x64xbf16>, vector<2x128xf32> -> vector<2x128xf32>
    %c0_45 = arith.constant 0 : index
    %c0_46 = arith.constant 0 : index
    %90 = vector.load %arg12[%c0_45, %c0_46] : memref<2x1xf32, #tpu.memory_space<vmem>>, vector<2x1xf32>
    %91 = vector.broadcast %90 : vector<2x1xf32> to vector<2x128xf32>
    %92 = arith.addf %89, %91 : vector<2x128xf32>
    %93 = vector.extract_strided_slice %92 {offsets = [0, 0], sizes = [1, 128], strides = [1, 1]} : vector<2x128xf32> to vector<1x128xf32>
    %94 = vector.extract_strided_slice %92 {offsets = [1, 0], sizes = [1, 128], strides = [1, 1]} : vector<2x128xf32> to vector<1x128xf32>
    %95 = arith.maximumf %93, %94 : vector<1x128xf32>
    %96 = arith.subf %93, %95 : vector<1x128xf32>
    %97 = math.exp %96 : vector<1x128xf32>
    %98 = arith.subf %94, %95 : vector<1x128xf32>
    %99 = math.exp %98 : vector<1x128xf32>
    %100 = arith.addf %97, %99 : vector<1x128xf32>
    %101 = math.log %100 : vector<1x128xf32>
    %102 = arith.addf %95, %101 : vector<1x128xf32>
    %103 = vector.broadcast %102 : vector<1x128xf32> to vector<2x128xf32>
    %104 = arith.subf %92, %103 : vector<2x128xf32>
    %c0_47 = arith.constant 0 : index
    %c0_48 = arith.constant 0 : index
    %c0_49 = arith.constant 0 : index
    %105 = vector.load %arg13[%c0_47, %c0_48, %c0_49] : memref<1x2x128xf32, #tpu.memory_space<vmem>>, vector<1x2x128xf32>
    %106 = vector.shape_cast %105 : vector<1x2x128xf32> to vector<2x128xf32>
    %107 = vector.shape_cast %104 : vector<2x128xf32> to vector<1x2x128xf32>
    tpu.vector_store %arg13[%c0_47, %c0_48, %c0_49], %107 {strides = array<i32>} : memref<1x2x128xf32, #tpu.memory_space<vmem>>, vector<1x2x128xf32>,
    return
  }
  func.func @transform_0(%arg0: i32) -> (i32, i32, i32) {
    %c0_i32 = arith.constant 0 : i32
    %c0_i32_0 = arith.constant 0 : i32
    %c0_i32_1 = arith.constant 0 : i32
    return %arg0, %c0_i32, %c0_i32_0 : i32, i32, i32
  }
  func.func @transform_1(%arg0: i32) -> (i32, i32, i32) {
    %c0_i32 = arith.constant 0 : i32
    %c0_i32_0 = arith.constant 0 : i32
    %c0_i32_1 = arith.constant 0 : i32
    return %arg0, %c0_i32, %c0_i32_0 : i32, i32, i32
  }
  func.func @transform_2(%arg0: i32) -> (i32, i32) {
    %c0_i32 = arith.constant 0 : i32
    %c0_i32_0 = arith.constant 0 : i32
    %c0_i32_1 = arith.constant 0 : i32
    return %c0_i32, %c0_i32_0 : i32, i32
  }
  func.func @transform_3(%arg0: i32) -> (i32, i32) {
    %c0_i32 = arith.constant 0 : i32
    %c0_i32_0 = arith.constant 0 : i32
    %c0_i32_1 = arith.constant 0 : i32
    return %c0_i32, %c0_i32_0 : i32, i32
  }
  func.func @transform_4(%arg0: i32) -> (i32, i32) {
    %c0_i32 = arith.constant 0 : i32
    %c0_i32_0 = arith.constant 0 : i32
    %c0_i32_1 = arith.constant 0 : i32
    return %c0_i32, %c0_i32_0 : i32, i32
  }
  func.func @transform_5(%arg0: i32) -> (i32, i32) {
    %c0_i32 = arith.constant 0 : i32
    %c0_i32_0 = arith.constant 0 : i32
    %c0_i32_1 = arith.constant 0 : i32
    return %c0_i32, %c0_i32_0 : i32, i32
  }
  func.func @transform_6(%arg0: i32) -> (i32, i32) {
    %c0_i32 = arith.constant 0 : i32
    %c0_i32_0 = arith.constant 0 : i32
    %c0_i32_1 = arith.constant 0 : i32
    return %c0_i32, %c0_i32_0 : i32, i32
  }
  func.func @transform_7(%arg0: i32) -> (i32, i32) {
    %c0_i32 = arith.constant 0 : i32
    %c0_i32_0 = arith.constant 0 : i32
    %c0_i32_1 = arith.constant 0 : i32
    return %c0_i32, %c0_i32_0 : i32, i32
  }
  func.func @transform_8(%arg0: i32) -> (i32, i32) {
    %c0_i32 = arith.constant 0 : i32
    %c0_i32_0 = arith.constant 0 : i32
    %c0_i32_1 = arith.constant 0 : i32
    return %c0_i32, %c0_i32_0 : i32, i32
  }
  func.func @transform_9(%arg0: i32) -> (i32, i32) {
    %c0_i32 = arith.constant 0 : i32
    %c0_i32_0 = arith.constant 0 : i32
    %c0_i32_1 = arith.constant 0 : i32
    return %c0_i32, %c0_i32_0 : i32, i32
  }
  func.func @transform_10(%arg0: i32) -> (i32, i32) {
    %c0_i32 = arith.constant 0 : i32
    %c0_i32_0 = arith.constant 0 : i32
    %c0_i32_1 = arith.constant 0 : i32
    return %c0_i32, %c0_i32_0 : i32, i32
  }
  func.func @transform_11(%arg0: i32) -> (i32, i32) {
    %c0_i32 = arith.constant 0 : i32
    %c0_i32_0 = arith.constant 0 : i32
    %c0_i32_1 = arith.constant 0 : i32
    return %c0_i32, %c0_i32_0 : i32, i32
  }
  func.func @transform_12(%arg0: i32) -> (i32, i32, i32) {
    %c0_i32 = arith.constant 0 : i32
    %c0_i32_0 = arith.constant 0 : i32
    %c0_i32_1 = arith.constant 0 : i32
    return %arg0, %c0_i32, %c0_i32_0 : i32, i32, i32
  }
}

</mosaic_0001>

<llo_original>
// kernel: tpu_custom_call.1
$region0: #{tpu_custom_call.1}
  #allocation0 [shape = 'u32[]', space=smem, size = 0x4, offset = 0x4, fixed_abs, tag = 'smem constant byte address 0x4 - core index']
  #allocation1 [shape = 'u32[72,128]{1,0:T(1,128)}', space=vmem, size = 0x9000, scoped, tag = 'internal scratch']
  %s0 = inlined_call_operand.hbm [shape: f32[2,128,256], index: 0, kind: input, shape index: {}]
  %s1 = inlined_call_operand.vmem [shape: f32[2,128,1], index: 1, kind: input, shape index: {}]
  %s2 = inlined_call_operand.vmem [shape: f32[1,256], index: 2, kind: input, shape index: {}]
  %s3 = inlined_call_operand.vmem [shape: f32[1,256], index: 3, kind: input, shape index: {}]
  %s4 = inlined_call_operand.vmem [shape: bf16[256,256], index: 4, kind: input, shape index: {}]
  %s5 = inlined_call_operand.vmem [shape: f32[1,256], index: 5, kind: input, shape index: {}]
  %s6 = inlined_call_operand.hbm [shape: bf16[256,128], index: 6, kind: input, shape index: {}]
  %s7 = inlined_call_operand.vmem [shape: f32[1,128], index: 7, kind: input, shape index: {}]
  %s8 = inlined_call_operand.vmem [shape: bf16[128,64], index: 8, kind: input, shape index: {}]
  %s9 = inlined_call_operand.vmem [shape: f32[1,64], index: 9, kind: input, shape index: {}]
  %s10 = inlined_call_operand.vmem [shape: bf16[2,64], index: 10, kind: input, shape index: {}]
  %s11 = inlined_call_operand.vmem [shape: f32[2,1], index: 11, kind: input, shape index: {}]
  %s12 = inlined_call_operand.hbm [shape: f32[2,2,128], index: 12, kind: output, shape index: {}]
  %s13 = sld [smem:[#allocation0]]
  $region89: #{tpu_custom_call.1} parent=0
    _
  %s15 = ssub.s32 1, %s13
  %s16 = scalar_select 0, %s15, %s13
  $region1: #{tpu_custom_call.1} parent=0
    #allocation2 [shape = 'u8[262144]{0}', space=vmem, size = 0x40000, scoped, tag = 'input window, operand 0']
    #allocation3 [shape = 's32[2]{0}', space=sflag, size = 0x8, scoped, tag = 'scoped memory for tpu_custom_call.1']
    #allocation4 [shape = 's32[2]{0}', space=sflag, size = 0x8, scoped, tag = 'scoped memory for tpu_custom_call.1']
    #allocation5 [shape = 'u8[65536]{0}', space=vmem, size = 0x10000, scoped, tag = 'input window, operand 6, single buffered']
    #allocation6 [shape = 's32[1]{0}', space=sflag, size = 0x4, scoped, tag = 'scoped memory for tpu_custom_call.1']
    #allocation7 [shape = 'u8[2048]{0}', space=vmem, size = 0x800, scoped, tag = 'output window, operand 0']
    %17 = vsyncpa [#allocation3], 0
    %s18 = scalar_lea.sflag [#allocation3], 1
    %19 = vsyncpa %s18, 0
    %20 = vsyncpa [#allocation6], 0
    %21 = vsyncpa [#allocation4], 0
    %s22 = scalar_lea.sflag [#allocation4], 1
    %23 = vsyncpa %s22, 0
    loop: start=0, step=1, limit=4
    $region2: #{tpu_custom_call.1} parent=1 // loop_pre_header
      _
    $region3: #{tpu_custom_call.1} parent=1 // loop_header
      %s25 = sphi 0, %s29
      %p26 = scmp.ge.s32.totalorder %s25, 4
      %s35 = sphi 0, %s37
      %s38 = sphi 0, %s35
      %s39 = sphi 0, %s38
      %s55 = sphi 0, %s39
      %s61 = sphi 0, %s63
      %s64 = sphi 0, %s61
      %s65 = sphi 0, %s64
      %s81 = sphi 0, %s65
      %s85 = sphi 0, %s85
      %s87 = sphi 0, %s85
      %s88 = sphi 0, %s87
      %s102 = sphi 0, %s88
      %s106 = sphi 0, %s106
      %s108 = sphi 0, %s106
      %s109 = sphi 0, %s108
      %s123 = sphi 0, %s109
      %s127 = sphi 0, %s127
      %s129 = sphi 0, %s127
      %s130 = sphi 0, %s129
      %s144 = sphi 0, %s130
      %s148 = sphi 0, %s148
      %s150 = sphi 0, %s148
      %s151 = sphi 0, %s150
      %s165 = sphi 0, %s151
      %s169 = sphi 0, %s169
      %s171 = sphi 0, %s169
      %s172 = sphi 0, %s171
      %s186 = sphi 0, %s172
      %s190 = sphi 0, %s190
      %s192 = sphi 0, %s190
      %s193 = sphi 0, %s192
      %s207 = sphi 0, %s193
      %s211 = sphi 0, %s211
      %s213 = sphi 0, %s211
      %s214 = sphi 0, %s213
      %s228 = sphi 0, %s214
      %s232 = sphi 0, %s232
      %s234 = sphi 0, %s232
      %s235 = sphi 0, %s234
      %s249 = sphi 0, %s235
      %s253 = sphi 0, %s253
      %s255 = sphi 0, %s253
      %s256 = sphi 0, %s255
      %s270 = sphi 0, %s256
      %s274 = sphi 0, %s274
      %s276 = sphi 0, %s274
      %s277 = sphi 0, %s276
      %s291 = sphi 0, %s277
      %s297 = sphi 0, %s299
      %s300 = sphi 0, %s297
      %s301 = sphi 0, %s300
      %s317 = sphi 0, %s301
    $region4: #{tpu_custom_call.1} parent=1 // loop_header_branch
      %28 = sbr.rel (%p26) target = $region8
    $region5: #{tpu_custom_call.1} parent=1 // loop_body
      %s30 = ssub.s32 %s25, 1
      %s31 = ssub.s32 %s25, 2
      %s32 = sadd.s32 %s25, 1
      %s33 = ssub.s32 %s25, %s32
      %p34 = scmp.eq.s32.totalorder %s33, 0
      %s36 = sadd.s32 %s35, 1
      %s37 = scalar_select %p34, %s35, %s36
      %p40 = pneg %p34
      %p41 = scmp.eq.s32.totalorder %s25, 1
      %p42 = por %p40, %p41
      %p43 = scmp.ne.s32.totalorder %s35, %s38
      %p44 = scmp.eq.s32.totalorder %s25, 0
      %p45 = por %p43, %p44
      %p46 = scmp.ne.s32.totalorder %s35, %s38
      %p47 = scmp.eq.s32.totalorder %s30, 1
      %p48 = por %p46, %p47
      %p49 = scmp.ne.s32.totalorder %s38, %s39
      %p50 = scmp.eq.s32.totalorder %s30, 0
      %p51 = por %p49, %p50
      %p52 = scmp.ne.s32.totalorder %s38, %s39
      %p53 = scmp.eq.s32.totalorder %s31, 1
      %p54 = por %p52, %p53
      %p56 = scmp.ne.s32.totalorder %s39, %s55
      %p57 = scmp.eq.s32.totalorder %s31, 0
      %p58 = por %p56, %p57
      %s59 = ssub.s32 %s25, %s32
      %p60 = scmp.eq.s32.totalorder %s59, 0
      %s62 = sadd.s32 %s61, 1
      %s63 = scalar_select %p60, %s61, %s62
      %p66 = pneg %p60
      %p67 = scmp.eq.s32.totalorder %s25, 1
      %p68 = por %p66, %p67
      %p69 = scmp.ne.s32.totalorder %s61, %s64
      %p70 = scmp.eq.s32.totalorder %s25, 0
      %p71 = por %p69, %p70
      %p72 = scmp.ne.s32.totalorder %s61, %s64
      %p73 = scmp.eq.s32.totalorder %s30, 1
      %p74 = por %p72, %p73
      %p75 = scmp.ne.s32.totalorder %s64, %s65
      %p76 = scmp.eq.s32.totalorder %s30, 0
      %p77 = por %p75, %p76
      %p78 = scmp.ne.s32.totalorder %s64, %s65
      %p79 = scmp.eq.s32.totalorder %s31, 1
      %p80 = por %p78, %p79
      %p82 = scmp.ne.s32.totalorder %s65, %s81
      %p83 = scmp.eq.s32.totalorder %s31, 0
      %p84 = por %p82, %p83
      %s86 = sadd.s32 %s85, 1
      %p89 = scmp.eq.s32.totalorder %s25, 1
      %p90 = scmp.ne.s32.totalorder %s85, %s87
      %p91 = scmp.eq.s32.totalorder %s25, 0
      %p92 = por %p90, %p91
      %p93 = scmp.ne.s32.totalorder %s85, %s87
      %p94 = scmp.eq.s32.totalorder %s30, 1
      %p95 = por %p93, %p94
      %p96 = scmp.ne.s32.totalorder %s87, %s88
      %p97 = scmp.eq.s32.totalorder %s30, 0
      %p98 = por %p96, %p97
      %p99 = scmp.ne.s32.totalorder %s87, %s88
      %p100 = scmp.eq.s32.totalorder %s31, 1
      %p101 = por %p99, %p100
      %p103 = scmp.ne.s32.totalorder %s88, %s102
      %p104 = scmp.eq.s32.totalorder %s31, 0
      %p105 = por %p103, %p104
      %s107 = sadd.s32 %s106, 1
      %p110 = scmp.eq.s32.totalorder %s25, 1
      %p111 = scmp.ne.s32.totalorder %s106, %s108
      %p112 = scmp.eq.s32.totalorder %s25, 0
      %p113 = por %p111, %p112
      %p114 = scmp.ne.s32.totalorder %s106, %s108
      %p115 = scmp.eq.s32.totalorder %s30, 1
      %p116 = por %p114, %p115
      %p117 = scmp.ne.s32.totalorder %s108, %s109
      %p118 = scmp.eq.s32.totalorder %s30, 0
      %p119 = por %p117, %p118
      %p120 = scmp.ne.s32.totalorder %s108, %s109
      %p121 = scmp.eq.s32.totalorder %s31, 1
      %p122 = por %p120, %p121
      %p124 = scmp.ne.s32.totalorder %s109, %s123
      %p125 = scmp.eq.s32.totalorder %s31, 0
      %p126 = por %p124, %p125
      %s128 = sadd.s32 %s127, 1
      %p131 = scmp.eq.s32.totalorder %s25, 1
      %p132 = scmp.ne.s32.totalorder %s127, %s129
      %p133 = scmp.eq.s32.totalorder %s25, 0
      %p134 = por %p132, %p133
      %p135 = scmp.ne.s32.totalorder %s127, %s129
      %p136 = scmp.eq.s32.totalorder %s30, 1
      %p137 = por %p135, %p136
      %p138 = scmp.ne.s32.totalorder %s129, %s130
      %p139 = scmp.eq.s32.totalorder %s30, 0
      %p140 = por %p138, %p139
      %p141 = scmp.ne.s32.totalorder %s129, %s130
      %p142 = scmp.eq.s32.totalorder %s31, 1
      %p143 = por %p141, %p142
      %p145 = scmp.ne.s32.totalorder %s130, %s144
      %p146 = scmp.eq.s32.totalorder %s31, 0
      %p147 = por %p145, %p146
      %s149 = sadd.s32 %s148, 1
      %p152 = scmp.eq.s32.totalorder %s25, 1
      %p153 = scmp.ne.s32.totalorder %s148, %s150
      %p154 = scmp.eq.s32.totalorder %s25, 0
      %p155 = por %p153, %p154
      %p156 = scmp.ne.s32.totalorder %s148, %s150
      %p157 = scmp.eq.s32.totalorder %s30, 1
      %p158 = por %p156, %p157
      %p159 = scmp.ne.s32.totalorder %s150, %s151
      %p160 = scmp.eq.s32.totalorder %s30, 0
      %p161 = por %p159, %p160
      %p162 = scmp.ne.s32.totalorder %s150, %s151
      %p163 = scmp.eq.s32.totalorder %s31, 1
      %p164 = por %p162, %p163
      %p166 = scmp.ne.s32.totalorder %s151, %s165
      %p167 = scmp.eq.s32.totalorder %s31, 0
      %p168 = por %p166, %p167
      %s170 = sadd.s32 %s169, 1
      %p173 = scmp.eq.s32.totalorder %s25, 1
      %p174 = scmp.ne.s32.totalorder %s169, %s171
      %p175 = scmp.eq.s32.totalorder %s25, 0
      %p176 = por %p174, %p175
      %p177 = scmp.ne.s32.totalorder %s169, %s171
      %p178 = scmp.eq.s32.totalorder %s30, 1
      %p179 = por %p177, %p178
      %p180 = scmp.ne.s32.totalorder %s171, %s172
      %p181 = scmp.eq.s32.totalorder %s30, 0
      %p182 = por %p180, %p181
      %p183 = scmp.ne.s32.totalorder %s171, %s172
      %p184 = scmp.eq.s32.totalorder %s31, 1
      %p185 = por %p183, %p184
      %p187 = scmp.ne.s32.totalorder %s172, %s186
      %p188 = scmp.eq.s32.totalorder %s31, 0
      %p189 = por %p187, %p188
      %s191 = sadd.s32 %s190, 1
      %p194 = scmp.eq.s32.totalorder %s25, 1
      %p195 = scmp.ne.s32.totalorder %s190, %s192
      %p196 = scmp.eq.s32.totalorder %s25, 0
      %p197 = por %p195, %p196
      %p198 = scmp.ne.s32.totalorder %s190, %s192
      %p199 = scmp.eq.s32.totalorder %s30, 1
      %p200 = por %p198, %p199
      %p201 = scmp.ne.s32.totalorder %s192, %s193
      %p202 = scmp.eq.s32.totalorder %s30, 0
      %p203 = por %p201, %p202
      %p204 = scmp.ne.s32.totalorder %s192, %s193
      %p205 = scmp.eq.s32.totalorder %s31, 1
      %p206 = por %p204, %p205
      %p208 = scmp.ne.s32.totalorder %s193, %s207
      %p209 = scmp.eq.s32.totalorder %s31, 0
      %p210 = por %p208, %p209
      %s212 = sadd.s32 %s211, 1
      %p215 = scmp.eq.s32.totalorder %s25, 1
      %p216 = scmp.ne.s32.totalorder %s211, %s213
      %p217 = scmp.eq.s32.totalorder %s25, 0
      %p218 = por %p216, %p217
      %p219 = scmp.ne.s32.totalorder %s211, %s213
      %p220 = scmp.eq.s32.totalorder %s30, 1
      %p221 = por %p219, %p220
      %p222 = scmp.ne.s32.totalorder %s213, %s214
      %p223 = scmp.eq.s32.totalorder %s30, 0
      %p224 = por %p222, %p223
      %p225 = scmp.ne.s32.totalorder %s213, %s214
      %p226 = scmp.eq.s32.totalorder %s31, 1
      %p227 = por %p225, %p226
      %p229 = scmp.ne.s32.totalorder %s214, %s228
      %p230 = scmp.eq.s32.totalorder %s31, 0
      %p231 = por %p229, %p230
      %s233 = sadd.s32 %s232, 1
      %p236 = scmp.eq.s32.totalorder %s25, 1
      %p237 = scmp.ne.s32.totalorder %s232, %s234
      %p238 = scmp.eq.s32.totalorder %s25, 0
      %p239 = por %p237, %p238
      %p240 = scmp.ne.s32.totalorder %s232, %s234
      %p241 = scmp.eq.s32.totalorder %s30, 1
      %p242 = por %p240, %p241
      %p243 = scmp.ne.s32.totalorder %s234, %s235
      %p244 = scmp.eq.s32.totalorder %s30, 0
      %p245 = por %p243, %p244
      %p246 = scmp.ne.s32.totalorder %s234, %s235
      %p247 = scmp.eq.s32.totalorder %s31, 1
      %p248 = por %p246, %p247
      %p250 = scmp.ne.s32.totalorder %s235, %s249
      %p251 = scmp.eq.s32.totalorder %s31, 0
      %p252 = por %p250, %p251
      %s254 = sadd.s32 %s253, 1
      %p257 = scmp.eq.s32.totalorder %s25, 1
      %p258 = scmp.ne.s32.totalorder %s253, %s255
      %p259 = scmp.eq.s32.totalorder %s25, 0
      %p260 = por %p258, %p259
      %p261 = scmp.ne.s32.totalorder %s253, %s255
      %p262 = scmp.eq.s32.totalorder %s30, 1
      %p263 = por %p261, %p262
      %p264 = scmp.ne.s32.totalorder %s255, %s256
      %p265 = scmp.eq.s32.totalorder %s30, 0
      %p266 = por %p264, %p265
      %p267 = scmp.ne.s32.totalorder %s255, %s256
      %p268 = scmp.eq.s32.totalorder %s31, 1
      %p269 = por %p267, %p268
      %p271 = scmp.ne.s32.totalorder %s256, %s270
      %p272 = scmp.eq.s32.totalorder %s31, 0
      %p273 = por %p271, %p272
      %s275 = sadd.s32 %s274, 1
      %p278 = scmp.eq.s32.totalorder %s25, 1
      %p279 = scmp.ne.s32.totalorder %s274, %s276
      %p280 = scmp.eq.s32.totalorder %s25, 0
      %p281 = por %p279, %p280
      %p282 = scmp.ne.s32.totalorder %s274, %s276
      %p283 = scmp.eq.s32.totalorder %s30, 1
      %p284 = por %p282, %p283
      %p285 = scmp.ne.s32.totalorder %s276, %s277
      %p286 = scmp.eq.s32.totalorder %s30, 0
      %p287 = por %p285, %p286
      %p288 = scmp.ne.s32.totalorder %s276, %s277
      %p289 = scmp.eq.s32.totalorder %s31, 1
      %p290 = por %p288, %p289
      %p292 = scmp.ne.s32.totalorder %s277, %s291
      %p293 = scmp.eq.s32.totalorder %s31, 0
      %p294 = por %p292, %p293
      %s295 = ssub.s32 %s25, %s32
      %p296 = scmp.eq.s32.totalorder %s295, 0
      %s298 = sadd.s32 %s297, 1
      %s299 = scalar_select %p296, %s297, %s298
      %p302 = pneg %p296
      %p303 = scmp.eq.s32.totalorder %s25, 1
      %p304 = por %p302, %p303
      %p305 = scmp.ne.s32.totalorder %s297, %s300
      %p306 = scmp.eq.s32.totalorder %s25, 0
      %p307 = por %p305, %p306
      %p308 = scmp.ne.s32.totalorder %s297, %s300
      %p309 = scmp.eq.s32.totalorder %s30, 1
      %p310 = por %p308, %p309
      %p311 = scmp.ne.s32.totalorder %s300, %s301
      %p312 = scmp.eq.s32.totalorder %s30, 0
      %p313 = por %p311, %p312
      %p314 = scmp.ne.s32.totalorder %s300, %s301
      %p315 = scmp.eq.s32.totalorder %s31, 1
      %p316 = por %p314, %p315
      %p318 = scmp.ne.s32.totalorder %s301, %s317
      %p319 = scmp.eq.s32.totalorder %s31, 0
      %p320 = por %p318, %p319
      %p321 = scmp.le.s32.totalorder 1, %s25
      %p322 = scmp.lt.s32.totalorder %s25, 3
      %p323 = pnand %p321, %p322
      %p324 = pneg %p323
      // Predicated region
      $region9: #{tpu_custom_call.1} parent=5 // pred_check
        _
      $region10: #{tpu_custom_call.1} parent=5 // pred_check_branch
        %326 = sbr.rel (%p323) target = $region12
      $region11: #{tpu_custom_call.1} parent=5 // pred_region
        %s327 = ssub.s32 %s25, 1
        // Predicated region
        $region13: #{tpu_custom_call.1} parent=11 // pred_check
          %p328 = pneg %p98
        $region14: #{tpu_custom_call.1} parent=11 // pred_check_branch
          %330 = sbr.rel (%p328) target = $region16
        $region15: #{tpu_custom_call.1} parent=11 // pred_region
          _
        $region16: #{tpu_custom_call.1} parent=11 // pred_fallthru
          _
        // Predicated region
        $region17: #{tpu_custom_call.1} parent=11 // pred_check
          %p331 = pneg %p119
        $region18: #{tpu_custom_call.1} parent=11 // pred_check_branch
          %333 = sbr.rel (%p331) target = $region20
        $region19: #{tpu_custom_call.1} parent=11 // pred_region
          _
        $region20: #{tpu_custom_call.1} parent=11 // pred_fallthru
          _
        // Predicated region
        $region21: #{tpu_custom_call.1} parent=11 // pred_check
          %p334 = pneg %p140
        $region22: #{tpu_custom_call.1} parent=11 // pred_check_branch
          %336 = sbr.rel (%p334) target = $region24
        $region23: #{tpu_custom_call.1} parent=11 // pred_region
          _
        $region24: #{tpu_custom_call.1} parent=11 // pred_fallthru
          _
        // Predicated region
        $region25: #{tpu_custom_call.1} parent=11 // pred_check
          %p337 = pneg %p161
        $region26: #{tpu_custom_call.1} parent=11 // pred_check_branch
          %339 = sbr.rel (%p337) target = $region28
        $region27: #{tpu_custom_call.1} parent=11 // pred_region
          _
        $region28: #{tpu_custom_call.1} parent=11 // pred_fallthru
          _
        // Predicated region
        $region29: #{tpu_custom_call.1} parent=11 // pred_check
          %p340 = pneg %p182
        $region30: #{tpu_custom_call.1} parent=11 // pred_check_branch
          %342 = sbr.rel (%p340) target = $region32
        $region31: #{tpu_custom_call.1} parent=11 // pred_region
          %344 = vsyncadd [#allocation6], 0
          %s345 = sshll.u32 %s6, 4
          %s346 = int_to_ptr.hbm [resolvable:$true] %s345
          %s347 = sshll.u32 [#allocation5], 4
          %s348 = int_to_ptr.vmem [resolvable:$true] %s347
          %353 = dma.hbm_to_vmem [thread:$0]  %s346, 2048, %s348, [#allocation6], 64, 64, 4
        $region32: #{tpu_custom_call.1} parent=11 // pred_fallthru
          _
        // Predicated region
        $region33: #{tpu_custom_call.1} parent=11 // pred_check
          %p354 = pneg %p203
        $region34: #{tpu_custom_call.1} parent=11 // pred_check_branch
          %356 = sbr.rel (%p354) target = $region36
        $region35: #{tpu_custom_call.1} parent=11 // pred_region
          _
        $region36: #{tpu_custom_call.1} parent=11 // pred_fallthru
          _
        // Predicated region
        $region37: #{tpu_custom_call.1} parent=11 // pred_check
          %p357 = pneg %p224
        $region38: #{tpu_custom_call.1} parent=11 // pred_check_branch
          %359 = sbr.rel (%p357) target = $region40
        $region39: #{tpu_custom_call.1} parent=11 // pred_region
          _
        $region40: #{tpu_custom_call.1} parent=11 // pred_fallthru
          _
        // Predicated region
        $region41: #{tpu_custom_call.1} parent=11 // pred_check
          %p360 = pneg %p245
        $region42: #{tpu_custom_call.1} parent=11 // pred_check_branch
          %362 = sbr.rel (%p360) target = $region44
        $region43: #{tpu_custom_call.1} parent=11 // pred_region
          _
        $region44: #{tpu_custom_call.1} parent=11 // pred_fallthru
          _
        // Predicated region
        $region45: #{tpu_custom_call.1} parent=11 // pred_check
          %p363 = pneg %p266
        $region46: #{tpu_custom_call.1} parent=11 // pred_check_branch
          %365 = sbr.rel (%p363) target = $region48
        $region47: #{tpu_custom_call.1} parent=11 // pred_region
          _
        $region48: #{tpu_custom_call.1} parent=11 // pred_fallthru
          _
        // Predicated region
        $region49: #{tpu_custom_call.1} parent=11 // pred_check
          %p366 = pneg %p287
        $region50: #{tpu_custom_call.1} parent=11 // pred_check_branch
          %368 = sbr.rel (%p366) target = $region52
        $region51: #{tpu_custom_call.1} parent=11 // pred_region
          _
        $region52: #{tpu_custom_call.1} parent=11 // pred_fallthru
          _
      $region12: #{tpu_custom_call.1} parent=5 // pred_fallthru
        _
      %p369 = scmp.lt.s32.totalorder %s25, 2
      // Predicated region
      $region53: #{tpu_custom_call.1} parent=5 // pred_check
        %p370 = pneg %p369
      $region54: #{tpu_custom_call.1} parent=5 // pred_check_branch
        %372 = sbr.rel (%p370) target = $region56
      $region55: #{tpu_custom_call.1} parent=5 // pred_region
        // Predicated region
        $region57: #{tpu_custom_call.1} parent=55 // pred_check
          %p373 = pneg %p45
        $region58: #{tpu_custom_call.1} parent=55 // pred_check_branch
          %375 = sbr.rel (%p373) target = $region60
        $region59: #{tpu_custom_call.1} parent=55 // pred_region
          %s376 = sand.u32 %s35, 1
          %s377 = scalar_lea.sflag [#allocation3], %s376
          %s378 = sand.u32 %s35, 1
          %s379 = smul.addr %s378, 256
          %s380 = scalar_lea.vmem [#allocation2], %s379
          %382 = vsyncadd %s377, 0
          %s383 = smul.addr %s25, 32
          %s384 = smul.addr %s383, 8
          %s385 = scalar_lea.hbm %s0, %s384
          %s386 = sshll.u32 %s385, 4
          %s387 = int_to_ptr.hbm [resolvable:$true] %s386
          %s388 = sshll.u32 %s380, 4
          %s389 = int_to_ptr.vmem [resolvable:$true] %s388
          %394 = dma.hbm_to_vmem [thread:$0]  %s387, 4096, %s389, %s377, 256, 256, 16
        $region60: #{tpu_custom_call.1} parent=55 // pred_fallthru
          _
        // Predicated region
        $region61: #{tpu_custom_call.1} parent=55 // pred_check
          %p395 = pneg %p71
        $region62: #{tpu_custom_call.1} parent=55 // pred_check_branch
          %397 = sbr.rel (%p395) target = $region64
        $region63: #{tpu_custom_call.1} parent=55 // pred_region
          %p398 = scmp.lt.s32.totalorder %s25, 1
          %s399 = scalar_select %p398, %s25, 1
          %s400 = smul.addr %s399, 16
          %s401 = smul.addr %s400, 8
          %s402 = scalar_lea.vmem %s1, %s401
        $region64: #{tpu_custom_call.1} parent=55 // pred_fallthru
          _
      $region56: #{tpu_custom_call.1} parent=5 // pred_fallthru
        _
      %p403 = scmp.le.s32.totalorder 1, %s25
      %p404 = scmp.lt.s32.totalorder %s25, 3
      %p405 = pnand %p403, %p404
      %p406 = pneg %p405
      // Predicated region
      $region65: #{tpu_custom_call.1} parent=5 // pred_check
        _
      $region66: #{tpu_custom_call.1} parent=5 // pred_check_branch
        %408 = sbr.rel (%p405) target = $region68
      $region67: #{tpu_custom_call.1} parent=5 // pred_region
        %s409 = ssub.s32 %s25, 1
        %s410 = sand.u32 %s38, 1
        %s411 = scalar_lea.sflag [#allocation3], %s410
        %s412 = sand.u32 %s38, 1
        %s413 = smul.addr %s412, 256
        %s414 = scalar_lea.vmem [#allocation2], %s413
        // Predicated region
        $region69: #{tpu_custom_call.1} parent=67 // pred_check
          %p415 = pneg %p51
        $region70: #{tpu_custom_call.1} parent=67 // pred_check_branch
          %417 = sbr.rel (%p415) target = $region72
        $region71: #{tpu_custom_call.1} parent=67 // pred_region
          %419 = dma.done %s411, 4096
        $region72: #{tpu_custom_call.1} parent=67 // pred_fallthru
          _
        // Predicated region
        $region73: #{tpu_custom_call.1} parent=67 // pred_check
          %p420 = pneg %p182
        $region74: #{tpu_custom_call.1} parent=67 // pred_check_branch
          %422 = sbr.rel (%p420) target = $region76
        $region75: #{tpu_custom_call.1} parent=67 // pred_region
          %424 = dma.done [#allocation6], 2048
        $region76: #{tpu_custom_call.1} parent=67 // pred_fallthru
          _
        %s425 = sand.u32 %s38, 1
        %s426 = scalar_lea.sflag [#allocation3], %s425
        %s427 = sand.u32 %s38, 1
        %s428 = smul.addr %s427, 256
        %s429 = scalar_lea.vmem [#allocation2], %s428
        %p430 = pneg %p51
        %p431 = pneg %p48
        %p432 = scmp.lt.s32.totalorder %s30, 1
        %s433 = scalar_select %p432, %s30, 1
        %s434 = smul.addr %s433, 16
        %s435 = smul.addr %s434, 8
        %s436 = scalar_lea.vmem %s1, %s435
        %p437 = pneg %p77
        %p438 = pneg %p74
        %p439 = pneg %p98
        %p440 = pneg %p95
        %p441 = pneg %p119
        %p442 = pneg %p116
        %p443 = pneg %p140
        %p444 = pneg %p137
        %p445 = pneg %p161
        %p446 = pneg %p158
        %p447 = pneg %p182
        %p448 = pneg %p179
        %p449 = pneg %p203
        %p450 = pneg %p200
        %p451 = pneg %p224
        %p452 = pneg %p221
        %p453 = pneg %p245
        %p454 = pneg %p242
        %p455 = pneg %p266
        %p456 = pneg %p263
        %p457 = pneg %p287
        %p458 = pneg %p284
        %p459 = pneg %p313
        %p460 = pneg %p310
        %s461 = sand.u32 %s300, 1
        %s462 = scalar_lea.sflag [#allocation4], %s461
        %s463 = sand.u32 %s300, 1
        %s464 = smul.addr %s463, 2
        %s465 = scalar_lea.vmem [#allocation7], %s464
        %p466 = scmp.lt.s32.totalorder %s30, 1
        %s467 = scalar_select %p466, %s30, 1
        %s468 = smul.addr %s467, 16
        %s469 = smul.addr %s468, 8
        %s470 = scalar_lea.vmem %s1, %s469
        %v471 = vld [vmem:[%s414] sm:$0xff]
        %v472 = vld [vmem:[%s414 + $0x8] sm:$0xff]
        %v473 = vld [vmem:[%s414 + $0x10] sm:$0xff]
        %v474 = vld [vmem:[%s414 + $0x18] sm:$0xff]
        %v475 = vld [vmem:[%s414 + $0x20] sm:$0xff]
        %v476 = vld [vmem:[%s414 + $0x28] sm:$0xff]
        %v477 = vld [vmem:[%s414 + $0x30] sm:$0xff]
        %v478 = vld [vmem:[%s414 + $0x38] sm:$0xff]
        %v479 = vld [vmem:[%s414 + $0x40] sm:$0xff]
        %v480 = vld [vmem:[%s414 + $0x48] sm:$0xff]
        %v481 = vld [vmem:[%s414 + $0x50] sm:$0xff]
        %v482 = vld [vmem:[%s414 + $0x58] sm:$0xff]
        %v483 = vld [vmem:[%s414 + $0x60] sm:$0xff]
        %v484 = vld [vmem:[%s414 + $0x68] sm:$0xff]
        %v485 = vld [vmem:[%s414 + $0x70] sm:$0xff]
        %v486 = vld [vmem:[%s414 + $0x78] sm:$0xff]
        %v487 = vld [vmem:[%s414 + $0x80] sm:$0xff]
        %v488 = vld [vmem:[%s414 + $0x88] sm:$0xff]
        %v489 = vld [vmem:[%s414 + $0x90] sm:$0xff]
        %v490 = vld [vmem:[%s414 + $0x98] sm:$0xff]
        %v491 = vld [vmem:[%s414 + $0xa0] sm:$0xff]
        %v492 = vld [vmem:[%s414 + $0xa8] sm:$0xff]
        %v493 = vld [vmem:[%s414 + $0xb0] sm:$0xff]
        %v494 = vld [vmem:[%s414 + $0xb8] sm:$0xff]
        %v495 = vld [vmem:[%s414 + $0xc0] sm:$0xff]
        %v496 = vld [vmem:[%s414 + $0xc8] sm:$0xff]
        %v497 = vld [vmem:[%s414 + $0xd0] sm:$0xff]
        %v498 = vld [vmem:[%s414 + $0xd8] sm:$0xff]
        %v499 = vld [vmem:[%s414 + $0xe0] sm:$0xff]
        %v500 = vld [vmem:[%s414 + $0xe8] sm:$0xff]
        %v501 = vld [vmem:[%s414 + $0xf0] sm:$0xff]
        %v502 = vld [vmem:[%s414 + $0xf8] sm:$0xff]
        %v503 = vld [vmem:[%s470] sm:$0xff]
        %v504 = vld [vmem:[%s470 + $0x8] sm:$0xff]
        %v505 = vld [vmem:[%s470 + $0x10] sm:$0xff]
        %v506 = vld [vmem:[%s470 + $0x18] sm:$0xff]
        %v507 = vld [vmem:[%s470 + $0x20] sm:$0xff]
        %v508 = vld [vmem:[%s470 + $0x28] sm:$0xff]
        %v509 = vld [vmem:[%s470 + $0x30] sm:$0xff]
        %v510 = vld [vmem:[%s470 + $0x38] sm:$0xff]
        %v511 = vld [vmem:[%s470 + $0x40] sm:$0xff]
        %v512 = vld [vmem:[%s470 + $0x48] sm:$0xff]
        %v513 = vld [vmem:[%s470 + $0x50] sm:$0xff]
        %v514 = vld [vmem:[%s470 + $0x58] sm:$0xff]
        %v515 = vld [vmem:[%s470 + $0x60] sm:$0xff]
        %v516 = vld [vmem:[%s470 + $0x68] sm:$0xff]
        %v517 = vld [vmem:[%s470 + $0x70] sm:$0xff]
        %v518 = vld [vmem:[%s470 + $0x78] sm:$0xff]
        %v519 = vadd.f32 %v471, %v472
        %520 = vadd.xlane.f32.xlu0 %v519
        %v521 = vpop.xlane.xlu0 %520
        %v522 = vadd.f32 %v473, %v474
        %523 = vadd.xlane.f32.xlu0 %v522
        %v524 = vpop.xlane.xlu0 %523
        %v525 = vadd.f32 %v475, %v476
        %526 = vadd.xlane.f32.xlu0 %v525
        %v527 = vpop.xlane.xlu0 %526
        %v528 = vadd.f32 %v477, %v478
        %529 = vadd.xlane.f32.xlu0 %v528
        %v530 = vpop.xlane.xlu0 %529
        %v531 = vadd.f32 %v479, %v480
        %532 = vadd.xlane.f32.xlu0 %v531
        %v533 = vpop.xlane.xlu0 %532
        %v534 = vadd.f32 %v481, %v482
        %535 = vadd.xlane.f32.xlu0 %v534
        %v536 = vpop.xlane.xlu0 %535
        %v537 = vadd.f32 %v483, %v484
        %538 = vadd.xlane.f32.xlu0 %v537
        %v539 = vpop.xlane.xlu0 %538
        %v540 = vadd.f32 %v485, %v486
        %541 = vadd.xlane.f32.xlu0 %v540
        %v542 = vpop.xlane.xlu0 %541
        %v543 = vadd.f32 %v487, %v488
        %544 = vadd.xlane.f32.xlu0 %v543
        %v545 = vpop.xlane.xlu0 %544
        %v546 = vadd.f32 %v489, %v490
        %547 = vadd.xlane.f32.xlu0 %v546
        %v548 = vpop.xlane.xlu0 %547
        %v549 = vadd.f32 %v491, %v492
        %550 = vadd.xlane.f32.xlu0 %v549
        %v551 = vpop.xlane.xlu0 %550
        %v552 = vadd.f32 %v493, %v494
        %553 = vadd.xlane.f32.xlu0 %v552
        %v554 = vpop.xlane.xlu0 %553
        %v555 = vadd.f32 %v495, %v496
        %556 = vadd.xlane.f32.xlu0 %v555
        %v557 = vpop.xlane.xlu0 %556
        %v558 = vadd.f32 %v497, %v498
        %559 = vadd.xlane.f32.xlu0 %v558
        %v560 = vpop.xlane.xlu0 %559
        %v561 = vadd.f32 %v499, %v500
        %562 = vadd.xlane.f32.xlu0 %v561
        %v563 = vpop.xlane.xlu0 %562
        %v564 = vadd.f32 %v501, %v502
        %565 = vadd.xlane.f32.xlu0 %v564
        %v566 = vpop.xlane.xlu0 %565
        %v567 = vmul.f32 %v521, 0.00390625
        %v568 = vmul.f32 %v524, 0.00390625
        %v569 = vmul.f32 %v527, 0.00390625
        %v570 = vmul.f32 %v530, 0.00390625
        %v571 = vmul.f32 %v533, 0.00390625
        %v572 = vmul.f32 %v536, 0.00390625
        %v573 = vmul.f32 %v539, 0.00390625
        %v574 = vmul.f32 %v542, 0.00390625
        %v575 = vmul.f32 %v545, 0.00390625
        %v576 = vmul.f32 %v548, 0.00390625
        %v577 = vmul.f32 %v551, 0.00390625
        %v578 = vmul.f32 %v554, 0.00390625
        %v579 = vmul.f32 %v557, 0.00390625
        %v580 = vmul.f32 %v560, 0.00390625
        %v581 = vmul.f32 %v563, 0.00390625
        %v582 = vmul.f32 %v566, 0.00390625
        %v583 = vmul.f32 %v471, %v471
        %v584 = vmul.f32 %v472, %v472
        %v585 = vmul.f32 %v473, %v473
        %v586 = vmul.f32 %v474, %v474
        %v587 = vmul.f32 %v475, %v475
        %v588 = vmul.f32 %v476, %v476
        %v589 = vmul.f32 %v477, %v477
        %v590 = vmul.f32 %v478, %v478
        %v591 = vmul.f32 %v479, %v479
        %v592 = vmul.f32 %v480, %v480
        %v593 = vmul.f32 %v481, %v481
        %v594 = vmul.f32 %v482, %v482
        %v595 = vmul.f32 %v483, %v483
        %v596 = vmul.f32 %v484, %v484
        %v597 = vmul.f32 %v485, %v485
        %v598 = vmul.f32 %v486, %v486
        %v599 = vmul.f32 %v487, %v487
        %v600 = vmul.f32 %v488, %v488
        %v601 = vmul.f32 %v489, %v489
        %v602 = vmul.f32 %v490, %v490
        %v603 = vmul.f32 %v491, %v491
        %v604 = vmul.f32 %v492, %v492
        %v605 = vmul.f32 %v493, %v493
        %v606 = vmul.f32 %v494, %v494
        %v607 = vmul.f32 %v495, %v495
        %v608 = vmul.f32 %v496, %v496
        %v609 = vmul.f32 %v497, %v497
        %v610 = vmul.f32 %v498, %v498
        %v611 = vmul.f32 %v499, %v499
        %v612 = vmul.f32 %v500, %v500
        %v613 = vmul.f32 %v501, %v501
        %v614 = vmul.f32 %v502, %v502
        %v615 = vadd.f32 %v583, %v584
        %616 = vadd.xlane.f32.xlu0 %v615
        %v617 = vpop.xlane.xlu0 %616
        %v618 = vadd.f32 %v585, %v586
        %619 = vadd.xlane.f32.xlu0 %v618
        %v620 = vpop.xlane.xlu0 %619
        %v621 = vadd.f32 %v587, %v588
        %622 = vadd.xlane.f32.xlu0 %v621
        %v623 = vpop.xlane.xlu0 %622
        %v624 = vadd.f32 %v589, %v590
        %625 = vadd.xlane.f32.xlu0 %v624
        %v626 = vpop.xlane.xlu0 %625
        %v627 = vadd.f32 %v591, %v592
        %628 = vadd.xlane.f32.xlu0 %v627
        %v629 = vpop.xlane.xlu0 %628
        %v630 = vadd.f32 %v593, %v594
        %631 = vadd.xlane.f32.xlu0 %v630
        %v632 = vpop.xlane.xlu0 %631
        %v633 = vadd.f32 %v595, %v596
        %634 = vadd.xlane.f32.xlu0 %v633
        %v635 = vpop.xlane.xlu0 %634
        %v636 = vadd.f32 %v597, %v598
        %637 = vadd.xlane.f32.xlu0 %v636
        %v638 = vpop.xlane.xlu0 %637
        %v639 = vadd.f32 %v599, %v600
        %640 = vadd.xlane.f32.xlu0 %v639
        %v641 = vpop.xlane.xlu0 %640
        %v642 = vadd.f32 %v601, %v602
        %643 = vadd.xlane.f32.xlu0 %v642
        %v644 = vpop.xlane.xlu0 %643
        %v645 = vadd.f32 %v603, %v604
        %646 = vadd.xlane.f32.xlu0 %v645
        %v647 = vpop.xlane.xlu0 %646
        %v648 = vadd.f32 %v605, %v606
        %649 = vadd.xlane.f32.xlu0 %v648
        %v650 = vpop.xlane.xlu0 %649
        %v651 = vadd.f32 %v607, %v608
        %652 = vadd.xlane.f32.xlu0 %v651
        %v653 = vpop.xlane.xlu0 %652
        %v654 = vadd.f32 %v609, %v610
        %655 = vadd.xlane.f32.xlu0 %v654
        %v656 = vpop.xlane.xlu0 %655
        %v657 = vadd.f32 %v611, %v612
        %658 = vadd.xlane.f32.xlu0 %v657
        %v659 = vpop.xlane.xlu0 %658
        %v660 = vadd.f32 %v613, %v614
        %661 = vadd.xlane.f32.xlu0 %v660
        %v662 = vpop.xlane.xlu0 %661
        %v663 = vmul.f32 %v617, 0.00390625
        %v664 = vmul.f32 %v620, 0.00390625
        %v665 = vmul.f32 %v623, 0.00390625
        %v666 = vmul.f32 %v626, 0.00390625
        %v667 = vmul.f32 %v629, 0.00390625
        %v668 = vmul.f32 %v632, 0.00390625
        %v669 = vmul.f32 %v635, 0.00390625
        %v670 = vmul.f32 %v638, 0.00390625
        %v671 = vmul.f32 %v641, 0.00390625
        %v672 = vmul.f32 %v644, 0.00390625
        %v673 = vmul.f32 %v647, 0.00390625
        %v674 = vmul.f32 %v650, 0.00390625
        %v675 = vmul.f32 %v653, 0.00390625
        %v676 = vmul.f32 %v656, 0.00390625
        %v677 = vmul.f32 %v659, 0.00390625
        %v678 = vmul.f32 %v662, 0.00390625
        %v679 = vmul.f32 %v567, %v567
        %v680 = vmul.f32 %v568, %v568
        %v681 = vmul.f32 %v569, %v569
        %v682 = vmul.f32 %v570, %v570
        %v683 = vmul.f32 %v571, %v571
        %v684 = vmul.f32 %v572, %v572
        %v685 = vmul.f32 %v573, %v573
        %v686 = vmul.f32 %v574, %v574
        %v687 = vmul.f32 %v575, %v575
        %v688 = vmul.f32 %v576, %v576
        %v689 = vmul.f32 %v577, %v577
        %v690 = vmul.f32 %v578, %v578
        %v691 = vmul.f32 %v579, %v579
        %v692 = vmul.f32 %v580, %v580
        %v693 = vmul.f32 %v581, %v581
        %v694 = vmul.f32 %v582, %v582
        %v695 = vsub.f32 %v663, %v679
        %v696 = vsub.f32 %v664, %v680
        %v697 = vsub.f32 %v665, %v681
        %v698 = vsub.f32 %v666, %v682
        %v699 = vsub.f32 %v667, %v683
        %v700 = vsub.f32 %v668, %v684
        %v701 = vsub.f32 %v669, %v685
        %v702 = vsub.f32 %v670, %v686
        %v703 = vsub.f32 %v671, %v687
        %v704 = vsub.f32 %v672, %v688
        %v705 = vsub.f32 %v673, %v689
        %v706 = vsub.f32 %v674, %v690
        %v707 = vsub.f32 %v675, %v691
        %v708 = vsub.f32 %v676, %v692
        %v709 = vsub.f32 %v677, %v693
        %v710 = vsub.f32 %v678, %v694
        %v711 = vmax.f32 %v695, 0.0
        %v712 = vmax.f32 %v696, 0.0
        %v713 = vmax.f32 %v697, 0.0
        %v714 = vmax.f32 %v698, 0.0
        %v715 = vmax.f32 %v699, 0.0
        %v716 = vmax.f32 %v700, 0.0
        %v717 = vmax.f32 %v701, 0.0
        %v718 = vmax.f32 %v702, 0.0
        %v719 = vmax.f32 %v703, 0.0
        %v720 = vmax.f32 %v704, 0.0
        %v721 = vmax.f32 %v705, 0.0
        %v722 = vmax.f32 %v706, 0.0
        %v723 = vmax.f32 %v707, 0.0
        %v724 = vmax.f32 %v708, 0.0
        %v725 = vmax.f32 %v709, 0.0
        %v726 = vmax.f32 %v710, 0.0
        %v727 = vsub.f32 %v471, %v567
        %v728 = vsub.f32 %v472, %v567
        %v729 = vsub.f32 %v473, %v568
        %v730 = vsub.f32 %v474, %v568
        %v731 = vsub.f32 %v475, %v569
        %v732 = vsub.f32 %v476, %v569
        %v733 = vsub.f32 %v477, %v570
        %v734 = vsub.f32 %v478, %v570
        %v735 = vsub.f32 %v479, %v571
        %v736 = vsub.f32 %v480, %v571
        %v737 = vsub.f32 %v481, %v572
        %v738 = vsub.f32 %v482, %v572
        %v739 = vsub.f32 %v483, %v573
        %v740 = vsub.f32 %v484, %v573
        %v741 = vsub.f32 %v485, %v574
        %v742 = vsub.f32 %v486, %v574
        %v743 = vsub.f32 %v487, %v575
        %v744 = vsub.f32 %v488, %v575
        %v745 = vsub.f32 %v489, %v576
        %v746 = vsub.f32 %v490, %v576
        %v747 = vsub.f32 %v491, %v577
        %v748 = vsub.f32 %v492, %v577
        %v749 = vsub.f32 %v493, %v578
        %v750 = vsub.f32 %v494, %v578
        %v751 = vsub.f32 %v495, %v579
        %v752 = vsub.f32 %v496, %v579
        %v753 = vsub.f32 %v497, %v580
        %v754 = vsub.f32 %v498, %v580
        %v755 = vsub.f32 %v499, %v581
        %v756 = vsub.f32 %v500, %v581
        %v757 = vsub.f32 %v501, %v582
        %v758 = vsub.f32 %v502, %v582
        %v759 = vadd.f32 %v711, 1e-05
        %v760 = vadd.f32 %v712, 1e-05
        %v761 = vadd.f32 %v713, 1e-05
        %v762 = vadd.f32 %v714, 1e-05
        %v763 = vadd.f32 %v715, 1e-05
        %v764 = vadd.f32 %v716, 1e-05
        %v765 = vadd.f32 %v717, 1e-05
        %v766 = vadd.f32 %v718, 1e-05
        %v767 = vadd.f32 %v719, 1e-05
        %v768 = vadd.f32 %v720, 1e-05
        %v769 = vadd.f32 %v721, 1e-05
        %v770 = vadd.f32 %v722, 1e-05
        %v771 = vadd.f32 %v723, 1e-05
        %v772 = vadd.f32 %v724, 1e-05
        %v773 = vadd.f32 %v725, 1e-05
        %v774 = vadd.f32 %v726, 1e-05
        %v775 = vrsqrt.pop %v759
        %v776 = vmul.f32 %v775, %v759
        %v777 = vmul.f32 %v776, %v775
        %v778 = vmul.f32 0.5, %v777
        %v779 = vsub.f32 1.5, %v778
        %v780 = vmul.f32 %v775, %v779
        %vm781 = vweird.f32 %v759
        %vm782 = vweird.f32 %v775
        %vm783 = vmor %vm781, %vm782
        %v784 = vsel %vm783, %v775, %v780
        %v785 = vrsqrt.pop %v760
        %v786 = vmul.f32 %v785, %v760
        %v787 = vmul.f32 %v786, %v785
        %v788 = vmul.f32 0.5, %v787
        %v789 = vsub.f32 1.5, %v788
        %v790 = vmul.f32 %v785, %v789
        %vm791 = vweird.f32 %v760
        %vm792 = vweird.f32 %v785
        %vm793 = vmor %vm791, %vm792
        %v794 = vsel %vm793, %v785, %v790
        %v795 = vrsqrt.pop %v761
        %v796 = vmul.f32 %v795, %v761
        %v797 = vmul.f32 %v796, %v795
        %v798 = vmul.f32 0.5, %v797
        %v799 = vsub.f32 1.5, %v798
        %v800 = vmul.f32 %v795, %v799
        %vm801 = vweird.f32 %v761
        %vm802 = vweird.f32 %v795
        %vm803 = vmor %vm801, %vm802
        %v804 = vsel %vm803, %v795, %v800
        %v805 = vrsqrt.pop %v762
        %v806 = vmul.f32 %v805, %v762
        %v807 = vmul.f32 %v806, %v805
        %v808 = vmul.f32 0.5, %v807
        %v809 = vsub.f32 1.5, %v808
        %v810 = vmul.f32 %v805, %v809
        %vm811 = vweird.f32 %v762
        %vm812 = vweird.f32 %v805
        %vm813 = vmor %vm811, %vm812
        %v814 = vsel %vm813, %v805, %v810
        %v815 = vrsqrt.pop %v763
        %v816 = vmul.f32 %v815, %v763
        %v817 = vmul.f32 %v816, %v815
        %v818 = vmul.f32 0.5, %v817
        %v819 = vsub.f32 1.5, %v818
        %v820 = vmul.f32 %v815, %v819
        %vm821 = vweird.f32 %v763
        %vm822 = vweird.f32 %v815
        %vm823 = vmor %vm821, %vm822
        %v824 = vsel %vm823, %v815, %v820
        %v825 = vrsqrt.pop %v764
        %v826 = vmul.f32 %v825, %v764
        %v827 = vmul.f32 %v826, %v825
        %v828 = vmul.f32 0.5, %v827
        %v829 = vsub.f32 1.5, %v828
        %v830 = vmul.f32 %v825, %v829
        %vm831 = vweird.f32 %v764
        %vm832 = vweird.f32 %v825
        %vm833 = vmor %vm831, %vm832
        %v834 = vsel %vm833, %v825, %v830
        %v835 = vrsqrt.pop %v765
        %v836 = vmul.f32 %v835, %v765
        %v837 = vmul.f32 %v836, %v835
        %v838 = vmul.f32 0.5, %v837
        %v839 = vsub.f32 1.5, %v838
        %v840 = vmul.f32 %v835, %v839
        %vm841 = vweird.f32 %v765
        %vm842 = vweird.f32 %v835
        %vm843 = vmor %vm841, %vm842
        %v844 = vsel %vm843, %v835, %v840
        %v845 = vrsqrt.pop %v766
        %v846 = vmul.f32 %v845, %v766
        %v847 = vmul.f32 %v846, %v845
        %v848 = vmul.f32 0.5, %v847
        %v849 = vsub.f32 1.5, %v848
        %v850 = vmul.f32 %v845, %v849
        %vm851 = vweird.f32 %v766
        %vm852 = vweird.f32 %v845
        %vm853 = vmor %vm851, %vm852
        %v854 = vsel %vm853, %v845, %v850
        %v855 = vrsqrt.pop %v767
        %v856 = vmul.f32 %v855, %v767
        %v857 = vmul.f32 %v856, %v855
        %v858 = vmul.f32 0.5, %v857
        %v859 = vsub.f32 1.5, %v858
        %v860 = vmul.f32 %v855, %v859
        %vm861 = vweird.f32 %v767
        %vm862 = vweird.f32 %v855
        %vm863 = vmor %vm861, %vm862
        %v864 = vsel %vm863, %v855, %v860
        %v865 = vrsqrt.pop %v768
        %v866 = vmul.f32 %v865, %v768
        %v867 = vmul.f32 %v866, %v865
        %v868 = vmul.f32 0.5, %v867
        %v869 = vsub.f32 1.5, %v868
        %v870 = vmul.f32 %v865, %v869
        %vm871 = vweird.f32 %v768
        %vm872 = vweird.f32 %v865
        %vm873 = vmor %vm871, %vm872
        %v874 = vsel %vm873, %v865, %v870
        %v875 = vrsqrt.pop %v769
        %v876 = vmul.f32 %v875, %v769
        %v877 = vmul.f32 %v876, %v875
        %v878 = vmul.f32 0.5, %v877
        %v879 = vsub.f32 1.5, %v878
        %v880 = vmul.f32 %v875, %v879
        %vm881 = vweird.f32 %v769
        %vm882 = vweird.f32 %v875
        %vm883 = vmor %vm881, %vm882
        %v884 = vsel %vm883, %v875, %v880
        %v885 = vrsqrt.pop %v770
        %v886 = vmul.f32 %v885, %v770
        %v887 = vmul.f32 %v886, %v885
        %v888 = vmul.f32 0.5, %v887
        %v889 = vsub.f32 1.5, %v888
        %v890 = vmul.f32 %v885, %v889
        %vm891 = vweird.f32 %v770
        %vm892 = vweird.f32 %v885
        %vm893 = vmor %vm891, %vm892
        %v894 = vsel %vm893, %v885, %v890
        %v895 = vrsqrt.pop %v771
        %v896 = vmul.f32 %v895, %v771
        %v897 = vmul.f32 %v896, %v895
        %v898 = vmul.f32 0.5, %v897
        %v899 = vsub.f32 1.5, %v898
        %v900 = vmul.f32 %v895, %v899
        %vm901 = vweird.f32 %v771
        %vm902 = vweird.f32 %v895
        %vm903 = vmor %vm901, %vm902
        %v904 = vsel %vm903, %v895, %v900
        %v905 = vrsqrt.pop %v772
        %v906 = vmul.f32 %v905, %v772
        %v907 = vmul.f32 %v906, %v905
        %v908 = vmul.f32 0.5, %v907
        %v909 = vsub.f32 1.5, %v908
        %v910 = vmul.f32 %v905, %v909
        %vm911 = vweird.f32 %v772
        %vm912 = vweird.f32 %v905
        %vm913 = vmor %vm911, %vm912
        %v914 = vsel %vm913, %v905, %v910
        %v915 = vrsqrt.pop %v773
        %v916 = vmul.f32 %v915, %v773
        %v917 = vmul.f32 %v916, %v915
        %v918 = vmul.f32 0.5, %v917
        %v919 = vsub.f32 1.5, %v918
        %v920 = vmul.f32 %v915, %v919
        %vm921 = vweird.f32 %v773
        %vm922 = vweird.f32 %v915
        %vm923 = vmor %vm921, %vm922
        %v924 = vsel %vm923, %v915, %v920
        %v925 = vrsqrt.pop %v774
        %v926 = vmul.f32 %v925, %v774
        %v927 = vmul.f32 %v926, %v925
        %v928 = vmul.f32 0.5, %v927
        %v929 = vsub.f32 1.5, %v928
        %v930 = vmul.f32 %v925, %v929
        %vm931 = vweird.f32 %v774
        %vm932 = vweird.f32 %v925
        %vm933 = vmor %vm931, %vm932
        %v934 = vsel %vm933, %v925, %v930
        %v935 = vmul.f32 %v727, %v784
        %v936 = vmul.f32 %v728, %v784
        %v937 = vmul.f32 %v729, %v794
        %v938 = vmul.f32 %v730, %v794
        %v939 = vmul.f32 %v731, %v804
        %v940 = vmul.f32 %v732, %v804
        %v941 = vmul.f32 %v733, %v814
        %v942 = vmul.f32 %v734, %v814
        %v943 = vmul.f32 %v735, %v824
        %v944 = vmul.f32 %v736, %v824
        %v945 = vmul.f32 %v737, %v834
        %v946 = vmul.f32 %v738, %v834
        %v947 = vmul.f32 %v739, %v844
        %v948 = vmul.f32 %v740, %v844
        %v949 = vmul.f32 %v741, %v854
        %v950 = vmul.f32 %v742, %v854
        %v951 = vmul.f32 %v743, %v864
        %v952 = vmul.f32 %v744, %v864
        %v953 = vmul.f32 %v745, %v874
        %v954 = vmul.f32 %v746, %v874
        %v955 = vmul.f32 %v747, %v884
        %v956 = vmul.f32 %v748, %v884
        %v957 = vmul.f32 %v749, %v894
        %v958 = vmul.f32 %v750, %v894
        %v959 = vmul.f32 %v751, %v904
        %v960 = vmul.f32 %v752, %v904
        %v961 = vmul.f32 %v753, %v914
        %v962 = vmul.f32 %v754, %v914
        %v963 = vmul.f32 %v755, %v924
        %v964 = vmul.f32 %v756, %v924
        %v965 = vmul.f32 %v757, %v934
        %v966 = vmul.f32 %v758, %v934
        %v967 = vld [vmem:[%s2] sm:$0x3]
        %v969 = vperm.slane %v967, 0
        %v970 = vperm.slane %v967, 1
        %v973 = vmul.f32 %v935, %v969
        %v974 = vmul.f32 %v936, %v970
        %v975 = vmul.f32 %v937, %v969
        %v976 = vmul.f32 %v938, %v970
        %v977 = vmul.f32 %v939, %v969
        %v978 = vmul.f32 %v940, %v970
        %v979 = vmul.f32 %v941, %v969
        %v980 = vmul.f32 %v942, %v970
        %v981 = vmul.f32 %v943, %v969
        %v982 = vmul.f32 %v944, %v970
        %v983 = vmul.f32 %v945, %v969
        %v984 = vmul.f32 %v946, %v970
        %v985 = vmul.f32 %v947, %v969
        %v986 = vmul.f32 %v948, %v970
        %v987 = vmul.f32 %v949, %v969
        %v988 = vmul.f32 %v950, %v970
        %v989 = vmul.f32 %v951, %v969
        %v990 = vmul.f32 %v952, %v970
        %v991 = vmul.f32 %v953, %v969
        %v992 = vmul.f32 %v954, %v970
        %v993 = vmul.f32 %v955, %v969
        %v994 = vmul.f32 %v956, %v970
        %v995 = vmul.f32 %v957, %v969
        %v996 = vmul.f32 %v958, %v970
        %v997 = vmul.f32 %v959, %v969
        %v998 = vmul.f32 %v960, %v970
        %v999 = vmul.f32 %v961, %v969
        %v1000 = vmul.f32 %v962, %v970
        %v1001 = vmul.f32 %v963, %v969
        %v1002 = vmul.f32 %v964, %v970
        %v1003 = vmul.f32 %v965, %v969
        %v1004 = vmul.f32 %v966, %v970
        %v1005 = vld [vmem:[%s3] sm:$0x3]
        %v1007 = vperm.slane %v1005, 0
        %v1008 = vperm.slane %v1005, 1
        %v1011 = vadd.f32 %v973, %v1007
        %v1012 = vadd.f32 %v974, %v1008
        %v1013 = vadd.f32 %v975, %v1007
        %v1014 = vadd.f32 %v976, %v1008
        %v1015 = vadd.f32 %v977, %v1007
        %v1016 = vadd.f32 %v978, %v1008
        %v1017 = vadd.f32 %v979, %v1007
        %v1018 = vadd.f32 %v980, %v1008
        %v1019 = vadd.f32 %v981, %v1007
        %v1020 = vadd.f32 %v982, %v1008
        %v1021 = vadd.f32 %v983, %v1007
        %v1022 = vadd.f32 %v984, %v1008
        %v1023 = vadd.f32 %v985, %v1007
        %v1024 = vadd.f32 %v986, %v1008
        %v1025 = vadd.f32 %v987, %v1007
        %v1026 = vadd.f32 %v988, %v1008
        %v1027 = vadd.f32 %v989, %v1007
        %v1028 = vadd.f32 %v990, %v1008
        %v1029 = vadd.f32 %v991, %v1007
        %v1030 = vadd.f32 %v992, %v1008
        %v1031 = vadd.f32 %v993, %v1007
        %v1032 = vadd.f32 %v994, %v1008
        %v1033 = vadd.f32 %v995, %v1007
        %v1034 = vadd.f32 %v996, %v1008
        %v1035 = vadd.f32 %v997, %v1007
        %v1036 = vadd.f32 %v998, %v1008
        %v1037 = vadd.f32 %v999, %v1007
        %v1038 = vadd.f32 %v1000, %v1008
        %v1039 = vadd.f32 %v1001, %v1007
        %v1040 = vadd.f32 %v1002, %v1008
        %v1041 = vadd.f32 %v1003, %v1007
        %v1042 = vadd.f32 %v1004, %v1008
        %v1043 = vpack.c.bf16 %v1013, %v1011
        %v1044 = vpack.c.bf16 %v1014, %v1012
        %v1045 = vpack.c.bf16 %v1017, %v1015
        %v1046 = vpack.c.bf16 %v1018, %v1016
        %v1047 = vpack.c.bf16 %v1021, %v1019
        %v1048 = vpack.c.bf16 %v1022, %v1020
        %v1049 = vpack.c.bf16 %v1025, %v1023
        %v1050 = vpack.c.bf16 %v1026, %v1024
        %v1051 = vpack.c.bf16 %v1029, %v1027
        %v1052 = vpack.c.bf16 %v1030, %v1028
        %v1053 = vpack.c.bf16 %v1033, %v1031
        %v1054 = vpack.c.bf16 %v1034, %v1032
        %v1055 = vpack.c.bf16 %v1037, %v1035
        %v1056 = vpack.c.bf16 %v1038, %v1036
        %v1057 = vpack.c.bf16 %v1041, %v1039
        %v1058 = vpack.c.bf16 %v1042, %v1040
        %v1059 = vld [vmem:[%s4] sm:$0xff]
        %v1060 = vld [vmem:[%s4 + $0x8] sm:$0xff]
        %v1061 = vld [vmem:[%s4 + $0x10] sm:$0xff]
        %v1062 = vld [vmem:[%s4 + $0x18] sm:$0xff]
        %v1063 = vld [vmem:[%s4 + $0x20] sm:$0xff]
        %v1064 = vld [vmem:[%s4 + $0x28] sm:$0xff]
        %v1065 = vld [vmem:[%s4 + $0x30] sm:$0xff]
        %v1066 = vld [vmem:[%s4 + $0x38] sm:$0xff]
        %v1067 = vld [vmem:[%s4 + $0x40] sm:$0xff]
        %v1068 = vld [vmem:[%s4 + $0x48] sm:$0xff]
        %v1069 = vld [vmem:[%s4 + $0x50] sm:$0xff]
        %v1070 = vld [vmem:[%s4 + $0x58] sm:$0xff]
        %v1071 = vld [vmem:[%s4 + $0x60] sm:$0xff]
        %v1072 = vld [vmem:[%s4 + $0x68] sm:$0xff]
        %v1073 = vld [vmem:[%s4 + $0x70] sm:$0xff]
        %v1074 = vld [vmem:[%s4 + $0x78] sm:$0xff]
        %v1075 = vld [vmem:[%s4 + $0x80] sm:$0xff]
        %v1076 = vld [vmem:[%s4 + $0x88] sm:$0xff]
        %v1077 = vld [vmem:[%s4 + $0x90] sm:$0xff]
        %v1078 = vld [vmem:[%s4 + $0x98] sm:$0xff]
        %v1079 = vld [vmem:[%s4 + $0xa0] sm:$0xff]
        %v1080 = vld [vmem:[%s4 + $0xa8] sm:$0xff]
        %v1081 = vld [vmem:[%s4 + $0xb0] sm:$0xff]
        %v1082 = vld [vmem:[%s4 + $0xb8] sm:$0xff]
        %v1083 = vld [vmem:[%s4 + $0xc0] sm:$0xff]
        %v1084 = vld [vmem:[%s4 + $0xc8] sm:$0xff]
        %v1085 = vld [vmem:[%s4 + $0xd0] sm:$0xff]
        %v1086 = vld [vmem:[%s4 + $0xd8] sm:$0xff]
        %v1087 = vld [vmem:[%s4 + $0xe0] sm:$0xff]
        %v1088 = vld [vmem:[%s4 + $0xe8] sm:$0xff]
        %v1089 = vld [vmem:[%s4 + $0xf0] sm:$0xff]
        %v1090 = vld [vmem:[%s4 + $0xf8] sm:$0xff]
        %v1091 = vld [vmem:[%s5] sm:$0x3]
        %v1093 = vperm.slane %v1091, 0
        %v1094 = vperm.slane %v1091, 1
        %v1129 = vunpack.c.l.b16 %v1059
        %v1130 = vunpack.c.h.b16 %v1059
        %v1131 = vunpack.c.l.b16 %v1060
        %v1132 = vunpack.c.h.b16 %v1060
        %v1133 = vunpack.c.l.b16 %v1061
        %v1134 = vunpack.c.h.b16 %v1061
        %v1135 = vunpack.c.l.b16 %v1062
        %v1136 = vunpack.c.h.b16 %v1062
        %v1137 = vunpack.c.l.b16 %v1063
        %v1138 = vunpack.c.h.b16 %v1063
        %v1139 = vunpack.c.l.b16 %v1064
        %v1140 = vunpack.c.h.b16 %v1064
        %v1141 = vunpack.c.l.b16 %v1065
        %v1142 = vunpack.c.h.b16 %v1065
        %v1143 = vunpack.c.l.b16 %v1066
        %v1144 = vunpack.c.h.b16 %v1066
        %v1145 = vunpack.c.l.b16 %v1067
        %v1146 = vunpack.c.h.b16 %v1067
        %v1147 = vunpack.c.l.b16 %v1068
        %v1148 = vunpack.c.h.b16 %v1068
        %v1149 = vunpack.c.l.b16 %v1069
        %v1150 = vunpack.c.h.b16 %v1069
        %v1151 = vunpack.c.l.b16 %v1070
        %v1152 = vunpack.c.h.b16 %v1070
        %v1153 = vunpack.c.l.b16 %v1071
        %v1154 = vunpack.c.h.b16 %v1071
        %v1155 = vunpack.c.l.b16 %v1072
        %v1156 = vunpack.c.h.b16 %v1072
        %v1157 = vunpack.c.l.b16 %v1073
        %v1158 = vunpack.c.h.b16 %v1073
        %v1159 = vunpack.c.l.b16 %v1074
        %v1160 = vunpack.c.h.b16 %v1074
        %v1161 = vunpack.c.l.b16 %v1075
        %v1162 = vunpack.c.h.b16 %v1075
        %v1163 = vunpack.c.l.b16 %v1076
        %v1164 = vunpack.c.h.b16 %v1076
        %v1165 = vunpack.c.l.b16 %v1077
        %v1166 = vunpack.c.h.b16 %v1077
        %v1167 = vunpack.c.l.b16 %v1078
        %v1168 = vunpack.c.h.b16 %v1078
        %v1169 = vunpack.c.l.b16 %v1079
        %v1170 = vunpack.c.h.b16 %v1079
        %v1171 = vunpack.c.l.b16 %v1080
        %v1172 = vunpack.c.h.b16 %v1080
        %v1173 = vunpack.c.l.b16 %v1081
        %v1174 = vunpack.c.h.b16 %v1081
        %v1175 = vunpack.c.l.b16 %v1082
        %v1176 = vunpack.c.h.b16 %v1082
        %v1177 = vunpack.c.l.b16 %v1083
        %v1178 = vunpack.c.h.b16 %v1083
        %v1179 = vunpack.c.l.b16 %v1084
        %v1180 = vunpack.c.h.b16 %v1084
        %v1181 = vunpack.c.l.b16 %v1085
        %v1182 = vunpack.c.h.b16 %v1085
        %v1183 = vunpack.c.l.b16 %v1086
        %v1184 = vunpack.c.h.b16 %v1086
        %v1185 = vunpack.c.l.b16 %v1087
        %v1186 = vunpack.c.h.b16 %v1087
        %v1187 = vunpack.c.l.b16 %v1088
        %v1188 = vunpack.c.h.b16 %v1088
        %v1189 = vunpack.c.l.b16 %v1089
        %v1190 = vunpack.c.h.b16 %v1089
        %v1191 = vunpack.c.l.b16 %v1090
        %v1192 = vunpack.c.h.b16 %v1090
        %v1193 = vpack.c.b16 %v1131, %v1129
        %v1194 = vpack.c.b16 %v1132, %v1130
        %v1195 = vpack.c.b16 %v1135, %v1133
        %v1196 = vpack.c.b16 %v1136, %v1134
        %v1197 = vpack.c.b16 %v1139, %v1137
        %v1198 = vpack.c.b16 %v1140, %v1138
        %v1199 = vpack.c.b16 %v1143, %v1141
        %v1200 = vpack.c.b16 %v1144, %v1142
        %v1201 = vpack.c.b16 %v1147, %v1145
        %v1202 = vpack.c.b16 %v1148, %v1146
        %v1203 = vpack.c.b16 %v1151, %v1149
        %v1204 = vpack.c.b16 %v1152, %v1150
        %v1205 = vpack.c.b16 %v1155, %v1153
        %v1206 = vpack.c.b16 %v1156, %v1154
        %v1207 = vpack.c.b16 %v1159, %v1157
        %v1208 = vpack.c.b16 %v1160, %v1158
        %v1209 = vpack.c.b16 %v1163, %v1161
        %v1210 = vpack.c.b16 %v1164, %v1162
        %v1211 = vpack.c.b16 %v1167, %v1165
        %v1212 = vpack.c.b16 %v1168, %v1166
        %v1213 = vpack.c.b16 %v1171, %v1169
        %v1214 = vpack.c.b16 %v1172, %v1170
        %v1215 = vpack.c.b16 %v1175, %v1173
        %v1216 = vpack.c.b16 %v1176, %v1174
        %v1217 = vpack.c.b16 %v1179, %v1177
        %v1218 = vpack.c.b16 %v1180, %v1178
        %v1219 = vpack.c.b16 %v1183, %v1181
        %v1220 = vpack.c.b16 %v1184, %v1182
        %v1221 = vpack.c.b16 %v1187, %v1185
        %v1222 = vpack.c.b16 %v1188, %v1186
        %v1223 = vpack.c.b16 %v1191, %v1189
        %v1224 = vpack.c.b16 %v1192, %v1190
        %1257 = vmatpush.bf16.msra.mxu0 %v1207
        %1258 = vmatpush.bf16.msra.mxu0 %v1205
        %1259 = vmatpush.bf16.msra.mxu0 %v1203
        %1260 = vmatpush.bf16.msra.mxu0 %v1201
        %1261 = vmatpush.bf16.msra.mxu0 %v1199
        %1262 = vmatpush.bf16.msra.mxu0 %v1197
        %1263 = vmatpush.bf16.msra.mxu0 %v1195
        %1264 = vmatpush.bf16.msra.mxu0 %v1193
        %1265 = vmatmul.bf16.gmra.mxu0 %v1043
        %v1266 = vpop.f32.mrf.mxu0
        %v1267 = vadd.f32 %v1093, %v1266
        %v1268 = vpop.f32.mrf.mxu0
        %v1269 = vadd.f32 %v1093, %v1268
        %1270 = vmatmul.bf16.gmra.mxu0 %v1045
        %v1271 = vpop.f32.mrf.mxu0
        %v1272 = vadd.f32 %v1093, %v1271
        %v1273 = vpop.f32.mrf.mxu0
        %v1274 = vadd.f32 %v1093, %v1273
        %1275 = vmatmul.bf16.gmra.mxu0 %v1047
        %v1276 = vpop.f32.mrf.mxu0
        %v1277 = vadd.f32 %v1093, %v1276
        %v1278 = vpop.f32.mrf.mxu0
        %v1279 = vadd.f32 %v1093, %v1278
        %1280 = vmatmul.bf16.gmra.mxu0 %v1049
        %v1281 = vpop.f32.mrf.mxu0
        %v1282 = vadd.f32 %v1093, %v1281
        %v1283 = vpop.f32.mrf.mxu0
        %v1284 = vadd.f32 %v1093, %v1283
        %1285 = vmatmul.bf16.gmra.mxu0 %v1051
        %v1286 = vpop.f32.mrf.mxu0
        %v1287 = vadd.f32 %v1093, %v1286
        %v1288 = vpop.f32.mrf.mxu0
        %v1289 = vadd.f32 %v1093, %v1288
        %1290 = vmatmul.bf16.gmra.mxu0 %v1053
        %v1291 = vpop.f32.mrf.mxu0
        %v1292 = vadd.f32 %v1093, %v1291
        %v1293 = vpop.f32.mrf.mxu0
        %v1294 = vadd.f32 %v1093, %v1293
        %1295 = vmatmul.bf16.gmra.mxu0 %v1055
        %v1296 = vpop.f32.mrf.mxu0
        %v1297 = vadd.f32 %v1093, %v1296
        %v1298 = vpop.f32.mrf.mxu0
        %v1299 = vadd.f32 %v1093, %v1298
        %1300 = vmatmul.bf16.gmra.mxu0 %v1057
        %v1301 = vpop.f32.mrf.mxu0
        %v1302 = vadd.f32 %v1093, %v1301
        %v1303 = vpop.f32.mrf.mxu0
        %v1304 = vadd.f32 %v1093, %v1303
        %1305 = vdwg.mxu0
        %1306 = vmatpush.bf16.msra.mxu0 %v1223
        %1307 = vmatpush.bf16.msra.mxu0 %v1221
        %1308 = vmatpush.bf16.msra.mxu0 %v1219
        %1309 = vmatpush.bf16.msra.mxu0 %v1217
        %1310 = vmatpush.bf16.msra.mxu0 %v1215
        %1311 = vmatpush.bf16.msra.mxu0 %v1213
        %1312 = vmatpush.bf16.msra.mxu0 %v1211
        %1313 = vmatpush.bf16.msra.mxu0 %v1209
        %1314 = vmatmul.bf16.gmra.mxu0 %v1044
        %v1315 = vpop.f32.mrf.mxu0
        %v1316 = vadd.f32 %v1267, %v1315
        %v1317 = vpop.f32.mrf.mxu0
        %v1318 = vadd.f32 %v1269, %v1317
        %1319 = vmatmul.bf16.gmra.mxu0 %v1046
        %v1320 = vpop.f32.mrf.mxu0
        %v1321 = vadd.f32 %v1272, %v1320
        %v1322 = vpop.f32.mrf.mxu0
        %v1323 = vadd.f32 %v1274, %v1322
        %1324 = vmatmul.bf16.gmra.mxu0 %v1048
        %v1325 = vpop.f32.mrf.mxu0
        %v1326 = vadd.f32 %v1277, %v1325
        %v1327 = vpop.f32.mrf.mxu0
        %v1328 = vadd.f32 %v1279, %v1327
        %1329 = vmatmul.bf16.gmra.mxu0 %v1050
        %v1330 = vpop.f32.mrf.mxu0
        %v1331 = vadd.f32 %v1282, %v1330
        %v1332 = vpop.f32.mrf.mxu0
        %v1333 = vadd.f32 %v1284, %v1332
        %1334 = vmatmul.bf16.gmra.mxu0 %v1052
        %v1335 = vpop.f32.mrf.mxu0
        %v1336 = vadd.f32 %v1287, %v1335
        %v1337 = vpop.f32.mrf.mxu0
        %v1338 = vadd.f32 %v1289, %v1337
        %1339 = vmatmul.bf16.gmra.mxu0 %v1054
        %v1340 = vpop.f32.mrf.mxu0
        %v1341 = vadd.f32 %v1292, %v1340
        %v1342 = vpop.f32.mrf.mxu0
        %v1343 = vadd.f32 %v1294, %v1342
        %1344 = vmatmul.bf16.gmra.mxu0 %v1056
        %v1345 = vpop.f32.mrf.mxu0
        %v1346 = vadd.f32 %v1297, %v1345
        %v1347 = vpop.f32.mrf.mxu0
        %v1348 = vadd.f32 %v1299, %v1347
        %1349 = vmatmul.bf16.gmra.mxu0 %v1058
        %v1350 = vpop.f32.mrf.mxu0
        %v1351 = vadd.f32 %v1302, %v1350
        %v1352 = vpop.f32.mrf.mxu0
        %v1353 = vadd.f32 %v1304, %v1352
        %1354 = vdwg.mxu0
        %1355 = vmatpush.bf16.msra.mxu0 %v1208
        %1356 = vmatpush.bf16.msra.mxu0 %v1206
        %1357 = vmatpush.bf16.msra.mxu0 %v1204
        %1358 = vmatpush.bf16.msra.mxu0 %v1202
        %1359 = vmatpush.bf16.msra.mxu0 %v1200
        %1360 = vmatpush.bf16.msra.mxu0 %v1198
        %1361 = vmatpush.bf16.msra.mxu0 %v1196
        %1362 = vmatpush.bf16.msra.mxu0 %v1194
        %1363 = vmatmul.bf16.gmra.mxu0 %v1043
        %v1364 = vpop.f32.mrf.mxu0
        %v1365 = vadd.f32 %v1094, %v1364
        %v1366 = vpop.f32.mrf.mxu0
        %v1367 = vadd.f32 %v1094, %v1366
        %1368 = vmatmul.bf16.gmra.mxu0 %v1045
        %v1369 = vpop.f32.mrf.mxu0
        %v1370 = vadd.f32 %v1094, %v1369
        %v1371 = vpop.f32.mrf.mxu0
        %v1372 = vadd.f32 %v1094, %v1371
        %1373 = vmatmul.bf16.gmra.mxu0 %v1047
        %v1374 = vpop.f32.mrf.mxu0
        %v1375 = vadd.f32 %v1094, %v1374
        %v1376 = vpop.f32.mrf.mxu0
        %v1377 = vadd.f32 %v1094, %v1376
        %1378 = vmatmul.bf16.gmra.mxu0 %v1049
        %v1379 = vpop.f32.mrf.mxu0
        %v1380 = vadd.f32 %v1094, %v1379
        %v1381 = vpop.f32.mrf.mxu0
        %v1382 = vadd.f32 %v1094, %v1381
        %1383 = vmatmul.bf16.gmra.mxu0 %v1051
        %v1384 = vpop.f32.mrf.mxu0
        %v1385 = vadd.f32 %v1094, %v1384
        %v1386 = vpop.f32.mrf.mxu0
        %v1387 = vadd.f32 %v1094, %v1386
        %1388 = vmatmul.bf16.gmra.mxu0 %v1053
        %v1389 = vpop.f32.mrf.mxu0
        %v1390 = vadd.f32 %v1094, %v1389
        %v1391 = vpop.f32.mrf.mxu0
        %v1392 = vadd.f32 %v1094, %v1391
        %1393 = vmatmul.bf16.gmra.mxu0 %v1055
        %v1394 = vpop.f32.mrf.mxu0
        %v1395 = vadd.f32 %v1094, %v1394
        %v1396 = vpop.f32.mrf.mxu0
        %v1397 = vadd.f32 %v1094, %v1396
        %1398 = vmatmul.bf16.gmra.mxu0 %v1057
        %v1399 = vpop.f32.mrf.mxu0
        %v1400 = vadd.f32 %v1094, %v1399
        %v1401 = vpop.f32.mrf.mxu0
        %v1402 = vadd.f32 %v1094, %v1401
        %1403 = vdwg.mxu0
        %1404 = vmatpush.bf16.msra.mxu0 %v1224
        %1405 = vmatpush.bf16.msra.mxu0 %v1222
        %1406 = vmatpush.bf16.msra.mxu0 %v1220
        %1407 = vmatpush.bf16.msra.mxu0 %v1218
        %1408 = vmatpush.bf16.msra.mxu0 %v1216
        %1409 = vmatpush.bf16.msra.mxu0 %v1214
        %1410 = vmatpush.bf16.msra.mxu0 %v1212
        %1411 = vmatpush.bf16.msra.mxu0 %v1210
        %1412 = vmatmul.bf16.gmra.mxu0 %v1044
        %v1413 = vpop.f32.mrf.mxu0
        %v1414 = vadd.f32 %v1365, %v1413
        %v1415 = vpop.f32.mrf.mxu0
        %v1416 = vadd.f32 %v1367, %v1415
        %1417 = vmatmul.bf16.gmra.mxu0 %v1046
        %v1418 = vpop.f32.mrf.mxu0
        %v1419 = vadd.f32 %v1370, %v1418
        %v1420 = vpop.f32.mrf.mxu0
        %v1421 = vadd.f32 %v1372, %v1420
        %1422 = vmatmul.bf16.gmra.mxu0 %v1048
        %v1423 = vpop.f32.mrf.mxu0
        %v1424 = vadd.f32 %v1375, %v1423
        %v1425 = vpop.f32.mrf.mxu0
        %v1426 = vadd.f32 %v1377, %v1425
        %1427 = vmatmul.bf16.gmra.mxu0 %v1050
        %v1428 = vpop.f32.mrf.mxu0
        %v1429 = vadd.f32 %v1380, %v1428
        %v1430 = vpop.f32.mrf.mxu0
        %v1431 = vadd.f32 %v1382, %v1430
        %1432 = vmatmul.bf16.gmra.mxu0 %v1052
        %v1433 = vpop.f32.mrf.mxu0
        %v1434 = vadd.f32 %v1385, %v1433
        %v1435 = vpop.f32.mrf.mxu0
        %v1436 = vadd.f32 %v1387, %v1435
        %1437 = vmatmul.bf16.gmra.mxu0 %v1054
        %v1438 = vpop.f32.mrf.mxu0
        %v1439 = vadd.f32 %v1390, %v1438
        %v1440 = vpop.f32.mrf.mxu0
        %v1441 = vadd.f32 %v1392, %v1440
        %1442 = vmatmul.bf16.gmra.mxu0 %v1056
        %v1443 = vpop.f32.mrf.mxu0
        %v1444 = vadd.f32 %v1395, %v1443
        %v1445 = vpop.f32.mrf.mxu0
        %v1446 = vadd.f32 %v1397, %v1445
        %1447 = vmatmul.bf16.gmra.mxu0 %v1058
        %v1448 = vpop.f32.mrf.mxu0
        %v1449 = vadd.f32 %v1400, %v1448
        %v1450 = vpop.f32.mrf.mxu0
        %v1451 = vadd.f32 %v1402, %v1450
        %1452 = vdwg.mxu0
        %v1453 = vmul.f32 %v1316, 0.5
        %v1454 = vmul.f32 %v1414, 0.5
        %v1455 = vmul.f32 %v1318, 0.5
        %v1456 = vmul.f32 %v1416, 0.5
        %v1457 = vmul.f32 %v1321, 0.5
        %v1458 = vmul.f32 %v1419, 0.5
        %v1459 = vmul.f32 %v1323, 0.5
        %v1460 = vmul.f32 %v1421, 0.5
        %v1461 = vmul.f32 %v1326, 0.5
        %v1462 = vmul.f32 %v1424, 0.5
        %v1463 = vmul.f32 %v1328, 0.5
        %v1464 = vmul.f32 %v1426, 0.5
        %v1465 = vmul.f32 %v1331, 0.5
        %v1466 = vmul.f32 %v1429, 0.5
        %v1467 = vmul.f32 %v1333, 0.5
        %v1468 = vmul.f32 %v1431, 0.5
        %v1469 = vmul.f32 %v1336, 0.5
        %v1470 = vmul.f32 %v1434, 0.5
        %v1471 = vmul.f32 %v1338, 0.5
        %v1472 = vmul.f32 %v1436, 0.5
        %v1473 = vmul.f32 %v1341, 0.5
        %v1474 = vmul.f32 %v1439, 0.5
        %v1475 = vmul.f32 %v1343, 0.5
        %v1476 = vmul.f32 %v1441, 0.5
        %v1477 = vmul.f32 %v1346, 0.5
        %v1478 = vmul.f32 %v1444, 0.5
        %v1479 = vmul.f32 %v1348, 0.5
        %v1480 = vmul.f32 %v1446, 0.5
        %v1481 = vmul.f32 %v1351, 0.5
        %v1482 = vmul.f32 %v1449, 0.5
        %v1483 = vmul.f32 %v1353, 0.5
        %v1484 = vmul.f32 %v1451, 0.5
        %v1485 = vmul.f32 %v1316, 0.70710677
        %v1486 = vmul.f32 %v1414, 0.70710677
        %v1487 = vmul.f32 %v1318, 0.70710677
        %v1488 = vmul.f32 %v1416, 0.70710677
        %v1489 = vmul.f32 %v1321, 0.70710677
        %v1490 = vmul.f32 %v1419, 0.70710677
        %v1491 = vmul.f32 %v1323, 0.70710677
        %v1492 = vmul.f32 %v1421, 0.70710677
        %v1493 = vmul.f32 %v1326, 0.70710677
        %v1494 = vmul.f32 %v1424, 0.70710677
        %v1495 = vmul.f32 %v1328, 0.70710677
        %v1496 = vmul.f32 %v1426, 0.70710677
        %v1497 = vmul.f32 %v1331, 0.70710677
        %v1498 = vmul.f32 %v1429, 0.70710677
        %v1499 = vmul.f32 %v1333, 0.70710677
        %v1500 = vmul.f32 %v1431, 0.70710677
        %v1501 = vmul.f32 %v1336, 0.70710677
        %v1502 = vmul.f32 %v1434, 0.70710677
        %v1503 = vmul.f32 %v1338, 0.70710677
        %v1504 = vmul.f32 %v1436, 0.70710677
        %v1505 = vmul.f32 %v1341, 0.70710677
        %v1506 = vmul.f32 %v1439, 0.70710677
        %v1507 = vmul.f32 %v1343, 0.70710677
        %v1508 = vmul.f32 %v1441, 0.70710677
        %v1509 = vmul.f32 %v1346, 0.70710677
        %v1510 = vmul.f32 %v1444, 0.70710677
        %v1511 = vmul.f32 %v1348, 0.70710677
        %v1512 = vmul.f32 %v1446, 0.70710677
        %v1513 = vmul.f32 %v1351, 0.70710677
        %v1514 = vmul.f32 %v1449, 0.70710677
        %v1515 = vmul.f32 %v1353, 0.70710677
        %v1516 = vmul.f32 %v1451, 0.70710677
        %v1517 = vmul.f32 %v1485, %v1485
        %v1518 = vmin.f32 16.0, %v1517
        %v1519 = vmul.f32 %v1518, 2.1237322e-06
        %v1520 = vadd.f32 %v1519, 0.00028619796
        %v1521 = vmul.f32 %v1518, %v1520
        %v1522 = vadd.f32 %v1521, 0.0036580483
        %v1523 = vmul.f32 %v1518, %v1522
        %v1524 = vadd.f32 %v1523, 0.05243302
        %v1525 = vmul.f32 %v1518, %v1524
        %v1526 = vadd.f32 %v1525, 0.18741608
        %v1527 = vmul.f32 %v1518, %v1526
        %v1528 = vadd.f32 %v1527, 1.1283791
        %v1529 = vmul.f32 %v1485, %v1528
        %v1530 = vmul.f32 %v1518, 3.8918573e-05
        %v1531 = vadd.f32 %v1530, 0.001143296
        %v1532 = vmul.f32 %v1518, %v1531
        %v1533 = vadd.f32 %v1532, 0.014752088
        %v1534 = vmul.f32 %v1518, %v1533
        %v1535 = vadd.f32 %v1534, 0.112945676
        %v1536 = vmul.f32 %v1518, %v1535
        %v1537 = vadd.f32 %v1536, 0.4994258
        %v1538 = vmul.f32 %v1518, %v1537
        %v1539 = vadd.f32 %v1538, 1.0
        %v1540 = vrcp.pop %v1539
        %v1541 = vmul.f32 %v1539, %v1540
        %v1542 = vsub.f32 1.0, %v1541
        %v1543 = vmul.f32 %v1540, %v1542
        %v1544 = vadd.f32 %v1540, %v1543
        %vm1545 = vweird.f32 %v1539
        %vm1546 = vweird.f32 %v1540
        %vm1547 = vmor %vm1545, %vm1546
        %v1548 = vsel %vm1547, %v1540, %v1544
        %v1549 = vand.u32 2147483647, %v1539
        %vm1550 = vcmp.eq.f32.partialorder %v1549, 8.507059e+37
        %v1551 = vand.u32 %v1539, 2147483648
        %v1552 = vor.u32 1.1754944e-38, %v1551
        %v1553 = vsel %vm1550, %v1552, %v1548
        %v1554 = vmul.f32 %v1529, %v1553
        %v1555 = vmin.f32 %v1554, 1.0
        %v1556 = vmax.f32 %v1555, -1.0
        %v1557 = vmul.f32 %v1486, %v1486
        %v1558 = vmin.f32 16.0, %v1557
        %v1559 = vmul.f32 %v1558, 2.1237322e-06
        %v1560 = vadd.f32 %v1559, 0.00028619796
        %v1561 = vmul.f32 %v1558, %v1560
        %v1562 = vadd.f32 %v1561, 0.0036580483
        %v1563 = vmul.f32 %v1558, %v1562
        %v1564 = vadd.f32 %v1563, 0.05243302
        %v1565 = vmul.f32 %v1558, %v1564
        %v1566 = vadd.f32 %v1565, 0.18741608
        %v1567 = vmul.f32 %v1558, %v1566
        %v1568 = vadd.f32 %v1567, 1.1283791
        %v1569 = vmul.f32 %v1486, %v1568
        %v1570 = vmul.f32 %v1558, 3.8918573e-05
        %v1571 = vadd.f32 %v1570, 0.001143296
        %v1572 = vmul.f32 %v1558, %v1571
        %v1573 = vadd.f32 %v1572, 0.014752088
        %v1574 = vmul.f32 %v1558, %v1573
        %v1575 = vadd.f32 %v1574, 0.112945676
        %v1576 = vmul.f32 %v1558, %v1575
        %v1577 = vadd.f32 %v1576, 0.4994258
        %v1578 = vmul.f32 %v1558, %v1577
        %v1579 = vadd.f32 %v1578, 1.0
        %v1580 = vrcp.pop %v1579
        %v1581 = vmul.f32 %v1579, %v1580
        %v1582 = vsub.f32 1.0, %v1581
        %v1583 = vmul.f32 %v1580, %v1582
        %v1584 = vadd.f32 %v1580, %v1583
        %vm1585 = vweird.f32 %v1579
        %vm1586 = vweird.f32 %v1580
        %vm1587 = vmor %vm1585, %vm1586
        %v1588 = vsel %vm1587, %v1580, %v1584
        %v1589 = vand.u32 2147483647, %v1579
        %vm1590 = vcmp.eq.f32.partialorder %v1589, 8.507059e+37
        %v1591 = vand.u32 %v1579, 2147483648
        %v1592 = vor.u32 1.1754944e-38, %v1591
        %v1593 = vsel %vm1590, %v1592, %v1588
        %v1594 = vmul.f32 %v1569, %v1593
        %v1595 = vmin.f32 %v1594, 1.0
        %v1596 = vmax.f32 %v1595, -1.0
        %v1597 = vmul.f32 %v1487, %v1487
        %v1598 = vmin.f32 16.0, %v1597
        %v1599 = vmul.f32 %v1598, 2.1237322e-06
        %v1600 = vadd.f32 %v1599, 0.00028619796
        %v1601 = vmul.f32 %v1598, %v1600
        %v1602 = vadd.f32 %v1601, 0.0036580483
        %v1603 = vmul.f32 %v1598, %v1602
        %v1604 = vadd.f32 %v1603, 0.05243302
        %v1605 = vmul.f32 %v1598, %v1604
        %v1606 = vadd.f32 %v1605, 0.18741608
        %v1607 = vmul.f32 %v1598, %v1606
        %v1608 = vadd.f32 %v1607, 1.1283791
        %v1609 = vmul.f32 %v1487, %v1608
        %v1610 = vmul.f32 %v1598, 3.8918573e-05
        %v1611 = vadd.f32 %v1610, 0.001143296
        %v1612 = vmul.f32 %v1598, %v1611
        %v1613 = vadd.f32 %v1612, 0.014752088
        %v1614 = vmul.f32 %v1598, %v1613
        %v1615 = vadd.f32 %v1614, 0.112945676
        %v1616 = vmul.f32 %v1598, %v1615
        %v1617 = vadd.f32 %v1616, 0.4994258
        %v1618 = vmul.f32 %v1598, %v1617
        %v1619 = vadd.f32 %v1618, 1.0
        %v1620 = vrcp.pop %v1619
        %v1621 = vmul.f32 %v1619, %v1620
        %v1622 = vsub.f32 1.0, %v1621
        %v1623 = vmul.f32 %v1620, %v1622
        %v1624 = vadd.f32 %v1620, %v1623
        %vm1625 = vweird.f32 %v1619
        %vm1626 = vweird.f32 %v1620
        %vm1627 = vmor %vm1625, %vm1626
        %v1628 = vsel %vm1627, %v1620, %v1624
        %v1629 = vand.u32 2147483647, %v1619
        %vm1630 = vcmp.eq.f32.partialorder %v1629, 8.507059e+37
        %v1631 = vand.u32 %v1619, 2147483648
        %v1632 = vor.u32 1.1754944e-38, %v1631
        %v1633 = vsel %vm1630, %v1632, %v1628
        %v1634 = vmul.f32 %v1609, %v1633
        %v1635 = vmin.f32 %v1634, 1.0
        %v1636 = vmax.f32 %v1635, -1.0
        %v1637 = vmul.f32 %v1488, %v1488
        %v1638 = vmin.f32 16.0, %v1637
        %v1639 = vmul.f32 %v1638, 2.1237322e-06
        %v1640 = vadd.f32 %v1639, 0.00028619796
        %v1641 = vmul.f32 %v1638, %v1640
        %v1642 = vadd.f32 %v1641, 0.0036580483
        %v1643 = vmul.f32 %v1638, %v1642
        %v1644 = vadd.f32 %v1643, 0.05243302
        %v1645 = vmul.f32 %v1638, %v1644
        %v1646 = vadd.f32 %v1645, 0.18741608
        %v1647 = vmul.f32 %v1638, %v1646
        %v1648 = vadd.f32 %v1647, 1.1283791
        %v1649 = vmul.f32 %v1488, %v1648
        %v1650 = vmul.f32 %v1638, 3.8918573e-05
        %v1651 = vadd.f32 %v1650, 0.001143296
        %v1652 = vmul.f32 %v1638, %v1651
        %v1653 = vadd.f32 %v1652, 0.014752088
        %v1654 = vmul.f32 %v1638, %v1653
        %v1655 = vadd.f32 %v1654, 0.112945676
        %v1656 = vmul.f32 %v1638, %v1655
        %v1657 = vadd.f32 %v1656, 0.4994258
        %v1658 = vmul.f32 %v1638, %v1657
        %v1659 = vadd.f32 %v1658, 1.0
        %v1660 = vrcp.pop %v1659
        %v1661 = vmul.f32 %v1659, %v1660
        %v1662 = vsub.f32 1.0, %v1661
        %v1663 = vmul.f32 %v1660, %v1662
        %v1664 = vadd.f32 %v1660, %v1663
        %vm1665 = vweird.f32 %v1659
        %vm1666 = vweird.f32 %v1660
        %vm1667 = vmor %vm1665, %vm1666
        %v1668 = vsel %vm1667, %v1660, %v1664
        %v1669 = vand.u32 2147483647, %v1659
        %vm1670 = vcmp.eq.f32.partialorder %v1669, 8.507059e+37
        %v1671 = vand.u32 %v1659, 2147483648
        %v1672 = vor.u32 1.1754944e-38, %v1671
        %v1673 = vsel %vm1670, %v1672, %v1668
        %v1674 = vmul.f32 %v1649, %v1673
        %v1675 = vmin.f32 %v1674, 1.0
        %v1676 = vmax.f32 %v1675, -1.0
        %v1677 = vmul.f32 %v1489, %v1489
        %v1678 = vmin.f32 16.0, %v1677
        %v1679 = vmul.f32 %v1678, 2.1237322e-06
        %v1680 = vadd.f32 %v1679, 0.00028619796
        %v1681 = vmul.f32 %v1678, %v1680
        %v1682 = vadd.f32 %v1681, 0.0036580483
        %v1683 = vmul.f32 %v1678, %v1682
        %v1684 = vadd.f32 %v1683, 0.05243302
        %v1685 = vmul.f32 %v1678, %v1684
        %v1686 = vadd.f32 %v1685, 0.18741608
        %v1687 = vmul.f32 %v1678, %v1686
        %v1688 = vadd.f32 %v1687, 1.1283791
        %v1689 = vmul.f32 %v1489, %v1688
        %v1690 = vmul.f32 %v1678, 3.8918573e-05
        %v1691 = vadd.f32 %v1690, 0.001143296
        %v1692 = vmul.f32 %v1678, %v1691
        %v1693 = vadd.f32 %v1692, 0.014752088
        %v1694 = vmul.f32 %v1678, %v1693
        %v1695 = vadd.f32 %v1694, 0.112945676
        %v1696 = vmul.f32 %v1678, %v1695
        %v1697 = vadd.f32 %v1696, 0.4994258
        %v1698 = vmul.f32 %v1678, %v1697
        %v1699 = vadd.f32 %v1698, 1.0
        %v1700 = vrcp.pop %v1699
        %v1701 = vmul.f32 %v1699, %v1700
        %v1702 = vsub.f32 1.0, %v1701
        %v1703 = vmul.f32 %v1700, %v1702
        %v1704 = vadd.f32 %v1700, %v1703
        %vm1705 = vweird.f32 %v1699
        %vm1706 = vweird.f32 %v1700
        %vm1707 = vmor %vm1705, %vm1706
        %v1708 = vsel %vm1707, %v1700, %v1704
        %v1709 = vand.u32 2147483647, %v1699
        %vm1710 = vcmp.eq.f32.partialorder %v1709, 8.507059e+37
        %v1711 = vand.u32 %v1699, 2147483648
        %v1712 = vor.u32 1.1754944e-38, %v1711
        %v1713 = vsel %vm1710, %v1712, %v1708
        %v1714 = vmul.f32 %v1689, %v1713
        %v1715 = vmin.f32 %v1714, 1.0
        %v1716 = vmax.f32 %v1715, -1.0
        %v1717 = vmul.f32 %v1490, %v1490
        %v1718 = vmin.f32 16.0, %v1717
        %v1719 = vmul.f32 %v1718, 2.1237322e-06
        %v1720 = vadd.f32 %v1719, 0.00028619796
        %v1721 = vmul.f32 %v1718, %v1720
        %v1722 = vadd.f32 %v1721, 0.0036580483
        %v1723 = vmul.f32 %v1718, %v1722
        %v1724 = vadd.f32 %v1723, 0.05243302
        %v1725 = vmul.f32 %v1718, %v1724
        %v1726 = vadd.f32 %v1725, 0.18741608
        %v1727 = vmul.f32 %v1718, %v1726
        %v1728 = vadd.f32 %v1727, 1.1283791
        %v1729 = vmul.f32 %v1490, %v1728
        %v1730 = vmul.f32 %v1718, 3.8918573e-05
        %v1731 = vadd.f32 %v1730, 0.001143296
        %v1732 = vmul.f32 %v1718, %v1731
        %v1733 = vadd.f32 %v1732, 0.014752088
        %v1734 = vmul.f32 %v1718, %v1733
        %v1735 = vadd.f32 %v1734, 0.112945676
        %v1736 = vmul.f32 %v1718, %v1735
        %v1737 = vadd.f32 %v1736, 0.4994258
        %v1738 = vmul.f32 %v1718, %v1737
        %v1739 = vadd.f32 %v1738, 1.0
        %v1740 = vrcp.pop %v1739
        %v1741 = vmul.f32 %v1739, %v1740
        %v1742 = vsub.f32 1.0, %v1741
        %v1743 = vmul.f32 %v1740, %v1742
        %v1744 = vadd.f32 %v1740, %v1743
        %vm1745 = vweird.f32 %v1739
        %vm1746 = vweird.f32 %v1740
        %vm1747 = vmor %vm1745, %vm1746
        %v1748 = vsel %vm1747, %v1740, %v1744
        %v1749 = vand.u32 2147483647, %v1739
        %vm1750 = vcmp.eq.f32.partialorder %v1749, 8.507059e+37
        %v1751 = vand.u32 %v1739, 2147483648
        %v1752 = vor.u32 1.1754944e-38, %v1751
        %v1753 = vsel %vm1750, %v1752, %v1748
        %v1754 = vmul.f32 %v1729, %v1753
        %v1755 = vmin.f32 %v1754, 1.0
        %v1756 = vmax.f32 %v1755, -1.0
        %v1757 = vmul.f32 %v1491, %v1491
        %v1758 = vmin.f32 16.0, %v1757
        %v1759 = vmul.f32 %v1758, 2.1237322e-06
        %v1760 = vadd.f32 %v1759, 0.00028619796
        %v1761 = vmul.f32 %v1758, %v1760
        %v1762 = vadd.f32 %v1761, 0.0036580483
        %v1763 = vmul.f32 %v1758, %v1762
        %v1764 = vadd.f32 %v1763, 0.05243302
        %v1765 = vmul.f32 %v1758, %v1764
        %v1766 = vadd.f32 %v1765, 0.18741608
        %v1767 = vmul.f32 %v1758, %v1766
        %v1768 = vadd.f32 %v1767, 1.1283791
        %v1769 = vmul.f32 %v1491, %v1768
        %v1770 = vmul.f32 %v1758, 3.8918573e-05
        %v1771 = vadd.f32 %v1770, 0.001143296
        %v1772 = vmul.f32 %v1758, %v1771
        %v1773 = vadd.f32 %v1772, 0.014752088
        %v1774 = vmul.f32 %v1758, %v1773
        %v1775 = vadd.f32 %v1774, 0.112945676
        %v1776 = vmul.f32 %v1758, %v1775
        %v1777 = vadd.f32 %v1776, 0.4994258
        %v1778 = vmul.f32 %v1758, %v1777
        %v1779 = vadd.f32 %v1778, 1.0
        %v1780 = vrcp.pop %v1779
        %v1781 = vmul.f32 %v1779, %v1780
        %v1782 = vsub.f32 1.0, %v1781
        %v1783 = vmul.f32 %v1780, %v1782
        %v1784 = vadd.f32 %v1780, %v1783
        %vm1785 = vweird.f32 %v1779
        %vm1786 = vweird.f32 %v1780
        %vm1787 = vmor %vm1785, %vm1786
        %v1788 = vsel %vm1787, %v1780, %v1784
        %v1789 = vand.u32 2147483647, %v1779
        %vm1790 = vcmp.eq.f32.partialorder %v1789, 8.507059e+37
        %v1791 = vand.u32 %v1779, 2147483648
        %v1792 = vor.u32 1.1754944e-38, %v1791
        %v1793 = vsel %vm1790, %v1792, %v1788
        %v1794 = vmul.f32 %v1769, %v1793
        %v1795 = vmin.f32 %v1794, 1.0
        %v1796 = vmax.f32 %v1795, -1.0
        %v1797 = vmul.f32 %v1492, %v1492
        %v1798 = vmin.f32 16.0, %v1797
        %v1799 = vmul.f32 %v1798, 2.1237322e-06
        %v1800 = vadd.f32 %v1799, 0.00028619796
        %v1801 = vmul.f32 %v1798, %v1800
        %v1802 = vadd.f32 %v1801, 0.0036580483
        %v1803 = vmul.f32 %v1798, %v1802
        %v1804 = vadd.f32 %v1803, 0.05243302
        %v1805 = vmul.f32 %v1798, %v1804
        %v1806 = vadd.f32 %v1805, 0.18741608
        %v1807 = vmul.f32 %v1798, %v1806
        %v1808 = vadd.f32 %v1807, 1.1283791
        %v1809 = vmul.f32 %v1492, %v1808
        %v1810 = vmul.f32 %v1798, 3.8918573e-05
        %v1811 = vadd.f32 %v1810, 0.001143296
        %v1812 = vmul.f32 %v1798, %v1811
        %v1813 = vadd.f32 %v1812, 0.014752088
        %v1814 = vmul.f32 %v1798, %v1813
        %v1815 = vadd.f32 %v1814, 0.112945676
        %v1816 = vmul.f32 %v1798, %v1815
        %v1817 = vadd.f32 %v1816, 0.4994258
        %v1818 = vmul.f32 %v1798, %v1817
        %v1819 = vadd.f32 %v1818, 1.0
        %v1820 = vrcp.pop %v1819
        %v1821 = vmul.f32 %v1819, %v1820
        %v1822 = vsub.f32 1.0, %v1821
        %v1823 = vmul.f32 %v1820, %v1822
        %v1824 = vadd.f32 %v1820, %v1823
        %vm1825 = vweird.f32 %v1819
        %vm1826 = vweird.f32 %v1820
        %vm1827 = vmor %vm1825, %vm1826
        %v1828 = vsel %vm1827, %v1820, %v1824
        %v1829 = vand.u32 2147483647, %v1819
        %vm1830 = vcmp.eq.f32.partialorder %v1829, 8.507059e+37
        %v1831 = vand.u32 %v1819, 2147483648
        %v1832 = vor.u32 1.1754944e-38, %v1831
        %v1833 = vsel %vm1830, %v1832, %v1828
        %v1834 = vmul.f32 %v1809, %v1833
        %v1835 = vmin.f32 %v1834, 1.0
        %v1836 = vmax.f32 %v1835, -1.0
        %v1837 = vmul.f32 %v1493, %v1493
        %v1838 = vmin.f32 16.0, %v1837
        %v1839 = vmul.f32 %v1838, 2.1237322e-06
        %v1840 = vadd.f32 %v1839, 0.00028619796
        %v1841 = vmul.f32 %v1838, %v1840
        %v1842 = vadd.f32 %v1841, 0.0036580483
        %v1843 = vmul.f32 %v1838, %v1842
        %v1844 = vadd.f32 %v1843, 0.05243302
        %v1845 = vmul.f32 %v1838, %v1844
        %v1846 = vadd.f32 %v1845, 0.18741608
        %v1847 = vmul.f32 %v1838, %v1846
        %v1848 = vadd.f32 %v1847, 1.1283791
        %v1849 = vmul.f32 %v1493, %v1848
        %v1850 = vmul.f32 %v1838, 3.8918573e-05
        %v1851 = vadd.f32 %v1850, 0.001143296
        %v1852 = vmul.f32 %v1838, %v1851
        %v1853 = vadd.f32 %v1852, 0.014752088
        %v1854 = vmul.f32 %v1838, %v1853
        %v1855 = vadd.f32 %v1854, 0.112945676
        %v1856 = vmul.f32 %v1838, %v1855
        %v1857 = vadd.f32 %v1856, 0.4994258
        %v1858 = vmul.f32 %v1838, %v1857
        %v1859 = vadd.f32 %v1858, 1.0
        %v1860 = vrcp.pop %v1859
        %v1861 = vmul.f32 %v1859, %v1860
        %v1862 = vsub.f32 1.0, %v1861
        %v1863 = vmul.f32 %v1860, %v1862
        %v1864 = vadd.f32 %v1860, %v1863
        %vm1865 = vweird.f32 %v1859
        %vm1866 = vweird.f32 %v1860
        %vm1867 = vmor %vm1865, %vm1866
        %v1868 = vsel %vm1867, %v1860, %v1864
        %v1869 = vand.u32 2147483647, %v1859
        %vm1870 = vcmp.eq.f32.partialorder %v1869, 8.507059e+37
        %v1871 = vand.u32 %v1859, 2147483648
        %v1872 = vor.u32 1.1754944e-38, %v1871
        %v1873 = vsel %vm1870, %v1872, %v1868
        %v1874 = vmul.f32 %v1849, %v1873
        %v1875 = vmin.f32 %v1874, 1.0
        %v1876 = vmax.f32 %v1875, -1.0
        %v1877 = vmul.f32 %v1494, %v1494
        %v1878 = vmin.f32 16.0, %v1877
        %v1879 = vmul.f32 %v1878, 2.1237322e-06
        %v1880 = vadd.f32 %v1879, 0.00028619796
        %v1881 = vmul.f32 %v1878, %v1880
        %v1882 = vadd.f32 %v1881, 0.0036580483
        %v1883 = vmul.f32 %v1878, %v1882
        %v1884 = vadd.f32 %v1883, 0.05243302
        %v1885 = vmul.f32 %v1878, %v1884
        %v1886 = vadd.f32 %v1885, 0.18741608
        %v1887 = vmul.f32 %v1878, %v1886
        %v1888 = vadd.f32 %v1887, 1.1283791
        %v1889 = vmul.f32 %v1494, %v1888
        %v1890 = vmul.f32 %v1878, 3.8918573e-05
        %v1891 = vadd.f32 %v1890, 0.001143296
        %v1892 = vmul.f32 %v1878, %v1891
        %v1893 = vadd.f32 %v1892, 0.014752088
        %v1894 = vmul.f32 %v1878, %v1893
        %v1895 = vadd.f32 %v1894, 0.112945676
        %v1896 = vmul.f32 %v1878, %v1895
        %v1897 = vadd.f32 %v1896, 0.4994258
        %v1898 = vmul.f32 %v1878, %v1897
        %v1899 = vadd.f32 %v1898, 1.0
        %v1900 = vrcp.pop %v1899
        %v1901 = vmul.f32 %v1899, %v1900
        %v1902 = vsub.f32 1.0, %v1901
        %v1903 = vmul.f32 %v1900, %v1902
        %v1904 = vadd.f32 %v1900, %v1903
        %vm1905 = vweird.f32 %v1899
        %vm1906 = vweird.f32 %v1900
        %vm1907 = vmor %vm1905, %vm1906
        %v1908 = vsel %vm1907, %v1900, %v1904
        %v1909 = vand.u32 2147483647, %v1899
        %vm1910 = vcmp.eq.f32.partialorder %v1909, 8.507059e+37
        %v1911 = vand.u32 %v1899, 2147483648
        %v1912 = vor.u32 1.1754944e-38, %v1911
        %v1913 = vsel %vm1910, %v1912, %v1908
        %v1914 = vmul.f32 %v1889, %v1913
        %v1915 = vmin.f32 %v1914, 1.0
        %v1916 = vmax.f32 %v1915, -1.0
        %v1917 = vmul.f32 %v1495, %v1495
        %v1918 = vmin.f32 16.0, %v1917
        %v1919 = vmul.f32 %v1918, 2.1237322e-06
        %v1920 = vadd.f32 %v1919, 0.00028619796
        %v1921 = vmul.f32 %v1918, %v1920
        %v1922 = vadd.f32 %v1921, 0.0036580483
        %v1923 = vmul.f32 %v1918, %v1922
        %v1924 = vadd.f32 %v1923, 0.05243302
        %v1925 = vmul.f32 %v1918, %v1924
        %v1926 = vadd.f32 %v1925, 0.18741608
        %v1927 = vmul.f32 %v1918, %v1926
        %v1928 = vadd.f32 %v1927, 1.1283791
        %v1929 = vmul.f32 %v1495, %v1928
        %v1930 = vmul.f32 %v1918, 3.8918573e-05
        %v1931 = vadd.f32 %v1930, 0.001143296
        %v1932 = vmul.f32 %v1918, %v1931
        %v1933 = vadd.f32 %v1932, 0.014752088
        %v1934 = vmul.f32 %v1918, %v1933
        %v1935 = vadd.f32 %v1934, 0.112945676
        %v1936 = vmul.f32 %v1918, %v1935
        %v1937 = vadd.f32 %v1936, 0.4994258
        %v1938 = vmul.f32 %v1918, %v1937
        %v1939 = vadd.f32 %v1938, 1.0
        %v1940 = vrcp.pop %v1939
        %v1941 = vmul.f32 %v1939, %v1940
        %v1942 = vsub.f32 1.0, %v1941
        %v1943 = vmul.f32 %v1940, %v1942
        %v1944 = vadd.f32 %v1940, %v1943
        %vm1945 = vweird.f32 %v1939
        %vm1946 = vweird.f32 %v1940
        %vm1947 = vmor %vm1945, %vm1946
        %v1948 = vsel %vm1947, %v1940, %v1944
        %v1949 = vand.u32 2147483647, %v1939
        %vm1950 = vcmp.eq.f32.partialorder %v1949, 8.507059e+37
        %v1951 = vand.u32 %v1939, 2147483648
        %v1952 = vor.u32 1.1754944e-38, %v1951
        %v1953 = vsel %vm1950, %v1952, %v1948
        %v1954 = vmul.f32 %v1929, %v1953
        %v1955 = vmin.f32 %v1954, 1.0
        %v1956 = vmax.f32 %v1955, -1.0
        %v1957 = vmul.f32 %v1496, %v1496
        %v1958 = vmin.f32 16.0, %v1957
        %v1959 = vmul.f32 %v1958, 2.1237322e-06
        %v1960 = vadd.f32 %v1959, 0.00028619796
        %v1961 = vmul.f32 %v1958, %v1960
        %v1962 = vadd.f32 %v1961, 0.0036580483
        %v1963 = vmul.f32 %v1958, %v1962
        %v1964 = vadd.f32 %v1963, 0.05243302
        %v1965 = vmul.f32 %v1958, %v1964
        %v1966 = vadd.f32 %v1965, 0.18741608
        %v1967 = vmul.f32 %v1958, %v1966
        %v1968 = vadd.f32 %v1967, 1.1283791
        %v1969 = vmul.f32 %v1496, %v1968
        %v1970 = vmul.f32 %v1958, 3.8918573e-05
        %v1971 = vadd.f32 %v1970, 0.001143296
        %v1972 = vmul.f32 %v1958, %v1971
        %v1973 = vadd.f32 %v1972, 0.014752088
        %v1974 = vmul.f32 %v1958, %v1973
        %v1975 = vadd.f32 %v1974, 0.112945676
        %v1976 = vmul.f32 %v1958, %v1975
        %v1977 = vadd.f32 %v1976, 0.4994258
        %v1978 = vmul.f32 %v1958, %v1977
        %v1979 = vadd.f32 %v1978, 1.0
        %v1980 = vrcp.pop %v1979
        %v1981 = vmul.f32 %v1979, %v1980
        %v1982 = vsub.f32 1.0, %v1981
        %v1983 = vmul.f32 %v1980, %v1982
        %v1984 = vadd.f32 %v1980, %v1983
        %vm1985 = vweird.f32 %v1979
        %vm1986 = vweird.f32 %v1980
        %vm1987 = vmor %vm1985, %vm1986
        %v1988 = vsel %vm1987, %v1980, %v1984
        %v1989 = vand.u32 2147483647, %v1979
        %vm1990 = vcmp.eq.f32.partialorder %v1989, 8.507059e+37
        %v1991 = vand.u32 %v1979, 2147483648
        %v1992 = vor.u32 1.1754944e-38, %v1991
        %v1993 = vsel %vm1990, %v1992, %v1988
        %v1994 = vmul.f32 %v1969, %v1993
        %v1995 = vmin.f32 %v1994, 1.0
        %v1996 = vmax.f32 %v1995, -1.0
        %v1997 = vmul.f32 %v1497, %v1497
        %v1998 = vmin.f32 16.0, %v1997
        %v1999 = vmul.f32 %v1998, 2.1237322e-06
        %v2000 = vadd.f32 %v1999, 0.00028619796
        %v2001 = vmul.f32 %v1998, %v2000
        %v2002 = vadd.f32 %v2001, 0.0036580483
        %v2003 = vmul.f32 %v1998, %v2002
        %v2004 = vadd.f32 %v2003, 0.05243302
        %v2005 = vmul.f32 %v1998, %v2004
        %v2006 = vadd.f32 %v2005, 0.18741608
        %v2007 = vmul.f32 %v1998, %v2006
        %v2008 = vadd.f32 %v2007, 1.1283791
        %v2009 = vmul.f32 %v1497, %v2008
        %v2010 = vmul.f32 %v1998, 3.8918573e-05
        %v2011 = vadd.f32 %v2010, 0.001143296
        %v2012 = vmul.f32 %v1998, %v2011
        %v2013 = vadd.f32 %v2012, 0.014752088
        %v2014 = vmul.f32 %v1998, %v2013
        %v2015 = vadd.f32 %v2014, 0.112945676
        %v2016 = vmul.f32 %v1998, %v2015
        %v2017 = vadd.f32 %v2016, 0.4994258
        %v2018 = vmul.f32 %v1998, %v2017
        %v2019 = vadd.f32 %v2018, 1.0
        %v2020 = vrcp.pop %v2019
        %v2021 = vmul.f32 %v2019, %v2020
        %v2022 = vsub.f32 1.0, %v2021
        %v2023 = vmul.f32 %v2020, %v2022
        %v2024 = vadd.f32 %v2020, %v2023
        %vm2025 = vweird.f32 %v2019
        %vm2026 = vweird.f32 %v2020
        %vm2027 = vmor %vm2025, %vm2026
        %v2028 = vsel %vm2027, %v2020, %v2024
        %v2029 = vand.u32 2147483647, %v2019
        %vm2030 = vcmp.eq.f32.partialorder %v2029, 8.507059e+37
        %v2031 = vand.u32 %v2019, 2147483648
        %v2032 = vor.u32 1.1754944e-38, %v2031
        %v2033 = vsel %vm2030, %v2032, %v2028
        %v2034 = vmul.f32 %v2009, %v2033
        %v2035 = vmin.f32 %v2034, 1.0
        %v2036 = vmax.f32 %v2035, -1.0
        %v2037 = vmul.f32 %v1498, %v1498
        %v2038 = vmin.f32 16.0, %v2037
        %v2039 = vmul.f32 %v2038, 2.1237322e-06
        %v2040 = vadd.f32 %v2039, 0.00028619796
        %v2041 = vmul.f32 %v2038, %v2040
        %v2042 = vadd.f32 %v2041, 0.0036580483
        %v2043 = vmul.f32 %v2038, %v2042
        %v2044 = vadd.f32 %v2043, 0.05243302
        %v2045 = vmul.f32 %v2038, %v2044
        %v2046 = vadd.f32 %v2045, 0.18741608
        %v2047 = vmul.f32 %v2038, %v2046
        %v2048 = vadd.f32 %v2047, 1.1283791
        %v2049 = vmul.f32 %v1498, %v2048
        %v2050 = vmul.f32 %v2038, 3.8918573e-05
        %v2051 = vadd.f32 %v2050, 0.001143296
        %v2052 = vmul.f32 %v2038, %v2051
        %v2053 = vadd.f32 %v2052, 0.014752088
        %v2054 = vmul.f32 %v2038, %v2053
        %v2055 = vadd.f32 %v2054, 0.112945676
        %v2056 = vmul.f32 %v2038, %v2055
        %v2057 = vadd.f32 %v2056, 0.4994258
        %v2058 = vmul.f32 %v2038, %v2057
        %v2059 = vadd.f32 %v2058, 1.0
        %v2060 = vrcp.pop %v2059
        %v2061 = vmul.f32 %v2059, %v2060
        %v2062 = vsub.f32 1.0, %v2061
        %v2063 = vmul.f32 %v2060, %v2062
        %v2064 = vadd.f32 %v2060, %v2063
        %vm2065 = vweird.f32 %v2059
        %vm2066 = vweird.f32 %v2060
        %vm2067 = vmor %vm2065, %vm2066
        %v2068 = vsel %vm2067, %v2060, %v2064
        %v2069 = vand.u32 2147483647, %v2059
        %vm2070 = vcmp.eq.f32.partialorder %v2069, 8.507059e+37
        %v2071 = vand.u32 %v2059, 2147483648
        %v2072 = vor.u32 1.1754944e-38, %v2071
        %v2073 = vsel %vm2070, %v2072, %v2068
        %v2074 = vmul.f32 %v2049, %v2073
        %v2075 = vmin.f32 %v2074, 1.0
        %v2076 = vmax.f32 %v2075, -1.0
        %v2077 = vmul.f32 %v1499, %v1499
        %v2078 = vmin.f32 16.0, %v2077
        %v2079 = vmul.f32 %v2078, 2.1237322e-06
        %v2080 = vadd.f32 %v2079, 0.00028619796
        %v2081 = vmul.f32 %v2078, %v2080
        %v2082 = vadd.f32 %v2081, 0.0036580483
        %v2083 = vmul.f32 %v2078, %v2082
        %v2084 = vadd.f32 %v2083, 0.05243302
        %v2085 = vmul.f32 %v2078, %v2084
        %v2086 = vadd.f32 %v2085, 0.18741608
        %v2087 = vmul.f32 %v2078, %v2086
        %v2088 = vadd.f32 %v2087, 1.1283791
        %v2089 = vmul.f32 %v1499, %v2088
        %v2090 = vmul.f32 %v2078, 3.8918573e-05
        %v2091 = vadd.f32 %v2090, 0.001143296
        %v2092 = vmul.f32 %v2078, %v2091
        %v2093 = vadd.f32 %v2092, 0.014752088
        %v2094 = vmul.f32 %v2078, %v2093
        %v2095 = vadd.f32 %v2094, 0.112945676
        %v2096 = vmul.f32 %v2078, %v2095
        %v2097 = vadd.f32 %v2096, 0.4994258
        %v2098 = vmul.f32 %v2078, %v2097
        %v2099 = vadd.f32 %v2098, 1.0
        %v2100 = vrcp.pop %v2099
        %v2101 = vmul.f32 %v2099, %v2100
        %v2102 = vsub.f32 1.0, %v2101
        %v2103 = vmul.f32 %v2100, %v2102
        %v2104 = vadd.f32 %v2100, %v2103
        %vm2105 = vweird.f32 %v2099
        %vm2106 = vweird.f32 %v2100
        %vm2107 = vmor %vm2105, %vm2106
        %v2108 = vsel %vm2107, %v2100, %v2104
        %v2109 = vand.u32 2147483647, %v2099
        %vm2110 = vcmp.eq.f32.partialorder %v2109, 8.507059e+37
        %v2111 = vand.u32 %v2099, 2147483648
        %v2112 = vor.u32 1.1754944e-38, %v2111
        %v2113 = vsel %vm2110, %v2112, %v2108
        %v2114 = vmul.f32 %v2089, %v2113
        %v2115 = vmin.f32 %v2114, 1.0
        %v2116 = vmax.f32 %v2115, -1.0
        %v2117 = vmul.f32 %v1500, %v1500
        %v2118 = vmin.f32 16.0, %v2117
        %v2119 = vmul.f32 %v2118, 2.1237322e-06
        %v2120 = vadd.f32 %v2119, 0.00028619796
        %v2121 = vmul.f32 %v2118, %v2120
        %v2122 = vadd.f32 %v2121, 0.0036580483
        %v2123 = vmul.f32 %v2118, %v2122
        %v2124 = vadd.f32 %v2123, 0.05243302
        %v2125 = vmul.f32 %v2118, %v2124
        %v2126 = vadd.f32 %v2125, 0.18741608
        %v2127 = vmul.f32 %v2118, %v2126
        %v2128 = vadd.f32 %v2127, 1.1283791
        %v2129 = vmul.f32 %v1500, %v2128
        %v2130 = vmul.f32 %v2118, 3.8918573e-05
        %v2131 = vadd.f32 %v2130, 0.001143296
        %v2132 = vmul.f32 %v2118, %v2131
        %v2133 = vadd.f32 %v2132, 0.014752088
        %v2134 = vmul.f32 %v2118, %v2133
        %v2135 = vadd.f32 %v2134, 0.112945676
        %v2136 = vmul.f32 %v2118, %v2135
        %v2137 = vadd.f32 %v2136, 0.4994258
        %v2138 = vmul.f32 %v2118, %v2137
        %v2139 = vadd.f32 %v2138, 1.0
        %v2140 = vrcp.pop %v2139
        %v2141 = vmul.f32 %v2139, %v2140
        %v2142 = vsub.f32 1.0, %v2141
        %v2143 = vmul.f32 %v2140, %v2142
        %v2144 = vadd.f32 %v2140, %v2143
        %vm2145 = vweird.f32 %v2139
        %vm2146 = vweird.f32 %v2140
        %vm2147 = vmor %vm2145, %vm2146
        %v2148 = vsel %vm2147, %v2140, %v2144
        %v2149 = vand.u32 2147483647, %v2139
        %vm2150 = vcmp.eq.f32.partialorder %v2149, 8.507059e+37
        %v2151 = vand.u32 %v2139, 2147483648
        %v2152 = vor.u32 1.1754944e-38, %v2151
        %v2153 = vsel %vm2150, %v2152, %v2148
        %v2154 = vmul.f32 %v2129, %v2153
        %v2155 = vmin.f32 %v2154, 1.0
        %v2156 = vmax.f32 %v2155, -1.0
        %v2157 = vmul.f32 %v1501, %v1501
        %v2158 = vmin.f32 16.0, %v2157
        %v2159 = vmul.f32 %v2158, 2.1237322e-06
        %v2160 = vadd.f32 %v2159, 0.00028619796
        %v2161 = vmul.f32 %v2158, %v2160
        %v2162 = vadd.f32 %v2161, 0.0036580483
        %v2163 = vmul.f32 %v2158, %v2162
        %v2164 = vadd.f32 %v2163, 0.05243302
        %v2165 = vmul.f32 %v2158, %v2164
        %v2166 = vadd.f32 %v2165, 0.18741608
        %v2167 = vmul.f32 %v2158, %v2166
        %v2168 = vadd.f32 %v2167, 1.1283791
        %v2169 = vmul.f32 %v1501, %v2168
        %v2170 = vmul.f32 %v2158, 3.8918573e-05
        %v2171 = vadd.f32 %v2170, 0.001143296
        %v2172 = vmul.f32 %v2158, %v2171
        %v2173 = vadd.f32 %v2172, 0.014752088
        %v2174 = vmul.f32 %v2158, %v2173
        %v2175 = vadd.f32 %v2174, 0.112945676
        %v2176 = vmul.f32 %v2158, %v2175
        %v2177 = vadd.f32 %v2176, 0.4994258
        %v2178 = vmul.f32 %v2158, %v2177
        %v2179 = vadd.f32 %v2178, 1.0
        %v2180 = vrcp.pop %v2179
        %v2181 = vmul.f32 %v2179, %v2180
        %v2182 = vsub.f32 1.0, %v2181
        %v2183 = vmul.f32 %v2180, %v2182
        %v2184 = vadd.f32 %v2180, %v2183
        %vm2185 = vweird.f32 %v2179
        %vm2186 = vweird.f32 %v2180
        %vm2187 = vmor %vm2185, %vm2186
        %v2188 = vsel %vm2187, %v2180, %v2184
        %v2189 = vand.u32 2147483647, %v2179
        %vm2190 = vcmp.eq.f32.partialorder %v2189, 8.507059e+37
        %v2191 = vand.u32 %v2179, 2147483648
        %v2192 = vor.u32 1.1754944e-38, %v2191
        %v2193 = vsel %vm2190, %v2192, %v2188
        %v2194 = vmul.f32 %v2169, %v2193
        %v2195 = vmin.f32 %v2194, 1.0
        %v2196 = vmax.f32 %v2195, -1.0
        %v2197 = vmul.f32 %v1502, %v1502
        %v2198 = vmin.f32 16.0, %v2197
        %v2199 = vmul.f32 %v2198, 2.1237322e-06
        %v2200 = vadd.f32 %v2199, 0.00028619796
        %v2201 = vmul.f32 %v2198, %v2200
        %v2202 = vadd.f32 %v2201, 0.0036580483
        %v2203 = vmul.f32 %v2198, %v2202
        %v2204 = vadd.f32 %v2203, 0.05243302
        %v2205 = vmul.f32 %v2198, %v2204
        %v2206 = vadd.f32 %v2205, 0.18741608
        %v2207 = vmul.f32 %v2198, %v2206
        %v2208 = vadd.f32 %v2207, 1.1283791
        %v2209 = vmul.f32 %v1502, %v2208
        %v2210 = vmul.f32 %v2198, 3.8918573e-05
        %v2211 = vadd.f32 %v2210, 0.001143296
        %v2212 = vmul.f32 %v2198, %v2211
        %v2213 = vadd.f32 %v2212, 0.014752088
        %v2214 = vmul.f32 %v2198, %v2213
        %v2215 = vadd.f32 %v2214, 0.112945676
        %v2216 = vmul.f32 %v2198, %v2215
        %v2217 = vadd.f32 %v2216, 0.4994258
        %v2218 = vmul.f32 %v2198, %v2217
        %v2219 = vadd.f32 %v2218, 1.0
        %v2220 = vrcp.pop %v2219
        %v2221 = vmul.f32 %v2219, %v2220
        %v2222 = vsub.f32 1.0, %v2221
        %v2223 = vmul.f32 %v2220, %v2222
        %v2224 = vadd.f32 %v2220, %v2223
        %vm2225 = vweird.f32 %v2219
        %vm2226 = vweird.f32 %v2220
        %vm2227 = vmor %vm2225, %vm2226
        %v2228 = vsel %vm2227, %v2220, %v2224
        %v2229 = vand.u32 2147483647, %v2219
        %vm2230 = vcmp.eq.f32.partialorder %v2229, 8.507059e+37
        %v2231 = vand.u32 %v2219, 2147483648
        %v2232 = vor.u32 1.1754944e-38, %v2231
        %v2233 = vsel %vm2230, %v2232, %v2228
        %v2234 = vmul.f32 %v2209, %v2233
        %v2235 = vmin.f32 %v2234, 1.0
        %v2236 = vmax.f32 %v2235, -1.0
        %v2237 = vmul.f32 %v1503, %v1503
        %v2238 = vmin.f32 16.0, %v2237
        %v2239 = vmul.f32 %v2238, 2.1237322e-06
        %v2240 = vadd.f32 %v2239, 0.00028619796
        %v2241 = vmul.f32 %v2238, %v2240
        %v2242 = vadd.f32 %v2241, 0.0036580483
        %v2243 = vmul.f32 %v2238, %v2242
        %v2244 = vadd.f32 %v2243, 0.05243302
        %v2245 = vmul.f32 %v2238, %v2244
        %v2246 = vadd.f32 %v2245, 0.18741608
        %v2247 = vmul.f32 %v2238, %v2246
        %v2248 = vadd.f32 %v2247, 1.1283791
        %v2249 = vmul.f32 %v1503, %v2248
        %v2250 = vmul.f32 %v2238, 3.8918573e-05
        %v2251 = vadd.f32 %v2250, 0.001143296
        %v2252 = vmul.f32 %v2238, %v2251
        %v2253 = vadd.f32 %v2252, 0.014752088
        %v2254 = vmul.f32 %v2238, %v2253
        %v2255 = vadd.f32 %v2254, 0.112945676
        %v2256 = vmul.f32 %v2238, %v2255
        %v2257 = vadd.f32 %v2256, 0.4994258
        %v2258 = vmul.f32 %v2238, %v2257
        %v2259 = vadd.f32 %v2258, 1.0
        %v2260 = vrcp.pop %v2259
        %v2261 = vmul.f32 %v2259, %v2260
        %v2262 = vsub.f32 1.0, %v2261
        %v2263 = vmul.f32 %v2260, %v2262
        %v2264 = vadd.f32 %v2260, %v2263
        %vm2265 = vweird.f32 %v2259
        %vm2266 = vweird.f32 %v2260
        %vm2267 = vmor %vm2265, %vm2266
        %v2268 = vsel %vm2267, %v2260, %v2264
        %v2269 = vand.u32 2147483647, %v2259
        %vm2270 = vcmp.eq.f32.partialorder %v2269, 8.507059e+37
        %v2271 = vand.u32 %v2259, 2147483648
        %v2272 = vor.u32 1.1754944e-38, %v2271
        %v2273 = vsel %vm2270, %v2272, %v2268
        %v2274 = vmul.f32 %v2249, %v2273
        %v2275 = vmin.f32 %v2274, 1.0
        %v2276 = vmax.f32 %v2275, -1.0
        %v2277 = vmul.f32 %v1504, %v1504
        %v2278 = vmin.f32 16.0, %v2277
        %v2279 = vmul.f32 %v2278, 2.1237322e-06
        %v2280 = vadd.f32 %v2279, 0.00028619796
        %v2281 = vmul.f32 %v2278, %v2280
        %v2282 = vadd.f32 %v2281, 0.0036580483
        %v2283 = vmul.f32 %v2278, %v2282
        %v2284 = vadd.f32 %v2283, 0.05243302
        %v2285 = vmul.f32 %v2278, %v2284
        %v2286 = vadd.f32 %v2285, 0.18741608
        %v2287 = vmul.f32 %v2278, %v2286
        %v2288 = vadd.f32 %v2287, 1.1283791
        %v2289 = vmul.f32 %v1504, %v2288
        %v2290 = vmul.f32 %v2278, 3.8918573e-05
        %v2291 = vadd.f32 %v2290, 0.001143296
        %v2292 = vmul.f32 %v2278, %v2291
        %v2293 = vadd.f32 %v2292, 0.014752088
        %v2294 = vmul.f32 %v2278, %v2293
        %v2295 = vadd.f32 %v2294, 0.112945676
        %v2296 = vmul.f32 %v2278, %v2295
        %v2297 = vadd.f32 %v2296, 0.4994258
        %v2298 = vmul.f32 %v2278, %v2297
        %v2299 = vadd.f32 %v2298, 1.0
        %v2300 = vrcp.pop %v2299
        %v2301 = vmul.f32 %v2299, %v2300
        %v2302 = vsub.f32 1.0, %v2301
        %v2303 = vmul.f32 %v2300, %v2302
        %v2304 = vadd.f32 %v2300, %v2303
        %vm2305 = vweird.f32 %v2299
        %vm2306 = vweird.f32 %v2300
        %vm2307 = vmor %vm2305, %vm2306
        %v2308 = vsel %vm2307, %v2300, %v2304
        %v2309 = vand.u32 2147483647, %v2299
        %vm2310 = vcmp.eq.f32.partialorder %v2309, 8.507059e+37
        %v2311 = vand.u32 %v2299, 2147483648
        %v2312 = vor.u32 1.1754944e-38, %v2311
        %v2313 = vsel %vm2310, %v2312, %v2308
        %v2314 = vmul.f32 %v2289, %v2313
        %v2315 = vmin.f32 %v2314, 1.0
        %v2316 = vmax.f32 %v2315, -1.0
        %v2317 = vmul.f32 %v1505, %v1505
        %v2318 = vmin.f32 16.0, %v2317
        %v2319 = vmul.f32 %v2318, 2.1237322e-06
        %v2320 = vadd.f32 %v2319, 0.00028619796
        %v2321 = vmul.f32 %v2318, %v2320
        %v2322 = vadd.f32 %v2321, 0.0036580483
        %v2323 = vmul.f32 %v2318, %v2322
        %v2324 = vadd.f32 %v2323, 0.05243302
        %v2325 = vmul.f32 %v2318, %v2324
        %v2326 = vadd.f32 %v2325, 0.18741608
        %v2327 = vmul.f32 %v2318, %v2326
        %v2328 = vadd.f32 %v2327, 1.1283791
        %v2329 = vmul.f32 %v1505, %v2328
        %v2330 = vmul.f32 %v2318, 3.8918573e-05
        %v2331 = vadd.f32 %v2330, 0.001143296
        %v2332 = vmul.f32 %v2318, %v2331
        %v2333 = vadd.f32 %v2332, 0.014752088
        %v2334 = vmul.f32 %v2318, %v2333
        %v2335 = vadd.f32 %v2334, 0.112945676
        %v2336 = vmul.f32 %v2318, %v2335
        %v2337 = vadd.f32 %v2336, 0.4994258
        %v2338 = vmul.f32 %v2318, %v2337
        %v2339 = vadd.f32 %v2338, 1.0
        %v2340 = vrcp.pop %v2339
        %v2341 = vmul.f32 %v2339, %v2340
        %v2342 = vsub.f32 1.0, %v2341
        %v2343 = vmul.f32 %v2340, %v2342
        %v2344 = vadd.f32 %v2340, %v2343
        %vm2345 = vweird.f32 %v2339
        %vm2346 = vweird.f32 %v2340
        %vm2347 = vmor %vm2345, %vm2346
        %v2348 = vsel %vm2347, %v2340, %v2344
        %v2349 = vand.u32 2147483647, %v2339
        %vm2350 = vcmp.eq.f32.partialorder %v2349, 8.507059e+37
        %v2351 = vand.u32 %v2339, 2147483648
        %v2352 = vor.u32 1.1754944e-38, %v2351
        %v2353 = vsel %vm2350, %v2352, %v2348
        %v2354 = vmul.f32 %v2329, %v2353
        %v2355 = vmin.f32 %v2354, 1.0
        %v2356 = vmax.f32 %v2355, -1.0
        %v2357 = vmul.f32 %v1506, %v1506
        %v2358 = vmin.f32 16.0, %v2357
        %v2359 = vmul.f32 %v2358, 2.1237322e-06
        %v2360 = vadd.f32 %v2359, 0.00028619796
        %v2361 = vmul.f32 %v2358, %v2360
        %v2362 = vadd.f32 %v2361, 0.0036580483
        %v2363 = vmul.f32 %v2358, %v2362
        %v2364 = vadd.f32 %v2363, 0.05243302
        %v2365 = vmul.f32 %v2358, %v2364
        %v2366 = vadd.f32 %v2365, 0.18741608
        %v2367 = vmul.f32 %v2358, %v2366
        %v2368 = vadd.f32 %v2367, 1.1283791
        %v2369 = vmul.f32 %v1506, %v2368
        %v2370 = vmul.f32 %v2358, 3.8918573e-05
        %v2371 = vadd.f32 %v2370, 0.001143296
        %v2372 = vmul.f32 %v2358, %v2371
        %v2373 = vadd.f32 %v2372, 0.014752088
        %v2374 = vmul.f32 %v2358, %v2373
        %v2375 = vadd.f32 %v2374, 0.112945676
        %v2376 = vmul.f32 %v2358, %v2375
        %v2377 = vadd.f32 %v2376, 0.4994258
        %v2378 = vmul.f32 %v2358, %v2377
        %v2379 = vadd.f32 %v2378, 1.0
        %v2380 = vrcp.pop %v2379
        %v2381 = vmul.f32 %v2379, %v2380
        %v2382 = vsub.f32 1.0, %v2381
        %v2383 = vmul.f32 %v2380, %v2382
        %v2384 = vadd.f32 %v2380, %v2383
        %vm2385 = vweird.f32 %v2379
        %vm2386 = vweird.f32 %v2380
        %vm2387 = vmor %vm2385, %vm2386
        %v2388 = vsel %vm2387, %v2380, %v2384
        %v2389 = vand.u32 2147483647, %v2379
        %vm2390 = vcmp.eq.f32.partialorder %v2389, 8.507059e+37
        %v2391 = vand.u32 %v2379, 2147483648
        %v2392 = vor.u32 1.1754944e-38, %v2391
        %v2393 = vsel %vm2390, %v2392, %v2388
        %v2394 = vmul.f32 %v2369, %v2393
        %v2395 = vmin.f32 %v2394, 1.0
        %v2396 = vmax.f32 %v2395, -1.0
        %v2397 = vmul.f32 %v1507, %v1507
        %v2398 = vmin.f32 16.0, %v2397
        %v2399 = vmul.f32 %v2398, 2.1237322e-06
        %v2400 = vadd.f32 %v2399, 0.00028619796
        %v2401 = vmul.f32 %v2398, %v2400
        %v2402 = vadd.f32 %v2401, 0.0036580483
        %v2403 = vmul.f32 %v2398, %v2402
        %v2404 = vadd.f32 %v2403, 0.05243302
        %v2405 = vmul.f32 %v2398, %v2404
        %v2406 = vadd.f32 %v2405, 0.18741608
        %v2407 = vmul.f32 %v2398, %v2406
        %v2408 = vadd.f32 %v2407, 1.1283791
        %v2409 = vmul.f32 %v1507, %v2408
        %v2410 = vmul.f32 %v2398, 3.8918573e-05
        %v2411 = vadd.f32 %v2410, 0.001143296
        %v2412 = vmul.f32 %v2398, %v2411
        %v2413 = vadd.f32 %v2412, 0.014752088
        %v2414 = vmul.f32 %v2398, %v2413
        %v2415 = vadd.f32 %v2414, 0.112945676
        %v2416 = vmul.f32 %v2398, %v2415
        %v2417 = vadd.f32 %v2416, 0.4994258
        %v2418 = vmul.f32 %v2398, %v2417
        %v2419 = vadd.f32 %v2418, 1.0
        %v2420 = vrcp.pop %v2419
        %v2421 = vmul.f32 %v2419, %v2420
        %v2422 = vsub.f32 1.0, %v2421
        %v2423 = vmul.f32 %v2420, %v2422
        %v2424 = vadd.f32 %v2420, %v2423
        %vm2425 = vweird.f32 %v2419
        %vm2426 = vweird.f32 %v2420
        %vm2427 = vmor %vm2425, %vm2426
        %v2428 = vsel %vm2427, %v2420, %v2424
        %v2429 = vand.u32 2147483647, %v2419
        %vm2430 = vcmp.eq.f32.partialorder %v2429, 8.507059e+37
        %v2431 = vand.u32 %v2419, 2147483648
        %v2432 = vor.u32 1.1754944e-38, %v2431
        %v2433 = vsel %vm2430, %v2432, %v2428
        %v2434 = vmul.f32 %v2409, %v2433
        %v2435 = vmin.f32 %v2434, 1.0
        %v2436 = vmax.f32 %v2435, -1.0
        %v2437 = vmul.f32 %v1508, %v1508
        %v2438 = vmin.f32 16.0, %v2437
        %v2439 = vmul.f32 %v2438, 2.1237322e-06
        %v2440 = vadd.f32 %v2439, 0.00028619796
        %v2441 = vmul.f32 %v2438, %v2440
        %v2442 = vadd.f32 %v2441, 0.0036580483
        %v2443 = vmul.f32 %v2438, %v2442
        %v2444 = vadd.f32 %v2443, 0.05243302
        %v2445 = vmul.f32 %v2438, %v2444
        %v2446 = vadd.f32 %v2445, 0.18741608
        %v2447 = vmul.f32 %v2438, %v2446
        %v2448 = vadd.f32 %v2447, 1.1283791
        %v2449 = vmul.f32 %v1508, %v2448
        %v2450 = vmul.f32 %v2438, 3.8918573e-05
        %v2451 = vadd.f32 %v2450, 0.001143296
        %v2452 = vmul.f32 %v2438, %v2451
        %v2453 = vadd.f32 %v2452, 0.014752088
        %v2454 = vmul.f32 %v2438, %v2453
        %v2455 = vadd.f32 %v2454, 0.112945676
        %v2456 = vmul.f32 %v2438, %v2455
        %v2457 = vadd.f32 %v2456, 0.4994258
        %v2458 = vmul.f32 %v2438, %v2457
        %v2459 = vadd.f32 %v2458, 1.0
        %v2460 = vrcp.pop %v2459
        %v2461 = vmul.f32 %v2459, %v2460
        %v2462 = vsub.f32 1.0, %v2461
        %v2463 = vmul.f32 %v2460, %v2462
        %v2464 = vadd.f32 %v2460, %v2463
        %vm2465 = vweird.f32 %v2459
        %vm2466 = vweird.f32 %v2460
        %vm2467 = vmor %vm2465, %vm2466
        %v2468 = vsel %vm2467, %v2460, %v2464
        %v2469 = vand.u32 2147483647, %v2459
        %vm2470 = vcmp.eq.f32.partialorder %v2469, 8.507059e+37
        %v2471 = vand.u32 %v2459, 2147483648
        %v2472 = vor.u32 1.1754944e-38, %v2471
        %v2473 = vsel %vm2470, %v2472, %v2468
        %v2474 = vmul.f32 %v2449, %v2473
        %v2475 = vmin.f32 %v2474, 1.0
        %v2476 = vmax.f32 %v2475, -1.0
        %v2477 = vmul.f32 %v1509, %v1509
        %v2478 = vmin.f32 16.0, %v2477
        %v2479 = vmul.f32 %v2478, 2.1237322e-06
        %v2480 = vadd.f32 %v2479, 0.00028619796
        %v2481 = vmul.f32 %v2478, %v2480
        %v2482 = vadd.f32 %v2481, 0.0036580483
        %v2483 = vmul.f32 %v2478, %v2482
        %v2484 = vadd.f32 %v2483, 0.05243302
        %v2485 = vmul.f32 %v2478, %v2484
        %v2486 = vadd.f32 %v2485, 0.18741608
        %v2487 = vmul.f32 %v2478, %v2486
        %v2488 = vadd.f32 %v2487, 1.1283791
        %v2489 = vmul.f32 %v1509, %v2488
        %v2490 = vmul.f32 %v2478, 3.8918573e-05
        %v2491 = vadd.f32 %v2490, 0.001143296
        %v2492 = vmul.f32 %v2478, %v2491
        %v2493 = vadd.f32 %v2492, 0.014752088
        %v2494 = vmul.f32 %v2478, %v2493
        %v2495 = vadd.f32 %v2494, 0.112945676
        %v2496 = vmul.f32 %v2478, %v2495
        %v2497 = vadd.f32 %v2496, 0.4994258
        %v2498 = vmul.f32 %v2478, %v2497
        %v2499 = vadd.f32 %v2498, 1.0
        %v2500 = vrcp.pop %v2499
        %v2501 = vmul.f32 %v2499, %v2500
        %v2502 = vsub.f32 1.0, %v2501
        %v2503 = vmul.f32 %v2500, %v2502
        %v2504 = vadd.f32 %v2500, %v2503
        %vm2505 = vweird.f32 %v2499
        %vm2506 = vweird.f32 %v2500
        %vm2507 = vmor %vm2505, %vm2506
        %v2508 = vsel %vm2507, %v2500, %v2504
        %v2509 = vand.u32 2147483647, %v2499
        %vm2510 = vcmp.eq.f32.partialorder %v2509, 8.507059e+37
        %v2511 = vand.u32 %v2499, 2147483648
        %v2512 = vor.u32 1.1754944e-38, %v2511
        %v2513 = vsel %vm2510, %v2512, %v2508
        %v2514 = vmul.f32 %v2489, %v2513
        %v2515 = vmin.f32 %v2514, 1.0
        %v2516 = vmax.f32 %v2515, -1.0
        %v2517 = vmul.f32 %v1510, %v1510
        %v2518 = vmin.f32 16.0, %v2517
        %v2519 = vmul.f32 %v2518, 2.1237322e-06
        %v2520 = vadd.f32 %v2519, 0.00028619796
        %v2521 = vmul.f32 %v2518, %v2520
        %v2522 = vadd.f32 %v2521, 0.0036580483
        %v2523 = vmul.f32 %v2518, %v2522
        %v2524 = vadd.f32 %v2523, 0.05243302
        %v2525 = vmul.f32 %v2518, %v2524
        %v2526 = vadd.f32 %v2525, 0.18741608
        %v2527 = vmul.f32 %v2518, %v2526
        %v2528 = vadd.f32 %v2527, 1.1283791
        %v2529 = vmul.f32 %v1510, %v2528
        %v2530 = vmul.f32 %v2518, 3.8918573e-05
        %v2531 = vadd.f32 %v2530, 0.001143296
        %v2532 = vmul.f32 %v2518, %v2531
        %v2533 = vadd.f32 %v2532, 0.014752088
        %v2534 = vmul.f32 %v2518, %v2533
        %v2535 = vadd.f32 %v2534, 0.112945676
        %v2536 = vmul.f32 %v2518, %v2535
        %v2537 = vadd.f32 %v2536, 0.4994258
        %v2538 = vmul.f32 %v2518, %v2537
        %v2539 = vadd.f32 %v2538, 1.0
        %v2540 = vrcp.pop %v2539
        %v2541 = vmul.f32 %v2539, %v2540
        %v2542 = vsub.f32 1.0, %v2541
        %v2543 = vmul.f32 %v2540, %v2542
        %v2544 = vadd.f32 %v2540, %v2543
        %vm2545 = vweird.f32 %v2539
        %vm2546 = vweird.f32 %v2540
        %vm2547 = vmor %vm2545, %vm2546
        %v2548 = vsel %vm2547, %v2540, %v2544
        %v2549 = vand.u32 2147483647, %v2539
        %vm2550 = vcmp.eq.f32.partialorder %v2549, 8.507059e+37
        %v2551 = vand.u32 %v2539, 2147483648
        %v2552 = vor.u32 1.1754944e-38, %v2551
        %v2553 = vsel %vm2550, %v2552, %v2548
        %v2554 = vmul.f32 %v2529, %v2553
        %v2555 = vmin.f32 %v2554, 1.0
        %v2556 = vmax.f32 %v2555, -1.0
        %v2557 = vmul.f32 %v1511, %v1511
        %v2558 = vmin.f32 16.0, %v2557
        %v2559 = vmul.f32 %v2558, 2.1237322e-06
        %v2560 = vadd.f32 %v2559, 0.00028619796
        %v2561 = vmul.f32 %v2558, %v2560
        %v2562 = vadd.f32 %v2561, 0.0036580483
        %v2563 = vmul.f32 %v2558, %v2562
        %v2564 = vadd.f32 %v2563, 0.05243302
        %v2565 = vmul.f32 %v2558, %v2564
        %v2566 = vadd.f32 %v2565, 0.18741608
        %v2567 = vmul.f32 %v2558, %v2566
        %v2568 = vadd.f32 %v2567, 1.1283791
        %v2569 = vmul.f32 %v1511, %v2568
        %v2570 = vmul.f32 %v2558, 3.8918573e-05
        %v2571 = vadd.f32 %v2570, 0.001143296
        %v2572 = vmul.f32 %v2558, %v2571
        %v2573 = vadd.f32 %v2572, 0.014752088
        %v2574 = vmul.f32 %v2558, %v2573
        %v2575 = vadd.f32 %v2574, 0.112945676
        %v2576 = vmul.f32 %v2558, %v2575
        %v2577 = vadd.f32 %v2576, 0.4994258
        %v2578 = vmul.f32 %v2558, %v2577
        %v2579 = vadd.f32 %v2578, 1.0
        %v2580 = vrcp.pop %v2579
        %v2581 = vmul.f32 %v2579, %v2580
        %v2582 = vsub.f32 1.0, %v2581
        %v2583 = vmul.f32 %v2580, %v2582
        %v2584 = vadd.f32 %v2580, %v2583
        %vm2585 = vweird.f32 %v2579
        %vm2586 = vweird.f32 %v2580
        %vm2587 = vmor %vm2585, %vm2586
        %v2588 = vsel %vm2587, %v2580, %v2584
        %v2589 = vand.u32 2147483647, %v2579
        %vm2590 = vcmp.eq.f32.partialorder %v2589, 8.507059e+37
        %v2591 = vand.u32 %v2579, 2147483648
        %v2592 = vor.u32 1.1754944e-38, %v2591
        %v2593 = vsel %vm2590, %v2592, %v2588
        %v2594 = vmul.f32 %v2569, %v2593
        %v2595 = vmin.f32 %v2594, 1.0
        %v2596 = vmax.f32 %v2595, -1.0
        %v2597 = vmul.f32 %v1512, %v1512
        %v2598 = vmin.f32 16.0, %v2597
        %v2599 = vmul.f32 %v2598, 2.1237322e-06
        %v2600 = vadd.f32 %v2599, 0.00028619796
        %v2601 = vmul.f32 %v2598, %v2600
        %v2602 = vadd.f32 %v2601, 0.0036580483
        %v2603 = vmul.f32 %v2598, %v2602
        %v2604 = vadd.f32 %v2603, 0.05243302
        %v2605 = vmul.f32 %v2598, %v2604
        %v2606 = vadd.f32 %v2605, 0.18741608
        %v2607 = vmul.f32 %v2598, %v2606
        %v2608 = vadd.f32 %v2607, 1.1283791
        %v2609 = vmul.f32 %v1512, %v2608
        %v2610 = vmul.f32 %v2598, 3.8918573e-05
        %v2611 = vadd.f32 %v2610, 0.001143296
        %v2612 = vmul.f32 %v2598, %v2611
        %v2613 = vadd.f32 %v2612, 0.014752088
        %v2614 = vmul.f32 %v2598, %v2613
        %v2615 = vadd.f32 %v2614, 0.112945676
        %v2616 = vmul.f32 %v2598, %v2615
        %v2617 = vadd.f32 %v2616, 0.4994258
        %v2618 = vmul.f32 %v2598, %v2617
        %v2619 = vadd.f32 %v2618, 1.0
        %v2620 = vrcp.pop %v2619
        %v2621 = vmul.f32 %v2619, %v2620
        %v2622 = vsub.f32 1.0, %v2621
        %v2623 = vmul.f32 %v2620, %v2622
        %v2624 = vadd.f32 %v2620, %v2623
        %vm2625 = vweird.f32 %v2619
        %vm2626 = vweird.f32 %v2620
        %vm2627 = vmor %vm2625, %vm2626
        %v2628 = vsel %vm2627, %v2620, %v2624
        %v2629 = vand.u32 2147483647, %v2619
        %vm2630 = vcmp.eq.f32.partialorder %v2629, 8.507059e+37
        %v2631 = vand.u32 %v2619, 2147483648
        %v2632 = vor.u32 1.1754944e-38, %v2631
        %v2633 = vsel %vm2630, %v2632, %v2628
        %v2634 = vmul.f32 %v2609, %v2633
        %v2635 = vmin.f32 %v2634, 1.0
        %v2636 = vmax.f32 %v2635, -1.0
        %v2637 = vmul.f32 %v1513, %v1513
        %v2638 = vmin.f32 16.0, %v2637
        %v2639 = vmul.f32 %v2638, 2.1237322e-06
        %v2640 = vadd.f32 %v2639, 0.00028619796
        %v2641 = vmul.f32 %v2638, %v2640
        %v2642 = vadd.f32 %v2641, 0.0036580483
        %v2643 = vmul.f32 %v2638, %v2642
        %v2644 = vadd.f32 %v2643, 0.05243302
        %v2645 = vmul.f32 %v2638, %v2644
        %v2646 = vadd.f32 %v2645, 0.18741608
        %v2647 = vmul.f32 %v2638, %v2646
        %v2648 = vadd.f32 %v2647, 1.1283791
        %v2649 = vmul.f32 %v1513, %v2648
        %v2650 = vmul.f32 %v2638, 3.8918573e-05
        %v2651 = vadd.f32 %v2650, 0.001143296
        %v2652 = vmul.f32 %v2638, %v2651
        %v2653 = vadd.f32 %v2652, 0.014752088
        %v2654 = vmul.f32 %v2638, %v2653
        %v2655 = vadd.f32 %v2654, 0.112945676
        %v2656 = vmul.f32 %v2638, %v2655
        %v2657 = vadd.f32 %v2656, 0.4994258
        %v2658 = vmul.f32 %v2638, %v2657
        %v2659 = vadd.f32 %v2658, 1.0
        %v2660 = vrcp.pop %v2659
        %v2661 = vmul.f32 %v2659, %v2660
        %v2662 = vsub.f32 1.0, %v2661
        %v2663 = vmul.f32 %v2660, %v2662
        %v2664 = vadd.f32 %v2660, %v2663
        %vm2665 = vweird.f32 %v2659
        %vm2666 = vweird.f32 %v2660
        %vm2667 = vmor %vm2665, %vm2666
        %v2668 = vsel %vm2667, %v2660, %v2664
        %v2669 = vand.u32 2147483647, %v2659
        %vm2670 = vcmp.eq.f32.partialorder %v2669, 8.507059e+37
        %v2671 = vand.u32 %v2659, 2147483648
        %v2672 = vor.u32 1.1754944e-38, %v2671
        %v2673 = vsel %vm2670, %v2672, %v2668
        %v2674 = vmul.f32 %v2649, %v2673
        %v2675 = vmin.f32 %v2674, 1.0
        %v2676 = vmax.f32 %v2675, -1.0
        %v2677 = vmul.f32 %v1514, %v1514
        %v2678 = vmin.f32 16.0, %v2677
        %v2679 = vmul.f32 %v2678, 2.1237322e-06
        %v2680 = vadd.f32 %v2679, 0.00028619796
        %v2681 = vmul.f32 %v2678, %v2680
        %v2682 = vadd.f32 %v2681, 0.0036580483
        %v2683 = vmul.f32 %v2678, %v2682
        %v2684 = vadd.f32 %v2683, 0.05243302
        %v2685 = vmul.f32 %v2678, %v2684
        %v2686 = vadd.f32 %v2685, 0.18741608
        %v2687 = vmul.f32 %v2678, %v2686
        %v2688 = vadd.f32 %v2687, 1.1283791
        %v2689 = vmul.f32 %v1514, %v2688
        %v2690 = vmul.f32 %v2678, 3.8918573e-05
        %v2691 = vadd.f32 %v2690, 0.001143296
        %v2692 = vmul.f32 %v2678, %v2691
        %v2693 = vadd.f32 %v2692, 0.014752088
        %v2694 = vmul.f32 %v2678, %v2693
        %v2695 = vadd.f32 %v2694, 0.112945676
        %v2696 = vmul.f32 %v2678, %v2695
        %v2697 = vadd.f32 %v2696, 0.4994258
        %v2698 = vmul.f32 %v2678, %v2697
        %v2699 = vadd.f32 %v2698, 1.0
        %v2700 = vrcp.pop %v2699
        %v2701 = vmul.f32 %v2699, %v2700
        %v2702 = vsub.f32 1.0, %v2701
        %v2703 = vmul.f32 %v2700, %v2702
        %v2704 = vadd.f32 %v2700, %v2703
        %vm2705 = vweird.f32 %v2699
        %vm2706 = vweird.f32 %v2700
        %vm2707 = vmor %vm2705, %vm2706
        %v2708 = vsel %vm2707, %v2700, %v2704
        %v2709 = vand.u32 2147483647, %v2699
        %vm2710 = vcmp.eq.f32.partialorder %v2709, 8.507059e+37
        %v2711 = vand.u32 %v2699, 2147483648
        %v2712 = vor.u32 1.1754944e-38, %v2711
        %v2713 = vsel %vm2710, %v2712, %v2708
        %v2714 = vmul.f32 %v2689, %v2713
        %v2715 = vmin.f32 %v2714, 1.0
        %v2716 = vmax.f32 %v2715, -1.0
        %v2717 = vmul.f32 %v1515, %v1515
        %v2718 = vmin.f32 16.0, %v2717
        %v2719 = vmul.f32 %v2718, 2.1237322e-06
        %v2720 = vadd.f32 %v2719, 0.00028619796
        %v2721 = vmul.f32 %v2718, %v2720
        %v2722 = vadd.f32 %v2721, 0.0036580483
        %v2723 = vmul.f32 %v2718, %v2722
        %v2724 = vadd.f32 %v2723, 0.05243302
        %v2725 = vmul.f32 %v2718, %v2724
        %v2726 = vadd.f32 %v2725, 0.18741608
        %v2727 = vmul.f32 %v2718, %v2726
        %v2728 = vadd.f32 %v2727, 1.1283791
        %v2729 = vmul.f32 %v1515, %v2728
        %v2730 = vmul.f32 %v2718, 3.8918573e-05
        %v2731 = vadd.f32 %v2730, 0.001143296
        %v2732 = vmul.f32 %v2718, %v2731
        %v2733 = vadd.f32 %v2732, 0.014752088
        %v2734 = vmul.f32 %v2718, %v2733
        %v2735 = vadd.f32 %v2734, 0.112945676
        %v2736 = vmul.f32 %v2718, %v2735
        %v2737 = vadd.f32 %v2736, 0.4994258
        %v2738 = vmul.f32 %v2718, %v2737
        %v2739 = vadd.f32 %v2738, 1.0
        %v2740 = vrcp.pop %v2739
        %v2741 = vmul.f32 %v2739, %v2740
        %v2742 = vsub.f32 1.0, %v2741
        %v2743 = vmul.f32 %v2740, %v2742
        %v2744 = vadd.f32 %v2740, %v2743
        %vm2745 = vweird.f32 %v2739
        %vm2746 = vweird.f32 %v2740
        %vm2747 = vmor %vm2745, %vm2746
        %v2748 = vsel %vm2747, %v2740, %v2744
        %v2749 = vand.u32 2147483647, %v2739
        %vm2750 = vcmp.eq.f32.partialorder %v2749, 8.507059e+37
        %v2751 = vand.u32 %v2739, 2147483648
        %v2752 = vor.u32 1.1754944e-38, %v2751
        %v2753 = vsel %vm2750, %v2752, %v2748
        %v2754 = vmul.f32 %v2729, %v2753
        %v2755 = vmin.f32 %v2754, 1.0
        %v2756 = vmax.f32 %v2755, -1.0
        %v2757 = vmul.f32 %v1516, %v1516
        %v2758 = vmin.f32 16.0, %v2757
        %v2759 = vmul.f32 %v2758, 2.1237322e-06
        %v2760 = vadd.f32 %v2759, 0.00028619796
        %v2761 = vmul.f32 %v2758, %v2760
        %v2762 = vadd.f32 %v2761, 0.0036580483
        %v2763 = vmul.f32 %v2758, %v2762
        %v2764 = vadd.f32 %v2763, 0.05243302
        %v2765 = vmul.f32 %v2758, %v2764
        %v2766 = vadd.f32 %v2765, 0.18741608
        %v2767 = vmul.f32 %v2758, %v2766
        %v2768 = vadd.f32 %v2767, 1.1283791
        %v2769 = vmul.f32 %v1516, %v2768
        %v2770 = vmul.f32 %v2758, 3.8918573e-05
        %v2771 = vadd.f32 %v2770, 0.001143296
        %v2772 = vmul.f32 %v2758, %v2771
        %v2773 = vadd.f32 %v2772, 0.014752088
        %v2774 = vmul.f32 %v2758, %v2773
        %v2775 = vadd.f32 %v2774, 0.112945676
        %v2776 = vmul.f32 %v2758, %v2775
        %v2777 = vadd.f32 %v2776, 0.4994258
        %v2778 = vmul.f32 %v2758, %v2777
        %v2779 = vadd.f32 %v2778, 1.0
        %v2780 = vrcp.pop %v2779
        %v2781 = vmul.f32 %v2779, %v2780
        %v2782 = vsub.f32 1.0, %v2781
        %v2783 = vmul.f32 %v2780, %v2782
        %v2784 = vadd.f32 %v2780, %v2783
        %vm2785 = vweird.f32 %v2779
        %vm2786 = vweird.f32 %v2780
        %vm2787 = vmor %vm2785, %vm2786
        %v2788 = vsel %vm2787, %v2780, %v2784
        %v2789 = vand.u32 2147483647, %v2779
        %vm2790 = vcmp.eq.f32.partialorder %v2789, 8.507059e+37
        %v2791 = vand.u32 %v2779, 2147483648
        %v2792 = vor.u32 1.1754944e-38, %v2791
        %v2793 = vsel %vm2790, %v2792, %v2788
        %v2794 = vmul.f32 %v2769, %v2793
        %v2795 = vmin.f32 %v2794, 1.0
        %v2796 = vmax.f32 %v2795, -1.0
        %v2797 = vadd.f32 %v1556, 1.0
        %v2798 = vadd.f32 %v1596, 1.0
        %v2799 = vadd.f32 %v1636, 1.0
        %v2800 = vadd.f32 %v1676, 1.0
        %v2801 = vadd.f32 %v1716, 1.0
        %v2802 = vadd.f32 %v1756, 1.0
        %v2803 = vadd.f32 %v1796, 1.0
        %v2804 = vadd.f32 %v1836, 1.0
        %v2805 = vadd.f32 %v1876, 1.0
        %v2806 = vadd.f32 %v1916, 1.0
        %v2807 = vadd.f32 %v1956, 1.0
        %v2808 = vadd.f32 %v1996, 1.0
        %v2809 = vadd.f32 %v2036, 1.0
        %v2810 = vadd.f32 %v2076, 1.0
        %v2811 = vadd.f32 %v2116, 1.0
        %v2812 = vadd.f32 %v2156, 1.0
        %v2813 = vadd.f32 %v2196, 1.0
        %v2814 = vadd.f32 %v2236, 1.0
        %v2815 = vadd.f32 %v2276, 1.0
        %v2816 = vadd.f32 %v2316, 1.0
        %v2817 = vadd.f32 %v2356, 1.0
        %v2818 = vadd.f32 %v2396, 1.0
        %v2819 = vadd.f32 %v2436, 1.0
        %v2820 = vadd.f32 %v2476, 1.0
        %v2821 = vadd.f32 %v2516, 1.0
        %v2822 = vadd.f32 %v2556, 1.0
        %v2823 = vadd.f32 %v2596, 1.0
        %v2824 = vadd.f32 %v2636, 1.0
        %v2825 = vadd.f32 %v2676, 1.0
        %v2826 = vadd.f32 %v2716, 1.0
        %v2827 = vadd.f32 %v2756, 1.0
        %v2828 = vadd.f32 %v2796, 1.0
        %v2829 = vmul.f32 %v1453, %v2797
        %v2830 = vmul.f32 %v1454, %v2798
        %v2831 = vmul.f32 %v1455, %v2799
        %v2832 = vmul.f32 %v1456, %v2800
        %v2833 = vmul.f32 %v1457, %v2801
        %v2834 = vmul.f32 %v1458, %v2802
        %v2835 = vmul.f32 %v1459, %v2803
        %v2836 = vmul.f32 %v1460, %v2804
        %v2837 = vmul.f32 %v1461, %v2805
        %v2838 = vmul.f32 %v1462, %v2806
        %v2839 = vmul.f32 %v1463, %v2807
        %v2840 = vmul.f32 %v1464, %v2808
        %v2841 = vmul.f32 %v1465, %v2809
        %v2842 = vmul.f32 %v1466, %v2810
        %v2843 = vmul.f32 %v1467, %v2811
        %v2844 = vmul.f32 %v1468, %v2812
        %v2845 = vmul.f32 %v1469, %v2813
        %v2846 = vmul.f32 %v1470, %v2814
        %v2847 = vmul.f32 %v1471, %v2815
        %v2848 = vmul.f32 %v1472, %v2816
        %v2849 = vmul.f32 %v1473, %v2817
        %v2850 = vmul.f32 %v1474, %v2818
        %v2851 = vmul.f32 %v1475, %v2819
        %v2852 = vmul.f32 %v1476, %v2820
        %v2853 = vmul.f32 %v1477, %v2821
        %v2854 = vmul.f32 %v1478, %v2822
        %v2855 = vmul.f32 %v1479, %v2823
        %v2856 = vmul.f32 %v1480, %v2824
        %v2857 = vmul.f32 %v1481, %v2825
        %v2858 = vmul.f32 %v1482, %v2826
        %v2859 = vmul.f32 %v1483, %v2827
        %v2860 = vmul.f32 %v1484, %v2828
        %2862 = vset.pattern.permute.xlu0 0
        %2863 = vperm.xlu0 %2862, %v503
        %v2864 = vpop.permute.xlu0 %2863
        %2867 = vset.pattern.permute.xlu0 0
        %2868 = vperm.xlu0 %2867, %v504
        %v2869 = vpop.permute.xlu0 %2868
        %2872 = vset.pattern.permute.xlu0 0
        %2873 = vperm.xlu0 %2872, %v505
        %v2874 = vpop.permute.xlu0 %2873
        %2877 = vset.pattern.permute.xlu0 0
        %2878 = vperm.xlu0 %2877, %v506
        %v2879 = vpop.permute.xlu0 %2878
        %2882 = vset.pattern.permute.xlu0 0
        %2883 = vperm.xlu0 %2882, %v507
        %v2884 = vpop.permute.xlu0 %2883
        %2887 = vset.pattern.permute.xlu0 0
        %2888 = vperm.xlu0 %2887, %v508
        %v2889 = vpop.permute.xlu0 %2888
        %2892 = vset.pattern.permute.xlu0 0
        %2893 = vperm.xlu0 %2892, %v509
        %v2894 = vpop.permute.xlu0 %2893
        %2897 = vset.pattern.permute.xlu0 0
        %2898 = vperm.xlu0 %2897, %v510
        %v2899 = vpop.permute.xlu0 %2898
        %2902 = vset.pattern.permute.xlu0 0
        %2903 = vperm.xlu0 %2902, %v511
        %v2904 = vpop.permute.xlu0 %2903
        %2907 = vset.pattern.permute.xlu0 0
        %2908 = vperm.xlu0 %2907, %v512
        %v2909 = vpop.permute.xlu0 %2908
        %2912 = vset.pattern.permute.xlu0 0
        %2913 = vperm.xlu0 %2912, %v513
        %v2914 = vpop.permute.xlu0 %2913
        %2917 = vset.pattern.permute.xlu0 0
        %2918 = vperm.xlu0 %2917, %v514
        %v2919 = vpop.permute.xlu0 %2918
        %2922 = vset.pattern.permute.xlu0 0
        %2923 = vperm.xlu0 %2922, %v515
        %v2924 = vpop.permute.xlu0 %2923
        %2927 = vset.pattern.permute.xlu0 0
        %2928 = vperm.xlu0 %2927, %v516
        %v2929 = vpop.permute.xlu0 %2928
        %2932 = vset.pattern.permute.xlu0 0
        %2933 = vperm.xlu0 %2932, %v517
        %v2934 = vpop.permute.xlu0 %2933
        %2937 = vset.pattern.permute.xlu0 0
        %2938 = vperm.xlu0 %2937, %v518
        %v2939 = vpop.permute.xlu0 %2938
        %v2941 = vmul.f32 %v2830, %v2864
        %v2942 = vmul.f32 %v2832, %v2869
        %v2943 = vmul.f32 %v2834, %v2874
        %v2944 = vmul.f32 %v2836, %v2879
        %v2945 = vmul.f32 %v2838, %v2884
        %v2946 = vmul.f32 %v2840, %v2889
        %v2947 = vmul.f32 %v2842, %v2894
        %v2948 = vmul.f32 %v2844, %v2899
        %v2949 = vmul.f32 %v2846, %v2904
        %v2950 = vmul.f32 %v2848, %v2909
        %v2951 = vmul.f32 %v2850, %v2914
        %v2952 = vmul.f32 %v2852, %v2919
        %v2953 = vmul.f32 %v2854, %v2924
        %v2954 = vmul.f32 %v2856, %v2929
        %v2955 = vmul.f32 %v2858, %v2934
        %v2956 = vmul.f32 %v2860, %v2939
        %v2957 = vadd.f32 %v2941, %v2942
        %v2958 = vadd.f32 %v2957, %v2943
        %v2959 = vadd.f32 %v2958, %v2944
        %v2960 = vadd.f32 %v2959, %v2945
        %v2961 = vadd.f32 %v2960, %v2946
        %v2962 = vadd.f32 %v2961, %v2947
        %v2963 = vadd.f32 %v2962, %v2948
        %v2964 = vadd.f32 %v2963, %v2949
        %v2965 = vadd.f32 %v2964, %v2950
        %v2966 = vadd.f32 %v2965, %v2951
        %v2967 = vadd.f32 %v2966, %v2952
        %v2968 = vadd.f32 %v2967, %v2953
        %v2969 = vadd.f32 %v2968, %v2954
        %v2970 = vadd.f32 %v2969, %v2955
        %v2971 = vadd.f32 %v2970, %v2956
        %v2972 = vrot.slane %v2971, 4
        %v2973 = vadd.f32 %v2971, %v2972
        %v2974 = vrot.slane %v2973, 2
        %v2975 = vadd.f32 %v2973, %v2974
        %v2976 = vrot.slane %v2975, 1
        %v2977 = vadd.f32 %v2975, %v2976
        %vm2978 = vcmask 7168
        %v2979 = vsel %vm2978, %v503, 0.0
        %v2980 = vsel %vm2978, %v504, 0.0
        %v2981 = vadd.f32 %v2979, %v2980
        %v2982 = vsel %vm2978, %v505, 0.0
        %v2983 = vadd.f32 %v2981, %v2982
        %v2984 = vsel %vm2978, %v506, 0.0
        %v2985 = vadd.f32 %v2983, %v2984
        %v2986 = vsel %vm2978, %v507, 0.0
        %v2987 = vadd.f32 %v2985, %v2986
        %v2988 = vsel %vm2978, %v508, 0.0
        %v2989 = vadd.f32 %v2987, %v2988
        %v2990 = vsel %vm2978, %v509, 0.0
        %v2991 = vadd.f32 %v2989, %v2990
        %v2992 = vsel %vm2978, %v510, 0.0
        %v2993 = vadd.f32 %v2991, %v2992
        %v2994 = vsel %vm2978, %v511, 0.0
        %v2995 = vadd.f32 %v2993, %v2994
        %v2996 = vsel %vm2978, %v512, 0.0
        %v2997 = vadd.f32 %v2995, %v2996
        %v2998 = vsel %vm2978, %v513, 0.0
        %v2999 = vadd.f32 %v2997, %v2998
        %v3000 = vsel %vm2978, %v514, 0.0
        %v3001 = vadd.f32 %v2999, %v3000
        %v3002 = vsel %vm2978, %v515, 0.0
        %v3003 = vadd.f32 %v3001, %v3002
        %v3004 = vsel %vm2978, %v516, 0.0
        %v3005 = vadd.f32 %v3003, %v3004
        %v3006 = vsel %vm2978, %v517, 0.0
        %v3007 = vadd.f32 %v3005, %v3006
        %v3008 = vsel %vm2978, %v518, 0.0
        %v3009 = vadd.f32 %v3007, %v3008
        %v3010 = vrot.slane %v3009, 4
        %v3011 = vadd.f32 %v3009, %v3010
        %v3012 = vrot.slane %v3011, 2
        %v3013 = vadd.f32 %v3011, %v3012
        %v3014 = vrot.slane %v3013, 1
        %v3015 = vadd.f32 %v3013, %v3014
        %3017 = vset.pattern.permute.xlu0 0
        %3018 = vperm.xlu0 %3017, %v3015
        %v3019 = vpop.permute.xlu0 %3018
        %v3021 = vrcp.pop %v3019
        %v3022 = vmul.f32 %v3019, %v3021
        %v3023 = vsub.f32 1.0, %v3022
        %v3024 = vmul.f32 %v3021, %v3023
        %v3025 = vadd.f32 %v3021, %v3024
        %vm3026 = vweird.f32 %v3019
        %vm3027 = vweird.f32 %v3021
        %vm3028 = vmor %vm3026, %vm3027
        %v3029 = vsel %vm3028, %v3021, %v3025
        %v3030 = vand.u32 2147483647, %v3019
        %vm3031 = vcmp.eq.f32.partialorder %v3030, 8.507059e+37
        %v3032 = vand.u32 %v3019, 2147483648
        %v3033 = vor.u32 1.1754944e-38, %v3032
        %v3034 = vsel %vm3031, %v3033, %v3029
        %v3035 = vmul.f32 %v2977, %v3034
        %v3036 = vld [vmem:[#allocation5] sm:$0xf]
        %v3037 = vld [vmem:[#allocation5 + $0x4] sm:$0xf]
        %v3038 = vld [vmem:[#allocation5 + $0x8] sm:$0xf]
        %v3039 = vld [vmem:[#allocation5 + $0xc] sm:$0xf]
        %v3040 = vld [vmem:[#allocation5 + $0x10] sm:$0xf]
        %v3041 = vld [vmem:[#allocation5 + $0x14] sm:$0xf]
        %v3042 = vld [vmem:[#allocation5 + $0x18] sm:$0xf]
        %v3043 = vld [vmem:[#allocation5 + $0x1c] sm:$0xf]
        %v3044 = vld [vmem:[#allocation5 + $0x20] sm:$0xf]
        %v3045 = vld [vmem:[#allocation5 + $0x24] sm:$0xf]
        %v3046 = vld [vmem:[#allocation5 + $0x28] sm:$0xf]
        %v3047 = vld [vmem:[#allocation5 + $0x2c] sm:$0xf]
        %v3048 = vld [vmem:[#allocation5 + $0x30] sm:$0xf]
        %v3049 = vld [vmem:[#allocation5 + $0x34] sm:$0xf]
        %v3050 = vld [vmem:[#allocation5 + $0x38] sm:$0xf]
        %v3051 = vld [vmem:[#allocation5 + $0x3c] sm:$0xf]
        %v3052 = vld [vmem:[#allocation5 + $0x40] sm:$0xf]
        %v3053 = vld [vmem:[#allocation5 + $0x44] sm:$0xf]
        %v3054 = vld [vmem:[#allocation5 + $0x48] sm:$0xf]
        %v3055 = vld [vmem:[#allocation5 + $0x4c] sm:$0xf]
        %v3056 = vld [vmem:[#allocation5 + $0x50] sm:$0xf]
        %v3057 = vld [vmem:[#allocation5 + $0x54] sm:$0xf]
        %v3058 = vld [vmem:[#allocation5 + $0x58] sm:$0xf]
        %v3059 = vld [vmem:[#allocation5 + $0x5c] sm:$0xf]
        %v3060 = vld [vmem:[#allocation5 + $0x60] sm:$0xf]
        %v3061 = vld [vmem:[#allocation5 + $0x64] sm:$0xf]
        %v3062 = vld [vmem:[#allocation5 + $0x68] sm:$0xf]
        %v3063 = vld [vmem:[#allocation5 + $0x6c] sm:$0xf]
        %v3064 = vld [vmem:[#allocation5 + $0x70] sm:$0xf]
        %v3065 = vld [vmem:[#allocation5 + $0x74] sm:$0xf]
        %v3066 = vld [vmem:[#allocation5 + $0x78] sm:$0xf]
        %v3067 = vld [vmem:[#allocation5 + $0x7c] sm:$0xf]
        %v3068 = vpack.c.bf16 %v2831, %v2829
        %v3069 = vpack.c.bf16 %v2835, %v2833
        %v3070 = vpack.c.bf16 %v2839, %v2837
        %v3071 = vpack.c.bf16 %v2843, %v2841
        %v3072 = vpack.c.bf16 %v2847, %v2845
        %v3073 = vpack.c.bf16 %v2851, %v2849
        %v3074 = vpack.c.bf16 %v2855, %v2853
        %v3075 = vpack.c.bf16 %v2859, %v2857
        %v3076 = vpack.c.bf16 %v3035, %v3035
        %v3093 = vunpack.c.l.b16 %v3052
        %v3094 = vunpack.c.l.b16 %v3053
        %v3095 = vunpack.c.l.b16 %v3054
        %v3096 = vunpack.c.l.b16 %v3055
        %v3097 = vunpack.c.l.b16 %v3056
        %v3098 = vunpack.c.l.b16 %v3057
        %v3099 = vunpack.c.l.b16 %v3058
        %v3100 = vunpack.c.l.b16 %v3059
        %v3101 = vunpack.c.l.b16 %v3060
        %v3102 = vunpack.c.l.b16 %v3061
        %v3103 = vunpack.c.l.b16 %v3062
        %v3104 = vunpack.c.l.b16 %v3063
        %v3105 = vunpack.c.l.b16 %v3064
        %v3106 = vunpack.c.l.b16 %v3065
        %v3107 = vunpack.c.l.b16 %v3066
        %v3108 = vunpack.c.l.b16 %v3067
        %v3109 = vpack.c.b16 %v3094, %v3093
        %v3110 = vpack.c.b16 %v3096, %v3095
        %v3111 = vpack.c.b16 %v3098, %v3097
        %v3112 = vpack.c.b16 %v3100, %v3099
        %v3113 = vpack.c.b16 %v3102, %v3101
        %v3114 = vpack.c.b16 %v3104, %v3103
        %v3115 = vpack.c.b16 %v3106, %v3105
        %v3116 = vpack.c.b16 %v3108, %v3107
        %3125 = vmatpush.bf16.msra.mxu0 %v3116
        %3126 = vmatpush.bf16.msra.mxu0 %v3115
        %3127 = vmatpush.bf16.msra.mxu0 %v3114
        %3128 = vmatpush.bf16.msra.mxu0 %v3113
        %3129 = vmatpush.bf16.msra.mxu0 %v3112
        %3130 = vmatpush.bf16.msra.mxu0 %v3111
        %3131 = vmatpush.bf16.msra.mxu0 %v3110
        %3132 = vmatpush.bf16.msra.mxu0 %v3109
        %3133 = vmatmul.bf16.gmra.mxu0 %v3076
        %v3134 = vpop.f32.mrf.mxu0
        %v3135 = vadd.f32 0.0, %v3134
        %v3136 = vpop.f32.mrf.mxu0
        %3137 = vdwg.mxu0
        %v3138 = vperm.slane %v3135, 0
        %v3155 = vunpack.c.l.b16 %v3036
        %v3156 = vunpack.c.l.b16 %v3037
        %v3157 = vunpack.c.l.b16 %v3038
        %v3158 = vunpack.c.l.b16 %v3039
        %v3159 = vunpack.c.l.b16 %v3040
        %v3160 = vunpack.c.l.b16 %v3041
        %v3161 = vunpack.c.l.b16 %v3042
        %v3162 = vunpack.c.l.b16 %v3043
        %v3163 = vunpack.c.l.b16 %v3044
        %v3164 = vunpack.c.l.b16 %v3045
        %v3165 = vunpack.c.l.b16 %v3046
        %v3166 = vunpack.c.l.b16 %v3047
        %v3167 = vunpack.c.l.b16 %v3048
        %v3168 = vunpack.c.l.b16 %v3049
        %v3169 = vunpack.c.l.b16 %v3050
        %v3170 = vunpack.c.l.b16 %v3051
        %v3171 = vpack.c.b16 %v3156, %v3155
        %v3172 = vpack.c.b16 %v3158, %v3157
        %v3173 = vpack.c.b16 %v3160, %v3159
        %v3174 = vpack.c.b16 %v3162, %v3161
        %v3175 = vpack.c.b16 %v3164, %v3163
        %v3176 = vpack.c.b16 %v3166, %v3165
        %v3177 = vpack.c.b16 %v3168, %v3167
        %v3178 = vpack.c.b16 %v3170, %v3169
        %3187 = vmatpush.bf16.msra.mxu0 %v3178
        %3188 = vmatpush.bf16.msra.mxu0 %v3177
        %3189 = vmatpush.bf16.msra.mxu0 %v3176
        %3190 = vmatpush.bf16.msra.mxu0 %v3175
        %3191 = vmatpush.bf16.msra.mxu0 %v3174
        %3192 = vmatpush.bf16.msra.mxu0 %v3173
        %3193 = vmatpush.bf16.msra.mxu0 %v3172
        %3194 = vmatpush.bf16.msra.mxu0 %v3171
        %3195 = vmatmul.bf16.gmra.mxu0 %v3068
        %v3196 = vpop.f32.mrf.mxu0
        %v3197 = vadd.f32 %v3138, %v3196
        %v3198 = vpop.f32.mrf.mxu0
        %v3199 = vadd.f32 %v3138, %v3198
        %3200 = vmatmul.bf16.gmra.mxu0 %v3069
        %v3201 = vpop.f32.mrf.mxu0
        %v3202 = vadd.f32 %v3138, %v3201
        %v3203 = vpop.f32.mrf.mxu0
        %v3204 = vadd.f32 %v3138, %v3203
        %3205 = vmatmul.bf16.gmra.mxu0 %v3070
        %v3206 = vpop.f32.mrf.mxu0
        %v3207 = vadd.f32 %v3138, %v3206
        %v3208 = vpop.f32.mrf.mxu0
        %v3209 = vadd.f32 %v3138, %v3208
        %3210 = vmatmul.bf16.gmra.mxu0 %v3071
        %v3211 = vpop.f32.mrf.mxu0
        %v3212 = vadd.f32 %v3138, %v3211
        %v3213 = vpop.f32.mrf.mxu0
        %v3214 = vadd.f32 %v3138, %v3213
        %3215 = vmatmul.bf16.gmra.mxu0 %v3072
        %v3216 = vpop.f32.mrf.mxu0
        %v3217 = vadd.f32 %v3138, %v3216
        %v3218 = vpop.f32.mrf.mxu0
        %v3219 = vadd.f32 %v3138, %v3218
        %3220 = vmatmul.bf16.gmra.mxu0 %v3073
        %v3221 = vpop.f32.mrf.mxu0
        %v3222 = vadd.f32 %v3138, %v3221
        %v3223 = vpop.f32.mrf.mxu0
        %v3224 = vadd.f32 %v3138, %v3223
        %3225 = vmatmul.bf16.gmra.mxu0 %v3074
        %v3226 = vpop.f32.mrf.mxu0
        %v3227 = vadd.f32 %v3138, %v3226
        %v3228 = vpop.f32.mrf.mxu0
        %v3229 = vadd.f32 %v3138, %v3228
        %3230 = vmatmul.bf16.gmra.mxu0 %v3075
        %v3231 = vpop.f32.mrf.mxu0
        %v3232 = vadd.f32 %v3138, %v3231
        %v3233 = vpop.f32.mrf.mxu0
        %v3234 = vadd.f32 %v3138, %v3233
        %3235 = vdwg.mxu0
        %v3236 = vld [vmem:[%s7] sm:$0x1]
        %v3238 = vperm.slane %v3236, 0
        %v3240 = vadd.f32 %v3197, %v3238
        %v3241 = vadd.f32 %v3199, %v3238
        %v3242 = vadd.f32 %v3202, %v3238
        %v3243 = vadd.f32 %v3204, %v3238
        %v3244 = vadd.f32 %v3207, %v3238
        %v3245 = vadd.f32 %v3209, %v3238
        %v3246 = vadd.f32 %v3212, %v3238
        %v3247 = vadd.f32 %v3214, %v3238
        %v3248 = vadd.f32 %v3217, %v3238
        %v3249 = vadd.f32 %v3219, %v3238
        %v3250 = vadd.f32 %v3222, %v3238
        %v3251 = vadd.f32 %v3224, %v3238
        %v3252 = vadd.f32 %v3227, %v3238
        %v3253 = vadd.f32 %v3229, %v3238
        %v3254 = vadd.f32 %v3232, %v3238
        %v3255 = vadd.f32 %v3234, %v3238
        %v3256 = vmul.f32 %v3240, 0.5
        %v3257 = vmul.f32 %v3241, 0.5
        %v3258 = vmul.f32 %v3242, 0.5
        %v3259 = vmul.f32 %v3243, 0.5
        %v3260 = vmul.f32 %v3244, 0.5
        %v3261 = vmul.f32 %v3245, 0.5
        %v3262 = vmul.f32 %v3246, 0.5
        %v3263 = vmul.f32 %v3247, 0.5
        %v3264 = vmul.f32 %v3248, 0.5
        %v3265 = vmul.f32 %v3249, 0.5
        %v3266 = vmul.f32 %v3250, 0.5
        %v3267 = vmul.f32 %v3251, 0.5
        %v3268 = vmul.f32 %v3252, 0.5
        %v3269 = vmul.f32 %v3253, 0.5
        %v3270 = vmul.f32 %v3254, 0.5
        %v3271 = vmul.f32 %v3255, 0.5
        %v3272 = vmul.f32 %v3240, 0.70710677
        %v3273 = vmul.f32 %v3241, 0.70710677
        %v3274 = vmul.f32 %v3242, 0.70710677
        %v3275 = vmul.f32 %v3243, 0.70710677
        %v3276 = vmul.f32 %v3244, 0.70710677
        %v3277 = vmul.f32 %v3245, 0.70710677
        %v3278 = vmul.f32 %v3246, 0.70710677
        %v3279 = vmul.f32 %v3247, 0.70710677
        %v3280 = vmul.f32 %v3248, 0.70710677
        %v3281 = vmul.f32 %v3249, 0.70710677
        %v3282 = vmul.f32 %v3250, 0.70710677
        %v3283 = vmul.f32 %v3251, 0.70710677
        %v3284 = vmul.f32 %v3252, 0.70710677
        %v3285 = vmul.f32 %v3253, 0.70710677
        %v3286 = vmul.f32 %v3254, 0.70710677
        %v3287 = vmul.f32 %v3255, 0.70710677
        %v3288 = vmul.f32 %v3272, %v3272
        %v3289 = vmin.f32 16.0, %v3288
        %v3290 = vmul.f32 %v3289, 2.1237322e-06
        %v3291 = vadd.f32 %v3290, 0.00028619796
        %v3292 = vmul.f32 %v3289, %v3291
        %v3293 = vadd.f32 %v3292, 0.0036580483
        %v3294 = vmul.f32 %v3289, %v3293
        %v3295 = vadd.f32 %v3294, 0.05243302
        %v3296 = vmul.f32 %v3289, %v3295
        %v3297 = vadd.f32 %v3296, 0.18741608
        %v3298 = vmul.f32 %v3289, %v3297
        %v3299 = vadd.f32 %v3298, 1.1283791
        %v3300 = vmul.f32 %v3272, %v3299
        %v3301 = vmul.f32 %v3289, 3.8918573e-05
        %v3302 = vadd.f32 %v3301, 0.001143296
        %v3303 = vmul.f32 %v3289, %v3302
        %v3304 = vadd.f32 %v3303, 0.014752088
        %v3305 = vmul.f32 %v3289, %v3304
        %v3306 = vadd.f32 %v3305, 0.112945676
        %v3307 = vmul.f32 %v3289, %v3306
        %v3308 = vadd.f32 %v3307, 0.4994258
        %v3309 = vmul.f32 %v3289, %v3308
        %v3310 = vadd.f32 %v3309, 1.0
        %v3311 = vrcp.pop %v3310
        %v3312 = vmul.f32 %v3310, %v3311
        %v3313 = vsub.f32 1.0, %v3312
        %v3314 = vmul.f32 %v3311, %v3313
        %v3315 = vadd.f32 %v3311, %v3314
        %vm3316 = vweird.f32 %v3310
        %vm3317 = vweird.f32 %v3311
        %vm3318 = vmor %vm3316, %vm3317
        %v3319 = vsel %vm3318, %v3311, %v3315
        %v3320 = vand.u32 2147483647, %v3310
        %vm3321 = vcmp.eq.f32.partialorder %v3320, 8.507059e+37
        %v3322 = vand.u32 %v3310, 2147483648
        %v3323 = vor.u32 1.1754944e-38, %v3322
        %v3324 = vsel %vm3321, %v3323, %v3319
        %v3325 = vmul.f32 %v3300, %v3324
        %v3326 = vmin.f32 %v3325, 1.0
        %v3327 = vmax.f32 %v3326, -1.0
        %v3328 = vmul.f32 %v3273, %v3273
        %v3329 = vmin.f32 16.0, %v3328
        %v3330 = vmul.f32 %v3329, 2.1237322e-06
        %v3331 = vadd.f32 %v3330, 0.00028619796
        %v3332 = vmul.f32 %v3329, %v3331
        %v3333 = vadd.f32 %v3332, 0.0036580483
        %v3334 = vmul.f32 %v3329, %v3333
        %v3335 = vadd.f32 %v3334, 0.05243302
        %v3336 = vmul.f32 %v3329, %v3335
        %v3337 = vadd.f32 %v3336, 0.18741608
        %v3338 = vmul.f32 %v3329, %v3337
        %v3339 = vadd.f32 %v3338, 1.1283791
        %v3340 = vmul.f32 %v3273, %v3339
        %v3341 = vmul.f32 %v3329, 3.8918573e-05
        %v3342 = vadd.f32 %v3341, 0.001143296
        %v3343 = vmul.f32 %v3329, %v3342
        %v3344 = vadd.f32 %v3343, 0.014752088
        %v3345 = vmul.f32 %v3329, %v3344
        %v3346 = vadd.f32 %v3345, 0.112945676
        %v3347 = vmul.f32 %v3329, %v3346
        %v3348 = vadd.f32 %v3347, 0.4994258
        %v3349 = vmul.f32 %v3329, %v3348
        %v3350 = vadd.f32 %v3349, 1.0
        %v3351 = vrcp.pop %v3350
        %v3352 = vmul.f32 %v3350, %v3351
        %v3353 = vsub.f32 1.0, %v3352
        %v3354 = vmul.f32 %v3351, %v3353
        %v3355 = vadd.f32 %v3351, %v3354
        %vm3356 = vweird.f32 %v3350
        %vm3357 = vweird.f32 %v3351
        %vm3358 = vmor %vm3356, %vm3357
        %v3359 = vsel %vm3358, %v3351, %v3355
        %v3360 = vand.u32 2147483647, %v3350
        %vm3361 = vcmp.eq.f32.partialorder %v3360, 8.507059e+37
        %v3362 = vand.u32 %v3350, 2147483648
        %v3363 = vor.u32 1.1754944e-38, %v3362
        %v3364 = vsel %vm3361, %v3363, %v3359
        %v3365 = vmul.f32 %v3340, %v3364
        %v3366 = vmin.f32 %v3365, 1.0
        %v3367 = vmax.f32 %v3366, -1.0
        %v3368 = vmul.f32 %v3274, %v3274
        %v3369 = vmin.f32 16.0, %v3368
        %v3370 = vmul.f32 %v3369, 2.1237322e-06
        %v3371 = vadd.f32 %v3370, 0.00028619796
        %v3372 = vmul.f32 %v3369, %v3371
        %v3373 = vadd.f32 %v3372, 0.0036580483
        %v3374 = vmul.f32 %v3369, %v3373
        %v3375 = vadd.f32 %v3374, 0.05243302
        %v3376 = vmul.f32 %v3369, %v3375
        %v3377 = vadd.f32 %v3376, 0.18741608
        %v3378 = vmul.f32 %v3369, %v3377
        %v3379 = vadd.f32 %v3378, 1.1283791
        %v3380 = vmul.f32 %v3274, %v3379
        %v3381 = vmul.f32 %v3369, 3.8918573e-05
        %v3382 = vadd.f32 %v3381, 0.001143296
        %v3383 = vmul.f32 %v3369, %v3382
        %v3384 = vadd.f32 %v3383, 0.014752088
        %v3385 = vmul.f32 %v3369, %v3384
        %v3386 = vadd.f32 %v3385, 0.112945676
        %v3387 = vmul.f32 %v3369, %v3386
        %v3388 = vadd.f32 %v3387, 0.4994258
        %v3389 = vmul.f32 %v3369, %v3388
        %v3390 = vadd.f32 %v3389, 1.0
        %v3391 = vrcp.pop %v3390
        %v3392 = vmul.f32 %v3390, %v3391
        %v3393 = vsub.f32 1.0, %v3392
        %v3394 = vmul.f32 %v3391, %v3393
        %v3395 = vadd.f32 %v3391, %v3394
        %vm3396 = vweird.f32 %v3390
        %vm3397 = vweird.f32 %v3391
        %vm3398 = vmor %vm3396, %vm3397
        %v3399 = vsel %vm3398, %v3391, %v3395
        %v3400 = vand.u32 2147483647, %v3390
        %vm3401 = vcmp.eq.f32.partialorder %v3400, 8.507059e+37
        %v3402 = vand.u32 %v3390, 2147483648
        %v3403 = vor.u32 1.1754944e-38, %v3402
        %v3404 = vsel %vm3401, %v3403, %v3399
        %v3405 = vmul.f32 %v3380, %v3404
        %v3406 = vmin.f32 %v3405, 1.0
        %v3407 = vmax.f32 %v3406, -1.0
        %v3408 = vmul.f32 %v3275, %v3275
        %v3409 = vmin.f32 16.0, %v3408
        %v3410 = vmul.f32 %v3409, 2.1237322e-06
        %v3411 = vadd.f32 %v3410, 0.00028619796
        %v3412 = vmul.f32 %v3409, %v3411
        %v3413 = vadd.f32 %v3412, 0.0036580483
        %v3414 = vmul.f32 %v3409, %v3413
        %v3415 = vadd.f32 %v3414, 0.05243302
        %v3416 = vmul.f32 %v3409, %v3415
        %v3417 = vadd.f32 %v3416, 0.18741608
        %v3418 = vmul.f32 %v3409, %v3417
        %v3419 = vadd.f32 %v3418, 1.1283791
        %v3420 = vmul.f32 %v3275, %v3419
        %v3421 = vmul.f32 %v3409, 3.8918573e-05
        %v3422 = vadd.f32 %v3421, 0.001143296
        %v3423 = vmul.f32 %v3409, %v3422
        %v3424 = vadd.f32 %v3423, 0.014752088
        %v3425 = vmul.f32 %v3409, %v3424
        %v3426 = vadd.f32 %v3425, 0.112945676
        %v3427 = vmul.f32 %v3409, %v3426
        %v3428 = vadd.f32 %v3427, 0.4994258
        %v3429 = vmul.f32 %v3409, %v3428
        %v3430 = vadd.f32 %v3429, 1.0
        %v3431 = vrcp.pop %v3430
        %v3432 = vmul.f32 %v3430, %v3431
        %v3433 = vsub.f32 1.0, %v3432
        %v3434 = vmul.f32 %v3431, %v3433
        %v3435 = vadd.f32 %v3431, %v3434
        %vm3436 = vweird.f32 %v3430
        %vm3437 = vweird.f32 %v3431
        %vm3438 = vmor %vm3436, %vm3437
        %v3439 = vsel %vm3438, %v3431, %v3435
        %v3440 = vand.u32 2147483647, %v3430
        %vm3441 = vcmp.eq.f32.partialorder %v3440, 8.507059e+37
        %v3442 = vand.u32 %v3430, 2147483648
        %v3443 = vor.u32 1.1754944e-38, %v3442
        %v3444 = vsel %vm3441, %v3443, %v3439
        %v3445 = vmul.f32 %v3420, %v3444
        %v3446 = vmin.f32 %v3445, 1.0
        %v3447 = vmax.f32 %v3446, -1.0
        %v3448 = vmul.f32 %v3276, %v3276
        %v3449 = vmin.f32 16.0, %v3448
        %v3450 = vmul.f32 %v3449, 2.1237322e-06
        %v3451 = vadd.f32 %v3450, 0.00028619796
        %v3452 = vmul.f32 %v3449, %v3451
        %v3453 = vadd.f32 %v3452, 0.0036580483
        %v3454 = vmul.f32 %v3449, %v3453
        %v3455 = vadd.f32 %v3454, 0.05243302
        %v3456 = vmul.f32 %v3449, %v3455
        %v3457 = vadd.f32 %v3456, 0.18741608
        %v3458 = vmul.f32 %v3449, %v3457
        %v3459 = vadd.f32 %v3458, 1.1283791
        %v3460 = vmul.f32 %v3276, %v3459
        %v3461 = vmul.f32 %v3449, 3.8918573e-05
        %v3462 = vadd.f32 %v3461, 0.001143296
        %v3463 = vmul.f32 %v3449, %v3462
        %v3464 = vadd.f32 %v3463, 0.014752088
        %v3465 = vmul.f32 %v3449, %v3464
        %v3466 = vadd.f32 %v3465, 0.112945676
        %v3467 = vmul.f32 %v3449, %v3466
        %v3468 = vadd.f32 %v3467, 0.4994258
        %v3469 = vmul.f32 %v3449, %v3468
        %v3470 = vadd.f32 %v3469, 1.0
        %v3471 = vrcp.pop %v3470
        %v3472 = vmul.f32 %v3470, %v3471
        %v3473 = vsub.f32 1.0, %v3472
        %v3474 = vmul.f32 %v3471, %v3473
        %v3475 = vadd.f32 %v3471, %v3474
        %vm3476 = vweird.f32 %v3470
        %vm3477 = vweird.f32 %v3471
        %vm3478 = vmor %vm3476, %vm3477
        %v3479 = vsel %vm3478, %v3471, %v3475
        %v3480 = vand.u32 2147483647, %v3470
        %vm3481 = vcmp.eq.f32.partialorder %v3480, 8.507059e+37
        %v3482 = vand.u32 %v3470, 2147483648
        %v3483 = vor.u32 1.1754944e-38, %v3482
        %v3484 = vsel %vm3481, %v3483, %v3479
        %v3485 = vmul.f32 %v3460, %v3484
        %v3486 = vmin.f32 %v3485, 1.0
        %v3487 = vmax.f32 %v3486, -1.0
        %v3488 = vmul.f32 %v3277, %v3277
        %v3489 = vmin.f32 16.0, %v3488
        %v3490 = vmul.f32 %v3489, 2.1237322e-06
        %v3491 = vadd.f32 %v3490, 0.00028619796
        %v3492 = vmul.f32 %v3489, %v3491
        %v3493 = vadd.f32 %v3492, 0.0036580483
        %v3494 = vmul.f32 %v3489, %v3493
        %v3495 = vadd.f32 %v3494, 0.05243302
        %v3496 = vmul.f32 %v3489, %v3495
        %v3497 = vadd.f32 %v3496, 0.18741608
        %v3498 = vmul.f32 %v3489, %v3497
        %v3499 = vadd.f32 %v3498, 1.1283791
        %v3500 = vmul.f32 %v3277, %v3499
        %v3501 = vmul.f32 %v3489, 3.8918573e-05
        %v3502 = vadd.f32 %v3501, 0.001143296
        %v3503 = vmul.f32 %v3489, %v3502
        %v3504 = vadd.f32 %v3503, 0.014752088
        %v3505 = vmul.f32 %v3489, %v3504
        %v3506 = vadd.f32 %v3505, 0.112945676
        %v3507 = vmul.f32 %v3489, %v3506
        %v3508 = vadd.f32 %v3507, 0.4994258
        %v3509 = vmul.f32 %v3489, %v3508
        %v3510 = vadd.f32 %v3509, 1.0
        %v3511 = vrcp.pop %v3510
        %v3512 = vmul.f32 %v3510, %v3511
        %v3513 = vsub.f32 1.0, %v3512
        %v3514 = vmul.f32 %v3511, %v3513
        %v3515 = vadd.f32 %v3511, %v3514
        %vm3516 = vweird.f32 %v3510
        %vm3517 = vweird.f32 %v3511
        %vm3518 = vmor %vm3516, %vm3517
        %v3519 = vsel %vm3518, %v3511, %v3515
        %v3520 = vand.u32 2147483647, %v3510
        %vm3521 = vcmp.eq.f32.partialorder %v3520, 8.507059e+37
        %v3522 = vand.u32 %v3510, 2147483648
        %v3523 = vor.u32 1.1754944e-38, %v3522
        %v3524 = vsel %vm3521, %v3523, %v3519
        %v3525 = vmul.f32 %v3500, %v3524
        %v3526 = vmin.f32 %v3525, 1.0
        %v3527 = vmax.f32 %v3526, -1.0
        %v3528 = vmul.f32 %v3278, %v3278
        %v3529 = vmin.f32 16.0, %v3528
        %v3530 = vmul.f32 %v3529, 2.1237322e-06
        %v3531 = vadd.f32 %v3530, 0.00028619796
        %v3532 = vmul.f32 %v3529, %v3531
        %v3533 = vadd.f32 %v3532, 0.0036580483
        %v3534 = vmul.f32 %v3529, %v3533
        %v3535 = vadd.f32 %v3534, 0.05243302
        %v3536 = vmul.f32 %v3529, %v3535
        %v3537 = vadd.f32 %v3536, 0.18741608
        %v3538 = vmul.f32 %v3529, %v3537
        %v3539 = vadd.f32 %v3538, 1.1283791
        %v3540 = vmul.f32 %v3278, %v3539
        %v3541 = vmul.f32 %v3529, 3.8918573e-05
        %v3542 = vadd.f32 %v3541, 0.001143296
        %v3543 = vmul.f32 %v3529, %v3542
        %v3544 = vadd.f32 %v3543, 0.014752088
        %v3545 = vmul.f32 %v3529, %v3544
        %v3546 = vadd.f32 %v3545, 0.112945676
        %v3547 = vmul.f32 %v3529, %v3546
        %v3548 = vadd.f32 %v3547, 0.4994258
        %v3549 = vmul.f32 %v3529, %v3548
        %v3550 = vadd.f32 %v3549, 1.0
        %v3551 = vrcp.pop %v3550
        %v3552 = vmul.f32 %v3550, %v3551
        %v3553 = vsub.f32 1.0, %v3552
        %v3554 = vmul.f32 %v3551, %v3553
        %v3555 = vadd.f32 %v3551, %v3554
        %vm3556 = vweird.f32 %v3550
        %vm3557 = vweird.f32 %v3551
        %vm3558 = vmor %vm3556, %vm3557
        %v3559 = vsel %vm3558, %v3551, %v3555
        %v3560 = vand.u32 2147483647, %v3550
        %vm3561 = vcmp.eq.f32.partialorder %v3560, 8.507059e+37
        %v3562 = vand.u32 %v3550, 2147483648
        %v3563 = vor.u32 1.1754944e-38, %v3562
        %v3564 = vsel %vm3561, %v3563, %v3559
        %v3565 = vmul.f32 %v3540, %v3564
        %v3566 = vmin.f32 %v3565, 1.0
        %v3567 = vmax.f32 %v3566, -1.0
        %v3568 = vmul.f32 %v3279, %v3279
        %v3569 = vmin.f32 16.0, %v3568
        %v3570 = vmul.f32 %v3569, 2.1237322e-06
        %v3571 = vadd.f32 %v3570, 0.00028619796
        %v3572 = vmul.f32 %v3569, %v3571
        %v3573 = vadd.f32 %v3572, 0.0036580483
        %v3574 = vmul.f32 %v3569, %v3573
        %v3575 = vadd.f32 %v3574, 0.05243302
        %v3576 = vmul.f32 %v3569, %v3575
        %v3577 = vadd.f32 %v3576, 0.18741608
        %v3578 = vmul.f32 %v3569, %v3577
        %v3579 = vadd.f32 %v3578, 1.1283791
        %v3580 = vmul.f32 %v3279, %v3579
        %v3581 = vmul.f32 %v3569, 3.8918573e-05
        %v3582 = vadd.f32 %v3581, 0.001143296
        %v3583 = vmul.f32 %v3569, %v3582
        %v3584 = vadd.f32 %v3583, 0.014752088
        %v3585 = vmul.f32 %v3569, %v3584
        %v3586 = vadd.f32 %v3585, 0.112945676
        %v3587 = vmul.f32 %v3569, %v3586
        %v3588 = vadd.f32 %v3587, 0.4994258
        %v3589 = vmul.f32 %v3569, %v3588
        %v3590 = vadd.f32 %v3589, 1.0
        %v3591 = vrcp.pop %v3590
        %v3592 = vmul.f32 %v3590, %v3591
        %v3593 = vsub.f32 1.0, %v3592
        %v3594 = vmul.f32 %v3591, %v3593
        %v3595 = vadd.f32 %v3591, %v3594
        %vm3596 = vweird.f32 %v3590
        %vm3597 = vweird.f32 %v3591
        %vm3598 = vmor %vm3596, %vm3597
        %v3599 = vsel %vm3598, %v3591, %v3595
        %v3600 = vand.u32 2147483647, %v3590
        %vm3601 = vcmp.eq.f32.partialorder %v3600, 8.507059e+37
        %v3602 = vand.u32 %v3590, 2147483648
        %v3603 = vor.u32 1.1754944e-38, %v3602
        %v3604 = vsel %vm3601, %v3603, %v3599
        %v3605 = vmul.f32 %v3580, %v3604
        %v3606 = vmin.f32 %v3605, 1.0
        %v3607 = vmax.f32 %v3606, -1.0
        %v3608 = vmul.f32 %v3280, %v3280
        %v3609 = vmin.f32 16.0, %v3608
        %v3610 = vmul.f32 %v3609, 2.1237322e-06
        %v3611 = vadd.f32 %v3610, 0.00028619796
        %v3612 = vmul.f32 %v3609, %v3611
        %v3613 = vadd.f32 %v3612, 0.0036580483
        %v3614 = vmul.f32 %v3609, %v3613
        %v3615 = vadd.f32 %v3614, 0.05243302
        %v3616 = vmul.f32 %v3609, %v3615
        %v3617 = vadd.f32 %v3616, 0.18741608
        %v3618 = vmul.f32 %v3609, %v3617
        %v3619 = vadd.f32 %v3618, 1.1283791
        %v3620 = vmul.f32 %v3280, %v3619
        %v3621 = vmul.f32 %v3609, 3.8918573e-05
        %v3622 = vadd.f32 %v3621, 0.001143296
        %v3623 = vmul.f32 %v3609, %v3622
        %v3624 = vadd.f32 %v3623, 0.014752088
        %v3625 = vmul.f32 %v3609, %v3624
        %v3626 = vadd.f32 %v3625, 0.112945676
        %v3627 = vmul.f32 %v3609, %v3626
        %v3628 = vadd.f32 %v3627, 0.4994258
        %v3629 = vmul.f32 %v3609, %v3628
        %v3630 = vadd.f32 %v3629, 1.0
        %v3631 = vrcp.pop %v3630
        %v3632 = vmul.f32 %v3630, %v3631
        %v3633 = vsub.f32 1.0, %v3632
        %v3634 = vmul.f32 %v3631, %v3633
        %v3635 = vadd.f32 %v3631, %v3634
        %vm3636 = vweird.f32 %v3630
        %vm3637 = vweird.f32 %v3631
        %vm3638 = vmor %vm3636, %vm3637
        %v3639 = vsel %vm3638, %v3631, %v3635
        %v3640 = vand.u32 2147483647, %v3630
        %vm3641 = vcmp.eq.f32.partialorder %v3640, 8.507059e+37
        %v3642 = vand.u32 %v3630, 2147483648
        %v3643 = vor.u32 1.1754944e-38, %v3642
        %v3644 = vsel %vm3641, %v3643, %v3639
        %v3645 = vmul.f32 %v3620, %v3644
        %v3646 = vmin.f32 %v3645, 1.0
        %v3647 = vmax.f32 %v3646, -1.0
        %v3648 = vmul.f32 %v3281, %v3281
        %v3649 = vmin.f32 16.0, %v3648
        %v3650 = vmul.f32 %v3649, 2.1237322e-06
        %v3651 = vadd.f32 %v3650, 0.00028619796
        %v3652 = vmul.f32 %v3649, %v3651
        %v3653 = vadd.f32 %v3652, 0.0036580483
        %v3654 = vmul.f32 %v3649, %v3653
        %v3655 = vadd.f32 %v3654, 0.05243302
        %v3656 = vmul.f32 %v3649, %v3655
        %v3657 = vadd.f32 %v3656, 0.18741608
        %v3658 = vmul.f32 %v3649, %v3657
        %v3659 = vadd.f32 %v3658, 1.1283791
        %v3660 = vmul.f32 %v3281, %v3659
        %v3661 = vmul.f32 %v3649, 3.8918573e-05
        %v3662 = vadd.f32 %v3661, 0.001143296
        %v3663 = vmul.f32 %v3649, %v3662
        %v3664 = vadd.f32 %v3663, 0.014752088
        %v3665 = vmul.f32 %v3649, %v3664
        %v3666 = vadd.f32 %v3665, 0.112945676
        %v3667 = vmul.f32 %v3649, %v3666
        %v3668 = vadd.f32 %v3667, 0.4994258
        %v3669 = vmul.f32 %v3649, %v3668
        %v3670 = vadd.f32 %v3669, 1.0
        %v3671 = vrcp.pop %v3670
        %v3672 = vmul.f32 %v3670, %v3671
        %v3673 = vsub.f32 1.0, %v3672
        %v3674 = vmul.f32 %v3671, %v3673
        %v3675 = vadd.f32 %v3671, %v3674
        %vm3676 = vweird.f32 %v3670
        %vm3677 = vweird.f32 %v3671
        %vm3678 = vmor %vm3676, %vm3677
        %v3679 = vsel %vm3678, %v3671, %v3675
        %v3680 = vand.u32 2147483647, %v3670
        %vm3681 = vcmp.eq.f32.partialorder %v3680, 8.507059e+37
        %v3682 = vand.u32 %v3670, 2147483648
        %v3683 = vor.u32 1.1754944e-38, %v3682
        %v3684 = vsel %vm3681, %v3683, %v3679
        %v3685 = vmul.f32 %v3660, %v3684
        %v3686 = vmin.f32 %v3685, 1.0
        %v3687 = vmax.f32 %v3686, -1.0
        %v3688 = vmul.f32 %v3282, %v3282
        %v3689 = vmin.f32 16.0, %v3688
        %v3690 = vmul.f32 %v3689, 2.1237322e-06
        %v3691 = vadd.f32 %v3690, 0.00028619796
        %v3692 = vmul.f32 %v3689, %v3691
        %v3693 = vadd.f32 %v3692, 0.0036580483
        %v3694 = vmul.f32 %v3689, %v3693
        %v3695 = vadd.f32 %v3694, 0.05243302
        %v3696 = vmul.f32 %v3689, %v3695
        %v3697 = vadd.f32 %v3696, 0.18741608
        %v3698 = vmul.f32 %v3689, %v3697
        %v3699 = vadd.f32 %v3698, 1.1283791
        %v3700 = vmul.f32 %v3282, %v3699
        %v3701 = vmul.f32 %v3689, 3.8918573e-05
        %v3702 = vadd.f32 %v3701, 0.001143296
        %v3703 = vmul.f32 %v3689, %v3702
        %v3704 = vadd.f32 %v3703, 0.014752088
        %v3705 = vmul.f32 %v3689, %v3704
        %v3706 = vadd.f32 %v3705, 0.112945676
        %v3707 = vmul.f32 %v3689, %v3706
        %v3708 = vadd.f32 %v3707, 0.4994258
        %v3709 = vmul.f32 %v3689, %v3708
        %v3710 = vadd.f32 %v3709, 1.0
        %v3711 = vrcp.pop %v3710
        %v3712 = vmul.f32 %v3710, %v3711
        %v3713 = vsub.f32 1.0, %v3712
        %v3714 = vmul.f32 %v3711, %v3713
        %v3715 = vadd.f32 %v3711, %v3714
        %vm3716 = vweird.f32 %v3710
        %vm3717 = vweird.f32 %v3711
        %vm3718 = vmor %vm3716, %vm3717
        %v3719 = vsel %vm3718, %v3711, %v3715
        %v3720 = vand.u32 2147483647, %v3710
        %vm3721 = vcmp.eq.f32.partialorder %v3720, 8.507059e+37
        %v3722 = vand.u32 %v3710, 2147483648
        %v3723 = vor.u32 1.1754944e-38, %v3722
        %v3724 = vsel %vm3721, %v3723, %v3719
        %v3725 = vmul.f32 %v3700, %v3724
        %v3726 = vmin.f32 %v3725, 1.0
        %v3727 = vmax.f32 %v3726, -1.0
        %v3728 = vmul.f32 %v3283, %v3283
        %v3729 = vmin.f32 16.0, %v3728
        %v3730 = vmul.f32 %v3729, 2.1237322e-06
        %v3731 = vadd.f32 %v3730, 0.00028619796
        %v3732 = vmul.f32 %v3729, %v3731
        %v3733 = vadd.f32 %v3732, 0.0036580483
        %v3734 = vmul.f32 %v3729, %v3733
        %v3735 = vadd.f32 %v3734, 0.05243302
        %v3736 = vmul.f32 %v3729, %v3735
        %v3737 = vadd.f32 %v3736, 0.18741608
        %v3738 = vmul.f32 %v3729, %v3737
        %v3739 = vadd.f32 %v3738, 1.1283791
        %v3740 = vmul.f32 %v3283, %v3739
        %v3741 = vmul.f32 %v3729, 3.8918573e-05
        %v3742 = vadd.f32 %v3741, 0.001143296
        %v3743 = vmul.f32 %v3729, %v3742
        %v3744 = vadd.f32 %v3743, 0.014752088
        %v3745 = vmul.f32 %v3729, %v3744
        %v3746 = vadd.f32 %v3745, 0.112945676
        %v3747 = vmul.f32 %v3729, %v3746
        %v3748 = vadd.f32 %v3747, 0.4994258
        %v3749 = vmul.f32 %v3729, %v3748
        %v3750 = vadd.f32 %v3749, 1.0
        %v3751 = vrcp.pop %v3750
        %v3752 = vmul.f32 %v3750, %v3751
        %v3753 = vsub.f32 1.0, %v3752
        %v3754 = vmul.f32 %v3751, %v3753
        %v3755 = vadd.f32 %v3751, %v3754
        %vm3756 = vweird.f32 %v3750
        %vm3757 = vweird.f32 %v3751
        %vm3758 = vmor %vm3756, %vm3757
        %v3759 = vsel %vm3758, %v3751, %v3755
        %v3760 = vand.u32 2147483647, %v3750
        %vm3761 = vcmp.eq.f32.partialorder %v3760, 8.507059e+37
        %v3762 = vand.u32 %v3750, 2147483648
        %v3763 = vor.u32 1.1754944e-38, %v3762
        %v3764 = vsel %vm3761, %v3763, %v3759
        %v3765 = vmul.f32 %v3740, %v3764
        %v3766 = vmin.f32 %v3765, 1.0
        %v3767 = vmax.f32 %v3766, -1.0
        %v3768 = vmul.f32 %v3284, %v3284
        %v3769 = vmin.f32 16.0, %v3768
        %v3770 = vmul.f32 %v3769, 2.1237322e-06
        %v3771 = vadd.f32 %v3770, 0.00028619796
        %v3772 = vmul.f32 %v3769, %v3771
        %v3773 = vadd.f32 %v3772, 0.0036580483
        %v3774 = vmul.f32 %v3769, %v3773
        %v3775 = vadd.f32 %v3774, 0.05243302
        %v3776 = vmul.f32 %v3769, %v3775
        %v3777 = vadd.f32 %v3776, 0.18741608
        %v3778 = vmul.f32 %v3769, %v3777
        %v3779 = vadd.f32 %v3778, 1.1283791
        %v3780 = vmul.f32 %v3284, %v3779
        %v3781 = vmul.f32 %v3769, 3.8918573e-05
        %v3782 = vadd.f32 %v3781, 0.001143296
        %v3783 = vmul.f32 %v3769, %v3782
        %v3784 = vadd.f32 %v3783, 0.014752088
        %v3785 = vmul.f32 %v3769, %v3784
        %v3786 = vadd.f32 %v3785, 0.112945676
        %v3787 = vmul.f32 %v3769, %v3786
        %v3788 = vadd.f32 %v3787, 0.4994258
        %v3789 = vmul.f32 %v3769, %v3788
        %v3790 = vadd.f32 %v3789, 1.0
        %v3791 = vrcp.pop %v3790
        %v3792 = vmul.f32 %v3790, %v3791
        %v3793 = vsub.f32 1.0, %v3792
        %v3794 = vmul.f32 %v3791, %v3793
        %v3795 = vadd.f32 %v3791, %v3794
        %vm3796 = vweird.f32 %v3790
        %vm3797 = vweird.f32 %v3791
        %vm3798 = vmor %vm3796, %vm3797
        %v3799 = vsel %vm3798, %v3791, %v3795
        %v3800 = vand.u32 2147483647, %v3790
        %vm3801 = vcmp.eq.f32.partialorder %v3800, 8.507059e+37
        %v3802 = vand.u32 %v3790, 2147483648
        %v3803 = vor.u32 1.1754944e-38, %v3802
        %v3804 = vsel %vm3801, %v3803, %v3799
        %v3805 = vmul.f32 %v3780, %v3804
        %v3806 = vmin.f32 %v3805, 1.0
        %v3807 = vmax.f32 %v3806, -1.0
        %v3808 = vmul.f32 %v3285, %v3285
        %v3809 = vmin.f32 16.0, %v3808
        %v3810 = vmul.f32 %v3809, 2.1237322e-06
        %v3811 = vadd.f32 %v3810, 0.00028619796
        %v3812 = vmul.f32 %v3809, %v3811
        %v3813 = vadd.f32 %v3812, 0.0036580483
        %v3814 = vmul.f32 %v3809, %v3813
        %v3815 = vadd.f32 %v3814, 0.05243302
        %v3816 = vmul.f32 %v3809, %v3815
        %v3817 = vadd.f32 %v3816, 0.18741608
        %v3818 = vmul.f32 %v3809, %v3817
        %v3819 = vadd.f32 %v3818, 1.1283791
        %v3820 = vmul.f32 %v3285, %v3819
        %v3821 = vmul.f32 %v3809, 3.8918573e-05
        %v3822 = vadd.f32 %v3821, 0.001143296
        %v3823 = vmul.f32 %v3809, %v3822
        %v3824 = vadd.f32 %v3823, 0.014752088
        %v3825 = vmul.f32 %v3809, %v3824
        %v3826 = vadd.f32 %v3825, 0.112945676
        %v3827 = vmul.f32 %v3809, %v3826
        %v3828 = vadd.f32 %v3827, 0.4994258
        %v3829 = vmul.f32 %v3809, %v3828
        %v3830 = vadd.f32 %v3829, 1.0
        %v3831 = vrcp.pop %v3830
        %v3832 = vmul.f32 %v3830, %v3831
        %v3833 = vsub.f32 1.0, %v3832
        %v3834 = vmul.f32 %v3831, %v3833
        %v3835 = vadd.f32 %v3831, %v3834
        %vm3836 = vweird.f32 %v3830
        %vm3837 = vweird.f32 %v3831
        %vm3838 = vmor %vm3836, %vm3837
        %v3839 = vsel %vm3838, %v3831, %v3835
        %v3840 = vand.u32 2147483647, %v3830
        %vm3841 = vcmp.eq.f32.partialorder %v3840, 8.507059e+37
        %v3842 = vand.u32 %v3830, 2147483648
        %v3843 = vor.u32 1.1754944e-38, %v3842
        %v3844 = vsel %vm3841, %v3843, %v3839
        %v3845 = vmul.f32 %v3820, %v3844
        %v3846 = vmin.f32 %v3845, 1.0
        %v3847 = vmax.f32 %v3846, -1.0
        %v3848 = vmul.f32 %v3286, %v3286
        %v3849 = vmin.f32 16.0, %v3848
        %v3850 = vmul.f32 %v3849, 2.1237322e-06
        %v3851 = vadd.f32 %v3850, 0.00028619796
        %v3852 = vmul.f32 %v3849, %v3851
        %v3853 = vadd.f32 %v3852, 0.0036580483
        %v3854 = vmul.f32 %v3849, %v3853
        %v3855 = vadd.f32 %v3854, 0.05243302
        %v3856 = vmul.f32 %v3849, %v3855
        %v3857 = vadd.f32 %v3856, 0.18741608
        %v3858 = vmul.f32 %v3849, %v3857
        %v3859 = vadd.f32 %v3858, 1.1283791
        %v3860 = vmul.f32 %v3286, %v3859
        %v3861 = vmul.f32 %v3849, 3.8918573e-05
        %v3862 = vadd.f32 %v3861, 0.001143296
        %v3863 = vmul.f32 %v3849, %v3862
        %v3864 = vadd.f32 %v3863, 0.014752088
        %v3865 = vmul.f32 %v3849, %v3864
        %v3866 = vadd.f32 %v3865, 0.112945676
        %v3867 = vmul.f32 %v3849, %v3866
        %v3868 = vadd.f32 %v3867, 0.4994258
        %v3869 = vmul.f32 %v3849, %v3868
        %v3870 = vadd.f32 %v3869, 1.0
        %v3871 = vrcp.pop %v3870
        %v3872 = vmul.f32 %v3870, %v3871
        %v3873 = vsub.f32 1.0, %v3872
        %v3874 = vmul.f32 %v3871, %v3873
        %v3875 = vadd.f32 %v3871, %v3874
        %vm3876 = vweird.f32 %v3870
        %vm3877 = vweird.f32 %v3871
        %vm3878 = vmor %vm3876, %vm3877
        %v3879 = vsel %vm3878, %v3871, %v3875
        %v3880 = vand.u32 2147483647, %v3870
        %vm3881 = vcmp.eq.f32.partialorder %v3880, 8.507059e+37
        %v3882 = vand.u32 %v3870, 2147483648
        %v3883 = vor.u32 1.1754944e-38, %v3882
        %v3884 = vsel %vm3881, %v3883, %v3879
        %v3885 = vmul.f32 %v3860, %v3884
        %v3886 = vmin.f32 %v3885, 1.0
        %v3887 = vmax.f32 %v3886, -1.0
        %v3888 = vmul.f32 %v3287, %v3287
        %v3889 = vmin.f32 16.0, %v3888
        %v3890 = vmul.f32 %v3889, 2.1237322e-06
        %v3891 = vadd.f32 %v3890, 0.00028619796
        %v3892 = vmul.f32 %v3889, %v3891
        %v3893 = vadd.f32 %v3892, 0.0036580483
        %v3894 = vmul.f32 %v3889, %v3893
        %v3895 = vadd.f32 %v3894, 0.05243302
        %v3896 = vmul.f32 %v3889, %v3895
        %v3897 = vadd.f32 %v3896, 0.18741608
        %v3898 = vmul.f32 %v3889, %v3897
        %v3899 = vadd.f32 %v3898, 1.1283791
        %v3900 = vmul.f32 %v3287, %v3899
        %v3901 = vmul.f32 %v3889, 3.8918573e-05
        %v3902 = vadd.f32 %v3901, 0.001143296
        %v3903 = vmul.f32 %v3889, %v3902
        %v3904 = vadd.f32 %v3903, 0.014752088
        %v3905 = vmul.f32 %v3889, %v3904
        %v3906 = vadd.f32 %v3905, 0.112945676
        %v3907 = vmul.f32 %v3889, %v3906
        %v3908 = vadd.f32 %v3907, 0.4994258
        %v3909 = vmul.f32 %v3889, %v3908
        %v3910 = vadd.f32 %v3909, 1.0
        %v3911 = vrcp.pop %v3910
        %v3912 = vmul.f32 %v3910, %v3911
        %v3913 = vsub.f32 1.0, %v3912
        %v3914 = vmul.f32 %v3911, %v3913
        %v3915 = vadd.f32 %v3911, %v3914
        %vm3916 = vweird.f32 %v3910
        %vm3917 = vweird.f32 %v3911
        %vm3918 = vmor %vm3916, %vm3917
        %v3919 = vsel %vm3918, %v3911, %v3915
        %v3920 = vand.u32 2147483647, %v3910
        %vm3921 = vcmp.eq.f32.partialorder %v3920, 8.507059e+37
        %v3922 = vand.u32 %v3910, 2147483648
        %v3923 = vor.u32 1.1754944e-38, %v3922
        %v3924 = vsel %vm3921, %v3923, %v3919
        %v3925 = vmul.f32 %v3900, %v3924
        %v3926 = vmin.f32 %v3925, 1.0
        %v3927 = vmax.f32 %v3926, -1.0
        %v3928 = vadd.f32 %v3327, 1.0
        %v3929 = vadd.f32 %v3367, 1.0
        %v3930 = vadd.f32 %v3407, 1.0
        %v3931 = vadd.f32 %v3447, 1.0
        %v3932 = vadd.f32 %v3487, 1.0
        %v3933 = vadd.f32 %v3527, 1.0
        %v3934 = vadd.f32 %v3567, 1.0
        %v3935 = vadd.f32 %v3607, 1.0
        %v3936 = vadd.f32 %v3647, 1.0
        %v3937 = vadd.f32 %v3687, 1.0
        %v3938 = vadd.f32 %v3727, 1.0
        %v3939 = vadd.f32 %v3767, 1.0
        %v3940 = vadd.f32 %v3807, 1.0
        %v3941 = vadd.f32 %v3847, 1.0
        %v3942 = vadd.f32 %v3887, 1.0
        %v3943 = vadd.f32 %v3927, 1.0
        %v3944 = vmul.f32 %v3256, %v3928
        %v3945 = vmul.f32 %v3257, %v3929
        %v3946 = vmul.f32 %v3258, %v3930
        %v3947 = vmul.f32 %v3259, %v3931
        %v3948 = vmul.f32 %v3260, %v3932
        %v3949 = vmul.f32 %v3261, %v3933
        %v3950 = vmul.f32 %v3262, %v3934
        %v3951 = vmul.f32 %v3263, %v3935
        %v3952 = vmul.f32 %v3264, %v3936
        %v3953 = vmul.f32 %v3265, %v3937
        %v3954 = vmul.f32 %v3266, %v3938
        %v3955 = vmul.f32 %v3267, %v3939
        %v3956 = vmul.f32 %v3268, %v3940
        %v3957 = vmul.f32 %v3269, %v3941
        %v3958 = vmul.f32 %v3270, %v3942
        %v3959 = vmul.f32 %v3271, %v3943
        %v3960 = vpack.c.bf16 %v3945, %v3944
        %v3961 = vpack.c.bf16 %v3947, %v3946
        %v3962 = vpack.c.bf16 %v3949, %v3948
        %v3963 = vpack.c.bf16 %v3951, %v3950
        %v3964 = vpack.c.bf16 %v3953, %v3952
        %v3965 = vpack.c.bf16 %v3955, %v3954
        %v3966 = vpack.c.bf16 %v3957, %v3956
        %v3967 = vpack.c.bf16 %v3959, %v3958
        %v3968 = vld [vmem:[%s8] sm:$0xf]
        %v3969 = vld [vmem:[%s8 + $0x4] sm:$0xf]
        %v3970 = vld [vmem:[%s8 + $0x8] sm:$0xf]
        %v3971 = vld [vmem:[%s8 + $0xc] sm:$0xf]
        %v3972 = vld [vmem:[%s8 + $0x10] sm:$0xf]
        %v3973 = vld [vmem:[%s8 + $0x14] sm:$0xf]
        %v3974 = vld [vmem:[%s8 + $0x18] sm:$0xf]
        %v3975 = vld [vmem:[%s8 + $0x1c] sm:$0xf]
        %v3976 = vld [vmem:[%s8 + $0x20] sm:$0xf]
        %v3977 = vld [vmem:[%s8 + $0x24] sm:$0xf]
        %v3978 = vld [vmem:[%s8 + $0x28] sm:$0xf]
        %v3979 = vld [vmem:[%s8 + $0x2c] sm:$0xf]
        %v3980 = vld [vmem:[%s8 + $0x30] sm:$0xf]
        %v3981 = vld [vmem:[%s8 + $0x34] sm:$0xf]
        %v3982 = vld [vmem:[%s8 + $0x38] sm:$0xf]
        %v3983 = vld [vmem:[%s8 + $0x3c] sm:$0xf]
        %v3984 = vld [vmem:[%s9] sm:$0x1]
        %v3986 = vperm.slane %v3984, 0
        %v4004 = vunpack.c.l.b16 %v3968
        %v4005 = vunpack.c.l.b16 %v3969
        %v4006 = vunpack.c.l.b16 %v3970
        %v4007 = vunpack.c.l.b16 %v3971
        %v4008 = vunpack.c.l.b16 %v3972
        %v4009 = vunpack.c.l.b16 %v3973
        %v4010 = vunpack.c.l.b16 %v3974
        %v4011 = vunpack.c.l.b16 %v3975
        %v4012 = vunpack.c.l.b16 %v3976
        %v4013 = vunpack.c.l.b16 %v3977
        %v4014 = vunpack.c.l.b16 %v3978
        %v4015 = vunpack.c.l.b16 %v3979
        %v4016 = vunpack.c.l.b16 %v3980
        %v4017 = vunpack.c.l.b16 %v3981
        %v4018 = vunpack.c.l.b16 %v3982
        %v4019 = vunpack.c.l.b16 %v3983
        %v4020 = vpack.c.b16 %v4005, %v4004
        %v4021 = vpack.c.b16 %v4007, %v4006
        %v4022 = vpack.c.b16 %v4009, %v4008
        %v4023 = vpack.c.b16 %v4011, %v4010
        %v4024 = vpack.c.b16 %v4013, %v4012
        %v4025 = vpack.c.b16 %v4015, %v4014
        %v4026 = vpack.c.b16 %v4017, %v4016
        %v4027 = vpack.c.b16 %v4019, %v4018
        %4036 = vmatpush.bf16.msra.mxu0 %v4027
        %4037 = vmatpush.bf16.msra.mxu0 %v4026
        %4038 = vmatpush.bf16.msra.mxu0 %v4025
        %4039 = vmatpush.bf16.msra.mxu0 %v4024
        %4040 = vmatpush.bf16.msra.mxu0 %v4023
        %4041 = vmatpush.bf16.msra.mxu0 %v4022
        %4042 = vmatpush.bf16.msra.mxu0 %v4021
        %4043 = vmatpush.bf16.msra.mxu0 %v4020
        %4044 = vmatmul.bf16.gmra.mxu0 %v3960
        %v4045 = vpop.f32.mrf.mxu0
        %v4046 = vadd.f32 %v3986, %v4045
        %v4047 = vpop.f32.mrf.mxu0
        %v4048 = vadd.f32 %v3986, %v4047
        %4049 = vmatmul.bf16.gmra.mxu0 %v3961
        %v4050 = vpop.f32.mrf.mxu0
        %v4051 = vadd.f32 %v3986, %v4050
        %v4052 = vpop.f32.mrf.mxu0
        %v4053 = vadd.f32 %v3986, %v4052
        %4054 = vmatmul.bf16.gmra.mxu0 %v3962
        %v4055 = vpop.f32.mrf.mxu0
        %v4056 = vadd.f32 %v3986, %v4055
        %v4057 = vpop.f32.mrf.mxu0
        %v4058 = vadd.f32 %v3986, %v4057
        %4059 = vmatmul.bf16.gmra.mxu0 %v3963
        %v4060 = vpop.f32.mrf.mxu0
        %v4061 = vadd.f32 %v3986, %v4060
        %v4062 = vpop.f32.mrf.mxu0
        %v4063 = vadd.f32 %v3986, %v4062
        %4064 = vmatmul.bf16.gmra.mxu0 %v3964
        %v4065 = vpop.f32.mrf.mxu0
        %v4066 = vadd.f32 %v3986, %v4065
        %v4067 = vpop.f32.mrf.mxu0
        %v4068 = vadd.f32 %v3986, %v4067
        %4069 = vmatmul.bf16.gmra.mxu0 %v3965
        %v4070 = vpop.f32.mrf.mxu0
        %v4071 = vadd.f32 %v3986, %v4070
        %v4072 = vpop.f32.mrf.mxu0
        %v4073 = vadd.f32 %v3986, %v4072
        %4074 = vmatmul.bf16.gmra.mxu0 %v3966
        %v4075 = vpop.f32.mrf.mxu0
        %v4076 = vadd.f32 %v3986, %v4075
        %v4077 = vpop.f32.mrf.mxu0
        %v4078 = vadd.f32 %v3986, %v4077
        %4079 = vmatmul.bf16.gmra.mxu0 %v3967
        %v4080 = vpop.f32.mrf.mxu0
        %v4081 = vadd.f32 %v3986, %v4080
        %v4082 = vpop.f32.mrf.mxu0
        %v4083 = vadd.f32 %v3986, %v4082
        %4084 = vdwg.mxu0
        %v4085 = vmul.f32 %v4046, 0.5
        %v4086 = vmul.f32 %v4048, 0.5
        %v4087 = vmul.f32 %v4051, 0.5
        %v4088 = vmul.f32 %v4053, 0.5
        %v4089 = vmul.f32 %v4056, 0.5
        %v4090 = vmul.f32 %v4058, 0.5
        %v4091 = vmul.f32 %v4061, 0.5
        %v4092 = vmul.f32 %v4063, 0.5
        %v4093 = vmul.f32 %v4066, 0.5
        %v4094 = vmul.f32 %v4068, 0.5
        %v4095 = vmul.f32 %v4071, 0.5
        %v4096 = vmul.f32 %v4073, 0.5
        %v4097 = vmul.f32 %v4076, 0.5
        %v4098 = vmul.f32 %v4078, 0.5
        %v4099 = vmul.f32 %v4081, 0.5
        %v4100 = vmul.f32 %v4083, 0.5
        %v4101 = vmul.f32 %v4046, 0.70710677
        %v4102 = vmul.f32 %v4048, 0.70710677
        %v4103 = vmul.f32 %v4051, 0.70710677
        %v4104 = vmul.f32 %v4053, 0.70710677
        %v4105 = vmul.f32 %v4056, 0.70710677
        %v4106 = vmul.f32 %v4058, 0.70710677
        %v4107 = vmul.f32 %v4061, 0.70710677
        %v4108 = vmul.f32 %v4063, 0.70710677
        %v4109 = vmul.f32 %v4066, 0.70710677
        %v4110 = vmul.f32 %v4068, 0.70710677
        %v4111 = vmul.f32 %v4071, 0.70710677
        %v4112 = vmul.f32 %v4073, 0.70710677
        %v4113 = vmul.f32 %v4076, 0.70710677
        %v4114 = vmul.f32 %v4078, 0.70710677
        %v4115 = vmul.f32 %v4081, 0.70710677
        %v4116 = vmul.f32 %v4083, 0.70710677
        %v4117 = vmul.f32 %v4101, %v4101
        %v4118 = vmin.f32 16.0, %v4117
        %v4119 = vmul.f32 %v4118, 2.1237322e-06
        %v4120 = vadd.f32 %v4119, 0.00028619796
        %v4121 = vmul.f32 %v4118, %v4120
        %v4122 = vadd.f32 %v4121, 0.0036580483
        %v4123 = vmul.f32 %v4118, %v4122
        %v4124 = vadd.f32 %v4123, 0.05243302
        %v4125 = vmul.f32 %v4118, %v4124
        %v4126 = vadd.f32 %v4125, 0.18741608
        %v4127 = vmul.f32 %v4118, %v4126
        %v4128 = vadd.f32 %v4127, 1.1283791
        %v4129 = vmul.f32 %v4101, %v4128
        %v4130 = vmul.f32 %v4118, 3.8918573e-05
        %v4131 = vadd.f32 %v4130, 0.001143296
        %v4132 = vmul.f32 %v4118, %v4131
        %v4133 = vadd.f32 %v4132, 0.014752088
        %v4134 = vmul.f32 %v4118, %v4133
        %v4135 = vadd.f32 %v4134, 0.112945676
        %v4136 = vmul.f32 %v4118, %v4135
        %v4137 = vadd.f32 %v4136, 0.4994258
        %v4138 = vmul.f32 %v4118, %v4137
        %v4139 = vadd.f32 %v4138, 1.0
        %v4140 = vrcp.pop %v4139
        %v4141 = vmul.f32 %v4139, %v4140
        %v4142 = vsub.f32 1.0, %v4141
        %v4143 = vmul.f32 %v4140, %v4142
        %v4144 = vadd.f32 %v4140, %v4143
        %vm4145 = vweird.f32 %v4139
        %vm4146 = vweird.f32 %v4140
        %vm4147 = vmor %vm4145, %vm4146
        %v4148 = vsel %vm4147, %v4140, %v4144
        %v4149 = vand.u32 2147483647, %v4139
        %vm4150 = vcmp.eq.f32.partialorder %v4149, 8.507059e+37
        %v4151 = vand.u32 %v4139, 2147483648
        %v4152 = vor.u32 1.1754944e-38, %v4151
        %v4153 = vsel %vm4150, %v4152, %v4148
        %v4154 = vmul.f32 %v4129, %v4153
        %v4155 = vmin.f32 %v4154, 1.0
        %v4156 = vmax.f32 %v4155, -1.0
        %v4157 = vmul.f32 %v4102, %v4102
        %v4158 = vmin.f32 16.0, %v4157
        %v4159 = vmul.f32 %v4158, 2.1237322e-06
        %v4160 = vadd.f32 %v4159, 0.00028619796
        %v4161 = vmul.f32 %v4158, %v4160
        %v4162 = vadd.f32 %v4161, 0.0036580483
        %v4163 = vmul.f32 %v4158, %v4162
        %v4164 = vadd.f32 %v4163, 0.05243302
        %v4165 = vmul.f32 %v4158, %v4164
        %v4166 = vadd.f32 %v4165, 0.18741608
        %v4167 = vmul.f32 %v4158, %v4166
        %v4168 = vadd.f32 %v4167, 1.1283791
        %v4169 = vmul.f32 %v4102, %v4168
        %v4170 = vmul.f32 %v4158, 3.8918573e-05
        %v4171 = vadd.f32 %v4170, 0.001143296
        %v4172 = vmul.f32 %v4158, %v4171
        %v4173 = vadd.f32 %v4172, 0.014752088
        %v4174 = vmul.f32 %v4158, %v4173
        %v4175 = vadd.f32 %v4174, 0.112945676
        %v4176 = vmul.f32 %v4158, %v4175
        %v4177 = vadd.f32 %v4176, 0.4994258
        %v4178 = vmul.f32 %v4158, %v4177
        %v4179 = vadd.f32 %v4178, 1.0
        %v4180 = vrcp.pop %v4179
        %v4181 = vmul.f32 %v4179, %v4180
        %v4182 = vsub.f32 1.0, %v4181
        %v4183 = vmul.f32 %v4180, %v4182
        %v4184 = vadd.f32 %v4180, %v4183
        %vm4185 = vweird.f32 %v4179
        %vm4186 = vweird.f32 %v4180
        %vm4187 = vmor %vm4185, %vm4186
        %v4188 = vsel %vm4187, %v4180, %v4184
        %v4189 = vand.u32 2147483647, %v4179
        %vm4190 = vcmp.eq.f32.partialorder %v4189, 8.507059e+37
        %v4191 = vand.u32 %v4179, 2147483648
        %v4192 = vor.u32 1.1754944e-38, %v4191
        %v4193 = vsel %vm4190, %v4192, %v4188
        %v4194 = vmul.f32 %v4169, %v4193
        %v4195 = vmin.f32 %v4194, 1.0
        %v4196 = vmax.f32 %v4195, -1.0
        %v4197 = vmul.f32 %v4103, %v4103
        %v4198 = vmin.f32 16.0, %v4197
        %v4199 = vmul.f32 %v4198, 2.1237322e-06
        %v4200 = vadd.f32 %v4199, 0.00028619796
        %v4201 = vmul.f32 %v4198, %v4200
        %v4202 = vadd.f32 %v4201, 0.0036580483
        %v4203 = vmul.f32 %v4198, %v4202
        %v4204 = vadd.f32 %v4203, 0.05243302
        %v4205 = vmul.f32 %v4198, %v4204
        %v4206 = vadd.f32 %v4205, 0.18741608
        %v4207 = vmul.f32 %v4198, %v4206
        %v4208 = vadd.f32 %v4207, 1.1283791
        %v4209 = vmul.f32 %v4103, %v4208
        %v4210 = vmul.f32 %v4198, 3.8918573e-05
        %v4211 = vadd.f32 %v4210, 0.001143296
        %v4212 = vmul.f32 %v4198, %v4211
        %v4213 = vadd.f32 %v4212, 0.014752088
        %v4214 = vmul.f32 %v4198, %v4213
        %v4215 = vadd.f32 %v4214, 0.112945676
        %v4216 = vmul.f32 %v4198, %v4215
        %v4217 = vadd.f32 %v4216, 0.4994258
        %v4218 = vmul.f32 %v4198, %v4217
        %v4219 = vadd.f32 %v4218, 1.0
        %v4220 = vrcp.pop %v4219
        %v4221 = vmul.f32 %v4219, %v4220
        %v4222 = vsub.f32 1.0, %v4221
        %v4223 = vmul.f32 %v4220, %v4222
        %v4224 = vadd.f32 %v4220, %v4223
        %vm4225 = vweird.f32 %v4219
        %vm4226 = vweird.f32 %v4220
        %vm4227 = vmor %vm4225, %vm4226
        %v4228 = vsel %vm4227, %v4220, %v4224
        %v4229 = vand.u32 2147483647, %v4219
        %vm4230 = vcmp.eq.f32.partialorder %v4229, 8.507059e+37
        %v4231 = vand.u32 %v4219, 2147483648
        %v4232 = vor.u32 1.1754944e-38, %v4231
        %v4233 = vsel %vm4230, %v4232, %v4228
        %v4234 = vmul.f32 %v4209, %v4233
        %v4235 = vmin.f32 %v4234, 1.0
        %v4236 = vmax.f32 %v4235, -1.0
        %v4237 = vmul.f32 %v4104, %v4104
        %v4238 = vmin.f32 16.0, %v4237
        %v4239 = vmul.f32 %v4238, 2.1237322e-06
        %v4240 = vadd.f32 %v4239, 0.00028619796
        %v4241 = vmul.f32 %v4238, %v4240
        %v4242 = vadd.f32 %v4241, 0.0036580483
        %v4243 = vmul.f32 %v4238, %v4242
        %v4244 = vadd.f32 %v4243, 0.05243302
        %v4245 = vmul.f32 %v4238, %v4244
        %v4246 = vadd.f32 %v4245, 0.18741608
        %v4247 = vmul.f32 %v4238, %v4246
        %v4248 = vadd.f32 %v4247, 1.1283791
        %v4249 = vmul.f32 %v4104, %v4248
        %v4250 = vmul.f32 %v4238, 3.8918573e-05
        %v4251 = vadd.f32 %v4250, 0.001143296
        %v4252 = vmul.f32 %v4238, %v4251
        %v4253 = vadd.f32 %v4252, 0.014752088
        %v4254 = vmul.f32 %v4238, %v4253
        %v4255 = vadd.f32 %v4254, 0.112945676
        %v4256 = vmul.f32 %v4238, %v4255
        %v4257 = vadd.f32 %v4256, 0.4994258
        %v4258 = vmul.f32 %v4238, %v4257
        %v4259 = vadd.f32 %v4258, 1.0
        %v4260 = vrcp.pop %v4259
        %v4261 = vmul.f32 %v4259, %v4260
        %v4262 = vsub.f32 1.0, %v4261
        %v4263 = vmul.f32 %v4260, %v4262
        %v4264 = vadd.f32 %v4260, %v4263
        %vm4265 = vweird.f32 %v4259
        %vm4266 = vweird.f32 %v4260
        %vm4267 = vmor %vm4265, %vm4266
        %v4268 = vsel %vm4267, %v4260, %v4264
        %v4269 = vand.u32 2147483647, %v4259
        %vm4270 = vcmp.eq.f32.partialorder %v4269, 8.507059e+37
        %v4271 = vand.u32 %v4259, 2147483648
        %v4272 = vor.u32 1.1754944e-38, %v4271
        %v4273 = vsel %vm4270, %v4272, %v4268
        %v4274 = vmul.f32 %v4249, %v4273
        %v4275 = vmin.f32 %v4274, 1.0
        %v4276 = vmax.f32 %v4275, -1.0
        %v4277 = vmul.f32 %v4105, %v4105
        %v4278 = vmin.f32 16.0, %v4277
        %v4279 = vmul.f32 %v4278, 2.1237322e-06
        %v4280 = vadd.f32 %v4279, 0.00028619796
        %v4281 = vmul.f32 %v4278, %v4280
        %v4282 = vadd.f32 %v4281, 0.0036580483
        %v4283 = vmul.f32 %v4278, %v4282
        %v4284 = vadd.f32 %v4283, 0.05243302
        %v4285 = vmul.f32 %v4278, %v4284
        %v4286 = vadd.f32 %v4285, 0.18741608
        %v4287 = vmul.f32 %v4278, %v4286
        %v4288 = vadd.f32 %v4287, 1.1283791
        %v4289 = vmul.f32 %v4105, %v4288
        %v4290 = vmul.f32 %v4278, 3.8918573e-05
        %v4291 = vadd.f32 %v4290, 0.001143296
        %v4292 = vmul.f32 %v4278, %v4291
        %v4293 = vadd.f32 %v4292, 0.014752088
        %v4294 = vmul.f32 %v4278, %v4293
        %v4295 = vadd.f32 %v4294, 0.112945676
        %v4296 = vmul.f32 %v4278, %v4295
        %v4297 = vadd.f32 %v4296, 0.4994258
        %v4298 = vmul.f32 %v4278, %v4297
        %v4299 = vadd.f32 %v4298, 1.0
        %v4300 = vrcp.pop %v4299
        %v4301 = vmul.f32 %v4299, %v4300
        %v4302 = vsub.f32 1.0, %v4301
        %v4303 = vmul.f32 %v4300, %v4302
        %v4304 = vadd.f32 %v4300, %v4303
        %vm4305 = vweird.f32 %v4299
        %vm4306 = vweird.f32 %v4300
        %vm4307 = vmor %vm4305, %vm4306
        %v4308 = vsel %vm4307, %v4300, %v4304
        %v4309 = vand.u32 2147483647, %v4299
        %vm4310 = vcmp.eq.f32.partialorder %v4309, 8.507059e+37
        %v4311 = vand.u32 %v4299, 2147483648
        %v4312 = vor.u32 1.1754944e-38, %v4311
        %v4313 = vsel %vm4310, %v4312, %v4308
        %v4314 = vmul.f32 %v4289, %v4313
        %v4315 = vmin.f32 %v4314, 1.0
        %v4316 = vmax.f32 %v4315, -1.0
        %v4317 = vmul.f32 %v4106, %v4106
        %v4318 = vmin.f32 16.0, %v4317
        %v4319 = vmul.f32 %v4318, 2.1237322e-06
        %v4320 = vadd.f32 %v4319, 0.00028619796
        %v4321 = vmul.f32 %v4318, %v4320
        %v4322 = vadd.f32 %v4321, 0.0036580483
        %v4323 = vmul.f32 %v4318, %v4322
        %v4324 = vadd.f32 %v4323, 0.05243302
        %v4325 = vmul.f32 %v4318, %v4324
        %v4326 = vadd.f32 %v4325, 0.18741608
        %v4327 = vmul.f32 %v4318, %v4326
        %v4328 = vadd.f32 %v4327, 1.1283791
        %v4329 = vmul.f32 %v4106, %v4328
        %v4330 = vmul.f32 %v4318, 3.8918573e-05
        %v4331 = vadd.f32 %v4330, 0.001143296
        %v4332 = vmul.f32 %v4318, %v4331
        %v4333 = vadd.f32 %v4332, 0.014752088
        %v4334 = vmul.f32 %v4318, %v4333
        %v4335 = vadd.f32 %v4334, 0.112945676
        %v4336 = vmul.f32 %v4318, %v4335
        %v4337 = vadd.f32 %v4336, 0.4994258
        %v4338 = vmul.f32 %v4318, %v4337
        %v4339 = vadd.f32 %v4338, 1.0
        %v4340 = vrcp.pop %v4339
        %v4341 = vmul.f32 %v4339, %v4340
        %v4342 = vsub.f32 1.0, %v4341
        %v4343 = vmul.f32 %v4340, %v4342
        %v4344 = vadd.f32 %v4340, %v4343
        %vm4345 = vweird.f32 %v4339
        %vm4346 = vweird.f32 %v4340
        %vm4347 = vmor %vm4345, %vm4346
        %v4348 = vsel %vm4347, %v4340, %v4344
        %v4349 = vand.u32 2147483647, %v4339
        %vm4350 = vcmp.eq.f32.partialorder %v4349, 8.507059e+37
        %v4351 = vand.u32 %v4339, 2147483648
        %v4352 = vor.u32 1.1754944e-38, %v4351
        %v4353 = vsel %vm4350, %v4352, %v4348
        %v4354 = vmul.f32 %v4329, %v4353
        %v4355 = vmin.f32 %v4354, 1.0
        %v4356 = vmax.f32 %v4355, -1.0
        %v4357 = vmul.f32 %v4107, %v4107
        %v4358 = vmin.f32 16.0, %v4357
        %v4359 = vmul.f32 %v4358, 2.1237322e-06
        %v4360 = vadd.f32 %v4359, 0.00028619796
        %v4361 = vmul.f32 %v4358, %v4360
        %v4362 = vadd.f32 %v4361, 0.0036580483
        %v4363 = vmul.f32 %v4358, %v4362
        %v4364 = vadd.f32 %v4363, 0.05243302
        %v4365 = vmul.f32 %v4358, %v4364
        %v4366 = vadd.f32 %v4365, 0.18741608
        %v4367 = vmul.f32 %v4358, %v4366
        %v4368 = vadd.f32 %v4367, 1.1283791
        %v4369 = vmul.f32 %v4107, %v4368
        %v4370 = vmul.f32 %v4358, 3.8918573e-05
        %v4371 = vadd.f32 %v4370, 0.001143296
        %v4372 = vmul.f32 %v4358, %v4371
        %v4373 = vadd.f32 %v4372, 0.014752088
        %v4374 = vmul.f32 %v4358, %v4373
        %v4375 = vadd.f32 %v4374, 0.112945676
        %v4376 = vmul.f32 %v4358, %v4375
        %v4377 = vadd.f32 %v4376, 0.4994258
        %v4378 = vmul.f32 %v4358, %v4377
        %v4379 = vadd.f32 %v4378, 1.0
        %v4380 = vrcp.pop %v4379
        %v4381 = vmul.f32 %v4379, %v4380
        %v4382 = vsub.f32 1.0, %v4381
        %v4383 = vmul.f32 %v4380, %v4382
        %v4384 = vadd.f32 %v4380, %v4383
        %vm4385 = vweird.f32 %v4379
        %vm4386 = vweird.f32 %v4380
        %vm4387 = vmor %vm4385, %vm4386
        %v4388 = vsel %vm4387, %v4380, %v4384
        %v4389 = vand.u32 2147483647, %v4379
        %vm4390 = vcmp.eq.f32.partialorder %v4389, 8.507059e+37
        %v4391 = vand.u32 %v4379, 2147483648
        %v4392 = vor.u32 1.1754944e-38, %v4391
        %v4393 = vsel %vm4390, %v4392, %v4388
        %v4394 = vmul.f32 %v4369, %v4393
        %v4395 = vmin.f32 %v4394, 1.0
        %v4396 = vmax.f32 %v4395, -1.0
        %v4397 = vmul.f32 %v4108, %v4108
        %v4398 = vmin.f32 16.0, %v4397
        %v4399 = vmul.f32 %v4398, 2.1237322e-06
        %v4400 = vadd.f32 %v4399, 0.00028619796
        %v4401 = vmul.f32 %v4398, %v4400
        %v4402 = vadd.f32 %v4401, 0.0036580483
        %v4403 = vmul.f32 %v4398, %v4402
        %v4404 = vadd.f32 %v4403, 0.05243302
        %v4405 = vmul.f32 %v4398, %v4404
        %v4406 = vadd.f32 %v4405, 0.18741608
        %v4407 = vmul.f32 %v4398, %v4406
        %v4408 = vadd.f32 %v4407, 1.1283791
        %v4409 = vmul.f32 %v4108, %v4408
        %v4410 = vmul.f32 %v4398, 3.8918573e-05
        %v4411 = vadd.f32 %v4410, 0.001143296
        %v4412 = vmul.f32 %v4398, %v4411
        %v4413 = vadd.f32 %v4412, 0.014752088
        %v4414 = vmul.f32 %v4398, %v4413
        %v4415 = vadd.f32 %v4414, 0.112945676
        %v4416 = vmul.f32 %v4398, %v4415
        %v4417 = vadd.f32 %v4416, 0.4994258
        %v4418 = vmul.f32 %v4398, %v4417
        %v4419 = vadd.f32 %v4418, 1.0
        %v4420 = vrcp.pop %v4419
        %v4421 = vmul.f32 %v4419, %v4420
        %v4422 = vsub.f32 1.0, %v4421
        %v4423 = vmul.f32 %v4420, %v4422
        %v4424 = vadd.f32 %v4420, %v4423
        %vm4425 = vweird.f32 %v4419
        %vm4426 = vweird.f32 %v4420
        %vm4427 = vmor %vm4425, %vm4426
        %v4428 = vsel %vm4427, %v4420, %v4424
        %v4429 = vand.u32 2147483647, %v4419
        %vm4430 = vcmp.eq.f32.partialorder %v4429, 8.507059e+37
        %v4431 = vand.u32 %v4419, 2147483648
        %v4432 = vor.u32 1.1754944e-38, %v4431
        %v4433 = vsel %vm4430, %v4432, %v4428
        %v4434 = vmul.f32 %v4409, %v4433
        %v4435 = vmin.f32 %v4434, 1.0
        %v4436 = vmax.f32 %v4435, -1.0
        %v4437 = vmul.f32 %v4109, %v4109
        %v4438 = vmin.f32 16.0, %v4437
        %v4439 = vmul.f32 %v4438, 2.1237322e-06
        %v4440 = vadd.f32 %v4439, 0.00028619796
        %v4441 = vmul.f32 %v4438, %v4440
        %v4442 = vadd.f32 %v4441, 0.0036580483
        %v4443 = vmul.f32 %v4438, %v4442
        %v4444 = vadd.f32 %v4443, 0.05243302
        %v4445 = vmul.f32 %v4438, %v4444
        %v4446 = vadd.f32 %v4445, 0.18741608
        %v4447 = vmul.f32 %v4438, %v4446
        %v4448 = vadd.f32 %v4447, 1.1283791
        %v4449 = vmul.f32 %v4109, %v4448
        %v4450 = vmul.f32 %v4438, 3.8918573e-05
        %v4451 = vadd.f32 %v4450, 0.001143296
        %v4452 = vmul.f32 %v4438, %v4451
        %v4453 = vadd.f32 %v4452, 0.014752088
        %v4454 = vmul.f32 %v4438, %v4453
        %v4455 = vadd.f32 %v4454, 0.112945676
        %v4456 = vmul.f32 %v4438, %v4455
        %v4457 = vadd.f32 %v4456, 0.4994258
        %v4458 = vmul.f32 %v4438, %v4457
        %v4459 = vadd.f32 %v4458, 1.0
        %v4460 = vrcp.pop %v4459
        %v4461 = vmul.f32 %v4459, %v4460
        %v4462 = vsub.f32 1.0, %v4461
        %v4463 = vmul.f32 %v4460, %v4462
        %v4464 = vadd.f32 %v4460, %v4463
        %vm4465 = vweird.f32 %v4459
        %vm4466 = vweird.f32 %v4460
        %vm4467 = vmor %vm4465, %vm4466
        %v4468 = vsel %vm4467, %v4460, %v4464
        %v4469 = vand.u32 2147483647, %v4459
        %vm4470 = vcmp.eq.f32.partialorder %v4469, 8.507059e+37
        %v4471 = vand.u32 %v4459, 2147483648
        %v4472 = vor.u32 1.1754944e-38, %v4471
        %v4473 = vsel %vm4470, %v4472, %v4468
        %v4474 = vmul.f32 %v4449, %v4473
        %v4475 = vmin.f32 %v4474, 1.0
        %v4476 = vmax.f32 %v4475, -1.0
        %v4477 = vmul.f32 %v4110, %v4110
        %v4478 = vmin.f32 16.0, %v4477
        %v4479 = vmul.f32 %v4478, 2.1237322e-06
        %v4480 = vadd.f32 %v4479, 0.00028619796
        %v4481 = vmul.f32 %v4478, %v4480
        %v4482 = vadd.f32 %v4481, 0.0036580483
        %v4483 = vmul.f32 %v4478, %v4482
        %v4484 = vadd.f32 %v4483, 0.05243302
        %v4485 = vmul.f32 %v4478, %v4484
        %v4486 = vadd.f32 %v4485, 0.18741608
        %v4487 = vmul.f32 %v4478, %v4486
        %v4488 = vadd.f32 %v4487, 1.1283791
        %v4489 = vmul.f32 %v4110, %v4488
        %v4490 = vmul.f32 %v4478, 3.8918573e-05
        %v4491 = vadd.f32 %v4490, 0.001143296
        %v4492 = vmul.f32 %v4478, %v4491
        %v4493 = vadd.f32 %v4492, 0.014752088
        %v4494 = vmul.f32 %v4478, %v4493
        %v4495 = vadd.f32 %v4494, 0.112945676
        %v4496 = vmul.f32 %v4478, %v4495
        %v4497 = vadd.f32 %v4496, 0.4994258
        %v4498 = vmul.f32 %v4478, %v4497
        %v4499 = vadd.f32 %v4498, 1.0
        %v4500 = vrcp.pop %v4499
        %v4501 = vmul.f32 %v4499, %v4500
        %v4502 = vsub.f32 1.0, %v4501
        %v4503 = vmul.f32 %v4500, %v4502
        %v4504 = vadd.f32 %v4500, %v4503
        %vm4505 = vweird.f32 %v4499
        %vm4506 = vweird.f32 %v4500
        %vm4507 = vmor %vm4505, %vm4506
        %v4508 = vsel %vm4507, %v4500, %v4504
        %v4509 = vand.u32 2147483647, %v4499
        %vm4510 = vcmp.eq.f32.partialorder %v4509, 8.507059e+37
        %v4511 = vand.u32 %v4499, 2147483648
        %v4512 = vor.u32 1.1754944e-38, %v4511
        %v4513 = vsel %vm4510, %v4512, %v4508
        %v4514 = vmul.f32 %v4489, %v4513
        %v4515 = vmin.f32 %v4514, 1.0
        %v4516 = vmax.f32 %v4515, -1.0
        %v4517 = vmul.f32 %v4111, %v4111
        %v4518 = vmin.f32 16.0, %v4517
        %v4519 = vmul.f32 %v4518, 2.1237322e-06
        %v4520 = vadd.f32 %v4519, 0.00028619796
        %v4521 = vmul.f32 %v4518, %v4520
        %v4522 = vadd.f32 %v4521, 0.0036580483
        %v4523 = vmul.f32 %v4518, %v4522
        %v4524 = vadd.f32 %v4523, 0.05243302
        %v4525 = vmul.f32 %v4518, %v4524
        %v4526 = vadd.f32 %v4525, 0.18741608
        %v4527 = vmul.f32 %v4518, %v4526
        %v4528 = vadd.f32 %v4527, 1.1283791
        %v4529 = vmul.f32 %v4111, %v4528
        %v4530 = vmul.f32 %v4518, 3.8918573e-05
        %v4531 = vadd.f32 %v4530, 0.001143296
        %v4532 = vmul.f32 %v4518, %v4531
        %v4533 = vadd.f32 %v4532, 0.014752088
        %v4534 = vmul.f32 %v4518, %v4533
        %v4535 = vadd.f32 %v4534, 0.112945676
        %v4536 = vmul.f32 %v4518, %v4535
        %v4537 = vadd.f32 %v4536, 0.4994258
        %v4538 = vmul.f32 %v4518, %v4537
        %v4539 = vadd.f32 %v4538, 1.0
        %v4540 = vrcp.pop %v4539
        %v4541 = vmul.f32 %v4539, %v4540
        %v4542 = vsub.f32 1.0, %v4541
        %v4543 = vmul.f32 %v4540, %v4542
        %v4544 = vadd.f32 %v4540, %v4543
        %vm4545 = vweird.f32 %v4539
        %vm4546 = vweird.f32 %v4540
        %vm4547 = vmor %vm4545, %vm4546
        %v4548 = vsel %vm4547, %v4540, %v4544
        %v4549 = vand.u32 2147483647, %v4539
        %vm4550 = vcmp.eq.f32.partialorder %v4549, 8.507059e+37
        %v4551 = vand.u32 %v4539, 2147483648
        %v4552 = vor.u32 1.1754944e-38, %v4551
        %v4553 = vsel %vm4550, %v4552, %v4548
        %v4554 = vmul.f32 %v4529, %v4553
        %v4555 = vmin.f32 %v4554, 1.0
        %v4556 = vmax.f32 %v4555, -1.0
        %v4557 = vmul.f32 %v4112, %v4112
        %v4558 = vmin.f32 16.0, %v4557
        %v4559 = vmul.f32 %v4558, 2.1237322e-06
        %v4560 = vadd.f32 %v4559, 0.00028619796
        %v4561 = vmul.f32 %v4558, %v4560
        %v4562 = vadd.f32 %v4561, 0.0036580483
        %v4563 = vmul.f32 %v4558, %v4562
        %v4564 = vadd.f32 %v4563, 0.05243302
        %v4565 = vmul.f32 %v4558, %v4564
        %v4566 = vadd.f32 %v4565, 0.18741608
        %v4567 = vmul.f32 %v4558, %v4566
        %v4568 = vadd.f32 %v4567, 1.1283791
        %v4569 = vmul.f32 %v4112, %v4568
        %v4570 = vmul.f32 %v4558, 3.8918573e-05
        %v4571 = vadd.f32 %v4570, 0.001143296
        %v4572 = vmul.f32 %v4558, %v4571
        %v4573 = vadd.f32 %v4572, 0.014752088
        %v4574 = vmul.f32 %v4558, %v4573
        %v4575 = vadd.f32 %v4574, 0.112945676
        %v4576 = vmul.f32 %v4558, %v4575
        %v4577 = vadd.f32 %v4576, 0.4994258
        %v4578 = vmul.f32 %v4558, %v4577
        %v4579 = vadd.f32 %v4578, 1.0
        %v4580 = vrcp.pop %v4579
        %v4581 = vmul.f32 %v4579, %v4580
        %v4582 = vsub.f32 1.0, %v4581
        %v4583 = vmul.f32 %v4580, %v4582
        %v4584 = vadd.f32 %v4580, %v4583
        %vm4585 = vweird.f32 %v4579
        %vm4586 = vweird.f32 %v4580
        %vm4587 = vmor %vm4585, %vm4586
        %v4588 = vsel %vm4587, %v4580, %v4584
        %v4589 = vand.u32 2147483647, %v4579
        %vm4590 = vcmp.eq.f32.partialorder %v4589, 8.507059e+37
        %v4591 = vand.u32 %v4579, 2147483648
        %v4592 = vor.u32 1.1754944e-38, %v4591
        %v4593 = vsel %vm4590, %v4592, %v4588
        %v4594 = vmul.f32 %v4569, %v4593
        %v4595 = vmin.f32 %v4594, 1.0
        %v4596 = vmax.f32 %v4595, -1.0
        %v4597 = vmul.f32 %v4113, %v4113
        %v4598 = vmin.f32 16.0, %v4597
        %v4599 = vmul.f32 %v4598, 2.1237322e-06
        %v4600 = vadd.f32 %v4599, 0.00028619796
        %v4601 = vmul.f32 %v4598, %v4600
        %v4602 = vadd.f32 %v4601, 0.0036580483
        %v4603 = vmul.f32 %v4598, %v4602
        %v4604 = vadd.f32 %v4603, 0.05243302
        %v4605 = vmul.f32 %v4598, %v4604
        %v4606 = vadd.f32 %v4605, 0.18741608
        %v4607 = vmul.f32 %v4598, %v4606
        %v4608 = vadd.f32 %v4607, 1.1283791
        %v4609 = vmul.f32 %v4113, %v4608
        %v4610 = vmul.f32 %v4598, 3.8918573e-05
        %v4611 = vadd.f32 %v4610, 0.001143296
        %v4612 = vmul.f32 %v4598, %v4611
        %v4613 = vadd.f32 %v4612, 0.014752088
        %v4614 = vmul.f32 %v4598, %v4613
        %v4615 = vadd.f32 %v4614, 0.112945676
        %v4616 = vmul.f32 %v4598, %v4615
        %v4617 = vadd.f32 %v4616, 0.4994258
        %v4618 = vmul.f32 %v4598, %v4617
        %v4619 = vadd.f32 %v4618, 1.0
        %v4620 = vrcp.pop %v4619
        %v4621 = vmul.f32 %v4619, %v4620
        %v4622 = vsub.f32 1.0, %v4621
        %v4623 = vmul.f32 %v4620, %v4622
        %v4624 = vadd.f32 %v4620, %v4623
        %vm4625 = vweird.f32 %v4619
        %vm4626 = vweird.f32 %v4620
        %vm4627 = vmor %vm4625, %vm4626
        %v4628 = vsel %vm4627, %v4620, %v4624
        %v4629 = vand.u32 2147483647, %v4619
        %vm4630 = vcmp.eq.f32.partialorder %v4629, 8.507059e+37
        %v4631 = vand.u32 %v4619, 2147483648
        %v4632 = vor.u32 1.1754944e-38, %v4631
        %v4633 = vsel %vm4630, %v4632, %v4628
        %v4634 = vmul.f32 %v4609, %v4633
        %v4635 = vmin.f32 %v4634, 1.0
        %v4636 = vmax.f32 %v4635, -1.0
        %v4637 = vmul.f32 %v4114, %v4114
        %v4638 = vmin.f32 16.0, %v4637
        %v4639 = vmul.f32 %v4638, 2.1237322e-06
        %v4640 = vadd.f32 %v4639, 0.00028619796
        %v4641 = vmul.f32 %v4638, %v4640
        %v4642 = vadd.f32 %v4641, 0.0036580483
        %v4643 = vmul.f32 %v4638, %v4642
        %v4644 = vadd.f32 %v4643, 0.05243302
        %v4645 = vmul.f32 %v4638, %v4644
        %v4646 = vadd.f32 %v4645, 0.18741608
        %v4647 = vmul.f32 %v4638, %v4646
        %v4648 = vadd.f32 %v4647, 1.1283791
        %v4649 = vmul.f32 %v4114, %v4648
        %v4650 = vmul.f32 %v4638, 3.8918573e-05
        %v4651 = vadd.f32 %v4650, 0.001143296
        %v4652 = vmul.f32 %v4638, %v4651
        %v4653 = vadd.f32 %v4652, 0.014752088
        %v4654 = vmul.f32 %v4638, %v4653
        %v4655 = vadd.f32 %v4654, 0.112945676
        %v4656 = vmul.f32 %v4638, %v4655
        %v4657 = vadd.f32 %v4656, 0.4994258
        %v4658 = vmul.f32 %v4638, %v4657
        %v4659 = vadd.f32 %v4658, 1.0
        %v4660 = vrcp.pop %v4659
        %v4661 = vmul.f32 %v4659, %v4660
        %v4662 = vsub.f32 1.0, %v4661
        %v4663 = vmul.f32 %v4660, %v4662
        %v4664 = vadd.f32 %v4660, %v4663
        %vm4665 = vweird.f32 %v4659
        %vm4666 = vweird.f32 %v4660
        %vm4667 = vmor %vm4665, %vm4666
        %v4668 = vsel %vm4667, %v4660, %v4664
        %v4669 = vand.u32 2147483647, %v4659
        %vm4670 = vcmp.eq.f32.partialorder %v4669, 8.507059e+37
        %v4671 = vand.u32 %v4659, 2147483648
        %v4672 = vor.u32 1.1754944e-38, %v4671
        %v4673 = vsel %vm4670, %v4672, %v4668
        %v4674 = vmul.f32 %v4649, %v4673
        %v4675 = vmin.f32 %v4674, 1.0
        %v4676 = vmax.f32 %v4675, -1.0
        %v4677 = vmul.f32 %v4115, %v4115
        %v4678 = vmin.f32 16.0, %v4677
        %v4679 = vmul.f32 %v4678, 2.1237322e-06
        %v4680 = vadd.f32 %v4679, 0.00028619796
        %v4681 = vmul.f32 %v4678, %v4680
        %v4682 = vadd.f32 %v4681, 0.0036580483
        %v4683 = vmul.f32 %v4678, %v4682
        %v4684 = vadd.f32 %v4683, 0.05243302
        %v4685 = vmul.f32 %v4678, %v4684
        %v4686 = vadd.f32 %v4685, 0.18741608
        %v4687 = vmul.f32 %v4678, %v4686
        %v4688 = vadd.f32 %v4687, 1.1283791
        %v4689 = vmul.f32 %v4115, %v4688
        %v4690 = vmul.f32 %v4678, 3.8918573e-05
        %v4691 = vadd.f32 %v4690, 0.001143296
        %v4692 = vmul.f32 %v4678, %v4691
        %v4693 = vadd.f32 %v4692, 0.014752088
        %v4694 = vmul.f32 %v4678, %v4693
        %v4695 = vadd.f32 %v4694, 0.112945676
        %v4696 = vmul.f32 %v4678, %v4695
        %v4697 = vadd.f32 %v4696, 0.4994258
        %v4698 = vmul.f32 %v4678, %v4697
        %v4699 = vadd.f32 %v4698, 1.0
        %v4700 = vrcp.pop %v4699
        %v4701 = vmul.f32 %v4699, %v4700
        %v4702 = vsub.f32 1.0, %v4701
        %v4703 = vmul.f32 %v4700, %v4702
        %v4704 = vadd.f32 %v4700, %v4703
        %vm4705 = vweird.f32 %v4699
        %vm4706 = vweird.f32 %v4700
        %vm4707 = vmor %vm4705, %vm4706
        %v4708 = vsel %vm4707, %v4700, %v4704
        %v4709 = vand.u32 2147483647, %v4699
        %vm4710 = vcmp.eq.f32.partialorder %v4709, 8.507059e+37
        %v4711 = vand.u32 %v4699, 2147483648
        %v4712 = vor.u32 1.1754944e-38, %v4711
        %v4713 = vsel %vm4710, %v4712, %v4708
        %v4714 = vmul.f32 %v4689, %v4713
        %v4715 = vmin.f32 %v4714, 1.0
        %v4716 = vmax.f32 %v4715, -1.0
        %v4717 = vmul.f32 %v4116, %v4116
        %v4718 = vmin.f32 16.0, %v4717
        %v4719 = vmul.f32 %v4718, 2.1237322e-06
        %v4720 = vadd.f32 %v4719, 0.00028619796
        %v4721 = vmul.f32 %v4718, %v4720
        %v4722 = vadd.f32 %v4721, 0.0036580483
        %v4723 = vmul.f32 %v4718, %v4722
        %v4724 = vadd.f32 %v4723, 0.05243302
        %v4725 = vmul.f32 %v4718, %v4724
        %v4726 = vadd.f32 %v4725, 0.18741608
        %v4727 = vmul.f32 %v4718, %v4726
        %v4728 = vadd.f32 %v4727, 1.1283791
        %v4729 = vmul.f32 %v4116, %v4728
        %v4730 = vmul.f32 %v4718, 3.8918573e-05
        %v4731 = vadd.f32 %v4730, 0.001143296
        %v4732 = vmul.f32 %v4718, %v4731
        %v4733 = vadd.f32 %v4732, 0.014752088
        %v4734 = vmul.f32 %v4718, %v4733
        %v4735 = vadd.f32 %v4734, 0.112945676
        %v4736 = vmul.f32 %v4718, %v4735
        %v4737 = vadd.f32 %v4736, 0.4994258
        %v4738 = vmul.f32 %v4718, %v4737
        %v4739 = vadd.f32 %v4738, 1.0
        %v4740 = vrcp.pop %v4739
        %v4741 = vmul.f32 %v4739, %v4740
        %v4742 = vsub.f32 1.0, %v4741
        %v4743 = vmul.f32 %v4740, %v4742
        %v4744 = vadd.f32 %v4740, %v4743
        %vm4745 = vweird.f32 %v4739
        %vm4746 = vweird.f32 %v4740
        %vm4747 = vmor %vm4745, %vm4746
        %v4748 = vsel %vm4747, %v4740, %v4744
        %v4749 = vand.u32 2147483647, %v4739
        %vm4750 = vcmp.eq.f32.partialorder %v4749, 8.507059e+37
        %v4751 = vand.u32 %v4739, 2147483648
        %v4752 = vor.u32 1.1754944e-38, %v4751
        %v4753 = vsel %vm4750, %v4752, %v4748
        %v4754 = vmul.f32 %v4729, %v4753
        %v4755 = vmin.f32 %v4754, 1.0
        %v4756 = vmax.f32 %v4755, -1.0
        %v4757 = vadd.f32 %v4156, 1.0
        %v4758 = vadd.f32 %v4196, 1.0
        %v4759 = vadd.f32 %v4236, 1.0
        %v4760 = vadd.f32 %v4276, 1.0
        %v4761 = vadd.f32 %v4316, 1.0
        %v4762 = vadd.f32 %v4356, 1.0
        %v4763 = vadd.f32 %v4396, 1.0
        %v4764 = vadd.f32 %v4436, 1.0
        %v4765 = vadd.f32 %v4476, 1.0
        %v4766 = vadd.f32 %v4516, 1.0
        %v4767 = vadd.f32 %v4556, 1.0
        %v4768 = vadd.f32 %v4596, 1.0
        %v4769 = vadd.f32 %v4636, 1.0
        %v4770 = vadd.f32 %v4676, 1.0
        %v4771 = vadd.f32 %v4716, 1.0
        %v4772 = vadd.f32 %v4756, 1.0
        %v4773 = vmul.f32 %v4085, %v4757
        %v4774 = vmul.f32 %v4086, %v4758
        %v4775 = vmul.f32 %v4087, %v4759
        %v4776 = vmul.f32 %v4088, %v4760
        %v4777 = vmul.f32 %v4089, %v4761
        %v4778 = vmul.f32 %v4090, %v4762
        %v4779 = vmul.f32 %v4091, %v4763
        %v4780 = vmul.f32 %v4092, %v4764
        %v4781 = vmul.f32 %v4093, %v4765
        %v4782 = vmul.f32 %v4094, %v4766
        %v4783 = vmul.f32 %v4095, %v4767
        %v4784 = vmul.f32 %v4096, %v4768
        %v4785 = vmul.f32 %v4097, %v4769
        %v4786 = vmul.f32 %v4098, %v4770
        %v4787 = vmul.f32 %v4099, %v4771
        %v4788 = vmul.f32 %v4100, %v4772
        %v4789 = vld [vmem:[%s10] sm:$0x1]
        %v4790 = vpack.c.bf16 %v4774, %v4773
        %v4791 = vpack.c.bf16 %v4776, %v4775
        %v4792 = vpack.c.bf16 %v4778, %v4777
        %v4793 = vpack.c.bf16 %v4780, %v4779
        %v4794 = vpack.c.bf16 %v4782, %v4781
        %v4795 = vpack.c.bf16 %v4784, %v4783
        %v4796 = vpack.c.bf16 %v4786, %v4785
        %v4797 = vpack.c.bf16 %v4788, %v4787
        %v4798 = vld [vmem:[%s11] sm:$0x3]
        %4800 = vset.pattern.permute.xlu0 0
        %4801 = vperm.xlu0 %4800, %v4798
        %v4802 = vpop.permute.xlu0 %4801
        %vm4804 = vcmask 523264
        %v4806 = vsel %vm4804, %v4789, 0
        %v4809 = vsel %vm4804, %v4790, 0
        %v4812 = vsel %vm4804, %v4791, 0
        %v4815 = vsel %vm4804, %v4792, 0
        %v4818 = vsel %vm4804, %v4793, 0
        %v4821 = vsel %vm4804, %v4794, 0
        %v4824 = vsel %vm4804, %v4795, 0
        %v4827 = vsel %vm4804, %v4796, 0
        %v4830 = vsel %vm4804, %v4797, 0
        %4832 = vmatpush.bf16.xpose.msra.mxu0 %v4830
        %4833 = vmatpush.bf16.xpose.msra.mxu0 %v4827
        %4834 = vmatpush.bf16.xpose.msra.mxu0 %v4824
        %4835 = vmatpush.bf16.xpose.msra.mxu0 %v4821
        %4836 = vmatpush.bf16.xpose.msra.mxu0 %v4818
        %4837 = vmatpush.bf16.xpose.msra.mxu0 %v4815
        %4838 = vmatpush.bf16.xpose.msra.mxu0 %v4812
        %4839 = vmatpush.bf16.xpose.msra.mxu0 %v4809
        %4840 = vmatmul.bf16.gmra.mxu0 %v4806
        %v4841 = vpop.f32.mrf.mxu0
        %v4842 = vadd.f32 %v4802, %v4841
        %v4843 = vpop.f32.mrf.mxu0
        %4844 = vdwg.mxu0
        %v4846 = vrot.slane %v4842, 1
        %v4848 = vmax.f32 %v4842, %v4846
        %v4849 = vsub.f32 %v4842, %v4848
        %v4850 = vmul.f32 %v4849, 1.442695
        %v4851 = vpow.pop %v4850
        %v4853 = vrot.slane %v4848, 7
        %v4855 = vsub.f32 %v4842, %v4853
        %v4856 = vmul.f32 %v4855, 1.442695
        %v4857 = vpow.pop %v4856
        %v4859 = vrot.slane %v4857, 1
        %v4861 = vadd.f32 %v4851, %v4859
        %v4862 = vlog2.pop %v4861
        %v4863 = vmul.f32 %v4862, 0.6931472
        %v4864 = vadd.f32 %v4848, %v4863
        %v4865 = vperm.slane %v4864, 0
        %v4866 = vsub.f32 %v4842, %v4865
        %4867 = vst [vmem:[%s465] sm:$0x3] %v4866
        %s4868 = sand.u32 %s300, 1
        %s4869 = scalar_lea.sflag [#allocation4], %s4868
        %s4870 = sand.u32 %s300, 1
        %s4871 = smul.addr %s4870, 2
        %s4872 = scalar_lea.vmem [#allocation7], %s4871
        // Predicated region
        $region77: #{tpu_custom_call.1} parent=67 // pred_check
          %p4873 = pneg %p310
        $region78: #{tpu_custom_call.1} parent=67 // pred_check_branch
          %4875 = sbr.rel (%p4873) target = $region80
        $region79: #{tpu_custom_call.1} parent=67 // pred_region
          %4877 = vsyncadd %s4869, 0
          %s4878 = smul.addr %s30, 2
          %s4879 = scalar_lea.hbm %s12, %s4878
          %s4881 = sshll.u32 %s4872, 4
          %s4882 = int_to_ptr.vmem [resolvable:$true] %s4881
          %s4883 = sshll.u32 %s4879, 4
          %s4884 = int_to_ptr.hbm [resolvable:$true] %s4883
          %4886 = dma.vmem_to_hbm [thread:$0]  %s4882, 32, %s4884, %s4869
        $region80: #{tpu_custom_call.1} parent=67 // pred_fallthru
          _
      $region68: #{tpu_custom_call.1} parent=5 // pred_fallthru
        _
      %p4887 = scmp.le.s32.totalorder 2, %s25
      // Predicated region
      $region81: #{tpu_custom_call.1} parent=5 // pred_check
        %p4888 = pneg %p4887
      $region82: #{tpu_custom_call.1} parent=5 // pred_check_branch
        %4890 = sbr.rel (%p4888) target = $region84
      $region83: #{tpu_custom_call.1} parent=5 // pred_region
        %s4891 = ssub.s32 %s25, 2
        // Predicated region
        $region85: #{tpu_custom_call.1} parent=83 // pred_check
          %p4892 = pneg %p316
        $region86: #{tpu_custom_call.1} parent=83 // pred_check_branch
          %4894 = sbr.rel (%p4892) target = $region88
        $region87: #{tpu_custom_call.1} parent=83 // pred_region
          %s4895 = sand.u32 %s301, 1
          %s4896 = scalar_lea.sflag [#allocation4], %s4895
          %s4897 = sand.u32 %s301, 1
          %s4898 = smul.addr %s4897, 2
          %s4899 = scalar_lea.vmem [#allocation7], %s4898
          %4901 = dma.done %s4896, 32
        $region88: #{tpu_custom_call.1} parent=83 // pred_fallthru
          _
      $region84: #{tpu_custom_call.1} parent=5 // pred_fallthru
        _
    $region6: #{tpu_custom_call.1} parent=1 // loop_footer
      %s29 = sadd.s32 1, %s25
    $region7: #{tpu_custom_call.1} parent=1 // loop_footer_branch
      %24 = sbr.rel target = $region3
    $region8: #{tpu_custom_call.1} parent=1 // loop_exit
      _
    %4902 = vsyncpa [#allocation3], 1
    %s4903 = scalar_lea.sflag [#allocation3], 1
    %4904 = vsyncpa %s4903, 1
    %4905 = vsyncpa [#allocation6], 1
    %4906 = vsyncpa [#allocation4], 1
    %s4907 = scalar_lea.sflag [#allocation4], 1
    %4908 = vsyncpa %s4907, 1

// kernel: tpu_custom_call.1
$region0: #{tpu_custom_call.1}
  #allocation0 [shape = 'u32[]', space=smem, size = 0x4, offset = 0x4, fixed_abs, tag = 'smem constant byte address 0x4 - core index']
  #allocation1 [shape = 'u32[72,128]{1,0:T(1,128)}', space=vmem, size = 0x9000, scoped, tag = 'internal scratch']
  %s0 = inlined_call_operand.hbm [shape: f32[2,128,256], index: 0, kind: input, shape index: {}]
  %s1 = inlined_call_operand.vmem [shape: f32[2,128,1], index: 1, kind: input, shape index: {}]
  %s2 = inlined_call_operand.vmem [shape: f32[1,256], index: 2, kind: input, shape index: {}]
  %s3 = inlined_call_operand.vmem [shape: f32[1,256], index: 3, kind: input, shape index: {}]
  %s4 = inlined_call_operand.vmem [shape: bf16[256,256], index: 4, kind: input, shape index: {}]
  %s5 = inlined_call_operand.vmem [shape: f32[1,256], index: 5, kind: input, shape index: {}]
  %s6 = inlined_call_operand.hbm [shape: bf16[256,128], index: 6, kind: input, shape index: {}]
  %s7 = inlined_call_operand.vmem [shape: f32[1,128], index: 7, kind: input, shape index: {}]
  %s8 = inlined_call_operand.vmem [shape: bf16[128,64], index: 8, kind: input, shape index: {}]
  %s9 = inlined_call_operand.vmem [shape: f32[1,64], index: 9, kind: input, shape index: {}]
  %s10 = inlined_call_operand.vmem [shape: bf16[2,64], index: 10, kind: input, shape index: {}]
  %s11 = inlined_call_operand.vmem [shape: f32[2,1], index: 11, kind: input, shape index: {}]
  %s12 = inlined_call_operand.hbm [shape: f32[2,2,128], index: 12, kind: output, shape index: {}]
  %s13 = sld [smem:[#allocation0]]
  $region89: #{tpu_custom_call.1} parent=0
    _
  %s15 = ssub.s32 1, %s13
  %s16 = scalar_select 0, %s15, %s13
  $region1: #{tpu_custom_call.1} parent=0
    #allocation2 [shape = 'u8[262144]{0}', space=vmem, size = 0x40000, scoped, tag = 'input window, operand 0']
    #allocation3 [shape = 's32[2]{0}', space=sflag, size = 0x8, scoped, tag = 'scoped memory for tpu_custom_call.1']
    #allocation4 [shape = 's32[2]{0}', space=sflag, size = 0x8, scoped, tag = 'scoped memory for tpu_custom_call.1']
    #allocation5 [shape = 'u8[65536]{0}', space=vmem, size = 0x10000, scoped, tag = 'input window, operand 6, single buffered']
    #allocation6 [shape = 's32[1]{0}', space=sflag, size = 0x4, scoped, tag = 'scoped memory for tpu_custom_call.1']
    #allocation7 [shape = 'u8[2048]{0}', space=vmem, size = 0x800, scoped, tag = 'output window, operand 0']
    %17 = vsyncpa [#allocation3], 0
    %s18 = scalar_lea.sflag [#allocation3], 1
    %19 = vsyncpa %s18, 0
    %20 = vsyncpa [#allocation6], 0
    %21 = vsyncpa [#allocation4], 0
    %s22 = scalar_lea.sflag [#allocation4], 1
    %23 = vsyncpa %s22, 0
    loop: start=0, step=1, limit=4
    $region2: #{tpu_custom_call.1} parent=1 // loop_pre_header
      _
    $region3: #{tpu_custom_call.1} parent=1 // loop_header
      %s25 = sphi 0, %s29
      %p26 = scmp.ge.s32.totalorder %s25, 4
      %s35 = sphi 0, %s37
      %s38 = sphi 0, %s35
      %s39 = sphi 0, %s38
      %s55 = sphi 0, %s39
      %s61 = sphi 0, %s63
      %s64 = sphi 0, %s61
      %s65 = sphi 0, %s64
      %s81 = sphi 0, %s65
      %s85 = sphi 0, %s85
      %s87 = sphi 0, %s85
      %s88 = sphi 0, %s87
      %s102 = sphi 0, %s88
      %s106 = sphi 0, %s106
      %s108 = sphi 0, %s106
      %s109 = sphi 0, %s108
      %s123 = sphi 0, %s109
      %s127 = sphi 0, %s127
      %s129 = sphi 0, %s127
      %s130 = sphi 0, %s129
      %s144 = sphi 0, %s130
      %s148 = sphi 0, %s148
      %s150 = sphi 0, %s148
      %s151 = sphi 0, %s150
      %s165 = sphi 0, %s151
      %s169 = sphi 0, %s169
      %s171 = sphi 0, %s169
      %s172 = sphi 0, %s171
      %s186 = sphi 0, %s172
      %s190 = sphi 0, %s190
      %s192 = sphi 0, %s190
      %s193 = sphi 0, %s192
      %s207 = sphi 0, %s193
      %s211 = sphi 0, %s211
      %s213 = sphi 0, %s211
      %s214 = sphi 0, %s213
      %s228 = sphi 0, %s214
      %s232 = sphi 0, %s232
      %s234 = sphi 0, %s232
      %s235 = sphi 0, %s234
      %s249 = sphi 0, %s235
      %s253 = sphi 0, %s253
      %s255 = sphi 0, %s253
      %s256 = sphi 0, %s255
      %s270 = sphi 0, %s256
      %s274 = sphi 0, %s274
      %s276 = sphi 0, %s274
      %s277 = sphi 0, %s276
      %s291 = sphi 0, %s277
      %s297 = sphi 0, %s299
      %s300 = sphi 0, %s297
      %s301 = sphi 0, %s300
      %s317 = sphi 0, %s301
    $region4: #{tpu_custom_call.1} parent=1 // loop_header_branch
      %28 = sbr.rel (%p26) target = $region8
    $region5: #{tpu_custom_call.1} parent=1 // loop_body
      %s30 = ssub.s32 %s25, 1
      %s31 = ssub.s32 %s25, 2
      %s32 = sadd.s32 %s25, 1
      %s33 = ssub.s32 %s25, %s32
      %p34 = scmp.eq.s32.totalorder %s33, 0
      %s36 = sadd.s32 %s35, 1
      %s37 = scalar_select %p34, %s35, %s36
      %p40 = pneg %p34
      %p41 = scmp.eq.s32.totalorder %s25, 1
      %p42 = por %p40, %p41
      %p43 = scmp.ne.s32.totalorder %s35, %s38
      %p44 = scmp.eq.s32.totalorder %s25, 0
      %p45 = por %p43, %p44
      %p46 = scmp.ne.s32.totalorder %s35, %s38
      %p47 = scmp.eq.s32.totalorder %s30, 1
      %p48 = por %p46, %p47
      %p49 = scmp.ne.s32.totalorder %s38, %s39
      %p50 = scmp.eq.s32.totalorder %s30, 0
      %p51 = por %p49, %p50
      %p52 = scmp.ne.s32.totalorder %s38, %s39
      %p53 = scmp.eq.s32.totalorder %s31, 1
      %p54 = por %p52, %p53
      %p56 = scmp.ne.s32.totalorder %s39, %s55
      %p57 = scmp.eq.s32.totalorder %s31, 0
      %p58 = por %p56, %p57
      %s59 = ssub.s32 %s25, %s32
      %p60 = scmp.eq.s32.totalorder %s59, 0
      %s62 = sadd.s32 %s61, 1
      %s63 = scalar_select %p60, %s61, %s62
      %p66 = pneg %p60
      %p67 = scmp.eq.s32.totalorder %s25, 1
      %p68 = por %p66, %p67
      %p69 = scmp.ne.s32.totalorder %s61, %s64
      %p70 = scmp.eq.s32.totalorder %s25, 0
      %p71 = por %p69, %p70
      %p72 = scmp.ne.s32.totalorder %s61, %s64
      %p73 = scmp.eq.s32.totalorder %s30, 1
      %p74 = por %p72, %p73
      %p75 = scmp.ne.s32.totalorder %s64, %s65
      %p76 = scmp.eq.s32.totalorder %s30, 0
      %p77 = por %p75, %p76
      %p78 = scmp.ne.s32.totalorder %s64, %s65
      %p79 = scmp.eq.s32.totalorder %s31, 1
      %p80 = por %p78, %p79
      %p82 = scmp.ne.s32.totalorder %s65, %s81
      %p83 = scmp.eq.s32.totalorder %s31, 0
      %p84 = por %p82, %p83
      %s86 = sadd.s32 %s85, 1
      %p89 = scmp.eq.s32.totalorder %s25, 1
      %p90 = scmp.ne.s32.totalorder %s85, %s87
      %p91 = scmp.eq.s32.totalorder %s25, 0
      %p92 = por %p90, %p91
      %p93 = scmp.ne.s32.totalorder %s85, %s87
      %p94 = scmp.eq.s32.totalorder %s30, 1
      %p95 = por %p93, %p94
      %p96 = scmp.ne.s32.totalorder %s87, %s88
      %p97 = scmp.eq.s32.totalorder %s30, 0
      %p98 = por %p96, %p97
      %p99 = scmp.ne.s32.totalorder %s87, %s88
      %p100 = scmp.eq.s32.totalorder %s31, 1
      %p101 = por %p99, %p100
      %p103 = scmp.ne.s32.totalorder %s88, %s102
      %p104 = scmp.eq.s32.totalorder %s31, 0
      %p105 = por %p103, %p104
      %s107 = sadd.s32 %s106, 1
      %p110 = scmp.eq.s32.totalorder %s25, 1
      %p111 = scmp.ne.s32.totalorder %s106, %s108
      %p112 = scmp.eq.s32.totalorder %s25, 0
      %p113 = por %p111, %p112
      %p114 = scmp.ne.s32.totalorder %s106, %s108
      %p115 = scmp.eq.s32.totalorder %s30, 1
      %p116 = por %p114, %p115
      %p117 = scmp.ne.s32.totalorder %s108, %s109
      %p118 = scmp.eq.s32.totalorder %s30, 0
      %p119 = por %p117, %p118
      %p120 = scmp.ne.s32.totalorder %s108, %s109
      %p121 = scmp.eq.s32.totalorder %s31, 1
      %p122 = por %p120, %p121
      %p124 = scmp.ne.s32.totalorder %s109, %s123
      %p125 = scmp.eq.s32.totalorder %s31, 0
      %p126 = por %p124, %p125
      %s128 = sadd.s32 %s127, 1
      %p131 = scmp.eq.s32.totalorder %s25, 1
      %p132 = scmp.ne.s32.totalorder %s127, %s129
      %p133 = scmp.eq.s32.totalorder %s25, 0
      %p134 = por %p132, %p133
      %p135 = scmp.ne.s32.totalorder %s127, %s129
      %p136 = scmp.eq.s32.totalorder %s30, 1
      %p137 = por %p135, %p136
      %p138 = scmp.ne.s32.totalorder %s129, %s130
      %p139 = scmp.eq.s32.totalorder %s30, 0
      %p140 = por %p138, %p139
      %p141 = scmp.ne.s32.totalorder %s129, %s130
      %p142 = scmp.eq.s32.totalorder %s31, 1
      %p143 = por %p141, %p142
      %p145 = scmp.ne.s32.totalorder %s130, %s144
      %p146 = scmp.eq.s32.totalorder %s31, 0
      %p147 = por %p145, %p146
      %s149 = sadd.s32 %s148, 1
      %p152 = scmp.eq.s32.totalorder %s25, 1
      %p153 = scmp.ne.s32.totalorder %s148, %s150
      %p154 = scmp.eq.s32.totalorder %s25, 0
      %p155 = por %p153, %p154
      %p156 = scmp.ne.s32.totalorder %s148, %s150
      %p157 = scmp.eq.s32.totalorder %s30, 1
      %p158 = por %p156, %p157
      %p159 = scmp.ne.s32.totalorder %s150, %s151
      %p160 = scmp.eq.s32.totalorder %s30, 0
      %p161 = por %p159, %p160
      %p162 = scmp.ne.s32.totalorder %s150, %s151
      %p163 = scmp.eq.s32.totalorder %s31, 1
      %p164 = por %p162, %p163
      %p166 = scmp.ne.s32.totalorder %s151, %s165
      %p167 = scmp.eq.s32.totalorder %s31, 0
      %p168 = por %p166, %p167
      %s170 = sadd.s32 %s169, 1
      %p173 = scmp.eq.s32.totalorder %s25, 1
      %p174 = scmp.ne.s32.totalorder %s169, %s171
      %p175 = scmp.eq.s32.totalorder %s25, 0
      %p176 = por %p174, %p175
      %p177 = scmp.ne.s32.totalorder %s169, %s171
      %p178 = scmp.eq.s32.totalorder %s30, 1
      %p179 = por %p177, %p178
      %p180 = scmp.ne.s32.totalorder %s171, %s172
      %p181 = scmp.eq.s32.totalorder %s30, 0
      %p182 = por %p180, %p181
      %p183 = scmp.ne.s32.totalorder %s171, %s172
      %p184 = scmp.eq.s32.totalorder %s31, 1
      %p185 = por %p183, %p184
      %p187 = scmp.ne.s32.totalorder %s172, %s186
      %p188 = scmp.eq.s32.totalorder %s31, 0
      %p189 = por %p187, %p188
      %s191 = sadd.s32 %s190, 1
      %p194 = scmp.eq.s32.totalorder %s25, 1
      %p195 = scmp.ne.s32.totalorder %s190, %s192
      %p196 = scmp.eq.s32.totalorder %s25, 0
      %p197 = por %p195, %p196
      %p198 = scmp.ne.s32.totalorder %s190, %s192
      %p199 = scmp.eq.s32.totalorder %s30, 1
      %p200 = por %p198, %p199
      %p201 = scmp.ne.s32.totalorder %s192, %s193
      %p202 = scmp.eq.s32.totalorder %s30, 0
      %p203 = por %p201, %p202
      %p204 = scmp.ne.s32.totalorder %s192, %s193
      %p205 = scmp.eq.s32.totalorder %s31, 1
      %p206 = por %p204, %p205
      %p208 = scmp.ne.s32.totalorder %s193, %s207
      %p209 = scmp.eq.s32.totalorder %s31, 0
      %p210 = por %p208, %p209
      %s212 = sadd.s32 %s211, 1
      %p215 = scmp.eq.s32.totalorder %s25, 1
      %p216 = scmp.ne.s32.totalorder %s211, %s213
      %p217 = scmp.eq.s32.totalorder %s25, 0
      %p218 = por %p216, %p217
      %p219 = scmp.ne.s32.totalorder %s211, %s213
      %p220 = scmp.eq.s32.totalorder %s30, 1
      %p221 = por %p219, %p220
      %p222 = scmp.ne.s32.totalorder %s213, %s214
      %p223 = scmp.eq.s32.totalorder %s30, 0
      %p224 = por %p222, %p223
      %p225 = scmp.ne.s32.totalorder %s213, %s214
      %p226 = scmp.eq.s32.totalorder %s31, 1
      %p227 = por %p225, %p226
      %p229 = scmp.ne.s32.totalorder %s214, %s228
      %p230 = scmp.eq.s32.totalorder %s31, 0
      %p231 = por %p229, %p230
      %s233 = sadd.s32 %s232, 1
      %p236 = scmp.eq.s32.totalorder %s25, 1
      %p237 = scmp.ne.s32.totalorder %s232, %s234
      %p238 = scmp.eq.s32.totalorder %s25, 0
      %p239 = por %p237, %p238
      %p240 = scmp.ne.s32.totalorder %s232, %s234
      %p241 = scmp.eq.s32.totalorder %s30, 1
      %p242 = por %p240, %p241
      %p243 = scmp.ne.s32.totalorder %s234, %s235
      %p244 = scmp.eq.s32.totalorder %s30, 0
      %p245 = por %p243, %p244
      %p246 = scmp.ne.s32.totalorder %s234, %s235
      %p247 = scmp.eq.s32.totalorder %s31, 1
      %p248 = por %p246, %p247
      %p250 = scmp.ne.s32.totalorder %s235, %s249
      %p251 = scmp.eq.s32.totalorder %s31, 0
      %p252 = por %p250, %p251
      %s254 = sadd.s32 %s253, 1
      %p257 = scmp.eq.s32.totalorder %s25, 1
      %p258 = scmp.ne.s32.totalorder %s253, %s255
      %p259 = scmp.eq.s32.totalorder %s25, 0
      %p260 = por %p258, %p259
      %p261 = scmp.ne.s32.totalorder %s253, %s255
      %p262 = scmp.eq.s32.totalorder %s30, 1
      %p263 = por %p261, %p262
      %p264 = scmp.ne.s32.totalorder %s255, %s256
      %p265 = scmp.eq.s32.totalorder %s30, 0
      %p266 = por %p264, %p265
      %p267 = scmp.ne.s32.totalorder %s255, %s256
      %p268 = scmp.eq.s32.totalorder %s31, 1
      %p269 = por %p267, %p268
      %p271 = scmp.ne.s32.totalorder %s256, %s270
      %p272 = scmp.eq.s32.totalorder %s31, 0
      %p273 = por %p271, %p272
      %s275 = sadd.s32 %s274, 1
      %p278 = scmp.eq.s32.totalorder %s25, 1
      %p279 = scmp.ne.s32.totalorder %s274, %s276
      %p280 = scmp.eq.s32.totalorder %s25, 0
      %p281 = por %p279, %p280
      %p282 = scmp.ne.s32.totalorder %s274, %s276
      %p283 = scmp.eq.s32.totalorder %s30, 1
      %p284 = por %p282, %p283
      %p285 = scmp.ne.s32.totalorder %s276, %s277
      %p286 = scmp.eq.s32.totalorder %s30, 0
      %p287 = por %p285, %p286
      %p288 = scmp.ne.s32.totalorder %s276, %s277
      %p289 = scmp.eq.s32.totalorder %s31, 1
      %p290 = por %p288, %p289
      %p292 = scmp.ne.s32.totalorder %s277, %s291
      %p293 = scmp.eq.s32.totalorder %s31, 0
      %p294 = por %p292, %p293
      %s295 = ssub.s32 %s25, %s32
      %p296 = scmp.eq.s32.totalorder %s295, 0
      %s298 = sadd.s32 %s297, 1
      %s299 = scalar_select %p296, %s297, %s298
      %p302 = pneg %p296
      %p303 = scmp.eq.s32.totalorder %s25, 1
      %p304 = por %p302, %p303
      %p305 = scmp.ne.s32.totalorder %s297, %s300
      %p306 = scmp.eq.s32.totalorder %s25, 0
      %p307 = por %p305, %p306
      %p308 = scmp.ne.s32.totalorder %s297, %s300
      %p309 = scmp.eq.s32.totalorder %s30, 1
      %p310 = por %p308, %p309
      %p311 = scmp.ne.s32.totalorder %s300, %s301
      %p312 = scmp.eq.s32.totalorder %s30, 0
      %p313 = por %p311, %p312
      %p314 = scmp.ne.s32.totalorder %s300, %s301
      %p315 = scmp.eq.s32.totalorder %s31, 1
      %p316 = por %p314, %p315
      %p318 = scmp.ne.s32.totalorder %s301, %s317
      %p319 = scmp.eq.s32.totalorder %s31, 0
      %p320 = por %p318, %p319
      %p321 = scmp.le.s32.totalorder 1, %s25
      %p322 = scmp.lt.s32.totalorder %s25, 3
      %p323 = pnand %p321, %p322
      %p324 = pneg %p323
      // Predicated region
      $region9: #{tpu_custom_call.1} parent=5 // pred_check
        _
      $region10: #{tpu_custom_call.1} parent=5 // pred_check_branch
        %326 = sbr.rel (%p323) target = $region12
      $region11: #{tpu_custom_call.1} parent=5 // pred_region
        %s327 = ssub.s32 %s25, 1
        // Predicated region
        $region13: #{tpu_custom_call.1} parent=11 // pred_check
          %p328 = pneg %p98
        $region14: #{tpu_custom_call.1} parent=11 // pred_check_branch
          %330 = sbr.rel (%p328) target = $region16
        $region15: #{tpu_custom_call.1} parent=11 // pred_region
          _
        $region16: #{tpu_custom_call.1} parent=11 // pred_fallthru
          _
        // Predicated region
        $region17: #{tpu_custom_call.1} parent=11 // pred_check
          %p331 = pneg %p119
        $region18: #{tpu_custom_call.1} parent=11 // pred_check_branch
          %333 = sbr.rel (%p331) target = $region20
        $region19: #{tpu_custom_call.1} parent=11 // pred_region
          _
        $region20: #{tpu_custom_call.1} parent=11 // pred_fallthru
          _
        // Predicated region
        $region21: #{tpu_custom_call.1} parent=11 // pred_check
          %p334 = pneg %p140
        $region22: #{tpu_custom_call.1} parent=11 // pred_check_branch
          %336 = sbr.rel (%p334) target = $region24
        $region23: #{tpu_custom_call.1} parent=11 // pred_region
          _
        $region24: #{tpu_custom_call.1} parent=11 // pred_fallthru
          _
        // Predicated region
        $region25: #{tpu_custom_call.1} parent=11 // pred_check
          %p337 = pneg %p161
        $region26: #{tpu_custom_call.1} parent=11 // pred_check_branch
          %339 = sbr.rel (%p337) target = $region28
        $region27: #{tpu_custom_call.1} parent=11 // pred_region
          _
        $region28: #{tpu_custom_call.1} parent=11 // pred_fallthru
          _
        // Predicated region
        $region29: #{tpu_custom_call.1} parent=11 // pred_check
          %p340 = pneg %p182
        $region30: #{tpu_custom_call.1} parent=11 // pred_check_branch
          %342 = sbr.rel (%p340) target = $region32
        $region31: #{tpu_custom_call.1} parent=11 // pred_region
          %344 = vsyncadd [#allocation6], 0
          %s345 = sshll.u32 %s6, 4
          %s346 = int_to_ptr.hbm [resolvable:$true] %s345
          %s347 = sshll.u32 [#allocation5], 4
          %s348 = int_to_ptr.vmem [resolvable:$true] %s347
          %353 = dma.hbm_to_vmem [thread:$0]  %s346, 2048, %s348, [#allocation6], 64, 64, 4
        $region32: #{tpu_custom_call.1} parent=11 // pred_fallthru
          _
        // Predicated region
        $region33: #{tpu_custom_call.1} parent=11 // pred_check
          %p354 = pneg %p203
        $region34: #{tpu_custom_call.1} parent=11 // pred_check_branch
          %356 = sbr.rel (%p354) target = $region36
        $region35: #{tpu_custom_call.1} parent=11 // pred_region
          _
        $region36: #{tpu_custom_call.1} parent=11 // pred_fallthru
          _
        // Predicated region
        $region37: #{tpu_custom_call.1} parent=11 // pred_check
          %p357 = pneg %p224
        $region38: #{tpu_custom_call.1} parent=11 // pred_check_branch
          %359 = sbr.rel (%p357) target = $region40
        $region39: #{tpu_custom_call.1} parent=11 // pred_region
          _
        $region40: #{tpu_custom_call.1} parent=11 // pred_fallthru
          _
        // Predicated region
        $region41: #{tpu_custom_call.1} parent=11 // pred_check
          %p360 = pneg %p245
        $region42: #{tpu_custom_call.1} parent=11 // pred_check_branch
          %362 = sbr.rel (%p360) target = $region44
        $region43: #{tpu_custom_call.1} parent=11 // pred_region
          _
        $region44: #{tpu_custom_call.1} parent=11 // pred_fallthru
          _
        // Predicated region
        $region45: #{tpu_custom_call.1} parent=11 // pred_check
          %p363 = pneg %p266
        $region46: #{tpu_custom_call.1} parent=11 // pred_check_branch
          %365 = sbr.rel (%p363) target = $region48
        $region47: #{tpu_custom_call.1} parent=11 // pred_region
          _
        $region48: #{tpu_custom_call.1} parent=11 // pred_fallthru
          _
        // Predicated region
        $region49: #{tpu_custom_call.1} parent=11 // pred_check
          %p366 = pneg %p287
        $region50: #{tpu_custom_call.1} parent=11 // pred_check_branch
          %368 = sbr.rel (%p366) target = $region52
        $region51: #{tpu_custom_call.1} parent=11 // pred_region
          _
        $region52: #{tpu_custom_call.1} parent=11 // pred_fallthru
          _
      $region12: #{tpu_custom_call.1} parent=5 // pred_fallthru
        _
      %p369 = scmp.lt.s32.totalorder %s25, 2
      // Predicated region
      $region53: #{tpu_custom_call.1} parent=5 // pred_check
        %p370 = pneg %p369
      $region54: #{tpu_custom_call.1} parent=5 // pred_check_branch
        %372 = sbr.rel (%p370) target = $region56
      $region55: #{tpu_custom_call.1} parent=5 // pred_region
        // Predicated region
        $region57: #{tpu_custom_call.1} parent=55 // pred_check
          %p373 = pneg %p45
        $region58: #{tpu_custom_call.1} parent=55 // pred_check_branch
          %375 = sbr.rel (%p373) target = $region60
        $region59: #{tpu_custom_call.1} parent=55 // pred_region
          %s376 = sand.u32 %s35, 1
          %s377 = scalar_lea.sflag [#allocation3], %s376
          %s378 = sand.u32 %s35, 1
          %s379 = smul.addr %s378, 256
          %s380 = scalar_lea.vmem [#allocation2], %s379
          %382 = vsyncadd %s377, 0
          %s383 = smul.addr %s25, 32
          %s384 = smul.addr %s383, 8
          %s385 = scalar_lea.hbm %s0, %s384
          %s386 = sshll.u32 %s385, 4
          %s387 = int_to_ptr.hbm [resolvable:$true] %s386
          %s388 = sshll.u32 %s380, 4
          %s389 = int_to_ptr.vmem [resolvable:$true] %s388
          %394 = dma.hbm_to_vmem [thread:$0]  %s387, 4096, %s389, %s377, 256, 256, 16
        $region60: #{tpu_custom_call.1} parent=55 // pred_fallthru
          _
        // Predicated region
        $region61: #{tpu_custom_call.1} parent=55 // pred_check
          %p395 = pneg %p71
        $region62: #{tpu_custom_call.1} parent=55 // pred_check_branch
          %397 = sbr.rel (%p395) target = $region64
        $region63: #{tpu_custom_call.1} parent=55 // pred_region
          %p398 = scmp.lt.s32.totalorder %s25, 1
          %s399 = scalar_select %p398, %s25, 1
          %s400 = smul.addr %s399, 16
          %s401 = smul.addr %s400, 8
          %s402 = scalar_lea.vmem %s1, %s401
        $region64: #{tpu_custom_call.1} parent=55 // pred_fallthru
          _
      $region56: #{tpu_custom_call.1} parent=5 // pred_fallthru
        _
      %p403 = scmp.le.s32.totalorder 1, %s25
      %p404 = scmp.lt.s32.totalorder %s25, 3
      %p405 = pnand %p403, %p404
      %p406 = pneg %p405
      // Predicated region
      $region65: #{tpu_custom_call.1} parent=5 // pred_check
        _
      $region66: #{tpu_custom_call.1} parent=5 // pred_check_branch
        %408 = sbr.rel (%p405) target = $region68
      $region67: #{tpu_custom_call.1} parent=5 // pred_region
        %s409 = ssub.s32 %s25, 1
        %s410 = sand.u32 %s38, 1
        %s411 = scalar_lea.sflag [#allocation3], %s410
        %s412 = sand.u32 %s38, 1
        %s413 = smul.addr %s412, 256
        %s414 = scalar_lea.vmem [#allocation2], %s413
        // Predicated region
        $region69: #{tpu_custom_call.1} parent=67 // pred_check
          %p415 = pneg %p51
        $region70: #{tpu_custom_call.1} parent=67 // pred_check_branch
          %417 = sbr.rel (%p415) target = $region72
        $region71: #{tpu_custom_call.1} parent=67 // pred_region
          %419 = dma.done %s411, 4096
        $region72: #{tpu_custom_call.1} parent=67 // pred_fallthru
          _
        // Predicated region
        $region73: #{tpu_custom_call.1} parent=67 // pred_check
          %p420 = pneg %p182
        $region74: #{tpu_custom_call.1} parent=67 // pred_check_branch
          %422 = sbr.rel (%p420) target = $region76
        $region75: #{tpu_custom_call.1} parent=67 // pred_region
          %424 = dma.done [#allocation6], 2048
        $region76: #{tpu_custom_call.1} parent=67 // pred_fallthru
          _
        %s425 = sand.u32 %s38, 1
        %s426 = scalar_lea.sflag [#allocation3], %s425
        %s427 = sand.u32 %s38, 1
        %s428 = smul.addr %s427, 256
        %s429 = scalar_lea.vmem [#allocation2], %s428
        %p430 = pneg %p51
        %p431 = pneg %p48
        %p432 = scmp.lt.s32.totalorder %s30, 1
        %s433 = scalar_select %p432, %s30, 1
        %s434 = smul.addr %s433, 16
        %s435 = smul.addr %s434, 8
        %s436 = scalar_lea.vmem %s1, %s435
        %p437 = pneg %p77
        %p438 = pneg %p74
        %p439 = pneg %p98
        %p440 = pneg %p95
        %p441 = pneg %p119
        %p442 = pneg %p116
        %p443 = pneg %p140
        %p444 = pneg %p137
        %p445 = pneg %p161
        %p446 = pneg %p158
        %p447 = pneg %p182
        %p448 = pneg %p179
        %p449 = pneg %p203
        %p450 = pneg %p200
        %p451 = pneg %p224
        %p452 = pneg %p221
        %p453 = pneg %p245
        %p454 = pneg %p242
        %p455 = pneg %p266
        %p456 = pneg %p263
        %p457 = pneg %p287
        %p458 = pneg %p284
        %p459 = pneg %p313
        %p460 = pneg %p310
        %s461 = sand.u32 %s300, 1
        %s462 = scalar_lea.sflag [#allocation4], %s461
        %s463 = sand.u32 %s300, 1
        %s464 = smul.addr %s463, 2
        %s465 = scalar_lea.vmem [#allocation7], %s464
        %p466 = scmp.lt.s32.totalorder %s30, 1
        %s467 = scalar_select %p466, %s30, 1
        %s468 = smul.addr %s467, 16
        %s469 = smul.addr %s468, 8
        %s470 = scalar_lea.vmem %s1, %s469
        %v471 = vld [vmem:[%s414] sm:$0xff]
        %v472 = vld [vmem:[%s414 + $0x8] sm:$0xff]
        %v473 = vld [vmem:[%s414 + $0x10] sm:$0xff]
        %v474 = vld [vmem:[%s414 + $0x18] sm:$0xff]
        %v475 = vld [vmem:[%s414 + $0x20] sm:$0xff]
        %v476 = vld [vmem:[%s414 + $0x28] sm:$0xff]
        %v477 = vld [vmem:[%s414 + $0x30] sm:$0xff]
        %v478 = vld [vmem:[%s414 + $0x38] sm:$0xff]
        %v479 = vld [vmem:[%s414 + $0x40] sm:$0xff]
        %v480 = vld [vmem:[%s414 + $0x48] sm:$0xff]
        %v481 = vld [vmem:[%s414 + $0x50] sm:$0xff]
        %v482 = vld [vmem:[%s414 + $0x58] sm:$0xff]
        %v483 = vld [vmem:[%s414 + $0x60] sm:$0xff]
        %v484 = vld [vmem:[%s414 + $0x68] sm:$0xff]
        %v485 = vld [vmem:[%s414 + $0x70] sm:$0xff]
        %v486 = vld [vmem:[%s414 + $0x78] sm:$0xff]
        %v487 = vld [vmem:[%s414 + $0x80] sm:$0xff]
        %v488 = vld [vmem:[%s414 + $0x88] sm:$0xff]
        %v489 = vld [vmem:[%s414 + $0x90] sm:$0xff]
        %v490 = vld [vmem:[%s414 + $0x98] sm:$0xff]
        %v491 = vld [vmem:[%s414 + $0xa0] sm:$0xff]
        %v492 = vld [vmem:[%s414 + $0xa8] sm:$0xff]
        %v493 = vld [vmem:[%s414 + $0xb0] sm:$0xff]
        %v494 = vld [vmem:[%s414 + $0xb8] sm:$0xff]
        %v495 = vld [vmem:[%s414 + $0xc0] sm:$0xff]
        %v496 = vld [vmem:[%s414 + $0xc8] sm:$0xff]
        %v497 = vld [vmem:[%s414 + $0xd0] sm:$0xff]
        %v498 = vld [vmem:[%s414 + $0xd8] sm:$0xff]
        %v499 = vld [vmem:[%s414 + $0xe0] sm:$0xff]
        %v500 = vld [vmem:[%s414 + $0xe8] sm:$0xff]
        %v501 = vld [vmem:[%s414 + $0xf0] sm:$0xff]
        %v502 = vld [vmem:[%s414 + $0xf8] sm:$0xff]
        %v503 = vld [vmem:[%s470] sm:$0xff]
        %v504 = vld [vmem:[%s470 + $0x8] sm:$0xff]
        %v505 = vld [vmem:[%s470 + $0x10] sm:$0xff]
        %v506 = vld [vmem:[%s470 + $0x18] sm:$0xff]
        %v507 = vld [vmem:[%s470 + $0x20] sm:$0xff]
        %v508 = vld [vmem:[%s470 + $0x28] sm:$0xff]
        %v509 = vld [vmem:[%s470 + $0x30] sm:$0xff]
        %v510 = vld [vmem:[%s470 + $0x38] sm:$0xff]
        %v511 = vld [vmem:[%s470 + $0x40] sm:$0xff]
        %v512 = vld [vmem:[%s470 + $0x48] sm:$0xff]
        %v513 = vld [vmem:[%s470 + $0x50] sm:$0xff]
        %v514 = vld [vmem:[%s470 + $0x58] sm:$0xff]
        %v515 = vld [vmem:[%s470 + $0x60] sm:$0xff]
        %v516 = vld [vmem:[%s470 + $0x68] sm:$0xff]
        %v517 = vld [vmem:[%s470 + $0x70] sm:$0xff]
        %v518 = vld [vmem:[%s470 + $0x78] sm:$0xff]
        %v519 = vadd.f32 %v471, %v472
        %520 = vadd.xlane.f32.xlu0 %v519
        %v521 = vpop.xlane.xlu0 %520
        %v522 = vadd.f32 %v473, %v474
        %523 = vadd.xlane.f32.xlu0 %v522
        %v524 = vpop.xlane.xlu0 %523
        %v525 = vadd.f32 %v475, %v476
        %526 = vadd.xlane.f32.xlu0 %v525
        %v527 = vpop.xlane.xlu0 %526
        %v528 = vadd.f32 %v477, %v478
        %529 = vadd.xlane.f32.xlu0 %v528
        %v530 = vpop.xlane.xlu0 %529
        %v531 = vadd.f32 %v479, %v480
        %532 = vadd.xlane.f32.xlu0 %v531
        %v533 = vpop.xlane.xlu0 %532
        %v534 = vadd.f32 %v481, %v482
        %535 = vadd.xlane.f32.xlu0 %v534
        %v536 = vpop.xlane.xlu0 %535
        %v537 = vadd.f32 %v483, %v484
        %538 = vadd.xlane.f32.xlu0 %v537
        %v539 = vpop.xlane.xlu0 %538
        %v540 = vadd.f32 %v485, %v486
        %541 = vadd.xlane.f32.xlu0 %v540
        %v542 = vpop.xlane.xlu0 %541
        %v543 = vadd.f32 %v487, %v488
        %544 = vadd.xlane.f32.xlu0 %v543
        %v545 = vpop.xlane.xlu0 %544
        %v546 = vadd.f32 %v489, %v490
        %547 = vadd.xlane.f32.xlu0 %v546
        %v548 = vpop.xlane.xlu0 %547
        %v549 = vadd.f32 %v491, %v492
        %550 = vadd.xlane.f32.xlu0 %v549
        %v551 = vpop.xlane.xlu0 %550
        %v552 = vadd.f32 %v493, %v494
        %553 = vadd.xlane.f32.xlu0 %v552
        %v554 = vpop.xlane.xlu0 %553
        %v555 = vadd.f32 %v495, %v496
        %556 = vadd.xlane.f32.xlu0 %v555
        %v557 = vpop.xlane.xlu0 %556
        %v558 = vadd.f32 %v497, %v498
        %559 = vadd.xlane.f32.xlu0 %v558
        %v560 = vpop.xlane.xlu0 %559
        %v561 = vadd.f32 %v499, %v500
        %562 = vadd.xlane.f32.xlu0 %v561
        %v563 = vpop.xlane.xlu0 %562
        %v564 = vadd.f32 %v501, %v502
        %565 = vadd.xlane.f32.xlu0 %v564
        %v566 = vpop.xlane.xlu0 %565
        %v567 = vmul.f32 %v521, 0.00390625
        %v568 = vmul.f32 %v524, 0.00390625
        %v569 = vmul.f32 %v527, 0.00390625
        %v570 = vmul.f32 %v530, 0.00390625
        %v571 = vmul.f32 %v533, 0.00390625
        %v572 = vmul.f32 %v536, 0.00390625
        %v573 = vmul.f32 %v539, 0.00390625
        %v574 = vmul.f32 %v542, 0.00390625
        %v575 = vmul.f32 %v545, 0.00390625
        %v576 = vmul.f32 %v548, 0.00390625
        %v577 = vmul.f32 %v551, 0.00390625
        %v578 = vmul.f32 %v554, 0.00390625
        %v579 = vmul.f32 %v557, 0.00390625
        %v580 = vmul.f32 %v560, 0.00390625
        %v581 = vmul.f32 %v563, 0.00390625
        %v582 = vmul.f32 %v566, 0.00390625
        %v583 = vmul.f32 %v471, %v471
        %v584 = vmul.f32 %v472, %v472
        %v585 = vmul.f32 %v473, %v473
        %v586 = vmul.f32 %v474, %v474
        %v587 = vmul.f32 %v475, %v475
        %v588 = vmul.f32 %v476, %v476
        %v589 = vmul.f32 %v477, %v477
        %v590 = vmul.f32 %v478, %v478
        %v591 = vmul.f32 %v479, %v479
        %v592 = vmul.f32 %v480, %v480
        %v593 = vmul.f32 %v481, %v481
        %v594 = vmul.f32 %v482, %v482
        %v595 = vmul.f32 %v483, %v483
        %v596 = vmul.f32 %v484, %v484
        %v597 = vmul.f32 %v485, %v485
        %v598 = vmul.f32 %v486, %v486
        %v599 = vmul.f32 %v487, %v487
        %v600 = vmul.f32 %v488, %v488
        %v601 = vmul.f32 %v489, %v489
        %v602 = vmul.f32 %v490, %v490
        %v603 = vmul.f32 %v491, %v491
        %v604 = vmul.f32 %v492, %v492
        %v605 = vmul.f32 %v493, %v493
        %v606 = vmul.f32 %v494, %v494
        %v607 = vmul.f32 %v495, %v495
        %v608 = vmul.f32 %v496, %v496
        %v609 = vmul.f32 %v497, %v497
        %v610 = vmul.f32 %v498, %v498
        %v611 = vmul.f32 %v499, %v499
        %v612 = vmul.f32 %v500, %v500
        %v613 = vmul.f32 %v501, %v501
        %v614 = vmul.f32 %v502, %v502
        %v615 = vadd.f32 %v583, %v584
        %616 = vadd.xlane.f32.xlu0 %v615
        %v617 = vpop.xlane.xlu0 %616
        %v618 = vadd.f32 %v585, %v586
        %619 = vadd.xlane.f32.xlu0 %v618
        %v620 = vpop.xlane.xlu0 %619
        %v621 = vadd.f32 %v587, %v588
        %622 = vadd.xlane.f32.xlu0 %v621
        %v623 = vpop.xlane.xlu0 %622
        %v624 = vadd.f32 %v589, %v590
        %625 = vadd.xlane.f32.xlu0 %v624
        %v626 = vpop.xlane.xlu0 %625
        %v627 = vadd.f32 %v591, %v592
        %628 = vadd.xlane.f32.xlu0 %v627
        %v629 = vpop.xlane.xlu0 %628
        %v630 = vadd.f32 %v593, %v594
        %631 = vadd.xlane.f32.xlu0 %v630
        %v632 = vpop.xlane.xlu0 %631
        %v633 = vadd.f32 %v595, %v596
        %634 = vadd.xlane.f32.xlu0 %v633
        %v635 = vpop.xlane.xlu0 %634
        %v636 = vadd.f32 %v597, %v598
        %637 = vadd.xlane.f32.xlu0 %v636
        %v638 = vpop.xlane.xlu0 %637
        %v639 = vadd.f32 %v599, %v600
        %640 = vadd.xlane.f32.xlu0 %v639
        %v641 = vpop.xlane.xlu0 %640
        %v642 = vadd.f32 %v601, %v602
        %643 = vadd.xlane.f32.xlu0 %v642
        %v644 = vpop.xlane.xlu0 %643
        %v645 = vadd.f32 %v603, %v604
        %646 = vadd.xlane.f32.xlu0 %v645
        %v647 = vpop.xlane.xlu0 %646
        %v648 = vadd.f32 %v605, %v606
        %649 = vadd.xlane.f32.xlu0 %v648
        %v650 = vpop.xlane.xlu0 %649
        %v651 = vadd.f32 %v607, %v608
        %652 = vadd.xlane.f32.xlu0 %v651
        %v653 = vpop.xlane.xlu0 %652
        %v654 = vadd.f32 %v609, %v610
        %655 = vadd.xlane.f32.xlu0 %v654
        %v656 = vpop.xlane.xlu0 %655
        %v657 = vadd.f32 %v611, %v612
        %658 = vadd.xlane.f32.xlu0 %v657
        %v659 = vpop.xlane.xlu0 %658
        %v660 = vadd.f32 %v613, %v614
        %661 = vadd.xlane.f32.xlu0 %v660
        %v662 = vpop.xlane.xlu0 %661
        %v663 = vmul.f32 %v617, 0.00390625
        %v664 = vmul.f32 %v620, 0.00390625
        %v665 = vmul.f32 %v623, 0.00390625
        %v666 = vmul.f32 %v626, 0.00390625
        %v667 = vmul.f32 %v629, 0.00390625
        %v668 = vmul.f32 %v632, 0.00390625
        %v669 = vmul.f32 %v635, 0.00390625
        %v670 = vmul.f32 %v638, 0.00390625
        %v671 = vmul.f32 %v641, 0.00390625
        %v672 = vmul.f32 %v644, 0.00390625
        %v673 = vmul.f32 %v647, 0.00390625
        %v674 = vmul.f32 %v650, 0.00390625
        %v675 = vmul.f32 %v653, 0.00390625
        %v676 = vmul.f32 %v656, 0.00390625
        %v677 = vmul.f32 %v659, 0.00390625
        %v678 = vmul.f32 %v662, 0.00390625
        %v679 = vmul.f32 %v567, %v567
        %v680 = vmul.f32 %v568, %v568
        %v681 = vmul.f32 %v569, %v569
        %v682 = vmul.f32 %v570, %v570
        %v683 = vmul.f32 %v571, %v571
        %v684 = vmul.f32 %v572, %v572
        %v685 = vmul.f32 %v573, %v573
        %v686 = vmul.f32 %v574, %v574
        %v687 = vmul.f32 %v575, %v575
        %v688 = vmul.f32 %v576, %v576
        %v689 = vmul.f32 %v577, %v577
        %v690 = vmul.f32 %v578, %v578
        %v691 = vmul.f32 %v579, %v579
        %v692 = vmul.f32 %v580, %v580
        %v693 = vmul.f32 %v581, %v581
        %v694 = vmul.f32 %v582, %v582
        %v695 = vsub.f32 %v663, %v679
        %v696 = vsub.f32 %v664, %v680
        %v697 = vsub.f32 %v665, %v681
        %v698 = vsub.f32 %v666, %v682
        %v699 = vsub.f32 %v667, %v683
        %v700 = vsub.f32 %v668, %v684
        %v701 = vsub.f32 %v669, %v685
        %v702 = vsub.f32 %v670, %v686
        %v703 = vsub.f32 %v671, %v687
        %v704 = vsub.f32 %v672, %v688
        %v705 = vsub.f32 %v673, %v689
        %v706 = vsub.f32 %v674, %v690
        %v707 = vsub.f32 %v675, %v691
        %v708 = vsub.f32 %v676, %v692
        %v709 = vsub.f32 %v677, %v693
        %v710 = vsub.f32 %v678, %v694
        %v711 = vmax.f32 %v695, 0.0
        %v712 = vmax.f32 %v696, 0.0
        %v713 = vmax.f32 %v697, 0.0
        %v714 = vmax.f32 %v698, 0.0
        %v715 = vmax.f32 %v699, 0.0
        %v716 = vmax.f32 %v700, 0.0
        %v717 = vmax.f32 %v701, 0.0
        %v718 = vmax.f32 %v702, 0.0
        %v719 = vmax.f32 %v703, 0.0
        %v720 = vmax.f32 %v704, 0.0
        %v721 = vmax.f32 %v705, 0.0
        %v722 = vmax.f32 %v706, 0.0
        %v723 = vmax.f32 %v707, 0.0
        %v724 = vmax.f32 %v708, 0.0
        %v725 = vmax.f32 %v709, 0.0
        %v726 = vmax.f32 %v710, 0.0
        %v727 = vsub.f32 %v471, %v567
        %v728 = vsub.f32 %v472, %v567
        %v729 = vsub.f32 %v473, %v568
        %v730 = vsub.f32 %v474, %v568
        %v731 = vsub.f32 %v475, %v569
        %v732 = vsub.f32 %v476, %v569
        %v733 = vsub.f32 %v477, %v570
        %v734 = vsub.f32 %v478, %v570
        %v735 = vsub.f32 %v479, %v571
        %v736 = vsub.f32 %v480, %v571
        %v737 = vsub.f32 %v481, %v572
        %v738 = vsub.f32 %v482, %v572
        %v739 = vsub.f32 %v483, %v573
        %v740 = vsub.f32 %v484, %v573
        %v741 = vsub.f32 %v485, %v574
        %v742 = vsub.f32 %v486, %v574
        %v743 = vsub.f32 %v487, %v575
        %v744 = vsub.f32 %v488, %v575
        %v745 = vsub.f32 %v489, %v576
        %v746 = vsub.f32 %v490, %v576
        %v747 = vsub.f32 %v491, %v577
        %v748 = vsub.f32 %v492, %v577
        %v749 = vsub.f32 %v493, %v578
        %v750 = vsub.f32 %v494, %v578
        %v751 = vsub.f32 %v495, %v579
        %v752 = vsub.f32 %v496, %v579
        %v753 = vsub.f32 %v497, %v580
        %v754 = vsub.f32 %v498, %v580
        %v755 = vsub.f32 %v499, %v581
        %v756 = vsub.f32 %v500, %v581
        %v757 = vsub.f32 %v501, %v582
        %v758 = vsub.f32 %v502, %v582
        %v759 = vadd.f32 %v711, 1e-05
        %v760 = vadd.f32 %v712, 1e-05
        %v761 = vadd.f32 %v713, 1e-05
        %v762 = vadd.f32 %v714, 1e-05
        %v763 = vadd.f32 %v715, 1e-05
        %v764 = vadd.f32 %v716, 1e-05
        %v765 = vadd.f32 %v717, 1e-05
        %v766 = vadd.f32 %v718, 1e-05
        %v767 = vadd.f32 %v719, 1e-05
        %v768 = vadd.f32 %v720, 1e-05
        %v769 = vadd.f32 %v721, 1e-05
        %v770 = vadd.f32 %v722, 1e-05
        %v771 = vadd.f32 %v723, 1e-05
        %v772 = vadd.f32 %v724, 1e-05
        %v773 = vadd.f32 %v725, 1e-05
        %v774 = vadd.f32 %v726, 1e-05
        %v775 = vrsqrt.pop %v759
        %v776 = vmul.f32 %v775, %v759
        %v777 = vmul.f32 %v776, %v775
        %v778 = vmul.f32 0.5, %v777
        %v779 = vsub.f32 1.5, %v778
        %v780 = vmul.f32 %v775, %v779
        %vm781 = vweird.f32 %v759
        %vm782 = vweird.f32 %v775
        %vm783 = vmor %vm781, %vm782
        %v784 = vsel %vm783, %v775, %v780
        %v785 = vrsqrt.pop %v760
        %v786 = vmul.f32 %v785, %v760
        %v787 = vmul.f32 %v786, %v785
        %v788 = vmul.f32 0.5, %v787
        %v789 = vsub.f32 1.5, %v788
        %v790 = vmul.f32 %v785, %v789
        %vm791 = vweird.f32 %v760
        %vm792 = vweird.f32 %v785
        %vm793 = vmor %vm791, %vm792
        %v794 = vsel %vm793, %v785, %v790
        %v795 = vrsqrt.pop %v761
        %v796 = vmul.f32 %v795, %v761
        %v797 = vmul.f32 %v796, %v795
        %v798 = vmul.f32 0.5, %v797
        %v799 = vsub.f32 1.5, %v798
        %v800 = vmul.f32 %v795, %v799
        %vm801 = vweird.f32 %v761
        %vm802 = vweird.f32 %v795
        %vm803 = vmor %vm801, %vm802
        %v804 = vsel %vm803, %v795, %v800
        %v805 = vrsqrt.pop %v762
        %v806 = vmul.f32 %v805, %v762
        %v807 = vmul.f32 %v806, %v805
        %v808 = vmul.f32 0.5, %v807
        %v809 = vsub.f32 1.5, %v808
        %v810 = vmul.f32 %v805, %v809
        %vm811 = vweird.f32 %v762
        %vm812 = vweird.f32 %v805
        %vm813 = vmor %vm811, %vm812
        %v814 = vsel %vm813, %v805, %v810
        %v815 = vrsqrt.pop %v763
        %v816 = vmul.f32 %v815, %v763
        %v817 = vmul.f32 %v816, %v815
        %v818 = vmul.f32 0.5, %v817
        %v819 = vsub.f32 1.5, %v818
        %v820 = vmul.f32 %v815, %v819
        %vm821 = vweird.f32 %v763
        %vm822 = vweird.f32 %v815
        %vm823 = vmor %vm821, %vm822
        %v824 = vsel %vm823, %v815, %v820
        %v825 = vrsqrt.pop %v764
        %v826 = vmul.f32 %v825, %v764
        %v827 = vmul.f32 %v826, %v825
        %v828 = vmul.f32 0.5, %v827
        %v829 = vsub.f32 1.5, %v828
        %v830 = vmul.f32 %v825, %v829
        %vm831 = vweird.f32 %v764
        %vm832 = vweird.f32 %v825
        %vm833 = vmor %vm831, %vm832
        %v834 = vsel %vm833, %v825, %v830
        %v835 = vrsqrt.pop %v765
        %v836 = vmul.f32 %v835, %v765
        %v837 = vmul.f32 %v836, %v835
        %v838 = vmul.f32 0.5, %v837
        %v839 = vsub.f32 1.5, %v838
        %v840 = vmul.f32 %v835, %v839
        %vm841 = vweird.f32 %v765
        %vm842 = vweird.f32 %v835
        %vm843 = vmor %vm841, %vm842
        %v844 = vsel %vm843, %v835, %v840
        %v845 = vrsqrt.pop %v766
        %v846 = vmul.f32 %v845, %v766
        %v847 = vmul.f32 %v846, %v845
        %v848 = vmul.f32 0.5, %v847
        %v849 = vsub.f32 1.5, %v848
        %v850 = vmul.f32 %v845, %v849
        %vm851 = vweird.f32 %v766
        %vm852 = vweird.f32 %v845
        %vm853 = vmor %vm851, %vm852
        %v854 = vsel %vm853, %v845, %v850
        %v855 = vrsqrt.pop %v767
        %v856 = vmul.f32 %v855, %v767
        %v857 = vmul.f32 %v856, %v855
        %v858 = vmul.f32 0.5, %v857
        %v859 = vsub.f32 1.5, %v858
        %v860 = vmul.f32 %v855, %v859
        %vm861 = vweird.f32 %v767
        %vm862 = vweird.f32 %v855
        %vm863 = vmor %vm861, %vm862
        %v864 = vsel %vm863, %v855, %v860
        %v865 = vrsqrt.pop %v768
        %v866 = vmul.f32 %v865, %v768
        %v867 = vmul.f32 %v866, %v865
        %v868 = vmul.f32 0.5, %v867
        %v869 = vsub.f32 1.5, %v868
        %v870 = vmul.f32 %v865, %v869
        %vm871 = vweird.f32 %v768
        %vm872 = vweird.f32 %v865
        %vm873 = vmor %vm871, %vm872
        %v874 = vsel %vm873, %v865, %v870
        %v875 = vrsqrt.pop %v769
        %v876 = vmul.f32 %v875, %v769
        %v877 = vmul.f32 %v876, %v875
        %v878 = vmul.f32 0.5, %v877
        %v879 = vsub.f32 1.5, %v878
        %v880 = vmul.f32 %v875, %v879
        %vm881 = vweird.f32 %v769
        %vm882 = vweird.f32 %v875
        %vm883 = vmor %vm881, %vm882
        %v884 = vsel %vm883, %v875, %v880
        %v885 = vrsqrt.pop %v770
        %v886 = vmul.f32 %v885, %v770
        %v887 = vmul.f32 %v886, %v885
        %v888 = vmul.f32 0.5, %v887
        %v889 = vsub.f32 1.5, %v888
        %v890 = vmul.f32 %v885, %v889
        %vm891 = vweird.f32 %v770
        %vm892 = vweird.f32 %v885
        %vm893 = vmor %vm891, %vm892
        %v894 = vsel %vm893, %v885, %v890
        %v895 = vrsqrt.pop %v771
        %v896 = vmul.f32 %v895, %v771
        %v897 = vmul.f32 %v896, %v895
        %v898 = vmul.f32 0.5, %v897
        %v899 = vsub.f32 1.5, %v898
        %v900 = vmul.f32 %v895, %v899
        %vm901 = vweird.f32 %v771
        %vm902 = vweird.f32 %v895
        %vm903 = vmor %vm901, %vm902
        %v904 = vsel %vm903, %v895, %v900
        %v905 = vrsqrt.pop %v772
        %v906 = vmul.f32 %v905, %v772
        %v907 = vmul.f32 %v906, %v905
        %v908 = vmul.f32 0.5, %v907
        %v909 = vsub.f32 1.5, %v908
        %v910 = vmul.f32 %v905, %v909
        %vm911 = vweird.f32 %v772
        %vm912 = vweird.f32 %v905
        %vm913 = vmor %vm911, %vm912
        %v914 = vsel %vm913, %v905, %v910
        %v915 = vrsqrt.pop %v773
        %v916 = vmul.f32 %v915, %v773
        %v917 = vmul.f32 %v916, %v915
        %v918 = vmul.f32 0.5, %v917
        %v919 = vsub.f32 1.5, %v918
        %v920 = vmul.f32 %v915, %v919
        %vm921 = vweird.f32 %v773
        %vm922 = vweird.f32 %v915
        %vm923 = vmor %vm921, %vm922
        %v924 = vsel %vm923, %v915, %v920
        %v925 = vrsqrt.pop %v774
        %v926 = vmul.f32 %v925, %v774
        %v927 = vmul.f32 %v926, %v925
        %v928 = vmul.f32 0.5, %v927
        %v929 = vsub.f32 1.5, %v928
        %v930 = vmul.f32 %v925, %v929
        %vm931 = vweird.f32 %v774
        %vm932 = vweird.f32 %v925
        %vm933 = vmor %vm931, %vm932
        %v934 = vsel %vm933, %v925, %v930
        %v935 = vmul.f32 %v727, %v784
        %v936 = vmul.f32 %v728, %v784
        %v937 = vmul.f32 %v729, %v794
        %v938 = vmul.f32 %v730, %v794
        %v939 = vmul.f32 %v731, %v804
        %v940 = vmul.f32 %v732, %v804
        %v941 = vmul.f32 %v733, %v814
        %v942 = vmul.f32 %v734, %v814
        %v943 = vmul.f32 %v735, %v824
        %v944 = vmul.f32 %v736, %v824
        %v945 = vmul.f32 %v737, %v834
        %v946 = vmul.f32 %v738, %v834
        %v947 = vmul.f32 %v739, %v844
        %v948 = vmul.f32 %v740, %v844
        %v949 = vmul.f32 %v741, %v854
        %v950 = vmul.f32 %v742, %v854
        %v951 = vmul.f32 %v743, %v864
        %v952 = vmul.f32 %v744, %v864
        %v953 = vmul.f32 %v745, %v874
        %v954 = vmul.f32 %v746, %v874
        %v955 = vmul.f32 %v747, %v884
        %v956 = vmul.f32 %v748, %v884
        %v957 = vmul.f32 %v749, %v894
        %v958 = vmul.f32 %v750, %v894
        %v959 = vmul.f32 %v751, %v904
        %v960 = vmul.f32 %v752, %v904
        %v961 = vmul.f32 %v753, %v914
        %v962 = vmul.f32 %v754, %v914
        %v963 = vmul.f32 %v755, %v924
        %v964 = vmul.f32 %v756, %v924
        %v965 = vmul.f32 %v757, %v934
        %v966 = vmul.f32 %v758, %v934
        %v967 = vld [vmem:[%s2] sm:$0x3]
        %v969 = vperm.slane %v967, 0
        %v970 = vperm.slane %v967, 1
        %v973 = vmul.f32 %v935, %v969
        %v974 = vmul.f32 %v936, %v970
        %v975 = vmul.f32 %v937, %v969
        %v976 = vmul.f32 %v938, %v970
        %v977 = vmul.f32 %v939, %v969
        %v978 = vmul.f32 %v940, %v970
        %v979 = vmul.f32 %v941, %v969
        %v980 = vmul.f32 %v942, %v970
        %v981 = vmul.f32 %v943, %v969
        %v982 = vmul.f32 %v944, %v970
        %v983 = vmul.f32 %v945, %v969
        %v984 = vmul.f32 %v946, %v970
        %v985 = vmul.f32 %v947, %v969
        %v986 = vmul.f32 %v948, %v970
        %v987 = vmul.f32 %v949, %v969
        %v988 = vmul.f32 %v950, %v970
        %v989 = vmul.f32 %v951, %v969
        %v990 = vmul.f32 %v952, %v970
        %v991 = vmul.f32 %v953, %v969
        %v992 = vmul.f32 %v954, %v970
        %v993 = vmul.f32 %v955, %v969
        %v994 = vmul.f32 %v956, %v970
        %v995 = vmul.f32 %v957, %v969
        %v996 = vmul.f32 %v958, %v970
        %v997 = vmul.f32 %v959, %v969
        %v998 = vmul.f32 %v960, %v970
        %v999 = vmul.f32 %v961, %v969
        %v1000 = vmul.f32 %v962, %v970
        %v1001 = vmul.f32 %v963, %v969
        %v1002 = vmul.f32 %v964, %v970
        %v1003 = vmul.f32 %v965, %v969
        %v1004 = vmul.f32 %v966, %v970
        %v1005 = vld [vmem:[%s3] sm:$0x3]
        %v1007 = vperm.slane %v1005, 0
        %v1008 = vperm.slane %v1005, 1
        %v1011 = vadd.f32 %v973, %v1007
        %v1012 = vadd.f32 %v974, %v1008
        %v1013 = vadd.f32 %v975, %v1007
        %v1014 = vadd.f32 %v976, %v1008
        %v1015 = vadd.f32 %v977, %v1007
        %v1016 = vadd.f32 %v978, %v1008
        %v1017 = vadd.f32 %v979, %v1007
        %v1018 = vadd.f32 %v980, %v1008
        %v1019 = vadd.f32 %v981, %v1007
        %v1020 = vadd.f32 %v982, %v1008
        %v1021 = vadd.f32 %v983, %v1007
        %v1022 = vadd.f32 %v984, %v1008
        %v1023 = vadd.f32 %v985, %v1007
        %v1024 = vadd.f32 %v986, %v1008
        %v1025 = vadd.f32 %v987, %v1007
        %v1026 = vadd.f32 %v988, %v1008
        %v1027 = vadd.f32 %v989, %v1007
        %v1028 = vadd.f32 %v990, %v1008
        %v1029 = vadd.f32 %v991, %v1007
        %v1030 = vadd.f32 %v992, %v1008
        %v1031 = vadd.f32 %v993, %v1007
        %v1032 = vadd.f32 %v994, %v1008
        %v1033 = vadd.f32 %v995, %v1007
        %v1034 = vadd.f32 %v996, %v1008
        %v1035 = vadd.f32 %v997, %v1007
        %v1036 = vadd.f32 %v998, %v1008
        %v1037 = vadd.f32 %v999, %v1007
        %v1038 = vadd.f32 %v1000, %v1008
        %v1039 = vadd.f32 %v1001, %v1007
        %v1040 = vadd.f32 %v1002, %v1008
        %v1041 = vadd.f32 %v1003, %v1007
        %v1042 = vadd.f32 %v1004, %v1008
        %v1043 = vpack.c.bf16 %v1013, %v1011
        %v1044 = vpack.c.bf16 %v1014, %v1012
        %v1045 = vpack.c.bf16 %v1017, %v1015
        %v1046 = vpack.c.bf16 %v1018, %v1016
        %v1047 = vpack.c.bf16 %v1021, %v1019
        %v1048 = vpack.c.bf16 %v1022, %v1020
        %v1049 = vpack.c.bf16 %v1025, %v1023
        %v1050 = vpack.c.bf16 %v1026, %v1024
        %v1051 = vpack.c.bf16 %v1029, %v1027
        %v1052 = vpack.c.bf16 %v1030, %v1028
        %v1053 = vpack.c.bf16 %v1033, %v1031
        %v1054 = vpack.c.bf16 %v1034, %v1032
        %v1055 = vpack.c.bf16 %v1037, %v1035
        %v1056 = vpack.c.bf16 %v1038, %v1036
        %v1057 = vpack.c.bf16 %v1041, %v1039
        %v1058 = vpack.c.bf16 %v1042, %v1040
        %v1059 = vld [vmem:[%s4] sm:$0xff]
        %v1060 = vld [vmem:[%s4 + $0x8] sm:$0xff]
        %v1061 = vld [vmem:[%s4 + $0x10] sm:$0xff]
        %v1062 = vld [vmem:[%s4 + $0x18] sm:$0xff]
        %v1063 = vld [vmem:[%s4 + $0x20] sm:$0xff]
        %v1064 = vld [vmem:[%s4 + $0x28] sm:$0xff]
        %v1065 = vld [vmem:[%s4 + $0x30] sm:$0xff]
        %v1066 = vld [vmem:[%s4 + $0x38] sm:$0xff]
        %v1067 = vld [vmem:[%s4 + $0x40] sm:$0xff]
        %v1068 = vld [vmem:[%s4 + $0x48] sm:$0xff]
        %v1069 = vld [vmem:[%s4 + $0x50] sm:$0xff]
        %v1070 = vld [vmem:[%s4 + $0x58] sm:$0xff]
        %v1071 = vld [vmem:[%s4 + $0x60] sm:$0xff]
        %v1072 = vld [vmem:[%s4 + $0x68] sm:$0xff]
        %v1073 = vld [vmem:[%s4 + $0x70] sm:$0xff]
        %v1074 = vld [vmem:[%s4 + $0x78] sm:$0xff]
        %v1075 = vld [vmem:[%s4 + $0x80] sm:$0xff]
        %v1076 = vld [vmem:[%s4 + $0x88] sm:$0xff]
        %v1077 = vld [vmem:[%s4 + $0x90] sm:$0xff]
        %v1078 = vld [vmem:[%s4 + $0x98] sm:$0xff]
        %v1079 = vld [vmem:[%s4 + $0xa0] sm:$0xff]
        %v1080 = vld [vmem:[%s4 + $0xa8] sm:$0xff]
        %v1081 = vld [vmem:[%s4 + $0xb0] sm:$0xff]
        %v1082 = vld [vmem:[%s4 + $0xb8] sm:$0xff]
        %v1083 = vld [vmem:[%s4 + $0xc0] sm:$0xff]
        %v1084 = vld [vmem:[%s4 + $0xc8] sm:$0xff]
        %v1085 = vld [vmem:[%s4 + $0xd0] sm:$0xff]
        %v1086 = vld [vmem:[%s4 + $0xd8] sm:$0xff]
        %v1087 = vld [vmem:[%s4 + $0xe0] sm:$0xff]
        %v1088 = vld [vmem:[%s4 + $0xe8] sm:$0xff]
        %v1089 = vld [vmem:[%s4 + $0xf0] sm:$0xff]
        %v1090 = vld [vmem:[%s4 + $0xf8] sm:$0xff]
        %v1091 = vld [vmem:[%s5] sm:$0x3]
        %v1093 = vperm.slane %v1091, 0
        %v1094 = vperm.slane %v1091, 1
        %v1129 = vunpack.c.l.b16 %v1059
        %v1130 = vunpack.c.h.b16 %v1059
        %v1131 = vunpack.c.l.b16 %v1060
        %v1132 = vunpack.c.h.b16 %v1060
        %v1133 = vunpack.c.l.b16 %v1061
        %v1134 = vunpack.c.h.b16 %v1061
        %v1135 = vunpack.c.l.b16 %v1062
        %v1136 = vunpack.c.h.b16 %v1062
        %v1137 = vunpack.c.l.b16 %v1063
        %v1138 = vunpack.c.h.b16 %v1063
        %v1139 = vunpack.c.l.b16 %v1064
        %v1140 = vunpack.c.h.b16 %v1064
        %v1141 = vunpack.c.l.b16 %v1065
        %v1142 = vunpack.c.h.b16 %v1065
        %v1143 = vunpack.c.l.b16 %v1066
        %v1144 = vunpack.c.h.b16 %v1066
        %v1145 = vunpack.c.l.b16 %v1067
        %v1146 = vunpack.c.h.b16 %v1067
        %v1147 = vunpack.c.l.b16 %v1068
        %v1148 = vunpack.c.h.b16 %v1068
        %v1149 = vunpack.c.l.b16 %v1069
        %v1150 = vunpack.c.h.b16 %v1069
        %v1151 = vunpack.c.l.b16 %v1070
        %v1152 = vunpack.c.h.b16 %v1070
        %v1153 = vunpack.c.l.b16 %v1071
        %v1154 = vunpack.c.h.b16 %v1071
        %v1155 = vunpack.c.l.b16 %v1072
        %v1156 = vunpack.c.h.b16 %v1072
        %v1157 = vunpack.c.l.b16 %v1073
        %v1158 = vunpack.c.h.b16 %v1073
        %v1159 = vunpack.c.l.b16 %v1074
        %v1160 = vunpack.c.h.b16 %v1074
        %v1161 = vunpack.c.l.b16 %v1075
        %v1162 = vunpack.c.h.b16 %v1075
        %v1163 = vunpack.c.l.b16 %v1076
        %v1164 = vunpack.c.h.b16 %v1076
        %v1165 = vunpack.c.l.b16 %v1077
        %v1166 = vunpack.c.h.b16 %v1077
        %v1167 = vunpack.c.l.b16 %v1078
        %v1168 = vunpack.c.h.b16 %v1078
        %v1169 = vunpack.c.l.b16 %v1079
        %v1170 = vunpack.c.h.b16 %v1079
        %v1171 = vunpack.c.l.b16 %v1080
        %v1172 = vunpack.c.h.b16 %v1080
        %v1173 = vunpack.c.l.b16 %v1081
        %v1174 = vunpack.c.h.b16 %v1081
        %v1175 = vunpack.c.l.b16 %v1082
        %v1176 = vunpack.c.h.b16 %v1082
        %v1177 = vunpack.c.l.b16 %v1083
        %v1178 = vunpack.c.h.b16 %v1083
        %v1179 = vunpack.c.l.b16 %v1084
        %v1180 = vunpack.c.h.b16 %v1084
        %v1181 = vunpack.c.l.b16 %v1085
        %v1182 = vunpack.c.h.b16 %v1085
        %v1183 = vunpack.c.l.b16 %v1086
        %v1184 = vunpack.c.h.b16 %v1086
        %v1185 = vunpack.c.l.b16 %v1087
        %v1186 = vunpack.c.h.b16 %v1087
        %v1187 = vunpack.c.l.b16 %v1088
        %v1188 = vunpack.c.h.b16 %v1088
        %v1189 = vunpack.c.l.b16 %v1089
        %v1190 = vunpack.c.h.b16 %v1089
        %v1191 = vunpack.c.l.b16 %v1090
        %v1192 = vunpack.c.h.b16 %v1090
        %v1193 = vpack.c.b16 %v1131, %v1129
        %v1194 = vpack.c.b16 %v1132, %v1130
        %v1195 = vpack.c.b16 %v1135, %v1133
        %v1196 = vpack.c.b16 %v1136, %v1134
        %v1197 = vpack.c.b16 %v1139, %v1137
        %v1198 = vpack.c.b16 %v1140, %v1138
        %v1199 = vpack.c.b16 %v1143, %v1141
        %v1200 = vpack.c.b16 %v1144, %v1142
        %v1201 = vpack.c.b16 %v1147, %v1145
        %v1202 = vpack.c.b16 %v1148, %v1146
        %v1203 = vpack.c.b16 %v1151, %v1149
        %v1204 = vpack.c.b16 %v1152, %v1150
        %v1205 = vpack.c.b16 %v1155, %v1153
        %v1206 = vpack.c.b16 %v1156, %v1154
        %v1207 = vpack.c.b16 %v1159, %v1157
        %v1208 = vpack.c.b16 %v1160, %v1158
        %v1209 = vpack.c.b16 %v1163, %v1161
        %v1210 = vpack.c.b16 %v1164, %v1162
        %v1211 = vpack.c.b16 %v1167, %v1165
        %v1212 = vpack.c.b16 %v1168, %v1166
        %v1213 = vpack.c.b16 %v1171, %v1169
        %v1214 = vpack.c.b16 %v1172, %v1170
        %v1215 = vpack.c.b16 %v1175, %v1173
        %v1216 = vpack.c.b16 %v1176, %v1174
        %v1217 = vpack.c.b16 %v1179, %v1177
        %v1218 = vpack.c.b16 %v1180, %v1178
        %v1219 = vpack.c.b16 %v1183, %v1181
        %v1220 = vpack.c.b16 %v1184, %v1182
        %v1221 = vpack.c.b16 %v1187, %v1185
        %v1222 = vpack.c.b16 %v1188, %v1186
        %v1223 = vpack.c.b16 %v1191, %v1189
        %v1224 = vpack.c.b16 %v1192, %v1190
        %1257 = vmatpush.bf16.msra.mxu0 %v1207
        %1258 = vmatpush.bf16.msra.mxu0 %v1205
        %1259 = vmatpush.bf16.msra.mxu0 %v1203
        %1260 = vmatpush.bf16.msra.mxu0 %v1201
        %1261 = vmatpush.bf16.msra.mxu0 %v1199
        %1262 = vmatpush.bf16.msra.mxu0 %v1197
        %1263 = vmatpush.bf16.msra.mxu0 %v1195
        %1264 = vmatpush.bf16.msra.mxu0 %v1193
        %1265 = vmatmul.bf16.gmra.mxu0 %v1043
        %v1266 = vpop.f32.mrf.mxu0
        %v1267 = vadd.f32 %v1093, %v1266
        %v1268 = vpop.f32.mrf.mxu0
        %v1269 = vadd.f32 %v1093, %v1268
        %1270 = vmatmul.bf16.gmra.mxu0 %v1045
        %v1271 = vpop.f32.mrf.mxu0
        %v1272 = vadd.f32 %v1093, %v1271
        %v1273 = vpop.f32.mrf.mxu0
        %v1274 = vadd.f32 %v1093, %v1273
        %1275 = vmatmul.bf16.gmra.mxu0 %v1047
        %v1276 = vpop.f32.mrf.mxu0
        %v1277 = vadd.f32 %v1093, %v1276
        %v1278 = vpop.f32.mrf.mxu0
        %v1279 = vadd.f32 %v1093, %v1278
        %1280 = vmatmul.bf16.gmra.mxu0 %v1049
        %v1281 = vpop.f32.mrf.mxu0
        %v1282 = vadd.f32 %v1093, %v1281
        %v1283 = vpop.f32.mrf.mxu0
        %v1284 = vadd.f32 %v1093, %v1283
        %1285 = vmatmul.bf16.gmra.mxu0 %v1051
        %v1286 = vpop.f32.mrf.mxu0
        %v1287 = vadd.f32 %v1093, %v1286
        %v1288 = vpop.f32.mrf.mxu0
        %v1289 = vadd.f32 %v1093, %v1288
        %1290 = vmatmul.bf16.gmra.mxu0 %v1053
        %v1291 = vpop.f32.mrf.mxu0
        %v1292 = vadd.f32 %v1093, %v1291
        %v1293 = vpop.f32.mrf.mxu0
        %v1294 = vadd.f32 %v1093, %v1293
        %1295 = vmatmul.bf16.gmra.mxu0 %v1055
        %v1296 = vpop.f32.mrf.mxu0
        %v1297 = vadd.f32 %v1093, %v1296
        %v1298 = vpop.f32.mrf.mxu0
        %v1299 = vadd.f32 %v1093, %v1298
        %1300 = vmatmul.bf16.gmra.mxu0 %v1057
        %v1301 = vpop.f32.mrf.mxu0
        %v1302 = vadd.f32 %v1093, %v1301
        %v1303 = vpop.f32.mrf.mxu0
        %v1304 = vadd.f32 %v1093, %v1303
        %1305 = vdwg.mxu0
        %1306 = vmatpush.bf16.msra.mxu0 %v1223
        %1307 = vmatpush.bf16.msra.mxu0 %v1221
        %1308 = vmatpush.bf16.msra.mxu0 %v1219
        %1309 = vmatpush.bf16.msra.mxu0 %v1217
        %1310 = vmatpush.bf16.msra.mxu0 %v1215
        %1311 = vmatpush.bf16.msra.mxu0 %v1213
        %1312 = vmatpush.bf16.msra.mxu0 %v1211
        %1313 = vmatpush.bf16.msra.mxu0 %v1209
        %1314 = vmatmul.bf16.gmra.mxu0 %v1044
        %v1315 = vpop.f32.mrf.mxu0
        %v1316 = vadd.f32 %v1267, %v1315
        %v1317 = vpop.f32.mrf.mxu0
        %v1318 = vadd.f32 %v1269, %v1317
        %1319 = vmatmul.bf16.gmra.mxu0 %v1046
        %v1320 = vpop.f32.mrf.mxu0
        %v1321 = vadd.f32 %v1272, %v1320
        %v1322 = vpop.f32.mrf.mxu0
        %v1323 = vadd.f32 %v1274, %v1322
        %1324 = vmatmul.bf16.gmra.mxu0 %v1048
        %v1325 = vpop.f32.mrf.mxu0
        %v1326 = vadd.f32 %v1277, %v1325
        %v1327 = vpop.f32.mrf.mxu0
        %v1328 = vadd.f32 %v1279, %v1327
        %1329 = vmatmul.bf16.gmra.mxu0 %v1050
        %v1330 = vpop.f32.mrf.mxu0
        %v1331 = vadd.f32 %v1282, %v1330
        %v1332 = vpop.f32.mrf.mxu0
        %v1333 = vadd.f32 %v1284, %v1332
        %1334 = vmatmul.bf16.gmra.mxu0 %v1052
        %v1335 = vpop.f32.mrf.mxu0
        %v1336 = vadd.f32 %v1287, %v1335
        %v1337 = vpop.f32.mrf.mxu0
        %v1338 = vadd.f32 %v1289, %v1337
        %1339 = vmatmul.bf16.gmra.mxu0 %v1054
        %v1340 = vpop.f32.mrf.mxu0
        %v1341 = vadd.f32 %v1292, %v1340
        %v1342 = vpop.f32.mrf.mxu0
        %v1343 = vadd.f32 %v1294, %v1342
        %1344 = vmatmul.bf16.gmra.mxu0 %v1056
        %v1345 = vpop.f32.mrf.mxu0
        %v1346 = vadd.f32 %v1297, %v1345
        %v1347 = vpop.f32.mrf.mxu0
        %v1348 = vadd.f32 %v1299, %v1347
        %1349 = vmatmul.bf16.gmra.mxu0 %v1058
        %v1350 = vpop.f32.mrf.mxu0
        %v1351 = vadd.f32 %v1302, %v1350
        %v1352 = vpop.f32.mrf.mxu0
        %v1353 = vadd.f32 %v1304, %v1352
        %1354 = vdwg.mxu0
        %1355 = vmatpush.bf16.msra.mxu0 %v1208
        %1356 = vmatpush.bf16.msra.mxu0 %v1206
        %1357 = vmatpush.bf16.msra.mxu0 %v1204
        %1358 = vmatpush.bf16.msra.mxu0 %v1202
        %1359 = vmatpush.bf16.msra.mxu0 %v1200
        %1360 = vmatpush.bf16.msra.mxu0 %v1198
        %1361 = vmatpush.bf16.msra.mxu0 %v1196
        %1362 = vmatpush.bf16.msra.mxu0 %v1194
        %1363 = vmatmul.bf16.gmra.mxu0 %v1043
        %v1364 = vpop.f32.mrf.mxu0
        %v1365 = vadd.f32 %v1094, %v1364
        %v1366 = vpop.f32.mrf.mxu0
        %v1367 = vadd.f32 %v1094, %v1366
        %1368 = vmatmul.bf16.gmra.mxu0 %v1045
        %v1369 = vpop.f32.mrf.mxu0
        %v1370 = vadd.f32 %v1094, %v1369
        %v1371 = vpop.f32.mrf.mxu0
        %v1372 = vadd.f32 %v1094, %v1371
        %1373 = vmatmul.bf16.gmra.mxu0 %v1047
        %v1374 = vpop.f32.mrf.mxu0
        %v1375 = vadd.f32 %v1094, %v1374
        %v1376 = vpop.f32.mrf.mxu0
        %v1377 = vadd.f32 %v1094, %v1376
        %1378 = vmatmul.bf16.gmra.mxu0 %v1049
        %v1379 = vpop.f32.mrf.mxu0
        %v1380 = vadd.f32 %v1094, %v1379
        %v1381 = vpop.f32.mrf.mxu0
        %v1382 = vadd.f32 %v1094, %v1381
        %1383 = vmatmul.bf16.gmra.mxu0 %v1051
        %v1384 = vpop.f32.mrf.mxu0
        %v1385 = vadd.f32 %v1094, %v1384
        %v1386 = vpop.f32.mrf.mxu0
        %v1387 = vadd.f32 %v1094, %v1386
        %1388 = vmatmul.bf16.gmra.mxu0 %v1053
        %v1389 = vpop.f32.mrf.mxu0
        %v1390 = vadd.f32 %v1094, %v1389
        %v1391 = vpop.f32.mrf.mxu0
        %v1392 = vadd.f32 %v1094, %v1391
        %1393 = vmatmul.bf16.gmra.mxu0 %v1055
        %v1394 = vpop.f32.mrf.mxu0
        %v1395 = vadd.f32 %v1094, %v1394
        %v1396 = vpop.f32.mrf.mxu0
        %v1397 = vadd.f32 %v1094, %v1396
        %1398 = vmatmul.bf16.gmra.mxu0 %v1057
        %v1399 = vpop.f32.mrf.mxu0
        %v1400 = vadd.f32 %v1094, %v1399
        %v1401 = vpop.f32.mrf.mxu0
        %v1402 = vadd.f32 %v1094, %v1401
        %1403 = vdwg.mxu0
        %1404 = vmatpush.bf16.msra.mxu0 %v1224
        %1405 = vmatpush.bf16.msra.mxu0 %v1222
        %1406 = vmatpush.bf16.msra.mxu0 %v1220
        %1407 = vmatpush.bf16.msra.mxu0 %v1218
        %1408 = vmatpush.bf16.msra.mxu0 %v1216
        %1409 = vmatpush.bf16.msra.mxu0 %v1214
        %1410 = vmatpush.bf16.msra.mxu0 %v1212
        %1411 = vmatpush.bf16.msra.mxu0 %v1210
        %1412 = vmatmul.bf16.gmra.mxu0 %v1044
        %v1413 = vpop.f32.mrf.mxu0
        %v1414 = vadd.f32 %v1365, %v1413
        %v1415 = vpop.f32.mrf.mxu0
        %v1416 = vadd.f32 %v1367, %v1415
        %1417 = vmatmul.bf16.gmra.mxu0 %v1046
        %v1418 = vpop.f32.mrf.mxu0
        %v1419 = vadd.f32 %v1370, %v1418
        %v1420 = vpop.f32.mrf.mxu0
        %v1421 = vadd.f32 %v1372, %v1420
        %1422 = vmatmul.bf16.gmra.mxu0 %v1048
        %v1423 = vpop.f32.mrf.mxu0
        %v1424 = vadd.f32 %v1375, %v1423
        %v1425 = vpop.f32.mrf.mxu0
        %v1426 = vadd.f32 %v1377, %v1425
        %1427 = vmatmul.bf16.gmra.mxu0 %v1050
        %v1428 = vpop.f32.mrf.mxu0
        %v1429 = vadd.f32 %v1380, %v1428
        %v1430 = vpop.f32.mrf.mxu0
        %v1431 = vadd.f32 %v1382, %v1430
        %1432 = vmatmul.bf16.gmra.mxu0 %v1052
        %v1433 = vpop.f32.mrf.mxu0
        %v1434 = vadd.f32 %v1385, %v1433
        %v1435 = vpop.f32.mrf.mxu0
        %v1436 = vadd.f32 %v1387, %v1435
        %1437 = vmatmul.bf16.gmra.mxu0 %v1054
        %v1438 = vpop.f32.mrf.mxu0
        %v1439 = vadd.f32 %v1390, %v1438
        %v1440 = vpop.f32.mrf.mxu0
        %v1441 = vadd.f32 %v1392, %v1440
        %1442 = vmatmul.bf16.gmra.mxu0 %v1056
        %v1443 = vpop.f32.mrf.mxu0
        %v1444 = vadd.f32 %v1395, %v1443
        %v1445 = vpop.f32.mrf.mxu0
        %v1446 = vadd.f32 %v1397, %v1445
        %1447 = vmatmul.bf16.gmra.mxu0 %v1058
        %v1448 = vpop.f32.mrf.mxu0
        %v1449 = vadd.f32 %v1400, %v1448
        %v1450 = vpop.f32.mrf.mxu0
        %v1451 = vadd.f32 %v1402, %v1450
        %1452 = vdwg.mxu0
        %v1453 = vmul.f32 %v1316, 0.5
        %v1454 = vmul.f32 %v1414, 0.5
        %v1455 = vmul.f32 %v1318, 0.5
        %v1456 = vmul.f32 %v1416, 0.5
        %v1457 = vmul.f32 %v1321, 0.5
        %v1458 = vmul.f32 %v1419, 0.5
        %v1459 = vmul.f32 %v1323, 0.5
        %v1460 = vmul.f32 %v1421, 0.5
        %v1461 = vmul.f32 %v1326, 0.5
        %v1462 = vmul.f32 %v1424, 0.5
        %v1463 = vmul.f32 %v1328, 0.5
        %v1464 = vmul.f32 %v1426, 0.5
        %v1465 = vmul.f32 %v1331, 0.5
        %v1466 = vmul.f32 %v1429, 0.5
        %v1467 = vmul.f32 %v1333, 0.5
        %v1468 = vmul.f32 %v1431, 0.5
        %v1469 = vmul.f32 %v1336, 0.5
        %v1470 = vmul.f32 %v1434, 0.5
        %v1471 = vmul.f32 %v1338, 0.5
        %v1472 = vmul.f32 %v1436, 0.5
        %v1473 = vmul.f32 %v1341, 0.5
        %v1474 = vmul.f32 %v1439, 0.5
        %v1475 = vmul.f32 %v1343, 0.5
        %v1476 = vmul.f32 %v1441, 0.5
        %v1477 = vmul.f32 %v1346, 0.5
        %v1478 = vmul.f32 %v1444, 0.5
        %v1479 = vmul.f32 %v1348, 0.5
        %v1480 = vmul.f32 %v1446, 0.5
        %v1481 = vmul.f32 %v1351, 0.5
        %v1482 = vmul.f32 %v1449, 0.5
        %v1483 = vmul.f32 %v1353, 0.5
        %v1484 = vmul.f32 %v1451, 0.5
        %v1485 = vmul.f32 %v1316, 0.70710677
        %v1486 = vmul.f32 %v1414, 0.70710677
        %v1487 = vmul.f32 %v1318, 0.70710677
        %v1488 = vmul.f32 %v1416, 0.70710677
        %v1489 = vmul.f32 %v1321, 0.70710677
        %v1490 = vmul.f32 %v1419, 0.70710677
        %v1491 = vmul.f32 %v1323, 0.70710677
        %v1492 = vmul.f32 %v1421, 0.70710677
        %v1493 = vmul.f32 %v1326, 0.70710677
        %v1494 = vmul.f32 %v1424, 0.70710677
        %v1495 = vmul.f32 %v1328, 0.70710677
        %v1496 = vmul.f32 %v1426, 0.70710677
        %v1497 = vmul.f32 %v1331, 0.70710677
        %v1498 = vmul.f32 %v1429, 0.70710677
        %v1499 = vmul.f32 %v1333, 0.70710677
        %v1500 = vmul.f32 %v1431, 0.70710677
        %v1501 = vmul.f32 %v1336, 0.70710677
        %v1502 = vmul.f32 %v1434, 0.70710677
        %v1503 = vmul.f32 %v1338, 0.70710677
        %v1504 = vmul.f32 %v1436, 0.70710677
        %v1505 = vmul.f32 %v1341, 0.70710677
        %v1506 = vmul.f32 %v1439, 0.70710677
        %v1507 = vmul.f32 %v1343, 0.70710677
        %v1508 = vmul.f32 %v1441, 0.70710677
        %v1509 = vmul.f32 %v1346, 0.70710677
        %v1510 = vmul.f32 %v1444, 0.70710677
        %v1511 = vmul.f32 %v1348, 0.70710677
        %v1512 = vmul.f32 %v1446, 0.70710677
        %v1513 = vmul.f32 %v1351, 0.70710677
        %v1514 = vmul.f32 %v1449, 0.70710677
        %v1515 = vmul.f32 %v1353, 0.70710677
        %v1516 = vmul.f32 %v1451, 0.70710677
        %v1517 = vmul.f32 %v1485, %v1485
        %v1518 = vmin.f32 16.0, %v1517
        %v1519 = vmul.f32 %v1518, 2.1237322e-06
        %v1520 = vadd.f32 %v1519, 0.00028619796
        %v1521 = vmul.f32 %v1518, %v1520
        %v1522 = vadd.f32 %v1521, 0.0036580483
        %v1523 = vmul.f32 %v1518, %v1522
        %v1524 = vadd.f32 %v1523, 0.05243302
        %v1525 = vmul.f32 %v1518, %v1524
        %v1526 = vadd.f32 %v1525, 0.18741608
        %v1527 = vmul.f32 %v1518, %v1526
        %v1528 = vadd.f32 %v1527, 1.1283791
        %v1529 = vmul.f32 %v1485, %v1528
        %v1530 = vmul.f32 %v1518, 3.8918573e-05
        %v1531 = vadd.f32 %v1530, 0.001143296
        %v1532 = vmul.f32 %v1518, %v1531
        %v1533 = vadd.f32 %v1532, 0.014752088
        %v1534 = vmul.f32 %v1518, %v1533
        %v1535 = vadd.f32 %v1534, 0.112945676
        %v1536 = vmul.f32 %v1518, %v1535
        %v1537 = vadd.f32 %v1536, 0.4994258
        %v1538 = vmul.f32 %v1518, %v1537
        %v1539 = vadd.f32 %v1538, 1.0
        %v1540 = vrcp.pop %v1539
        %v1541 = vmul.f32 %v1539, %v1540
        %v1542 = vsub.f32 1.0, %v1541
        %v1543 = vmul.f32 %v1540, %v1542
        %v1544 = vadd.f32 %v1540, %v1543
        %vm1545 = vweird.f32 %v1539
        %vm1546 = vweird.f32 %v1540
        %vm1547 = vmor %vm1545, %vm1546
        %v1548 = vsel %vm1547, %v1540, %v1544
        %v1549 = vand.u32 2147483647, %v1539
        %vm1550 = vcmp.eq.f32.partialorder %v1549, 8.507059e+37
        %v1551 = vand.u32 %v1539, 2147483648
        %v1552 = vor.u32 1.1754944e-38, %v1551
        %v1553 = vsel %vm1550, %v1552, %v1548
        %v1554 = vmul.f32 %v1529, %v1553
        %v1555 = vmin.f32 %v1554, 1.0
        %v1556 = vmax.f32 %v1555, -1.0
        %v1557 = vmul.f32 %v1486, %v1486
        %v1558 = vmin.f32 16.0, %v1557
        %v1559 = vmul.f32 %v1558, 2.1237322e-06
        %v1560 = vadd.f32 %v1559, 0.00028619796
        %v1561 = vmul.f32 %v1558, %v1560
        %v1562 = vadd.f32 %v1561, 0.0036580483
        %v1563 = vmul.f32 %v1558, %v1562
        %v1564 = vadd.f32 %v1563, 0.05243302
        %v1565 = vmul.f32 %v1558, %v1564
        %v1566 = vadd.f32 %v1565, 0.18741608
        %v1567 = vmul.f32 %v1558, %v1566
        %v1568 = vadd.f32 %v1567, 1.1283791
        %v1569 = vmul.f32 %v1486, %v1568
        %v1570 = vmul.f32 %v1558, 3.8918573e-05
        %v1571 = vadd.f32 %v1570, 0.001143296
        %v1572 = vmul.f32 %v1558, %v1571
        %v1573 = vadd.f32 %v1572, 0.014752088
        %v1574 = vmul.f32 %v1558, %v1573
        %v1575 = vadd.f32 %v1574, 0.112945676
        %v1576 = vmul.f32 %v1558, %v1575
        %v1577 = vadd.f32 %v1576, 0.4994258
        %v1578 = vmul.f32 %v1558, %v1577
        %v1579 = vadd.f32 %v1578, 1.0
        %v1580 = vrcp.pop %v1579
        %v1581 = vmul.f32 %v1579, %v1580
        %v1582 = vsub.f32 1.0, %v1581
        %v1583 = vmul.f32 %v1580, %v1582
        %v1584 = vadd.f32 %v1580, %v1583
        %vm1585 = vweird.f32 %v1579
        %vm1586 = vweird.f32 %v1580
        %vm1587 = vmor %vm1585, %vm1586
        %v1588 = vsel %vm1587, %v1580, %v1584
        %v1589 = vand.u32 2147483647, %v1579
        %vm1590 = vcmp.eq.f32.partialorder %v1589, 8.507059e+37
        %v1591 = vand.u32 %v1579, 2147483648
        %v1592 = vor.u32 1.1754944e-38, %v1591
        %v1593 = vsel %vm1590, %v1592, %v1588
        %v1594 = vmul.f32 %v1569, %v1593
        %v1595 = vmin.f32 %v1594, 1.0
        %v1596 = vmax.f32 %v1595, -1.0
        %v1597 = vmul.f32 %v1487, %v1487
        %v1598 = vmin.f32 16.0, %v1597
        %v1599 = vmul.f32 %v1598, 2.1237322e-06
        %v1600 = vadd.f32 %v1599, 0.00028619796
        %v1601 = vmul.f32 %v1598, %v1600
        %v1602 = vadd.f32 %v1601, 0.0036580483
        %v1603 = vmul.f32 %v1598, %v1602
        %v1604 = vadd.f32 %v1603, 0.05243302
        %v1605 = vmul.f32 %v1598, %v1604
        %v1606 = vadd.f32 %v1605, 0.18741608
        %v1607 = vmul.f32 %v1598, %v1606
        %v1608 = vadd.f32 %v1607, 1.1283791
        %v1609 = vmul.f32 %v1487, %v1608
        %v1610 = vmul.f32 %v1598, 3.8918573e-05
        %v1611 = vadd.f32 %v1610, 0.001143296
        %v1612 = vmul.f32 %v1598, %v1611
        %v1613 = vadd.f32 %v1612, 0.014752088
        %v1614 = vmul.f32 %v1598, %v1613
        %v1615 = vadd.f32 %v1614, 0.112945676
        %v1616 = vmul.f32 %v1598, %v1615
        %v1617 = vadd.f32 %v1616, 0.4994258
        %v1618 = vmul.f32 %v1598, %v1617
        %v1619 = vadd.f32 %v1618, 1.0
        %v1620 = vrcp.pop %v1619
        %v1621 = vmul.f32 %v1619, %v1620
        %v1622 = vsub.f32 1.0, %v1621
        %v1623 = vmul.f32 %v1620, %v1622
        %v1624 = vadd.f32 %v1620, %v1623
        %vm1625 = vweird.f32 %v1619
        %vm1626 = vweird.f32 %v1620
        %vm1627 = vmor %vm1625, %vm1626
        %v1628 = vsel %vm1627, %v1620, %v1624
        %v1629 = vand.u32 2147483647, %v1619
        %vm1630 = vcmp.eq.f32.partialorder %v1629, 8.507059e+37
        %v1631 = vand.u32 %v1619, 2147483648
        %v1632 = vor.u32 1.1754944e-38, %v1631
        %v1633 = vsel %vm1630, %v1632, %v1628
        %v1634 = vmul.f32 %v1609, %v1633
        %v1635 = vmin.f32 %v1634, 1.0
        %v1636 = vmax.f32 %v1635, -1.0
        %v1637 = vmul.f32 %v1488, %v1488
        %v1638 = vmin.f32 16.0, %v1637
        %v1639 = vmul.f32 %v1638, 2.1237322e-06
        %v1640 = vadd.f32 %v1639, 0.00028619796
        %v1641 = vmul.f32 %v1638, %v1640
        %v1642 = vadd.f32 %v1641, 0.0036580483
        %v1643 = vmul.f32 %v1638, %v1642
        %v1644 = vadd.f32 %v1643, 0.05243302
        %v1645 = vmul.f32 %v1638, %v1644
        %v1646 = vadd.f32 %v1645, 0.18741608
        %v1647 = vmul.f32 %v1638, %v1646
        %v1648 = vadd.f32 %v1647, 1.1283791
        %v1649 = vmul.f32 %v1488, %v1648
        %v1650 = vmul.f32 %v1638, 3.8918573e-05
        %v1651 = vadd.f32 %v1650, 0.001143296
        %v1652 = vmul.f32 %v1638, %v1651
        %v1653 = vadd.f32 %v1652, 0.014752088
        %v1654 = vmul.f32 %v1638, %v1653
        %v1655 = vadd.f32 %v1654, 0.112945676
        %v1656 = vmul.f32 %v1638, %v1655
        %v1657 = vadd.f32 %v1656, 0.4994258
        %v1658 = vmul.f32 %v1638, %v1657
        %v1659 = vadd.f32 %v1658, 1.0
        %v1660 = vrcp.pop %v1659
        %v1661 = vmul.f32 %v1659, %v1660
        %v1662 = vsub.f32 1.0, %v1661
        %v1663 = vmul.f32 %v1660, %v1662
        %v1664 = vadd.f32 %v1660, %v1663
        %vm1665 = vweird.f32 %v1659
        %vm1666 = vweird.f32 %v1660
        %vm1667 = vmor %vm1665, %vm1666
        %v1668 = vsel %vm1667, %v1660, %v1664
        %v1669 = vand.u32 2147483647, %v1659
        %vm1670 = vcmp.eq.f32.partialorder %v1669, 8.507059e+37
        %v1671 = vand.u32 %v1659, 2147483648
        %v1672 = vor.u32 1.1754944e-38, %v1671
        %v1673 = vsel %vm1670, %v1672, %v1668
        %v1674 = vmul.f32 %v1649, %v1673
        %v1675 = vmin.f32 %v1674, 1.0
        %v1676 = vmax.f32 %v1675, -1.0
        %v1677 = vmul.f32 %v1489, %v1489
        %v1678 = vmin.f32 16.0, %v1677
        %v1679 = vmul.f32 %v1678, 2.1237322e-06
        %v1680 = vadd.f32 %v1679, 0.00028619796
        %v1681 = vmul.f32 %v1678, %v1680
        %v1682 = vadd.f32 %v1681, 0.0036580483
        %v1683 = vmul.f32 %v1678, %v1682
        %v1684 = vadd.f32 %v1683, 0.05243302
        %v1685 = vmul.f32 %v1678, %v1684
        %v1686 = vadd.f32 %v1685, 0.18741608
        %v1687 = vmul.f32 %v1678, %v1686
        %v1688 = vadd.f32 %v1687, 1.1283791
        %v1689 = vmul.f32 %v1489, %v1688
        %v1690 = vmul.f32 %v1678, 3.8918573e-05
        %v1691 = vadd.f32 %v1690, 0.001143296
        %v1692 = vmul.f32 %v1678, %v1691
        %v1693 = vadd.f32 %v1692, 0.014752088
        %v1694 = vmul.f32 %v1678, %v1693
        %v1695 = vadd.f32 %v1694, 0.112945676
        %v1696 = vmul.f32 %v1678, %v1695
        %v1697 = vadd.f32 %v1696, 0.4994258
        %v1698 = vmul.f32 %v1678, %v1697
        %v1699 = vadd.f32 %v1698, 1.0
        %v1700 = vrcp.pop %v1699
        %v1701 = vmul.f32 %v1699, %v1700
        %v1702 = vsub.f32 1.0, %v1701
        %v1703 = vmul.f32 %v1700, %v1702
        %v1704 = vadd.f32 %v1700, %v1703
        %vm1705 = vweird.f32 %v1699
        %vm1706 = vweird.f32 %v1700
        %vm1707 = vmor %vm1705, %vm1706
        %v1708 = vsel %vm1707, %v1700, %v1704
        %v1709 = vand.u32 2147483647, %v1699
        %vm1710 = vcmp.eq.f32.partialorder %v1709, 8.507059e+37
        %v1711 = vand.u32 %v1699, 2147483648
        %v1712 = vor.u32 1.1754944e-38, %v1711
        %v1713 = vsel %vm1710, %v1712, %v1708
        %v1714 = vmul.f32 %v1689, %v1713
        %v1715 = vmin.f32 %v1714, 1.0
        %v1716 = vmax.f32 %v1715, -1.0
        %v1717 = vmul.f32 %v1490, %v1490
        %v1718 = vmin.f32 16.0, %v1717
        %v1719 = vmul.f32 %v1718, 2.1237322e-06
        %v1720 = vadd.f32 %v1719, 0.00028619796
        %v1721 = vmul.f32 %v1718, %v1720
        %v1722 = vadd.f32 %v1721, 0.0036580483
        %v1723 = vmul.f32 %v1718, %v1722
        %v1724 = vadd.f32 %v1723, 0.05243302
        %v1725 = vmul.f32 %v1718, %v1724
        %v1726 = vadd.f32 %v1725, 0.18741608
        %v1727 = vmul.f32 %v1718, %v1726
        %v1728 = vadd.f32 %v1727, 1.1283791
        %v1729 = vmul.f32 %v1490, %v1728
        %v1730 = vmul.f32 %v1718, 3.8918573e-05
        %v1731 = vadd.f32 %v1730, 0.001143296
        %v1732 = vmul.f32 %v1718, %v1731
        %v1733 = vadd.f32 %v1732, 0.014752088
        %v1734 = vmul.f32 %v1718, %v1733
        %v1735 = vadd.f32 %v1734, 0.112945676
        %v1736 = vmul.f32 %v1718, %v1735
        %v1737 = vadd.f32 %v1736, 0.4994258
        %v1738 = vmul.f32 %v1718, %v1737
        %v1739 = vadd.f32 %v1738, 1.0
        %v1740 = vrcp.pop %v1739
        %v1741 = vmul.f32 %v1739, %v1740
        %v1742 = vsub.f32 1.0, %v1741
        %v1743 = vmul.f32 %v1740, %v1742
        %v1744 = vadd.f32 %v1740, %v1743
        %vm1745 = vweird.f32 %v1739
        %vm1746 = vweird.f32 %v1740
        %vm1747 = vmor %vm1745, %vm1746
        %v1748 = vsel %vm1747, %v1740, %v1744
        %v1749 = vand.u32 2147483647, %v1739
        %vm1750 = vcmp.eq.f32.partialorder %v1749, 8.507059e+37
        %v1751 = vand.u32 %v1739, 2147483648
        %v1752 = vor.u32 1.1754944e-38, %v1751
        %v1753 = vsel %vm1750, %v1752, %v1748
        %v1754 = vmul.f32 %v1729, %v1753
        %v1755 = vmin.f32 %v1754, 1.0
        %v1756 = vmax.f32 %v1755, -1.0
        %v1757 = vmul.f32 %v1491, %v1491
        %v1758 = vmin.f32 16.0, %v1757
        %v1759 = vmul.f32 %v1758, 2.1237322e-06
        %v1760 = vadd.f32 %v1759, 0.00028619796
        %v1761 = vmul.f32 %v1758, %v1760
        %v1762 = vadd.f32 %v1761, 0.0036580483
        %v1763 = vmul.f32 %v1758, %v1762
        %v1764 = vadd.f32 %v1763, 0.05243302
        %v1765 = vmul.f32 %v1758, %v1764
        %v1766 = vadd.f32 %v1765, 0.18741608
        %v1767 = vmul.f32 %v1758, %v1766
        %v1768 = vadd.f32 %v1767, 1.1283791
        %v1769 = vmul.f32 %v1491, %v1768
        %v1770 = vmul.f32 %v1758, 3.8918573e-05
        %v1771 = vadd.f32 %v1770, 0.001143296
        %v1772 = vmul.f32 %v1758, %v1771
        %v1773 = vadd.f32 %v1772, 0.014752088
        %v1774 = vmul.f32 %v1758, %v1773
        %v1775 = vadd.f32 %v1774, 0.112945676
        %v1776 = vmul.f32 %v1758, %v1775
        %v1777 = vadd.f32 %v1776, 0.4994258
        %v1778 = vmul.f32 %v1758, %v1777
        %v1779 = vadd.f32 %v1778, 1.0
        %v1780 = vrcp.pop %v1779
        %v1781 = vmul.f32 %v1779, %v1780
        %v1782 = vsub.f32 1.0, %v1781
        %v1783 = vmul.f32 %v1780, %v1782
        %v1784 = vadd.f32 %v1780, %v1783
        %vm1785 = vweird.f32 %v1779
        %vm1786 = vweird.f32 %v1780
        %vm1787 = vmor %vm1785, %vm1786
        %v1788 = vsel %vm1787, %v1780, %v1784
        %v1789 = vand.u32 2147483647, %v1779
        %vm1790 = vcmp.eq.f32.partialorder %v1789, 8.507059e+37
        %v1791 = vand.u32 %v1779, 2147483648
        %v1792 = vor.u32 1.1754944e-38, %v1791
        %v1793 = vsel %vm1790, %v1792, %v1788
        %v1794 = vmul.f32 %v1769, %v1793
        %v1795 = vmin.f32 %v1794, 1.0
        %v1796 = vmax.f32 %v1795, -1.0
        %v1797 = vmul.f32 %v1492, %v1492
        %v1798 = vmin.f32 16.0, %v1797
        %v1799 = vmul.f32 %v1798, 2.1237322e-06
        %v1800 = vadd.f32 %v1799, 0.00028619796
        %v1801 = vmul.f32 %v1798, %v1800
        %v1802 = vadd.f32 %v1801, 0.0036580483
        %v1803 = vmul.f32 %v1798, %v1802
        %v1804 = vadd.f32 %v1803, 0.05243302
        %v1805 = vmul.f32 %v1798, %v1804
        %v1806 = vadd.f32 %v1805, 0.18741608
        %v1807 = vmul.f32 %v1798, %v1806
        %v1808 = vadd.f32 %v1807, 1.1283791
        %v1809 = vmul.f32 %v1492, %v1808
        %v1810 = vmul.f32 %v1798, 3.8918573e-05
        %v1811 = vadd.f32 %v1810, 0.001143296
        %v1812 = vmul.f32 %v1798, %v1811
        %v1813 = vadd.f32 %v1812, 0.014752088
        %v1814 = vmul.f32 %v1798, %v1813
        %v1815 = vadd.f32 %v1814, 0.112945676
        %v1816 = vmul.f32 %v1798, %v1815
        %v1817 = vadd.f32 %v1816, 0.4994258
        %v1818 = vmul.f32 %v1798, %v1817
        %v1819 = vadd.f32 %v1818, 1.0
        %v1820 = vrcp.pop %v1819
        %v1821 = vmul.f32 %v1819, %v1820
        %v1822 = vsub.f32 1.0, %v1821
        %v1823 = vmul.f32 %v1820, %v1822
        %v1824 = vadd.f32 %v1820, %v1823
        %vm1825 = vweird.f32 %v1819
        %vm1826 = vweird.f32 %v1820
        %vm1827 = vmor %vm1825, %vm1826
        %v1828 = vsel %vm1827, %v1820, %v1824
        %v1829 = vand.u32 2147483647, %v1819
        %vm1830 = vcmp.eq.f32.partialorder %v1829, 8.507059e+37
        %v1831 = vand.u32 %v1819, 2147483648
        %v1832 = vor.u32 1.1754944e-38, %v1831
        %v1833 = vsel %vm1830, %v1832, %v1828
        %v1834 = vmul.f32 %v1809, %v1833
        %v1835 = vmin.f32 %v1834, 1.0
        %v1836 = vmax.f32 %v1835, -1.0
        %v1837 = vmul.f32 %v1493, %v1493
        %v1838 = vmin.f32 16.0, %v1837
        %v1839 = vmul.f32 %v1838, 2.1237322e-06
        %v1840 = vadd.f32 %v1839, 0.00028619796
        %v1841 = vmul.f32 %v1838, %v1840
        %v1842 = vadd.f32 %v1841, 0.0036580483
        %v1843 = vmul.f32 %v1838, %v1842
        %v1844 = vadd.f32 %v1843, 0.05243302
        %v1845 = vmul.f32 %v1838, %v1844
        %v1846 = vadd.f32 %v1845, 0.18741608
        %v1847 = vmul.f32 %v1838, %v1846
        %v1848 = vadd.f32 %v1847, 1.1283791
        %v1849 = vmul.f32 %v1493, %v1848
        %v1850 = vmul.f32 %v1838, 3.8918573e-05
        %v1851 = vadd.f32 %v1850, 0.001143296
        %v1852 = vmul.f32 %v1838, %v1851
        %v1853 = vadd.f32 %v1852, 0.014752088
        %v1854 = vmul.f32 %v1838, %v1853
        %v1855 = vadd.f32 %v1854, 0.112945676
        %v1856 = vmul.f32 %v1838, %v1855
        %v1857 = vadd.f32 %v1856, 0.4994258
        %v1858 = vmul.f32 %v1838, %v1857
        %v1859 = vadd.f32 %v1858, 1.0
        %v1860 = vrcp.pop %v1859
        %v1861 = vmul.f32 %v1859, %v1860
        %v1862 = vsub.f32 1.0, %v1861
        %v1863 = vmul.f32 %v1860, %v1862
        %v1864 = vadd.f32 %v1860, %v1863
        %vm1865 = vweird.f32 %v1859
        %vm1866 = vweird.f32 %v1860
        %vm1867 = vmor %vm1865, %vm1866
        %v1868 = vsel %vm1867, %v1860, %v1864
        %v1869 = vand.u32 2147483647, %v1859
        %vm1870 = vcmp.eq.f32.partialorder %v1869, 8.507059e+37
        %v1871 = vand.u32 %v1859, 2147483648
        %v1872 = vor.u32 1.1754944e-38, %v1871
        %v1873 = vsel %vm1870, %v1872, %v1868
        %v1874 = vmul.f32 %v1849, %v1873
        %v1875 = vmin.f32 %v1874, 1.0
        %v1876 = vmax.f32 %v1875, -1.0
        %v1877 = vmul.f32 %v1494, %v1494
        %v1878 = vmin.f32 16.0, %v1877
        %v1879 = vmul.f32 %v1878, 2.1237322e-06
        %v1880 = vadd.f32 %v1879, 0.00028619796
        %v1881 = vmul.f32 %v1878, %v1880
        %v1882 = vadd.f32 %v1881, 0.0036580483
        %v1883 = vmul.f32 %v1878, %v1882
        %v1884 = vadd.f32 %v1883, 0.05243302
        %v1885 = vmul.f32 %v1878, %v1884
        %v1886 = vadd.f32 %v1885, 0.18741608
        %v1887 = vmul.f32 %v1878, %v1886
        %v1888 = vadd.f32 %v1887, 1.1283791
        %v1889 = vmul.f32 %v1494, %v1888
        %v1890 = vmul.f32 %v1878, 3.8918573e-05
        %v1891 = vadd.f32 %v1890, 0.001143296
        %v1892 = vmul.f32 %v1878, %v1891
        %v1893 = vadd.f32 %v1892, 0.014752088
        %v1894 = vmul.f32 %v1878, %v1893
        %v1895 = vadd.f32 %v1894, 0.112945676
        %v1896 = vmul.f32 %v1878, %v1895
        %v1897 = vadd.f32 %v1896, 0.4994258
        %v1898 = vmul.f32 %v1878, %v1897
        %v1899 = vadd.f32 %v1898, 1.0
        %v1900 = vrcp.pop %v1899
        %v1901 = vmul.f32 %v1899, %v1900
        %v1902 = vsub.f32 1.0, %v1901
        %v1903 = vmul.f32 %v1900, %v1902
        %v1904 = vadd.f32 %v1900, %v1903
        %vm1905 = vweird.f32 %v1899
        %vm1906 = vweird.f32 %v1900
        %vm1907 = vmor %vm1905, %vm1906
        %v1908 = vsel %vm1907, %v1900, %v1904
        %v1909 = vand.u32 2147483647, %v1899
        %vm1910 = vcmp.eq.f32.partialorder %v1909, 8.507059e+37
        %v1911 = vand.u32 %v1899, 2147483648
        %v1912 = vor.u32 1.1754944e-38, %v1911
        %v1913 = vsel %vm1910, %v1912, %v1908
        %v1914 = vmul.f32 %v1889, %v1913
        %v1915 = vmin.f32 %v1914, 1.0
        %v1916 = vmax.f32 %v1915, -1.0
        %v1917 = vmul.f32 %v1495, %v1495
        %v1918 = vmin.f32 16.0, %v1917
        %v1919 = vmul.f32 %v1918, 2.1237322e-06
        %v1920 = vadd.f32 %v1919, 0.00028619796
        %v1921 = vmul.f32 %v1918, %v1920
        %v1922 = vadd.f32 %v1921, 0.0036580483
        %v1923 = vmul.f32 %v1918, %v1922
        %v1924 = vadd.f32 %v1923, 0.05243302
        %v1925 = vmul.f32 %v1918, %v1924
        %v1926 = vadd.f32 %v1925, 0.18741608
        %v1927 = vmul.f32 %v1918, %v1926
        %v1928 = vadd.f32 %v1927, 1.1283791
        %v1929 = vmul.f32 %v1495, %v1928
        %v1930 = vmul.f32 %v1918, 3.8918573e-05
        %v1931 = vadd.f32 %v1930, 0.001143296
        %v1932 = vmul.f32 %v1918, %v1931
        %v1933 = vadd.f32 %v1932, 0.014752088
        %v1934 = vmul.f32 %v1918, %v1933
        %v1935 = vadd.f32 %v1934, 0.112945676
        %v1936 = vmul.f32 %v1918, %v1935
        %v1937 = vadd.f32 %v1936, 0.4994258
        %v1938 = vmul.f32 %v1918, %v1937
        %v1939 = vadd.f32 %v1938, 1.0
        %v1940 = vrcp.pop %v1939
        %v1941 = vmul.f32 %v1939, %v1940
        %v1942 = vsub.f32 1.0, %v1941
        %v1943 = vmul.f32 %v1940, %v1942
        %v1944 = vadd.f32 %v1940, %v1943
        %vm1945 = vweird.f32 %v1939
        %vm1946 = vweird.f32 %v1940
        %vm1947 = vmor %vm1945, %vm1946
        %v1948 = vsel %vm1947, %v1940, %v1944
        %v1949 = vand.u32 2147483647, %v1939
        %vm1950 = vcmp.eq.f32.partialorder %v1949, 8.507059e+37
        %v1951 = vand.u32 %v1939, 2147483648
        %v1952 = vor.u32 1.1754944e-38, %v1951
        %v1953 = vsel %vm1950, %v1952, %v1948
        %v1954 = vmul.f32 %v1929, %v1953
        %v1955 = vmin.f32 %v1954, 1.0
        %v1956 = vmax.f32 %v1955, -1.0
        %v1957 = vmul.f32 %v1496, %v1496
        %v1958 = vmin.f32 16.0, %v1957
        %v1959 = vmul.f32 %v1958, 2.1237322e-06
        %v1960 = vadd.f32 %v1959, 0.00028619796
        %v1961 = vmul.f32 %v1958, %v1960
        %v1962 = vadd.f32 %v1961, 0.0036580483
        %v1963 = vmul.f32 %v1958, %v1962
        %v1964 = vadd.f32 %v1963, 0.05243302
        %v1965 = vmul.f32 %v1958, %v1964
        %v1966 = vadd.f32 %v1965, 0.18741608
        %v1967 = vmul.f32 %v1958, %v1966
        %v1968 = vadd.f32 %v1967, 1.1283791
        %v1969 = vmul.f32 %v1496, %v1968
        %v1970 = vmul.f32 %v1958, 3.8918573e-05
        %v1971 = vadd.f32 %v1970, 0.001143296
        %v1972 = vmul.f32 %v1958, %v1971
        %v1973 = vadd.f32 %v1972, 0.014752088
        %v1974 = vmul.f32 %v1958, %v1973
        %v1975 = vadd.f32 %v1974, 0.112945676
        %v1976 = vmul.f32 %v1958, %v1975
        %v1977 = vadd.f32 %v1976, 0.4994258
        %v1978 = vmul.f32 %v1958, %v1977
        %v1979 = vadd.f32 %v1978, 1.0
        %v1980 = vrcp.pop %v1979
        %v1981 = vmul.f32 %v1979, %v1980
        %v1982 = vsub.f32 1.0, %v1981
        %v1983 = vmul.f32 %v1980, %v1982
        %v1984 = vadd.f32 %v1980, %v1983
        %vm1985 = vweird.f32 %v1979
        %vm1986 = vweird.f32 %v1980
        %vm1987 = vmor %vm1985, %vm1986
        %v1988 = vsel %vm1987, %v1980, %v1984
        %v1989 = vand.u32 2147483647, %v1979
        %vm1990 = vcmp.eq.f32.partialorder %v1989, 8.507059e+37
        %v1991 = vand.u32 %v1979, 2147483648
        %v1992 = vor.u32 1.1754944e-38, %v1991
        %v1993 = vsel %vm1990, %v1992, %v1988
        %v1994 = vmul.f32 %v1969, %v1993
        %v1995 = vmin.f32 %v1994, 1.0
        %v1996 = vmax.f32 %v1995, -1.0
        %v1997 = vmul.f32 %v1497, %v1497
        %v1998 = vmin.f32 16.0, %v1997
        %v1999 = vmul.f32 %v1998, 2.1237322e-06
        %v2000 = vadd.f32 %v1999, 0.00028619796
        %v2001 = vmul.f32 %v1998, %v2000
        %v2002 = vadd.f32 %v2001, 0.0036580483
        %v2003 = vmul.f32 %v1998, %v2002
        %v2004 = vadd.f32 %v2003, 0.05243302
        %v2005 = vmul.f32 %v1998, %v2004
        %v2006 = vadd.f32 %v2005, 0.18741608
        %v2007 = vmul.f32 %v1998, %v2006
        %v2008 = vadd.f32 %v2007, 1.1283791
        %v2009 = vmul.f32 %v1497, %v2008
        %v2010 = vmul.f32 %v1998, 3.8918573e-05
        %v2011 = vadd.f32 %v2010, 0.001143296
        %v2012 = vmul.f32 %v1998, %v2011
        %v2013 = vadd.f32 %v2012, 0.014752088
        %v2014 = vmul.f32 %v1998, %v2013
        %v2015 = vadd.f32 %v2014, 0.112945676
        %v2016 = vmul.f32 %v1998, %v2015
        %v2017 = vadd.f32 %v2016, 0.4994258
        %v2018 = vmul.f32 %v1998, %v2017
        %v2019 = vadd.f32 %v2018, 1.0
        %v2020 = vrcp.pop %v2019
        %v2021 = vmul.f32 %v2019, %v2020
        %v2022 = vsub.f32 1.0, %v2021
        %v2023 = vmul.f32 %v2020, %v2022
        %v2024 = vadd.f32 %v2020, %v2023
        %vm2025 = vweird.f32 %v2019
        %vm2026 = vweird.f32 %v2020
        %vm2027 = vmor %vm2025, %vm2026
        %v2028 = vsel %vm2027, %v2020, %v2024
        %v2029 = vand.u32 2147483647, %v2019
        %vm2030 = vcmp.eq.f32.partialorder %v2029, 8.507059e+37
        %v2031 = vand.u32 %v2019, 2147483648
        %v2032 = vor.u32 1.1754944e-38, %v2031
        %v2033 = vsel %vm2030, %v2032, %v2028
        %v2034 = vmul.f32 %v2009, %v2033
        %v2035 = vmin.f32 %v2034, 1.0
        %v2036 = vmax.f32 %v2035, -1.0
        %v2037 = vmul.f32 %v1498, %v1498
        %v2038 = vmin.f32 16.0, %v2037
        %v2039 = vmul.f32 %v2038, 2.1237322e-06
        %v2040 = vadd.f32 %v2039, 0.00028619796
        %v2041 = vmul.f32 %v2038, %v2040
        %v2042 = vadd.f32 %v2041, 0.0036580483
        %v2043 = vmul.f32 %v2038, %v2042
        %v2044 = vadd.f32 %v2043, 0.05243302
        %v2045 = vmul.f32 %v2038, %v2044
        %v2046 = vadd.f32 %v2045, 0.18741608
        %v2047 = vmul.f32 %v2038, %v2046
        %v2048 = vadd.f32 %v2047, 1.1283791
        %v2049 = vmul.f32 %v1498, %v2048
        %v2050 = vmul.f32 %v2038, 3.8918573e-05
        %v2051 = vadd.f32 %v2050, 0.001143296
        %v2052 = vmul.f32 %v2038, %v2051
        %v2053 = vadd.f32 %v2052, 0.014752088
        %v2054 = vmul.f32 %v2038, %v2053
        %v2055 = vadd.f32 %v2054, 0.112945676
        %v2056 = vmul.f32 %v2038, %v2055
        %v2057 = vadd.f32 %v2056, 0.4994258
        %v2058 = vmul.f32 %v2038, %v2057
        %v2059 = vadd.f32 %v2058, 1.0
        %v2060 = vrcp.pop %v2059
        %v2061 = vmul.f32 %v2059, %v2060
        %v2062 = vsub.f32 1.0, %v2061
        %v2063 = vmul.f32 %v2060, %v2062
        %v2064 = vadd.f32 %v2060, %v2063
        %vm2065 = vweird.f32 %v2059
        %vm2066 = vweird.f32 %v2060
        %vm2067 = vmor %vm2065, %vm2066
        %v2068 = vsel %vm2067, %v2060, %v2064
        %v2069 = vand.u32 2147483647, %v2059
        %vm2070 = vcmp.eq.f32.partialorder %v2069, 8.507059e+37
        %v2071 = vand.u32 %v2059, 2147483648
        %v2072 = vor.u32 1.1754944e-38, %v2071
        %v2073 = vsel %vm2070, %v2072, %v2068
        %v2074 = vmul.f32 %v2049, %v2073
        %v2075 = vmin.f32 %v2074, 1.0
        %v2076 = vmax.f32 %v2075, -1.0
        %v2077 = vmul.f32 %v1499, %v1499
        %v2078 = vmin.f32 16.0, %v2077
        %v2079 = vmul.f32 %v2078, 2.1237322e-06
        %v2080 = vadd.f32 %v2079, 0.00028619796
        %v2081 = vmul.f32 %v2078, %v2080
        %v2082 = vadd.f32 %v2081, 0.0036580483
        %v2083 = vmul.f32 %v2078, %v2082
        %v2084 = vadd.f32 %v2083, 0.05243302
        %v2085 = vmul.f32 %v2078, %v2084
        %v2086 = vadd.f32 %v2085, 0.18741608
        %v2087 = vmul.f32 %v2078, %v2086
        %v2088 = vadd.f32 %v2087, 1.1283791
        %v2089 = vmul.f32 %v1499, %v2088
        %v2090 = vmul.f32 %v2078, 3.8918573e-05
        %v2091 = vadd.f32 %v2090, 0.001143296
        %v2092 = vmul.f32 %v2078, %v2091
        %v2093 = vadd.f32 %v2092, 0.014752088
        %v2094 = vmul.f32 %v2078, %v2093
        %v2095 = vadd.f32 %v2094, 0.112945676
        %v2096 = vmul.f32 %v2078, %v2095
        %v2097 = vadd.f32 %v2096, 0.4994258
        %v2098 = vmul.f32 %v2078, %v2097
        %v2099 = vadd.f32 %v2098, 1.0
        %v2100 = vrcp.pop %v2099
        %v2101 = vmul.f32 %v2099, %v2100
        %v2102 = vsub.f32 1.0, %v2101
        %v2103 = vmul.f32 %v2100, %v2102
        %v2104 = vadd.f32 %v2100, %v2103
        %vm2105 = vweird.f32 %v2099
        %vm2106 = vweird.f32 %v2100
        %vm2107 = vmor %vm2105, %vm2106
        %v2108 = vsel %vm2107, %v2100, %v2104
        %v2109 = vand.u32 2147483647, %v2099
        %vm2110 = vcmp.eq.f32.partialorder %v2109, 8.507059e+37
        %v2111 = vand.u32 %v2099, 2147483648
        %v2112 = vor.u32 1.1754944e-38, %v2111
        %v2113 = vsel %vm2110, %v2112, %v2108
        %v2114 = vmul.f32 %v2089, %v2113
        %v2115 = vmin.f32 %v2114, 1.0
        %v2116 = vmax.f32 %v2115, -1.0
        %v2117 = vmul.f32 %v1500, %v1500
        %v2118 = vmin.f32 16.0, %v2117
        %v2119 = vmul.f32 %v2118, 2.1237322e-06
        %v2120 = vadd.f32 %v2119, 0.00028619796
        %v2121 = vmul.f32 %v2118, %v2120
        %v2122 = vadd.f32 %v2121, 0.0036580483
        %v2123 = vmul.f32 %v2118, %v2122
        %v2124 = vadd.f32 %v2123, 0.05243302
        %v2125 = vmul.f32 %v2118, %v2124
        %v2126 = vadd.f32 %v2125, 0.18741608
        %v2127 = vmul.f32 %v2118, %v2126
        %v2128 = vadd.f32 %v2127, 1.1283791
        %v2129 = vmul.f32 %v1500, %v2128
        %v2130 = vmul.f32 %v2118, 3.8918573e-05
        %v2131 = vadd.f32 %v2130, 0.001143296
        %v2132 = vmul.f32 %v2118, %v2131
        %v2133 = vadd.f32 %v2132, 0.014752088
        %v2134 = vmul.f32 %v2118, %v2133
        %v2135 = vadd.f32 %v2134, 0.112945676
        %v2136 = vmul.f32 %v2118, %v2135
        %v2137 = vadd.f32 %v2136, 0.4994258
        %v2138 = vmul.f32 %v2118, %v2137
        %v2139 = vadd.f32 %v2138, 1.0
        %v2140 = vrcp.pop %v2139
        %v2141 = vmul.f32 %v2139, %v2140
        %v2142 = vsub.f32 1.0, %v2141
        %v2143 = vmul.f32 %v2140, %v2142
        %v2144 = vadd.f32 %v2140, %v2143
        %vm2145 = vweird.f32 %v2139
        %vm2146 = vweird.f32 %v2140
        %vm2147 = vmor %vm2145, %vm2146
        %v2148 = vsel %vm2147, %v2140, %v2144
        %v2149 = vand.u32 2147483647, %v2139
        %vm2150 = vcmp.eq.f32.partialorder %v2149, 8.507059e+37
        %v2151 = vand.u32 %v2139, 2147483648
        %v2152 = vor.u32 1.1754944e-38, %v2151
        %v2153 = vsel %vm2150, %v2152, %v2148
        %v2154 = vmul.f32 %v2129, %v2153
        %v2155 = vmin.f32 %v2154, 1.0
        %v2156 = vmax.f32 %v2155, -1.0
        %v2157 = vmul.f32 %v1501, %v1501
        %v2158 = vmin.f32 16.0, %v2157
        %v2159 = vmul.f32 %v2158, 2.1237322e-06
        %v2160 = vadd.f32 %v2159, 0.00028619796
        %v2161 = vmul.f32 %v2158, %v2160
        %v2162 = vadd.f32 %v2161, 0.0036580483
        %v2163 = vmul.f32 %v2158, %v2162
        %v2164 = vadd.f32 %v2163, 0.05243302
        %v2165 = vmul.f32 %v2158, %v2164
        %v2166 = vadd.f32 %v2165, 0.18741608
        %v2167 = vmul.f32 %v2158, %v2166
        %v2168 = vadd.f32 %v2167, 1.1283791
        %v2169 = vmul.f32 %v1501, %v2168
        %v2170 = vmul.f32 %v2158, 3.8918573e-05
        %v2171 = vadd.f32 %v2170, 0.001143296
        %v2172 = vmul.f32 %v2158, %v2171
        %v2173 = vadd.f32 %v2172, 0.014752088
        %v2174 = vmul.f32 %v2158, %v2173
        %v2175 = vadd.f32 %v2174, 0.112945676
        %v2176 = vmul.f32 %v2158, %v2175
        %v2177 = vadd.f32 %v2176, 0.4994258
        %v2178 = vmul.f32 %v2158, %v2177
        %v2179 = vadd.f32 %v2178, 1.0
        %v2180 = vrcp.pop %v2179
        %v2181 = vmul.f32 %v2179, %v2180
        %v2182 = vsub.f32 1.0, %v2181
        %v2183 = vmul.f32 %v2180, %v2182
        %v2184 = vadd.f32 %v2180, %v2183
        %vm2185 = vweird.f32 %v2179
        %vm2186 = vweird.f32 %v2180
        %vm2187 = vmor %vm2185, %vm2186
        %v2188 = vsel %vm2187, %v2180, %v2184
        %v2189 = vand.u32 2147483647, %v2179
        %vm2190 = vcmp.eq.f32.partialorder %v2189, 8.507059e+37
        %v2191 = vand.u32 %v2179, 2147483648
        %v2192 = vor.u32 1.1754944e-38, %v2191
        %v2193 = vsel %vm2190, %v2192, %v2188
        %v2194 = vmul.f32 %v2169, %v2193
        %v2195 = vmin.f32 %v2194, 1.0
        %v2196 = vmax.f32 %v2195, -1.0
        %v2197 = vmul.f32 %v1502, %v1502
        %v2198 = vmin.f32 16.0, %v2197
        %v2199 = vmul.f32 %v2198, 2.1237322e-06
        %v2200 = vadd.f32 %v2199, 0.00028619796
        %v2201 = vmul.f32 %v2198, %v2200
        %v2202 = vadd.f32 %v2201, 0.0036580483
        %v2203 = vmul.f32 %v2198, %v2202
        %v2204 = vadd.f32 %v2203, 0.05243302
        %v2205 = vmul.f32 %v2198, %v2204
        %v2206 = vadd.f32 %v2205, 0.18741608
        %v2207 = vmul.f32 %v2198, %v2206
        %v2208 = vadd.f32 %v2207, 1.1283791
        %v2209 = vmul.f32 %v1502, %v2208
        %v2210 = vmul.f32 %v2198, 3.8918573e-05
        %v2211 = vadd.f32 %v2210, 0.001143296
        %v2212 = vmul.f32 %v2198, %v2211
        %v2213 = vadd.f32 %v2212, 0.014752088
        %v2214 = vmul.f32 %v2198, %v2213
        %v2215 = vadd.f32 %v2214, 0.112945676
        %v2216 = vmul.f32 %v2198, %v2215
        %v2217 = vadd.f32 %v2216, 0.4994258
        %v2218 = vmul.f32 %v2198, %v2217
        %v2219 = vadd.f32 %v2218, 1.0
        %v2220 = vrcp.pop %v2219
        %v2221 = vmul.f32 %v2219, %v2220
        %v2222 = vsub.f32 1.0, %v2221
        %v2223 = vmul.f32 %v2220, %v2222
        %v2224 = vadd.f32 %v2220, %v2223
        %vm2225 = vweird.f32 %v2219
        %vm2226 = vweird.f32 %v2220
        %vm2227 = vmor %vm2225, %vm2226
        %v2228 = vsel %vm2227, %v2220, %v2224
        %v2229 = vand.u32 2147483647, %v2219
        %vm2230 = vcmp.eq.f32.partialorder %v2229, 8.507059e+37
        %v2231 = vand.u32 %v2219, 2147483648
        %v2232 = vor.u32 1.1754944e-38, %v2231
        %v2233 = vsel %vm2230, %v2232, %v2228
        %v2234 = vmul.f32 %v2209, %v2233
        %v2235 = vmin.f32 %v2234, 1.0
        %v2236 = vmax.f32 %v2235, -1.0
        %v2237 = vmul.f32 %v1503, %v1503
        %v2238 = vmin.f32 16.0, %v2237
        %v2239 = vmul.f32 %v2238, 2.1237322e-06
        %v2240 = vadd.f32 %v2239, 0.00028619796
        %v2241 = vmul.f32 %v2238, %v2240
        %v2242 = vadd.f32 %v2241, 0.0036580483
        %v2243 = vmul.f32 %v2238, %v2242
        %v2244 = vadd.f32 %v2243, 0.05243302
        %v2245 = vmul.f32 %v2238, %v2244
        %v2246 = vadd.f32 %v2245, 0.18741608
        %v2247 = vmul.f32 %v2238, %v2246
        %v2248 = vadd.f32 %v2247, 1.1283791
        %v2249 = vmul.f32 %v1503, %v2248
        %v2250 = vmul.f32 %v2238, 3.8918573e-05
        %v2251 = vadd.f32 %v2250, 0.001143296
        %v2252 = vmul.f32 %v2238, %v2251
        %v2253 = vadd.f32 %v2252, 0.014752088
        %v2254 = vmul.f32 %v2238, %v2253
        %v2255 = vadd.f32 %v2254, 0.112945676
        %v2256 = vmul.f32 %v2238, %v2255
        %v2257 = vadd.f32 %v2256, 0.4994258
        %v2258 = vmul.f32 %v2238, %v2257
        %v2259 = vadd.f32 %v2258, 1.0
        %v2260 = vrcp.pop %v2259
        %v2261 = vmul.f32 %v2259, %v2260
        %v2262 = vsub.f32 1.0, %v2261
        %v2263 = vmul.f32 %v2260, %v2262
        %v2264 = vadd.f32 %v2260, %v2263
        %vm2265 = vweird.f32 %v2259
        %vm2266 = vweird.f32 %v2260
        %vm2267 = vmor %vm2265, %vm2266
        %v2268 = vsel %vm2267, %v2260, %v2264
        %v2269 = vand.u32 2147483647, %v2259
        %vm2270 = vcmp.eq.f32.partialorder %v2269, 8.507059e+37
        %v2271 = vand.u32 %v2259, 2147483648
        %v2272 = vor.u32 1.1754944e-38, %v2271
        %v2273 = vsel %vm2270, %v2272, %v2268
        %v2274 = vmul.f32 %v2249, %v2273
        %v2275 = vmin.f32 %v2274, 1.0
        %v2276 = vmax.f32 %v2275, -1.0
        %v2277 = vmul.f32 %v1504, %v1504
        %v2278 = vmin.f32 16.0, %v2277
        %v2279 = vmul.f32 %v2278, 2.1237322e-06
        %v2280 = vadd.f32 %v2279, 0.00028619796
        %v2281 = vmul.f32 %v2278, %v2280
        %v2282 = vadd.f32 %v2281, 0.0036580483
        %v2283 = vmul.f32 %v2278, %v2282
        %v2284 = vadd.f32 %v2283, 0.05243302
        %v2285 = vmul.f32 %v2278, %v2284
        %v2286 = vadd.f32 %v2285, 0.18741608
        %v2287 = vmul.f32 %v2278, %v2286
        %v2288 = vadd.f32 %v2287, 1.1283791
        %v2289 = vmul.f32 %v1504, %v2288
        %v2290 = vmul.f32 %v2278, 3.8918573e-05
        %v2291 = vadd.f32 %v2290, 0.001143296
        %v2292 = vmul.f32 %v2278, %v2291
        %v2293 = vadd.f32 %v2292, 0.014752088
        %v2294 = vmul.f32 %v2278, %v2293
        %v2295 = vadd.f32 %v2294, 0.112945676
        %v2296 = vmul.f32 %v2278, %v2295
        %v2297 = vadd.f32 %v2296, 0.4994258
        %v2298 = vmul.f32 %v2278, %v2297
        %v2299 = vadd.f32 %v2298, 1.0
        %v2300 = vrcp.pop %v2299
        %v2301 = vmul.f32 %v2299, %v2300
        %v2302 = vsub.f32 1.0, %v2301
        %v2303 = vmul.f32 %v2300, %v2302
        %v2304 = vadd.f32 %v2300, %v2303
        %vm2305 = vweird.f32 %v2299
        %vm2306 = vweird.f32 %v2300
        %vm2307 = vmor %vm2305, %vm2306
        %v2308 = vsel %vm2307, %v2300, %v2304
        %v2309 = vand.u32 2147483647, %v2299
        %vm2310 = vcmp.eq.f32.partialorder %v2309, 8.507059e+37
        %v2311 = vand.u32 %v2299, 2147483648
        %v2312 = vor.u32 1.1754944e-38, %v2311
        %v2313 = vsel %vm2310, %v2312, %v2308
        %v2314 = vmul.f32 %v2289, %v2313
        %v2315 = vmin.f32 %v2314, 1.0
        %v2316 = vmax.f32 %v2315, -1.0
        %v2317 = vmul.f32 %v1505, %v1505
        %v2318 = vmin.f32 16.0, %v2317
        %v2319 = vmul.f32 %v2318, 2.1237322e-06
        %v2320 = vadd.f32 %v2319, 0.00028619796
        %v2321 = vmul.f32 %v2318, %v2320
        %v2322 = vadd.f32 %v2321, 0.0036580483
        %v2323 = vmul.f32 %v2318, %v2322
        %v2324 = vadd.f32 %v2323, 0.05243302
        %v2325 = vmul.f32 %v2318, %v2324
        %v2326 = vadd.f32 %v2325, 0.18741608
        %v2327 = vmul.f32 %v2318, %v2326
        %v2328 = vadd.f32 %v2327, 1.1283791
        %v2329 = vmul.f32 %v1505, %v2328
        %v2330 = vmul.f32 %v2318, 3.8918573e-05
        %v2331 = vadd.f32 %v2330, 0.001143296
        %v2332 = vmul.f32 %v2318, %v2331
        %v2333 = vadd.f32 %v2332, 0.014752088
        %v2334 = vmul.f32 %v2318, %v2333
        %v2335 = vadd.f32 %v2334, 0.112945676
        %v2336 = vmul.f32 %v2318, %v2335
        %v2337 = vadd.f32 %v2336, 0.4994258
        %v2338 = vmul.f32 %v2318, %v2337
        %v2339 = vadd.f32 %v2338, 1.0
        %v2340 = vrcp.pop %v2339
        %v2341 = vmul.f32 %v2339, %v2340
        %v2342 = vsub.f32 1.0, %v2341
        %v2343 = vmul.f32 %v2340, %v2342
        %v2344 = vadd.f32 %v2340, %v2343
        %vm2345 = vweird.f32 %v2339
        %vm2346 = vweird.f32 %v2340
        %vm2347 = vmor %vm2345, %vm2346
        %v2348 = vsel %vm2347, %v2340, %v2344
        %v2349 = vand.u32 2147483647, %v2339
        %vm2350 = vcmp.eq.f32.partialorder %v2349, 8.507059e+37
        %v2351 = vand.u32 %v2339, 2147483648
        %v2352 = vor.u32 1.1754944e-38, %v2351
        %v2353 = vsel %vm2350, %v2352, %v2348
        %v2354 = vmul.f32 %v2329, %v2353
        %v2355 = vmin.f32 %v2354, 1.0
        %v2356 = vmax.f32 %v2355, -1.0
        %v2357 = vmul.f32 %v1506, %v1506
        %v2358 = vmin.f32 16.0, %v2357
        %v2359 = vmul.f32 %v2358, 2.1237322e-06
        %v2360 = vadd.f32 %v2359, 0.00028619796
        %v2361 = vmul.f32 %v2358, %v2360
        %v2362 = vadd.f32 %v2361, 0.0036580483
        %v2363 = vmul.f32 %v2358, %v2362
        %v2364 = vadd.f32 %v2363, 0.05243302
        %v2365 = vmul.f32 %v2358, %v2364
        %v2366 = vadd.f32 %v2365, 0.18741608
        %v2367 = vmul.f32 %v2358, %v2366
        %v2368 = vadd.f32 %v2367, 1.1283791
        %v2369 = vmul.f32 %v1506, %v2368
        %v2370 = vmul.f32 %v2358, 3.8918573e-05
        %v2371 = vadd.f32 %v2370, 0.001143296
        %v2372 = vmul.f32 %v2358, %v2371
        %v2373 = vadd.f32 %v2372, 0.014752088
        %v2374 = vmul.f32 %v2358, %v2373
        %v2375 = vadd.f32 %v2374, 0.112945676
        %v2376 = vmul.f32 %v2358, %v2375
        %v2377 = vadd.f32 %v2376, 0.4994258
        %v2378 = vmul.f32 %v2358, %v2377
        %v2379 = vadd.f32 %v2378, 1.0
        %v2380 = vrcp.pop %v2379
        %v2381 = vmul.f32 %v2379, %v2380
        %v2382 = vsub.f32 1.0, %v2381
        %v2383 = vmul.f32 %v2380, %v2382
        %v2384 = vadd.f32 %v2380, %v2383
        %vm2385 = vweird.f32 %v2379
        %vm2386 = vweird.f32 %v2380
        %vm2387 = vmor %vm2385, %vm2386
        %v2388 = vsel %vm2387, %v2380, %v2384
        %v2389 = vand.u32 2147483647, %v2379
        %vm2390 = vcmp.eq.f32.partialorder %v2389, 8.507059e+37
        %v2391 = vand.u32 %v2379, 2147483648
        %v2392 = vor.u32 1.1754944e-38, %v2391
        %v2393 = vsel %vm2390, %v2392, %v2388
        %v2394 = vmul.f32 %v2369, %v2393
        %v2395 = vmin.f32 %v2394, 1.0
        %v2396 = vmax.f32 %v2395, -1.0
        %v2397 = vmul.f32 %v1507, %v1507
        %v2398 = vmin.f32 16.0, %v2397
        %v2399 = vmul.f32 %v2398, 2.1237322e-06
        %v2400 = vadd.f32 %v2399, 0.00028619796
        %v2401 = vmul.f32 %v2398, %v2400
        %v2402 = vadd.f32 %v2401, 0.0036580483
        %v2403 = vmul.f32 %v2398, %v2402
        %v2404 = vadd.f32 %v2403, 0.05243302
        %v2405 = vmul.f32 %v2398, %v2404
        %v2406 = vadd.f32 %v2405, 0.18741608
        %v2407 = vmul.f32 %v2398, %v2406
        %v2408 = vadd.f32 %v2407, 1.1283791
        %v2409 = vmul.f32 %v1507, %v2408
        %v2410 = vmul.f32 %v2398, 3.8918573e-05
        %v2411 = vadd.f32 %v2410, 0.001143296
        %v2412 = vmul.f32 %v2398, %v2411
        %v2413 = vadd.f32 %v2412, 0.014752088
        %v2414 = vmul.f32 %v2398, %v2413
        %v2415 = vadd.f32 %v2414, 0.112945676
        %v2416 = vmul.f32 %v2398, %v2415
        %v2417 = vadd.f32 %v2416, 0.4994258
        %v2418 = vmul.f32 %v2398, %v2417
        %v2419 = vadd.f32 %v2418, 1.0
        %v2420 = vrcp.pop %v2419
        %v2421 = vmul.f32 %v2419, %v2420
        %v2422 = vsub.f32 1.0, %v2421
        %v2423 = vmul.f32 %v2420, %v2422
        %v2424 = vadd.f32 %v2420, %v2423
        %vm2425 = vweird.f32 %v2419
        %vm2426 = vweird.f32 %v2420
        %vm2427 = vmor %vm2425, %vm2426
        %v2428 = vsel %vm2427, %v2420, %v2424
        %v2429 = vand.u32 2147483647, %v2419
        %vm2430 = vcmp.eq.f32.partialorder %v2429, 8.507059e+37
        %v2431 = vand.u32 %v2419, 2147483648
        %v2432 = vor.u32 1.1754944e-38, %v2431
        %v2433 = vsel %vm2430, %v2432, %v2428
        %v2434 = vmul.f32 %v2409, %v2433
        %v2435 = vmin.f32 %v2434, 1.0
        %v2436 = vmax.f32 %v2435, -1.0
        %v2437 = vmul.f32 %v1508, %v1508
        %v2438 = vmin.f32 16.0, %v2437
        %v2439 = vmul.f32 %v2438, 2.1237322e-06
        %v2440 = vadd.f32 %v2439, 0.00028619796
        %v2441 = vmul.f32 %v2438, %v2440
        %v2442 = vadd.f32 %v2441, 0.0036580483
        %v2443 = vmul.f32 %v2438, %v2442
        %v2444 = vadd.f32 %v2443, 0.05243302
        %v2445 = vmul.f32 %v2438, %v2444
        %v2446 = vadd.f32 %v2445, 0.18741608
        %v2447 = vmul.f32 %v2438, %v2446
        %v2448 = vadd.f32 %v2447, 1.1283791
        %v2449 = vmul.f32 %v1508, %v2448
        %v2450 = vmul.f32 %v2438, 3.8918573e-05
        %v2451 = vadd.f32 %v2450, 0.001143296
        %v2452 = vmul.f32 %v2438, %v2451
        %v2453 = vadd.f32 %v2452, 0.014752088
        %v2454 = vmul.f32 %v2438, %v2453
        %v2455 = vadd.f32 %v2454, 0.112945676
        %v2456 = vmul.f32 %v2438, %v2455
        %v2457 = vadd.f32 %v2456, 0.4994258
        %v2458 = vmul.f32 %v2438, %v2457
        %v2459 = vadd.f32 %v2458, 1.0
        %v2460 = vrcp.pop %v2459
        %v2461 = vmul.f32 %v2459, %v2460
        %v2462 = vsub.f32 1.0, %v2461
        %v2463 = vmul.f32 %v2460, %v2462
        %v2464 = vadd.f32 %v2460, %v2463
        %vm2465 = vweird.f32 %v2459
        %vm2466 = vweird.f32 %v2460
        %vm2467 = vmor %vm2465, %vm2466
        %v2468 = vsel %vm2467, %v2460, %v2464
        %v2469 = vand.u32 2147483647, %v2459
        %vm2470 = vcmp.eq.f32.partialorder %v2469, 8.507059e+37
        %v2471 = vand.u32 %v2459, 2147483648
        %v2472 = vor.u32 1.1754944e-38, %v2471
        %v2473 = vsel %vm2470, %v2472, %v2468
        %v2474 = vmul.f32 %v2449, %v2473
        %v2475 = vmin.f32 %v2474, 1.0
        %v2476 = vmax.f32 %v2475, -1.0
        %v2477 = vmul.f32 %v1509, %v1509
        %v2478 = vmin.f32 16.0, %v2477
        %v2479 = vmul.f32 %v2478, 2.1237322e-06
        %v2480 = vadd.f32 %v2479, 0.00028619796
        %v2481 = vmul.f32 %v2478, %v2480
        %v2482 = vadd.f32 %v2481, 0.0036580483
        %v2483 = vmul.f32 %v2478, %v2482
        %v2484 = vadd.f32 %v2483, 0.05243302
        %v2485 = vmul.f32 %v2478, %v2484
        %v2486 = vadd.f32 %v2485, 0.18741608
        %v2487 = vmul.f32 %v2478, %v2486
        %v2488 = vadd.f32 %v2487, 1.1283791
        %v2489 = vmul.f32 %v1509, %v2488
        %v2490 = vmul.f32 %v2478, 3.8918573e-05
        %v2491 = vadd.f32 %v2490, 0.001143296
        %v2492 = vmul.f32 %v2478, %v2491
        %v2493 = vadd.f32 %v2492, 0.014752088
        %v2494 = vmul.f32 %v2478, %v2493
        %v2495 = vadd.f32 %v2494, 0.112945676
        %v2496 = vmul.f32 %v2478, %v2495
        %v2497 = vadd.f32 %v2496, 0.4994258
        %v2498 = vmul.f32 %v2478, %v2497
        %v2499 = vadd.f32 %v2498, 1.0
        %v2500 = vrcp.pop %v2499
        %v2501 = vmul.f32 %v2499, %v2500
        %v2502 = vsub.f32 1.0, %v2501
        %v2503 = vmul.f32 %v2500, %v2502
        %v2504 = vadd.f32 %v2500, %v2503
        %vm2505 = vweird.f32 %v2499
        %vm2506 = vweird.f32 %v2500
        %vm2507 = vmor %vm2505, %vm2506
        %v2508 = vsel %vm2507, %v2500, %v2504
        %v2509 = vand.u32 2147483647, %v2499
        %vm2510 = vcmp.eq.f32.partialorder %v2509, 8.507059e+37
        %v2511 = vand.u32 %v2499, 2147483648
        %v2512 = vor.u32 1.1754944e-38, %v2511
        %v2513 = vsel %vm2510, %v2512, %v2508
        %v2514 = vmul.f32 %v2489, %v2513
        %v2515 = vmin.f32 %v2514, 1.0
        %v2516 = vmax.f32 %v2515, -1.0
        %v2517 = vmul.f32 %v1510, %v1510
        %v2518 = vmin.f32 16.0, %v2517
        %v2519 = vmul.f32 %v2518, 2.1237322e-06
        %v2520 = vadd.f32 %v2519, 0.00028619796
        %v2521 = vmul.f32 %v2518, %v2520
        %v2522 = vadd.f32 %v2521, 0.0036580483
        %v2523 = vmul.f32 %v2518, %v2522
        %v2524 = vadd.f32 %v2523, 0.05243302
        %v2525 = vmul.f32 %v2518, %v2524
        %v2526 = vadd.f32 %v2525, 0.18741608
        %v2527 = vmul.f32 %v2518, %v2526
        %v2528 = vadd.f32 %v2527, 1.1283791
        %v2529 = vmul.f32 %v1510, %v2528
        %v2530 = vmul.f32 %v2518, 3.8918573e-05
        %v2531 = vadd.f32 %v2530, 0.001143296
        %v2532 = vmul.f32 %v2518, %v2531
        %v2533 = vadd.f32 %v2532, 0.014752088
        %v2534 = vmul.f32 %v2518, %v2533
        %v2535 = vadd.f32 %v2534, 0.112945676
        %v2536 = vmul.f32 %v2518, %v2535
        %v2537 = vadd.f32 %v2536, 0.4994258
        %v2538 = vmul.f32 %v2518, %v2537
        %v2539 = vadd.f32 %v2538, 1.0
        %v2540 = vrcp.pop %v2539
        %v2541 = vmul.f32 %v2539, %v2540
        %v2542 = vsub.f32 1.0, %v2541
        %v2543 = vmul.f32 %v2540, %v2542
        %v2544 = vadd.f32 %v2540, %v2543
        %vm2545 = vweird.f32 %v2539
        %vm2546 = vweird.f32 %v2540
        %vm2547 = vmor %vm2545, %vm2546
        %v2548 = vsel %vm2547, %v2540, %v2544
        %v2549 = vand.u32 2147483647, %v2539
        %vm2550 = vcmp.eq.f32.partialorder %v2549, 8.507059e+37
        %v2551 = vand.u32 %v2539, 2147483648
        %v2552 = vor.u32 1.1754944e-38, %v2551
        %v2553 = vsel %vm2550, %v2552, %v2548
        %v2554 = vmul.f32 %v2529, %v2553
        %v2555 = vmin.f32 %v2554, 1.0
        %v2556 = vmax.f32 %v2555, -1.0
        %v2557 = vmul.f32 %v1511, %v1511
        %v2558 = vmin.f32 16.0, %v2557
        %v2559 = vmul.f32 %v2558, 2.1237322e-06
        %v2560 = vadd.f32 %v2559, 0.00028619796
        %v2561 = vmul.f32 %v2558, %v2560
        %v2562 = vadd.f32 %v2561, 0.0036580483
        %v2563 = vmul.f32 %v2558, %v2562
        %v2564 = vadd.f32 %v2563, 0.05243302
        %v2565 = vmul.f32 %v2558, %v2564
        %v2566 = vadd.f32 %v2565, 0.18741608
        %v2567 = vmul.f32 %v2558, %v2566
        %v2568 = vadd.f32 %v2567, 1.1283791
        %v2569 = vmul.f32 %v1511, %v2568
        %v2570 = vmul.f32 %v2558, 3.8918573e-05
        %v2571 = vadd.f32 %v2570, 0.001143296
        %v2572 = vmul.f32 %v2558, %v2571
        %v2573 = vadd.f32 %v2572, 0.014752088
        %v2574 = vmul.f32 %v2558, %v2573
        %v2575 = vadd.f32 %v2574, 0.112945676
        %v2576 = vmul.f32 %v2558, %v2575
        %v2577 = vadd.f32 %v2576, 0.4994258
        %v2578 = vmul.f32 %v2558, %v2577
        %v2579 = vadd.f32 %v2578, 1.0
        %v2580 = vrcp.pop %v2579
        %v2581 = vmul.f32 %v2579, %v2580
        %v2582 = vsub.f32 1.0, %v2581
        %v2583 = vmul.f32 %v2580, %v2582
        %v2584 = vadd.f32 %v2580, %v2583
        %vm2585 = vweird.f32 %v2579
        %vm2586 = vweird.f32 %v2580
        %vm2587 = vmor %vm2585, %vm2586
        %v2588 = vsel %vm2587, %v2580, %v2584
        %v2589 = vand.u32 2147483647, %v2579
        %vm2590 = vcmp.eq.f32.partialorder %v2589, 8.507059e+37
        %v2591 = vand.u32 %v2579, 2147483648
        %v2592 = vor.u32 1.1754944e-38, %v2591
        %v2593 = vsel %vm2590, %v2592, %v2588
        %v2594 = vmul.f32 %v2569, %v2593
        %v2595 = vmin.f32 %v2594, 1.0
        %v2596 = vmax.f32 %v2595, -1.0
        %v2597 = vmul.f32 %v1512, %v1512
        %v2598 = vmin.f32 16.0, %v2597
        %v2599 = vmul.f32 %v2598, 2.1237322e-06
        %v2600 = vadd.f32 %v2599, 0.00028619796
        %v2601 = vmul.f32 %v2598, %v2600
        %v2602 = vadd.f32 %v2601, 0.0036580483
        %v2603 = vmul.f32 %v2598, %v2602
        %v2604 = vadd.f32 %v2603, 0.05243302
        %v2605 = vmul.f32 %v2598, %v2604
        %v2606 = vadd.f32 %v2605, 0.18741608
        %v2607 = vmul.f32 %v2598, %v2606
        %v2608 = vadd.f32 %v2607, 1.1283791
        %v2609 = vmul.f32 %v1512, %v2608
        %v2610 = vmul.f32 %v2598, 3.8918573e-05
        %v2611 = vadd.f32 %v2610, 0.001143296
        %v2612 = vmul.f32 %v2598, %v2611
        %v2613 = vadd.f32 %v2612, 0.014752088
        %v2614 = vmul.f32 %v2598, %v2613
        %v2615 = vadd.f32 %v2614, 0.112945676
        %v2616 = vmul.f32 %v2598, %v2615
        %v2617 = vadd.f32 %v2616, 0.4994258
        %v2618 = vmul.f32 %v2598, %v2617
        %v2619 = vadd.f32 %v2618, 1.0
        %v2620 = vrcp.pop %v2619
        %v2621 = vmul.f32 %v2619, %v2620
        %v2622 = vsub.f32 1.0, %v2621
        %v2623 = vmul.f32 %v2620, %v2622
        %v2624 = vadd.f32 %v2620, %v2623
        %vm2625 = vweird.f32 %v2619
        %vm2626 = vweird.f32 %v2620
        %vm2627 = vmor %vm2625, %vm2626
        %v2628 = vsel %vm2627, %v2620, %v2624
        %v2629 = vand.u32 2147483647, %v2619
        %vm2630 = vcmp.eq.f32.partialorder %v2629, 8.507059e+37
        %v2631 = vand.u32 %v2619, 2147483648
        %v2632 = vor.u32 1.1754944e-38, %v2631
        %v2633 = vsel %vm2630, %v2632, %v2628
        %v2634 = vmul.f32 %v2609, %v2633
        %v2635 = vmin.f32 %v2634, 1.0
        %v2636 = vmax.f32 %v2635, -1.0
        %v2637 = vmul.f32 %v1513, %v1513
        %v2638 = vmin.f32 16.0, %v2637
        %v2639 = vmul.f32 %v2638, 2.1237322e-06
        %v2640 = vadd.f32 %v2639, 0.00028619796
        %v2641 = vmul.f32 %v2638, %v2640
        %v2642 = vadd.f32 %v2641, 0.0036580483
        %v2643 = vmul.f32 %v2638, %v2642
        %v2644 = vadd.f32 %v2643, 0.05243302
        %v2645 = vmul.f32 %v2638, %v2644
        %v2646 = vadd.f32 %v2645, 0.18741608
        %v2647 = vmul.f32 %v2638, %v2646
        %v2648 = vadd.f32 %v2647, 1.1283791
        %v2649 = vmul.f32 %v1513, %v2648
        %v2650 = vmul.f32 %v2638, 3.8918573e-05
        %v2651 = vadd.f32 %v2650, 0.001143296
        %v2652 = vmul.f32 %v2638, %v2651
        %v2653 = vadd.f32 %v2652, 0.014752088
        %v2654 = vmul.f32 %v2638, %v2653
        %v2655 = vadd.f32 %v2654, 0.112945676
        %v2656 = vmul.f32 %v2638, %v2655
        %v2657 = vadd.f32 %v2656, 0.4994258
        %v2658 = vmul.f32 %v2638, %v2657
        %v2659 = vadd.f32 %v2658, 1.0
        %v2660 = vrcp.pop %v2659
        %v2661 = vmul.f32 %v2659, %v2660
        %v2662 = vsub.f32 1.0, %v2661
        %v2663 = vmul.f32 %v2660, %v2662
        %v2664 = vadd.f32 %v2660, %v2663
        %vm2665 = vweird.f32 %v2659
        %vm2666 = vweird.f32 %v2660
        %vm2667 = vmor %vm2665, %vm2666
        %v2668 = vsel %vm2667, %v2660, %v2664
        %v2669 = vand.u32 2147483647, %v2659
        %vm2670 = vcmp.eq.f32.partialorder %v2669, 8.507059e+37
        %v2671 = vand.u32 %v2659, 2147483648
        %v2672 = vor.u32 1.1754944e-38, %v2671
        %v2673 = vsel %vm2670, %v2672, %v2668
        %v2674 = vmul.f32 %v2649, %v2673
        %v2675 = vmin.f32 %v2674, 1.0
        %v2676 = vmax.f32 %v2675, -1.0
        %v2677 = vmul.f32 %v1514, %v1514
        %v2678 = vmin.f32 16.0, %v2677
        %v2679 = vmul.f32 %v2678, 2.1237322e-06
        %v2680 = vadd.f32 %v2679, 0.00028619796
        %v2681 = vmul.f32 %v2678, %v2680
        %v2682 = vadd.f32 %v2681, 0.0036580483
        %v2683 = vmul.f32 %v2678, %v2682
        %v2684 = vadd.f32 %v2683, 0.05243302
        %v2685 = vmul.f32 %v2678, %v2684
        %v2686 = vadd.f32 %v2685, 0.18741608
        %v2687 = vmul.f32 %v2678, %v2686
        %v2688 = vadd.f32 %v2687, 1.1283791
        %v2689 = vmul.f32 %v1514, %v2688
        %v2690 = vmul.f32 %v2678, 3.8918573e-05
        %v2691 = vadd.f32 %v2690, 0.001143296
        %v2692 = vmul.f32 %v2678, %v2691
        %v2693 = vadd.f32 %v2692, 0.014752088
        %v2694 = vmul.f32 %v2678, %v2693
        %v2695 = vadd.f32 %v2694, 0.112945676
        %v2696 = vmul.f32 %v2678, %v2695
        %v2697 = vadd.f32 %v2696, 0.4994258
        %v2698 = vmul.f32 %v2678, %v2697
        %v2699 = vadd.f32 %v2698, 1.0
        %v2700 = vrcp.pop %v2699
        %v2701 = vmul.f32 %v2699, %v2700
        %v2702 = vsub.f32 1.0, %v2701
        %v2703 = vmul.f32 %v2700, %v2702
        %v2704 = vadd.f32 %v2700, %v2703
        %vm2705 = vweird.f32 %v2699
        %vm2706 = vweird.f32 %v2700
        %vm2707 = vmor %vm2705, %vm2706
        %v2708 = vsel %vm2707, %v2700, %v2704
        %v2709 = vand.u32 2147483647, %v2699
        %vm2710 = vcmp.eq.f32.partialorder %v2709, 8.507059e+37
        %v2711 = vand.u32 %v2699, 2147483648
        %v2712 = vor.u32 1.1754944e-38, %v2711
        %v2713 = vsel %vm2710, %v2712, %v2708
        %v2714 = vmul.f32 %v2689, %v2713
        %v2715 = vmin.f32 %v2714, 1.0
        %v2716 = vmax.f32 %v2715, -1.0
        %v2717 = vmul.f32 %v1515, %v1515
        %v2718 = vmin.f32 16.0, %v2717
        %v2719 = vmul.f32 %v2718, 2.1237322e-06
        %v2720 = vadd.f32 %v2719, 0.00028619796
        %v2721 = vmul.f32 %v2718, %v2720
        %v2722 = vadd.f32 %v2721, 0.0036580483
        %v2723 = vmul.f32 %v2718, %v2722
        %v2724 = vadd.f32 %v2723, 0.05243302
        %v2725 = vmul.f32 %v2718, %v2724
        %v2726 = vadd.f32 %v2725, 0.18741608
        %v2727 = vmul.f32 %v2718, %v2726
        %v2728 = vadd.f32 %v2727, 1.1283791
        %v2729 = vmul.f32 %v1515, %v2728
        %v2730 = vmul.f32 %v2718, 3.8918573e-05
        %v2731 = vadd.f32 %v2730, 0.001143296
        %v2732 = vmul.f32 %v2718, %v2731
        %v2733 = vadd.f32 %v2732, 0.014752088
        %v2734 = vmul.f32 %v2718, %v2733
        %v2735 = vadd.f32 %v2734, 0.112945676
        %v2736 = vmul.f32 %v2718, %v2735
        %v2737 = vadd.f32 %v2736, 0.4994258
        %v2738 = vmul.f32 %v2718, %v2737
        %v2739 = vadd.f32 %v2738, 1.0
        %v2740 = vrcp.pop %v2739
        %v2741 = vmul.f32 %v2739, %v2740
        %v2742 = vsub.f32 1.0, %v2741
        %v2743 = vmul.f32 %v2740, %v2742
        %v2744 = vadd.f32 %v2740, %v2743
        %vm2745 = vweird.f32 %v2739
        %vm2746 = vweird.f32 %v2740
        %vm2747 = vmor %vm2745, %vm2746
        %v2748 = vsel %vm2747, %v2740, %v2744
        %v2749 = vand.u32 2147483647, %v2739
        %vm2750 = vcmp.eq.f32.partialorder %v2749, 8.507059e+37
        %v2751 = vand.u32 %v2739, 2147483648
        %v2752 = vor.u32 1.1754944e-38, %v2751
        %v2753 = vsel %vm2750, %v2752, %v2748
        %v2754 = vmul.f32 %v2729, %v2753
        %v2755 = vmin.f32 %v2754, 1.0
        %v2756 = vmax.f32 %v2755, -1.0
        %v2757 = vmul.f32 %v1516, %v1516
        %v2758 = vmin.f32 16.0, %v2757
        %v2759 = vmul.f32 %v2758, 2.1237322e-06
        %v2760 = vadd.f32 %v2759, 0.00028619796
        %v2761 = vmul.f32 %v2758, %v2760
        %v2762 = vadd.f32 %v2761, 0.0036580483
        %v2763 = vmul.f32 %v2758, %v2762
        %v2764 = vadd.f32 %v2763, 0.05243302
        %v2765 = vmul.f32 %v2758, %v2764
        %v2766 = vadd.f32 %v2765, 0.18741608
        %v2767 = vmul.f32 %v2758, %v2766
        %v2768 = vadd.f32 %v2767, 1.1283791
        %v2769 = vmul.f32 %v1516, %v2768
        %v2770 = vmul.f32 %v2758, 3.8918573e-05
        %v2771 = vadd.f32 %v2770, 0.001143296
        %v2772 = vmul.f32 %v2758, %v2771
        %v2773 = vadd.f32 %v2772, 0.014752088
        %v2774 = vmul.f32 %v2758, %v2773
        %v2775 = vadd.f32 %v2774, 0.112945676
        %v2776 = vmul.f32 %v2758, %v2775
        %v2777 = vadd.f32 %v2776, 0.4994258
        %v2778 = vmul.f32 %v2758, %v2777
        %v2779 = vadd.f32 %v2778, 1.0
        %v2780 = vrcp.pop %v2779
        %v2781 = vmul.f32 %v2779, %v2780
        %v2782 = vsub.f32 1.0, %v2781
        %v2783 = vmul.f32 %v2780, %v2782
        %v2784 = vadd.f32 %v2780, %v2783
        %vm2785 = vweird.f32 %v2779
        %vm2786 = vweird.f32 %v2780
        %vm2787 = vmor %vm2785, %vm2786
        %v2788 = vsel %vm2787, %v2780, %v2784
        %v2789 = vand.u32 2147483647, %v2779
        %vm2790 = vcmp.eq.f32.partialorder %v2789, 8.507059e+37
        %v2791 = vand.u32 %v2779, 2147483648
        %v2792 = vor.u32 1.1754944e-38, %v2791
        %v2793 = vsel %vm2790, %v2792, %v2788
        %v2794 = vmul.f32 %v2769, %v2793
        %v2795 = vmin.f32 %v2794, 1.0
        %v2796 = vmax.f32 %v2795, -1.0
        %v2797 = vadd.f32 %v1556, 1.0
        %v2798 = vadd.f32 %v1596, 1.0
        %v2799 = vadd.f32 %v1636, 1.0
        %v2800 = vadd.f32 %v1676, 1.0
        %v2801 = vadd.f32 %v1716, 1.0
        %v2802 = vadd.f32 %v1756, 1.0
        %v2803 = vadd.f32 %v1796, 1.0
        %v2804 = vadd.f32 %v1836, 1.0
        %v2805 = vadd.f32 %v1876, 1.0
        %v2806 = vadd.f32 %v1916, 1.0
        %v2807 = vadd.f32 %v1956, 1.0
        %v2808 = vadd.f32 %v1996, 1.0
        %v2809 = vadd.f32 %v2036, 1.0
        %v2810 = vadd.f32 %v2076, 1.0
        %v2811 = vadd.f32 %v2116, 1.0
        %v2812 = vadd.f32 %v2156, 1.0
        %v2813 = vadd.f32 %v2196, 1.0
        %v2814 = vadd.f32 %v2236, 1.0
        %v2815 = vadd.f32 %v2276, 1.0
        %v2816 = vadd.f32 %v2316, 1.0
        %v2817 = vadd.f32 %v2356, 1.0
        %v2818 = vadd.f32 %v2396, 1.0
        %v2819 = vadd.f32 %v2436, 1.0
        %v2820 = vadd.f32 %v2476, 1.0
        %v2821 = vadd.f32 %v2516, 1.0
        %v2822 = vadd.f32 %v2556, 1.0
        %v2823 = vadd.f32 %v2596, 1.0
        %v2824 = vadd.f32 %v2636, 1.0
        %v2825 = vadd.f32 %v2676, 1.0
        %v2826 = vadd.f32 %v2716, 1.0
        %v2827 = vadd.f32 %v2756, 1.0
        %v2828 = vadd.f32 %v2796, 1.0
        %v2829 = vmul.f32 %v1453, %v2797
        %v2830 = vmul.f32 %v1454, %v2798
        %v2831 = vmul.f32 %v1455, %v2799
        %v2832 = vmul.f32 %v1456, %v2800
        %v2833 = vmul.f32 %v1457, %v2801
        %v2834 = vmul.f32 %v1458, %v2802
        %v2835 = vmul.f32 %v1459, %v2803
        %v2836 = vmul.f32 %v1460, %v2804
        %v2837 = vmul.f32 %v1461, %v2805
        %v2838 = vmul.f32 %v1462, %v2806
        %v2839 = vmul.f32 %v1463, %v2807
        %v2840 = vmul.f32 %v1464, %v2808
        %v2841 = vmul.f32 %v1465, %v2809
        %v2842 = vmul.f32 %v1466, %v2810
        %v2843 = vmul.f32 %v1467, %v2811
        %v2844 = vmul.f32 %v1468, %v2812
        %v2845 = vmul.f32 %v1469, %v2813
        %v2846 = vmul.f32 %v1470, %v2814
        %v2847 = vmul.f32 %v1471, %v2815
        %v2848 = vmul.f32 %v1472, %v2816
        %v2849 = vmul.f32 %v1473, %v2817
        %v2850 = vmul.f32 %v1474, %v2818
        %v2851 = vmul.f32 %v1475, %v2819
        %v2852 = vmul.f32 %v1476, %v2820
        %v2853 = vmul.f32 %v1477, %v2821
        %v2854 = vmul.f32 %v1478, %v2822
        %v2855 = vmul.f32 %v1479, %v2823
        %v2856 = vmul.f32 %v1480, %v2824
        %v2857 = vmul.f32 %v1481, %v2825
        %v2858 = vmul.f32 %v1482, %v2826
        %v2859 = vmul.f32 %v1483, %v2827
        %v2860 = vmul.f32 %v1484, %v2828
        %2862 = vset.pattern.permute.xlu0 0
        %2863 = vperm.xlu0 %2862, %v503
        %v2864 = vpop.permute.xlu0 %2863
        %2867 = vset.pattern.permute.xlu0 0
        %2868 = vperm.xlu0 %2867, %v504
        %v2869 = vpop.permute.xlu0 %2868
        %2872 = vset.pattern.permute.xlu0 0
        %2873 = vperm.xlu0 %2872, %v505
        %v2874 = vpop.permute.xlu0 %2873
        %2877 = vset.pattern.permute.xlu0 0
        %2878 = vperm.xlu0 %2877, %v506
        %v2879 = vpop.permute.xlu0 %2878
        %2882 = vset.pattern.permute.xlu0 0
        %2883 = vperm.xlu0 %2882, %v507
        %v2884 = vpop.permute.xlu0 %2883
        %2887 = vset.pattern.permute.xlu0 0
        %2888 = vperm.xlu0 %2887, %v508
        %v2889 = vpop.permute.xlu0 %2888
        %2892 = vset.pattern.permute.xlu0 0
        %2893 = vperm.xlu0 %2892, %v509
        %v2894 = vpop.permute.xlu0 %2893
        %2897 = vset.pattern.permute.xlu0 0
        %2898 = vperm.xlu0 %2897, %v510
        %v2899 = vpop.permute.xlu0 %2898
        %2902 = vset.pattern.permute.xlu0 0
        %2903 = vperm.xlu0 %2902, %v511
        %v2904 = vpop.permute.xlu0 %2903
        %2907 = vset.pattern.permute.xlu0 0
        %2908 = vperm.xlu0 %2907, %v512
        %v2909 = vpop.permute.xlu0 %2908
        %2912 = vset.pattern.permute.xlu0 0
        %2913 = vperm.xlu0 %2912, %v513
        %v2914 = vpop.permute.xlu0 %2913
        %2917 = vset.pattern.permute.xlu0 0
        %2918 = vperm.xlu0 %2917, %v514
        %v2919 = vpop.permute.xlu0 %2918
        %2922 = vset.pattern.permute.xlu0 0
        %2923 = vperm.xlu0 %2922, %v515
        %v2924 = vpop.permute.xlu0 %2923
        %2927 = vset.pattern.permute.xlu0 0
        %2928 = vperm.xlu0 %2927, %v516
        %v2929 = vpop.permute.xlu0 %2928
        %2932 = vset.pattern.permute.xlu0 0
        %2933 = vperm.xlu0 %2932, %v517
        %v2934 = vpop.permute.xlu0 %2933
        %2937 = vset.pattern.permute.xlu0 0
        %2938 = vperm.xlu0 %2937, %v518
        %v2939 = vpop.permute.xlu0 %2938
        %v2941 = vmul.f32 %v2830, %v2864
        %v2942 = vmul.f32 %v2832, %v2869
        %v2943 = vmul.f32 %v2834, %v2874
        %v2944 = vmul.f32 %v2836, %v2879
        %v2945 = vmul.f32 %v2838, %v2884
        %v2946 = vmul.f32 %v2840, %v2889
        %v2947 = vmul.f32 %v2842, %v2894
        %v2948 = vmul.f32 %v2844, %v2899
        %v2949 = vmul.f32 %v2846, %v2904
        %v2950 = vmul.f32 %v2848, %v2909
        %v2951 = vmul.f32 %v2850, %v2914
        %v2952 = vmul.f32 %v2852, %v2919
        %v2953 = vmul.f32 %v2854, %v2924
        %v2954 = vmul.f32 %v2856, %v2929
        %v2955 = vmul.f32 %v2858, %v2934
        %v2956 = vmul.f32 %v2860, %v2939
        %v2957 = vadd.f32 %v2941, %v2942
        %v2958 = vadd.f32 %v2957, %v2943
        %v2959 = vadd.f32 %v2958, %v2944
        %v2960 = vadd.f32 %v2959, %v2945
        %v2961 = vadd.f32 %v2960, %v2946
        %v2962 = vadd.f32 %v2961, %v2947
        %v2963 = vadd.f32 %v2962, %v2948
        %v2964 = vadd.f32 %v2963, %v2949
        %v2965 = vadd.f32 %v2964, %v2950
        %v2966 = vadd.f32 %v2965, %v2951
        %v2967 = vadd.f32 %v2966, %v2952
        %v2968 = vadd.f32 %v2967, %v2953
        %v2969 = vadd.f32 %v2968, %v2954
        %v2970 = vadd.f32 %v2969, %v2955
        %v2971 = vadd.f32 %v2970, %v2956
        %v2972 = vrot.slane %v2971, 4
        %v2973 = vadd.f32 %v2971, %v2972
        %v2974 = vrot.slane %v2973, 2
        %v2975 = vadd.f32 %v2973, %v2974
        %v2976 = vrot.slane %v2975, 1
        %v2977 = vadd.f32 %v2975, %v2976
        %vm2978 = vcmask 7168
        %v2979 = vsel %vm2978, %v503, 0.0
        %v2980 = vsel %vm2978, %v504, 0.0
        %v2981 = vadd.f32 %v2979, %v2980
        %v2982 = vsel %vm2978, %v505, 0.0
        %v2983 = vadd.f32 %v2981, %v2982
        %v2984 = vsel %vm2978, %v506, 0.0
        %v2985 = vadd.f32 %v2983, %v2984
        %v2986 = vsel %vm2978, %v507, 0.0
        %v2987 = vadd.f32 %v2985, %v2986
        %v2988 = vsel %vm2978, %v508, 0.0
        %v2989 = vadd.f32 %v2987, %v2988
        %v2990 = vsel %vm2978, %v509, 0.0
        %v2991 = vadd.f32 %v2989, %v2990
        %v2992 = vsel %vm2978, %v510, 0.0
        %v2993 = vadd.f32 %v2991, %v2992
        %v2994 = vsel %vm2978, %v511, 0.0
        %v2995 = vadd.f32 %v2993, %v2994
        %v2996 = vsel %vm2978, %v512, 0.0
        %v2997 = vadd.f32 %v2995, %v2996
        %v2998 = vsel %vm2978, %v513, 0.0
        %v2999 = vadd.f32 %v2997, %v2998
        %v3000 = vsel %vm2978, %v514, 0.0
        %v3001 = vadd.f32 %v2999, %v3000
        %v3002 = vsel %vm2978, %v515, 0.0
        %v3003 = vadd.f32 %v3001, %v3002
        %v3004 = vsel %vm2978, %v516, 0.0
        %v3005 = vadd.f32 %v3003, %v3004
        %v3006 = vsel %vm2978, %v517, 0.0
        %v3007 = vadd.f32 %v3005, %v3006
        %v3008 = vsel %vm2978, %v518, 0.0
        %v3009 = vadd.f32 %v3007, %v3008
        %v3010 = vrot.slane %v3009, 4
        %v3011 = vadd.f32 %v3009, %v3010
        %v3012 = vrot.slane %v3011, 2
        %v3013 = vadd.f32 %v3011, %v3012
        %v3014 = vrot.slane %v3013, 1
        %v3015 = vadd.f32 %v3013, %v3014
        %3017 = vset.pattern.permute.xlu0 0
        %3018 = vperm.xlu0 %3017, %v3015
        %v3019 = vpop.permute.xlu0 %3018
        %v3021 = vrcp.pop %v3019
        %v3022 = vmul.f32 %v3019, %v3021
        %v3023 = vsub.f32 1.0, %v3022
        %v3024 = vmul.f32 %v3021, %v3023
        %v3025 = vadd.f32 %v3021, %v3024
        %vm3026 = vweird.f32 %v3019
        %vm3027 = vweird.f32 %v3021
        %vm3028 = vmor %vm3026, %vm3027
        %v3029 = vsel %vm3028, %v3021, %v3025
        %v3030 = vand.u32 2147483647, %v3019
        %vm3031 = vcmp.eq.f32.partialorder %v3030, 8.507059e+37
        %v3032 = vand.u32 %v3019, 2147483648
        %v3033 = vor.u32 1.1754944e-38, %v3032
        %v3034 = vsel %vm3031, %v3033, %v3029
        %v3035 = vmul.f32 %v2977, %v3034
        %v3036 = vld [vmem:[#allocation5] sm:$0xf]
        %v3037 = vld [vmem:[#allocation5 + $0x4] sm:$0xf]
        %v3038 = vld [vmem:[#allocation5 + $0x8] sm:$0xf]
        %v3039 = vld [vmem:[#allocation5 + $0xc] sm:$0xf]
        %v3040 = vld [vmem:[#allocation5 + $0x10] sm:$0xf]
        %v3041 = vld [vmem:[#allocation5 + $0x14] sm:$0xf]
        %v3042 = vld [vmem:[#allocation5 + $0x18] sm:$0xf]
        %v3043 = vld [vmem:[#allocation5 + $0x1c] sm:$0xf]
        %v3044 = vld [vmem:[#allocation5 + $0x20] sm:$0xf]
        %v3045 = vld [vmem:[#allocation5 + $0x24] sm:$0xf]
        %v3046 = vld [vmem:[#allocation5 + $0x28] sm:$0xf]
        %v3047 = vld [vmem:[#allocation5 + $0x2c] sm:$0xf]
        %v3048 = vld [vmem:[#allocation5 + $0x30] sm:$0xf]
        %v3049 = vld [vmem:[#allocation5 + $0x34] sm:$0xf]
        %v3050 = vld [vmem:[#allocation5 + $0x38] sm:$0xf]
        %v3051 = vld [vmem:[#allocation5 + $0x3c] sm:$0xf]
        %v3052 = vld [vmem:[#allocation5 + $0x40] sm:$0xf]
        %v3053 = vld [vmem:[#allocation5 + $0x44] sm:$0xf]
        %v3054 = vld [vmem:[#allocation5 + $0x48] sm:$0xf]
        %v3055 = vld [vmem:[#allocation5 + $0x4c] sm:$0xf]
        %v3056 = vld [vmem:[#allocation5 + $0x50] sm:$0xf]
        %v3057 = vld [vmem:[#allocation5 + $0x54] sm:$0xf]
        %v3058 = vld [vmem:[#allocation5 + $0x58] sm:$0xf]
        %v3059 = vld [vmem:[#allocation5 + $0x5c] sm:$0xf]
        %v3060 = vld [vmem:[#allocation5 + $0x60] sm:$0xf]
        %v3061 = vld [vmem:[#allocation5 + $0x64] sm:$0xf]
        %v3062 = vld [vmem:[#allocation5 + $0x68] sm:$0xf]
        %v3063 = vld [vmem:[#allocation5 + $0x6c] sm:$0xf]
        %v3064 = vld [vmem:[#allocation5 + $0x70] sm:$0xf]
        %v3065 = vld [vmem:[#allocation5 + $0x74] sm:$0xf]
        %v3066 = vld [vmem:[#allocation5 + $0x78] sm:$0xf]
        %v3067 = vld [vmem:[#allocation5 + $0x7c] sm:$0xf]
        %v3068 = vpack.c.bf16 %v2831, %v2829
        %v3069 = vpack.c.bf16 %v2835, %v2833
        %v3070 = vpack.c.bf16 %v2839, %v2837
        %v3071 = vpack.c.bf16 %v2843, %v2841
        %v3072 = vpack.c.bf16 %v2847, %v2845
        %v3073 = vpack.c.bf16 %v2851, %v2849
        %v3074 = vpack.c.bf16 %v2855, %v2853
        %v3075 = vpack.c.bf16 %v2859, %v2857
        %v3076 = vpack.c.bf16 %v3035, %v3035
        %v3093 = vunpack.c.l.b16 %v3052
        %v3094 = vunpack.c.l.b16 %v3053
        %v3095 = vunpack.c.l.b16 %v3054
        %v3096 = vunpack.c.l.b16 %v3055
        %v3097 = vunpack.c.l.b16 %v3056
        %v3098 = vunpack.c.l.b16 %v3057
        %v3099 = vunpack.c.l.b16 %v3058
        %v3100 = vunpack.c.l.b16 %v3059
        %v3101 = vunpack.c.l.b16 %v3060
        %v3102 = vunpack.c.l.b16 %v3061
        %v3103 = vunpack.c.l.b16 %v3062
        %v3104 = vunpack.c.l.b16 %v3063
        %v3105 = vunpack.c.l.b16 %v3064
        %v3106 = vunpack.c.l.b16 %v3065
        %v3107 = vunpack.c.l.b16 %v3066
        %v3108 = vunpack.c.l.b16 %v3067
        %v3109 = vpack.c.b16 %v3094, %v3093
        %v3110 = vpack.c.b16 %v3096, %v3095
        %v3111 = vpack.c.b16 %v3098, %v3097
        %v3112 = vpack.c.b16 %v3100, %v3099
        %v3113 = vpack.c.b16 %v3102, %v3101
        %v3114 = vpack.c.b16 %v3104, %v3103
        %v3115 = vpack.c.b16 %v3106, %v3105
        %v3116 = vpack.c.b16 %v3108, %v3107
        %3125 = vmatpush.bf16.msra.mxu0 %v3116
        %3126 = vmatpush.bf16.msra.mxu0 %v3115
        %3127 = vmatpush.bf16.msra.mxu0 %v3114
        %3128 = vmatpush.bf16.msra.mxu0 %v3113
        %3129 = vmatpush.bf16.msra.mxu0 %v3112
        %3130 = vmatpush.bf16.msra.mxu0 %v3111
        %3131 = vmatpush.bf16.msra.mxu0 %v3110
        %3132 = vmatpush.bf16.msra.mxu0 %v3109
        %3133 = vmatmul.bf16.gmra.mxu0 %v3076
        %v3134 = vpop.f32.mrf.mxu0
        %v3135 = vadd.f32 0.0, %v3134
        %v3136 = vpop.f32.mrf.mxu0
        %3137 = vdwg.mxu0
        %v3138 = vperm.slane %v3135, 0
        %v3155 = vunpack.c.l.b16 %v3036
        %v3156 = vunpack.c.l.b16 %v3037
        %v3157 = vunpack.c.l.b16 %v3038
        %v3158 = vunpack.c.l.b16 %v3039
        %v3159 = vunpack.c.l.b16 %v3040
        %v3160 = vunpack.c.l.b16 %v3041
        %v3161 = vunpack.c.l.b16 %v3042
        %v3162 = vunpack.c.l.b16 %v3043
        %v3163 = vunpack.c.l.b16 %v3044
        %v3164 = vunpack.c.l.b16 %v3045
        %v3165 = vunpack.c.l.b16 %v3046
        %v3166 = vunpack.c.l.b16 %v3047
        %v3167 = vunpack.c.l.b16 %v3048
        %v3168 = vunpack.c.l.b16 %v3049
        %v3169 = vunpack.c.l.b16 %v3050
        %v3170 = vunpack.c.l.b16 %v3051
        %v3171 = vpack.c.b16 %v3156, %v3155
        %v3172 = vpack.c.b16 %v3158, %v3157
        %v3173 = vpack.c.b16 %v3160, %v3159
        %v3174 = vpack.c.b16 %v3162, %v3161
        %v3175 = vpack.c.b16 %v3164, %v3163
        %v3176 = vpack.c.b16 %v3166, %v3165
        %v3177 = vpack.c.b16 %v3168, %v3167
        %v3178 = vpack.c.b16 %v3170, %v3169
        %3187 = vmatpush.bf16.msra.mxu0 %v3178
        %3188 = vmatpush.bf16.msra.mxu0 %v3177
        %3189 = vmatpush.bf16.msra.mxu0 %v3176
        %3190 = vmatpush.bf16.msra.mxu0 %v3175
        %3191 = vmatpush.bf16.msra.mxu0 %v3174
        %3192 = vmatpush.bf16.msra.mxu0 %v3173
        %3193 = vmatpush.bf16.msra.mxu0 %v3172
        %3194 = vmatpush.bf16.msra.mxu0 %v3171
        %3195 = vmatmul.bf16.gmra.mxu0 %v3068
        %v3196 = vpop.f32.mrf.mxu0
        %v3197 = vadd.f32 %v3138, %v3196
        %v3198 = vpop.f32.mrf.mxu0
        %v3199 = vadd.f32 %v3138, %v3198
        %3200 = vmatmul.bf16.gmra.mxu0 %v3069
        %v3201 = vpop.f32.mrf.mxu0
        %v3202 = vadd.f32 %v3138, %v3201
        %v3203 = vpop.f32.mrf.mxu0
        %v3204 = vadd.f32 %v3138, %v3203
        %3205 = vmatmul.bf16.gmra.mxu0 %v3070
        %v3206 = vpop.f32.mrf.mxu0
        %v3207 = vadd.f32 %v3138, %v3206
        %v3208 = vpop.f32.mrf.mxu0
        %v3209 = vadd.f32 %v3138, %v3208
        %3210 = vmatmul.bf16.gmra.mxu0 %v3071
        %v3211 = vpop.f32.mrf.mxu0
        %v3212 = vadd.f32 %v3138, %v3211
        %v3213 = vpop.f32.mrf.mxu0
        %v3214 = vadd.f32 %v3138, %v3213
        %3215 = vmatmul.bf16.gmra.mxu0 %v3072
        %v3216 = vpop.f32.mrf.mxu0
        %v3217 = vadd.f32 %v3138, %v3216
        %v3218 = vpop.f32.mrf.mxu0
        %v3219 = vadd.f32 %v3138, %v3218
        %3220 = vmatmul.bf16.gmra.mxu0 %v3073
        %v3221 = vpop.f32.mrf.mxu0
        %v3222 = vadd.f32 %v3138, %v3221
        %v3223 = vpop.f32.mrf.mxu0
        %v3224 = vadd.f32 %v3138, %v3223
        %3225 = vmatmul.bf16.gmra.mxu0 %v3074
        %v3226 = vpop.f32.mrf.mxu0
        %v3227 = vadd.f32 %v3138, %v3226
        %v3228 = vpop.f32.mrf.mxu0
        %v3229 = vadd.f32 %v3138, %v3228
        %3230 = vmatmul.bf16.gmra.mxu0 %v3075
        %v3231 = vpop.f32.mrf.mxu0
        %v3232 = vadd.f32 %v3138, %v3231
        %v3233 = vpop.f32.mrf.mxu0
        %v3234 = vadd.f32 %v3138, %v3233
        %3235 = vdwg.mxu0
        %v3236 = vld [vmem:[%s7] sm:$0x1]
        %v3238 = vperm.slane %v3236, 0
        %v3240 = vadd.f32 %v3197, %v3238
        %v3241 = vadd.f32 %v3199, %v3238
        %v3242 = vadd.f32 %v3202, %v3238
        %v3243 = vadd.f32 %v3204, %v3238
        %v3244 = vadd.f32 %v3207, %v3238
        %v3245 = vadd.f32 %v3209, %v3238
        %v3246 = vadd.f32 %v3212, %v3238
        %v3247 = vadd.f32 %v3214, %v3238
        %v3248 = vadd.f32 %v3217, %v3238
        %v3249 = vadd.f32 %v3219, %v3238
        %v3250 = vadd.f32 %v3222, %v3238
        %v3251 = vadd.f32 %v3224, %v3238
        %v3252 = vadd.f32 %v3227, %v3238
        %v3253 = vadd.f32 %v3229, %v3238
        %v3254 = vadd.f32 %v3232, %v3238
        %v3255 = vadd.f32 %v3234, %v3238
        %v3256 = vmul.f32 %v3240, 0.5
        %v3257 = vmul.f32 %v3241, 0.5
        %v3258 = vmul.f32 %v3242, 0.5
        %v3259 = vmul.f32 %v3243, 0.5
        %v3260 = vmul.f32 %v3244, 0.5
        %v3261 = vmul.f32 %v3245, 0.5
        %v3262 = vmul.f32 %v3246, 0.5
        %v3263 = vmul.f32 %v3247, 0.5
        %v3264 = vmul.f32 %v3248, 0.5
        %v3265 = vmul.f32 %v3249, 0.5
        %v3266 = vmul.f32 %v3250, 0.5
        %v3267 = vmul.f32 %v3251, 0.5
        %v3268 = vmul.f32 %v3252, 0.5
        %v3269 = vmul.f32 %v3253, 0.5
        %v3270 = vmul.f32 %v3254, 0.5
        %v3271 = vmul.f32 %v3255, 0.5
        %v3272 = vmul.f32 %v3240, 0.70710677
        %v3273 = vmul.f32 %v3241, 0.70710677
        %v3274 = vmul.f32 %v3242, 0.70710677
        %v3275 = vmul.f32 %v3243, 0.70710677
        %v3276 = vmul.f32 %v3244, 0.70710677
        %v3277 = vmul.f32 %v3245, 0.70710677
        %v3278 = vmul.f32 %v3246, 0.70710677
        %v3279 = vmul.f32 %v3247, 0.70710677
        %v3280 = vmul.f32 %v3248, 0.70710677
        %v3281 = vmul.f32 %v3249, 0.70710677
        %v3282 = vmul.f32 %v3250, 0.70710677
        %v3283 = vmul.f32 %v3251, 0.70710677
        %v3284 = vmul.f32 %v3252, 0.70710677
        %v3285 = vmul.f32 %v3253, 0.70710677
        %v3286 = vmul.f32 %v3254, 0.70710677
        %v3287 = vmul.f32 %v3255, 0.70710677
        %v3288 = vmul.f32 %v3272, %v3272
        %v3289 = vmin.f32 16.0, %v3288
        %v3290 = vmul.f32 %v3289, 2.1237322e-06
        %v3291 = vadd.f32 %v3290, 0.00028619796
        %v3292 = vmul.f32 %v3289, %v3291
        %v3293 = vadd.f32 %v3292, 0.0036580483
        %v3294 = vmul.f32 %v3289, %v3293
        %v3295 = vadd.f32 %v3294, 0.05243302
        %v3296 = vmul.f32 %v3289, %v3295
        %v3297 = vadd.f32 %v3296, 0.18741608
        %v3298 = vmul.f32 %v3289, %v3297
        %v3299 = vadd.f32 %v3298, 1.1283791
        %v3300 = vmul.f32 %v3272, %v3299
        %v3301 = vmul.f32 %v3289, 3.8918573e-05
        %v3302 = vadd.f32 %v3301, 0.001143296
        %v3303 = vmul.f32 %v3289, %v3302
        %v3304 = vadd.f32 %v3303, 0.014752088
        %v3305 = vmul.f32 %v3289, %v3304
        %v3306 = vadd.f32 %v3305, 0.112945676
        %v3307 = vmul.f32 %v3289, %v3306
        %v3308 = vadd.f32 %v3307, 0.4994258
        %v3309 = vmul.f32 %v3289, %v3308
        %v3310 = vadd.f32 %v3309, 1.0
        %v3311 = vrcp.pop %v3310
        %v3312 = vmul.f32 %v3310, %v3311
        %v3313 = vsub.f32 1.0, %v3312
        %v3314 = vmul.f32 %v3311, %v3313
        %v3315 = vadd.f32 %v3311, %v3314
        %vm3316 = vweird.f32 %v3310
        %vm3317 = vweird.f32 %v3311
        %vm3318 = vmor %vm3316, %vm3317
        %v3319 = vsel %vm3318, %v3311, %v3315
        %v3320 = vand.u32 2147483647, %v3310
        %vm3321 = vcmp.eq.f32.partialorder %v3320, 8.507059e+37
        %v3322 = vand.u32 %v3310, 2147483648
        %v3323 = vor.u32 1.1754944e-38, %v3322
        %v3324 = vsel %vm3321, %v3323, %v3319
        %v3325 = vmul.f32 %v3300, %v3324
        %v3326 = vmin.f32 %v3325, 1.0
        %v3327 = vmax.f32 %v3326, -1.0
        %v3328 = vmul.f32 %v3273, %v3273
        %v3329 = vmin.f32 16.0, %v3328
        %v3330 = vmul.f32 %v3329, 2.1237322e-06
        %v3331 = vadd.f32 %v3330, 0.00028619796
        %v3332 = vmul.f32 %v3329, %v3331
        %v3333 = vadd.f32 %v3332, 0.0036580483
        %v3334 = vmul.f32 %v3329, %v3333
        %v3335 = vadd.f32 %v3334, 0.05243302
        %v3336 = vmul.f32 %v3329, %v3335
        %v3337 = vadd.f32 %v3336, 0.18741608
        %v3338 = vmul.f32 %v3329, %v3337
        %v3339 = vadd.f32 %v3338, 1.1283791
        %v3340 = vmul.f32 %v3273, %v3339
        %v3341 = vmul.f32 %v3329, 3.8918573e-05
        %v3342 = vadd.f32 %v3341, 0.001143296
        %v3343 = vmul.f32 %v3329, %v3342
        %v3344 = vadd.f32 %v3343, 0.014752088
        %v3345 = vmul.f32 %v3329, %v3344
        %v3346 = vadd.f32 %v3345, 0.112945676
        %v3347 = vmul.f32 %v3329, %v3346
        %v3348 = vadd.f32 %v3347, 0.4994258
        %v3349 = vmul.f32 %v3329, %v3348
        %v3350 = vadd.f32 %v3349, 1.0
        %v3351 = vrcp.pop %v3350
        %v3352 = vmul.f32 %v3350, %v3351
        %v3353 = vsub.f32 1.0, %v3352
        %v3354 = vmul.f32 %v3351, %v3353
        %v3355 = vadd.f32 %v3351, %v3354
        %vm3356 = vweird.f32 %v3350
        %vm3357 = vweird.f32 %v3351
        %vm3358 = vmor %vm3356, %vm3357
        %v3359 = vsel %vm3358, %v3351, %v3355
        %v3360 = vand.u32 2147483647, %v3350
        %vm3361 = vcmp.eq.f32.partialorder %v3360, 8.507059e+37
        %v3362 = vand.u32 %v3350, 2147483648
        %v3363 = vor.u32 1.1754944e-38, %v3362
        %v3364 = vsel %vm3361, %v3363, %v3359
        %v3365 = vmul.f32 %v3340, %v3364
        %v3366 = vmin.f32 %v3365, 1.0
        %v3367 = vmax.f32 %v3366, -1.0
        %v3368 = vmul.f32 %v3274, %v3274
        %v3369 = vmin.f32 16.0, %v3368
        %v3370 = vmul.f32 %v3369, 2.1237322e-06
        %v3371 = vadd.f32 %v3370, 0.00028619796
        %v3372 = vmul.f32 %v3369, %v3371
        %v3373 = vadd.f32 %v3372, 0.0036580483
        %v3374 = vmul.f32 %v3369, %v3373
        %v3375 = vadd.f32 %v3374, 0.05243302
        %v3376 = vmul.f32 %v3369, %v3375
        %v3377 = vadd.f32 %v3376, 0.18741608
        %v3378 = vmul.f32 %v3369, %v3377
        %v3379 = vadd.f32 %v3378, 1.1283791
        %v3380 = vmul.f32 %v3274, %v3379
        %v3381 = vmul.f32 %v3369, 3.8918573e-05
        %v3382 = vadd.f32 %v3381, 0.001143296
        %v3383 = vmul.f32 %v3369, %v3382
        %v3384 = vadd.f32 %v3383, 0.014752088
        %v3385 = vmul.f32 %v3369, %v3384
        %v3386 = vadd.f32 %v3385, 0.112945676
        %v3387 = vmul.f32 %v3369, %v3386
        %v3388 = vadd.f32 %v3387, 0.4994258
        %v3389 = vmul.f32 %v3369, %v3388
        %v3390 = vadd.f32 %v3389, 1.0
        %v3391 = vrcp.pop %v3390
        %v3392 = vmul.f32 %v3390, %v3391
        %v3393 = vsub.f32 1.0, %v3392
        %v3394 = vmul.f32 %v3391, %v3393
        %v3395 = vadd.f32 %v3391, %v3394
        %vm3396 = vweird.f32 %v3390
        %vm3397 = vweird.f32 %v3391
        %vm3398 = vmor %vm3396, %vm3397
        %v3399 = vsel %vm3398, %v3391, %v3395
        %v3400 = vand.u32 2147483647, %v3390
        %vm3401 = vcmp.eq.f32.partialorder %v3400, 8.507059e+37
        %v3402 = vand.u32 %v3390, 2147483648
        %v3403 = vor.u32 1.1754944e-38, %v3402
        %v3404 = vsel %vm3401, %v3403, %v3399
        %v3405 = vmul.f32 %v3380, %v3404
        %v3406 = vmin.f32 %v3405, 1.0
        %v3407 = vmax.f32 %v3406, -1.0
        %v3408 = vmul.f32 %v3275, %v3275
        %v3409 = vmin.f32 16.0, %v3408
        %v3410 = vmul.f32 %v3409, 2.1237322e-06
        %v3411 = vadd.f32 %v3410, 0.00028619796
        %v3412 = vmul.f32 %v3409, %v3411
        %v3413 = vadd.f32 %v3412, 0.0036580483
        %v3414 = vmul.f32 %v3409, %v3413
        %v3415 = vadd.f32 %v3414, 0.05243302
        %v3416 = vmul.f32 %v3409, %v3415
        %v3417 = vadd.f32 %v3416, 0.18741608
        %v3418 = vmul.f32 %v3409, %v3417
        %v3419 = vadd.f32 %v3418, 1.1283791
        %v3420 = vmul.f32 %v3275, %v3419
        %v3421 = vmul.f32 %v3409, 3.8918573e-05
        %v3422 = vadd.f32 %v3421, 0.001143296
        %v3423 = vmul.f32 %v3409, %v3422
        %v3424 = vadd.f32 %v3423, 0.014752088
        %v3425 = vmul.f32 %v3409, %v3424
        %v3426 = vadd.f32 %v3425, 0.112945676
        %v3427 = vmul.f32 %v3409, %v3426
        %v3428 = vadd.f32 %v3427, 0.4994258
        %v3429 = vmul.f32 %v3409, %v3428
        %v3430 = vadd.f32 %v3429, 1.0
        %v3431 = vrcp.pop %v3430
        %v3432 = vmul.f32 %v3430, %v3431
        %v3433 = vsub.f32 1.0, %v3432
        %v3434 = vmul.f32 %v3431, %v3433
        %v3435 = vadd.f32 %v3431, %v3434
        %vm3436 = vweird.f32 %v3430
        %vm3437 = vweird.f32 %v3431
        %vm3438 = vmor %vm3436, %vm3437
        %v3439 = vsel %vm3438, %v3431, %v3435
        %v3440 = vand.u32 2147483647, %v3430
        %vm3441 = vcmp.eq.f32.partialorder %v3440, 8.507059e+37
        %v3442 = vand.u32 %v3430, 2147483648
        %v3443 = vor.u32 1.1754944e-38, %v3442
        %v3444 = vsel %vm3441, %v3443, %v3439
        %v3445 = vmul.f32 %v3420, %v3444
        %v3446 = vmin.f32 %v3445, 1.0
        %v3447 = vmax.f32 %v3446, -1.0
        %v3448 = vmul.f32 %v3276, %v3276
        %v3449 = vmin.f32 16.0, %v3448
        %v3450 = vmul.f32 %v3449, 2.1237322e-06
        %v3451 = vadd.f32 %v3450, 0.00028619796
        %v3452 = vmul.f32 %v3449, %v3451
        %v3453 = vadd.f32 %v3452, 0.0036580483
        %v3454 = vmul.f32 %v3449, %v3453
        %v3455 = vadd.f32 %v3454, 0.05243302
        %v3456 = vmul.f32 %v3449, %v3455
        %v3457 = vadd.f32 %v3456, 0.18741608
        %v3458 = vmul.f32 %v3449, %v3457
        %v3459 = vadd.f32 %v3458, 1.1283791
        %v3460 = vmul.f32 %v3276, %v3459
        %v3461 = vmul.f32 %v3449, 3.8918573e-05
        %v3462 = vadd.f32 %v3461, 0.001143296
        %v3463 = vmul.f32 %v3449, %v3462
        %v3464 = vadd.f32 %v3463, 0.014752088
        %v3465 = vmul.f32 %v3449, %v3464
        %v3466 = vadd.f32 %v3465, 0.112945676
        %v3467 = vmul.f32 %v3449, %v3466
        %v3468 = vadd.f32 %v3467, 0.4994258
        %v3469 = vmul.f32 %v3449, %v3468
        %v3470 = vadd.f32 %v3469, 1.0
        %v3471 = vrcp.pop %v3470
        %v3472 = vmul.f32 %v3470, %v3471
        %v3473 = vsub.f32 1.0, %v3472
        %v3474 = vmul.f32 %v3471, %v3473
        %v3475 = vadd.f32 %v3471, %v3474
        %vm3476 = vweird.f32 %v3470
        %vm3477 = vweird.f32 %v3471
        %vm3478 = vmor %vm3476, %vm3477
        %v3479 = vsel %vm3478, %v3471, %v3475
        %v3480 = vand.u32 2147483647, %v3470
        %vm3481 = vcmp.eq.f32.partialorder %v3480, 8.507059e+37
        %v3482 = vand.u32 %v3470, 2147483648
        %v3483 = vor.u32 1.1754944e-38, %v3482
        %v3484 = vsel %vm3481, %v3483, %v3479
        %v3485 = vmul.f32 %v3460, %v3484
        %v3486 = vmin.f32 %v3485, 1.0
        %v3487 = vmax.f32 %v3486, -1.0
        %v3488 = vmul.f32 %v3277, %v3277
        %v3489 = vmin.f32 16.0, %v3488
        %v3490 = vmul.f32 %v3489, 2.1237322e-06
        %v3491 = vadd.f32 %v3490, 0.00028619796
        %v3492 = vmul.f32 %v3489, %v3491
        %v3493 = vadd.f32 %v3492, 0.0036580483
        %v3494 = vmul.f32 %v3489, %v3493
        %v3495 = vadd.f32 %v3494, 0.05243302
        %v3496 = vmul.f32 %v3489, %v3495
        %v3497 = vadd.f32 %v3496, 0.18741608
        %v3498 = vmul.f32 %v3489, %v3497
        %v3499 = vadd.f32 %v3498, 1.1283791
        %v3500 = vmul.f32 %v3277, %v3499
        %v3501 = vmul.f32 %v3489, 3.8918573e-05
        %v3502 = vadd.f32 %v3501, 0.001143296
        %v3503 = vmul.f32 %v3489, %v3502
        %v3504 = vadd.f32 %v3503, 0.014752088
        %v3505 = vmul.f32 %v3489, %v3504
        %v3506 = vadd.f32 %v3505, 0.112945676
        %v3507 = vmul.f32 %v3489, %v3506
        %v3508 = vadd.f32 %v3507, 0.4994258
        %v3509 = vmul.f32 %v3489, %v3508
        %v3510 = vadd.f32 %v3509, 1.0
        %v3511 = vrcp.pop %v3510
        %v3512 = vmul.f32 %v3510, %v3511
        %v3513 = vsub.f32 1.0, %v3512
        %v3514 = vmul.f32 %v3511, %v3513
        %v3515 = vadd.f32 %v3511, %v3514
        %vm3516 = vweird.f32 %v3510
        %vm3517 = vweird.f32 %v3511
        %vm3518 = vmor %vm3516, %vm3517
        %v3519 = vsel %vm3518, %v3511, %v3515
        %v3520 = vand.u32 2147483647, %v3510
        %vm3521 = vcmp.eq.f32.partialorder %v3520, 8.507059e+37
        %v3522 = vand.u32 %v3510, 2147483648
        %v3523 = vor.u32 1.1754944e-38, %v3522
        %v3524 = vsel %vm3521, %v3523, %v3519
        %v3525 = vmul.f32 %v3500, %v3524
        %v3526 = vmin.f32 %v3525, 1.0
        %v3527 = vmax.f32 %v3526, -1.0
        %v3528 = vmul.f32 %v3278, %v3278
        %v3529 = vmin.f32 16.0, %v3528
        %v3530 = vmul.f32 %v3529, 2.1237322e-06
        %v3531 = vadd.f32 %v3530, 0.00028619796
        %v3532 = vmul.f32 %v3529, %v3531
        %v3533 = vadd.f32 %v3532, 0.0036580483
        %v3534 = vmul.f32 %v3529, %v3533
        %v3535 = vadd.f32 %v3534, 0.05243302
        %v3536 = vmul.f32 %v3529, %v3535
        %v3537 = vadd.f32 %v3536, 0.18741608
        %v3538 = vmul.f32 %v3529, %v3537
        %v3539 = vadd.f32 %v3538, 1.1283791
        %v3540 = vmul.f32 %v3278, %v3539
        %v3541 = vmul.f32 %v3529, 3.8918573e-05
        %v3542 = vadd.f32 %v3541, 0.001143296
        %v3543 = vmul.f32 %v3529, %v3542
        %v3544 = vadd.f32 %v3543, 0.014752088
        %v3545 = vmul.f32 %v3529, %v3544
        %v3546 = vadd.f32 %v3545, 0.112945676
        %v3547 = vmul.f32 %v3529, %v3546
        %v3548 = vadd.f32 %v3547, 0.4994258
        %v3549 = vmul.f32 %v3529, %v3548
        %v3550 = vadd.f32 %v3549, 1.0
        %v3551 = vrcp.pop %v3550
        %v3552 = vmul.f32 %v3550, %v3551
        %v3553 = vsub.f32 1.0, %v3552
        %v3554 = vmul.f32 %v3551, %v3553
        %v3555 = vadd.f32 %v3551, %v3554
        %vm3556 = vweird.f32 %v3550
        %vm3557 = vweird.f32 %v3551
        %vm3558 = vmor %vm3556, %vm3557
        %v3559 = vsel %vm3558, %v3551, %v3555
        %v3560 = vand.u32 2147483647, %v3550
        %vm3561 = vcmp.eq.f32.partialorder %v3560, 8.507059e+37
        %v3562 = vand.u32 %v3550, 2147483648
        %v3563 = vor.u32 1.1754944e-38, %v3562
        %v3564 = vsel %vm3561, %v3563, %v3559
        %v3565 = vmul.f32 %v3540, %v3564
        %v3566 = vmin.f32 %v3565, 1.0
        %v3567 = vmax.f32 %v3566, -1.0
        %v3568 = vmul.f32 %v3279, %v3279
        %v3569 = vmin.f32 16.0, %v3568
        %v3570 = vmul.f32 %v3569, 2.1237322e-06
        %v3571 = vadd.f32 %v3570, 0.00028619796
        %v3572 = vmul.f32 %v3569, %v3571
        %v3573 = vadd.f32 %v3572, 0.0036580483
        %v3574 = vmul.f32 %v3569, %v3573
        %v3575 = vadd.f32 %v3574, 0.05243302
        %v3576 = vmul.f32 %v3569, %v3575
        %v3577 = vadd.f32 %v3576, 0.18741608
        %v3578 = vmul.f32 %v3569, %v3577
        %v3579 = vadd.f32 %v3578, 1.1283791
        %v3580 = vmul.f32 %v3279, %v3579
        %v3581 = vmul.f32 %v3569, 3.8918573e-05
        %v3582 = vadd.f32 %v3581, 0.001143296
        %v3583 = vmul.f32 %v3569, %v3582
        %v3584 = vadd.f32 %v3583, 0.014752088
        %v3585 = vmul.f32 %v3569, %v3584
        %v3586 = vadd.f32 %v3585, 0.112945676
        %v3587 = vmul.f32 %v3569, %v3586
        %v3588 = vadd.f32 %v3587, 0.4994258
        %v3589 = vmul.f32 %v3569, %v3588
        %v3590 = vadd.f32 %v3589, 1.0
        %v3591 = vrcp.pop %v3590
        %v3592 = vmul.f32 %v3590, %v3591
        %v3593 = vsub.f32 1.0, %v3592
        %v3594 = vmul.f32 %v3591, %v3593
        %v3595 = vadd.f32 %v3591, %v3594
        %vm3596 = vweird.f32 %v3590
        %vm3597 = vweird.f32 %v3591
        %vm3598 = vmor %vm3596, %vm3597
        %v3599 = vsel %vm3598, %v3591, %v3595
        %v3600 = vand.u32 2147483647, %v3590
        %vm3601 = vcmp.eq.f32.partialorder %v3600, 8.507059e+37
        %v3602 = vand.u32 %v3590, 2147483648
        %v3603 = vor.u32 1.1754944e-38, %v3602
        %v3604 = vsel %vm3601, %v3603, %v3599
        %v3605 = vmul.f32 %v3580, %v3604
        %v3606 = vmin.f32 %v3605, 1.0
        %v3607 = vmax.f32 %v3606, -1.0
        %v3608 = vmul.f32 %v3280, %v3280
        %v3609 = vmin.f32 16.0, %v3608
        %v3610 = vmul.f32 %v3609, 2.1237322e-06
        %v3611 = vadd.f32 %v3610, 0.00028619796
        %v3612 = vmul.f32 %v3609, %v3611
        %v3613 = vadd.f32 %v3612, 0.0036580483
        %v3614 = vmul.f32 %v3609, %v3613
        %v3615 = vadd.f32 %v3614, 0.05243302
        %v3616 = vmul.f32 %v3609, %v3615
        %v3617 = vadd.f32 %v3616, 0.18741608
        %v3618 = vmul.f32 %v3609, %v3617
        %v3619 = vadd.f32 %v3618, 1.1283791
        %v3620 = vmul.f32 %v3280, %v3619
        %v3621 = vmul.f32 %v3609, 3.8918573e-05
        %v3622 = vadd.f32 %v3621, 0.001143296
        %v3623 = vmul.f32 %v3609, %v3622
        %v3624 = vadd.f32 %v3623, 0.014752088
        %v3625 = vmul.f32 %v3609, %v3624
        %v3626 = vadd.f32 %v3625, 0.112945676
        %v3627 = vmul.f32 %v3609, %v3626
        %v3628 = vadd.f32 %v3627, 0.4994258
        %v3629 = vmul.f32 %v3609, %v3628
        %v3630 = vadd.f32 %v3629, 1.0
        %v3631 = vrcp.pop %v3630
        %v3632 = vmul.f32 %v3630, %v3631
        %v3633 = vsub.f32 1.0, %v3632
        %v3634 = vmul.f32 %v3631, %v3633
        %v3635 = vadd.f32 %v3631, %v3634
        %vm3636 = vweird.f32 %v3630
        %vm3637 = vweird.f32 %v3631
        %vm3638 = vmor %vm3636, %vm3637
        %v3639 = vsel %vm3638, %v3631, %v3635
        %v3640 = vand.u32 2147483647, %v3630
        %vm3641 = vcmp.eq.f32.partialorder %v3640, 8.507059e+37
        %v3642 = vand.u32 %v3630, 2147483648
        %v3643 = vor.u32 1.1754944e-38, %v3642
        %v3644 = vsel %vm3641, %v3643, %v3639
        %v3645 = vmul.f32 %v3620, %v3644
        %v3646 = vmin.f32 %v3645, 1.0
        %v3647 = vmax.f32 %v3646, -1.0
        %v3648 = vmul.f32 %v3281, %v3281
        %v3649 = vmin.f32 16.0, %v3648
        %v3650 = vmul.f32 %v3649, 2.1237322e-06
        %v3651 = vadd.f32 %v3650, 0.00028619796
        %v3652 = vmul.f32 %v3649, %v3651
        %v3653 = vadd.f32 %v3652, 0.0036580483
        %v3654 = vmul.f32 %v3649, %v3653
        %v3655 = vadd.f32 %v3654, 0.05243302
        %v3656 = vmul.f32 %v3649, %v3655
        %v3657 = vadd.f32 %v3656, 0.18741608
        %v3658 = vmul.f32 %v3649, %v3657
        %v3659 = vadd.f32 %v3658, 1.1283791
        %v3660 = vmul.f32 %v3281, %v3659
        %v3661 = vmul.f32 %v3649, 3.8918573e-05
        %v3662 = vadd.f32 %v3661, 0.001143296
        %v3663 = vmul.f32 %v3649, %v3662
        %v3664 = vadd.f32 %v3663, 0.014752088
        %v3665 = vmul.f32 %v3649, %v3664
        %v3666 = vadd.f32 %v3665, 0.112945676
        %v3667 = vmul.f32 %v3649, %v3666
        %v3668 = vadd.f32 %v3667, 0.4994258
        %v3669 = vmul.f32 %v3649, %v3668
        %v3670 = vadd.f32 %v3669, 1.0
        %v3671 = vrcp.pop %v3670
        %v3672 = vmul.f32 %v3670, %v3671
        %v3673 = vsub.f32 1.0, %v3672
        %v3674 = vmul.f32 %v3671, %v3673
        %v3675 = vadd.f32 %v3671, %v3674
        %vm3676 = vweird.f32 %v3670
        %vm3677 = vweird.f32 %v3671
        %vm3678 = vmor %vm3676, %vm3677
        %v3679 = vsel %vm3678, %v3671, %v3675
        %v3680 = vand.u32 2147483647, %v3670
        %vm3681 = vcmp.eq.f32.partialorder %v3680, 8.507059e+37
        %v3682 = vand.u32 %v3670, 2147483648
        %v3683 = vor.u32 1.1754944e-38, %v3682
        %v3684 = vsel %vm3681, %v3683, %v3679
        %v3685 = vmul.f32 %v3660, %v3684
        %v3686 = vmin.f32 %v3685, 1.0
        %v3687 = vmax.f32 %v3686, -1.0
        %v3688 = vmul.f32 %v3282, %v3282
        %v3689 = vmin.f32 16.0, %v3688
        %v3690 = vmul.f32 %v3689, 2.1237322e-06
        %v3691 = vadd.f32 %v3690, 0.00028619796
        %v3692 = vmul.f32 %v3689, %v3691
        %v3693 = vadd.f32 %v3692, 0.0036580483
        %v3694 = vmul.f32 %v3689, %v3693
        %v3695 = vadd.f32 %v3694, 0.05243302
        %v3696 = vmul.f32 %v3689, %v3695
        %v3697 = vadd.f32 %v3696, 0.18741608
        %v3698 = vmul.f32 %v3689, %v3697
        %v3699 = vadd.f32 %v3698, 1.1283791
        %v3700 = vmul.f32 %v3282, %v3699
        %v3701 = vmul.f32 %v3689, 3.8918573e-05
        %v3702 = vadd.f32 %v3701, 0.001143296
        %v3703 = vmul.f32 %v3689, %v3702
        %v3704 = vadd.f32 %v3703, 0.014752088
        %v3705 = vmul.f32 %v3689, %v3704
        %v3706 = vadd.f32 %v3705, 0.112945676
        %v3707 = vmul.f32 %v3689, %v3706
        %v3708 = vadd.f32 %v3707, 0.4994258
        %v3709 = vmul.f32 %v3689, %v3708
        %v3710 = vadd.f32 %v3709, 1.0
        %v3711 = vrcp.pop %v3710
        %v3712 = vmul.f32 %v3710, %v3711
        %v3713 = vsub.f32 1.0, %v3712
        %v3714 = vmul.f32 %v3711, %v3713
        %v3715 = vadd.f32 %v3711, %v3714
        %vm3716 = vweird.f32 %v3710
        %vm3717 = vweird.f32 %v3711
        %vm3718 = vmor %vm3716, %vm3717
        %v3719 = vsel %vm3718, %v3711, %v3715
        %v3720 = vand.u32 2147483647, %v3710
        %vm3721 = vcmp.eq.f32.partialorder %v3720, 8.507059e+37
        %v3722 = vand.u32 %v3710, 2147483648
        %v3723 = vor.u32 1.1754944e-38, %v3722
        %v3724 = vsel %vm3721, %v3723, %v3719
        %v3725 = vmul.f32 %v3700, %v3724
        %v3726 = vmin.f32 %v3725, 1.0
        %v3727 = vmax.f32 %v3726, -1.0
        %v3728 = vmul.f32 %v3283, %v3283
        %v3729 = vmin.f32 16.0, %v3728
        %v3730 = vmul.f32 %v3729, 2.1237322e-06
        %v3731 = vadd.f32 %v3730, 0.00028619796
        %v3732 = vmul.f32 %v3729, %v3731
        %v3733 = vadd.f32 %v3732, 0.0036580483
        %v3734 = vmul.f32 %v3729, %v3733
        %v3735 = vadd.f32 %v3734, 0.05243302
        %v3736 = vmul.f32 %v3729, %v3735
        %v3737 = vadd.f32 %v3736, 0.18741608
        %v3738 = vmul.f32 %v3729, %v3737
        %v3739 = vadd.f32 %v3738, 1.1283791
        %v3740 = vmul.f32 %v3283, %v3739
        %v3741 = vmul.f32 %v3729, 3.8918573e-05
        %v3742 = vadd.f32 %v3741, 0.001143296
        %v3743 = vmul.f32 %v3729, %v3742
        %v3744 = vadd.f32 %v3743, 0.014752088
        %v3745 = vmul.f32 %v3729, %v3744
        %v3746 = vadd.f32 %v3745, 0.112945676
        %v3747 = vmul.f32 %v3729, %v3746
        %v3748 = vadd.f32 %v3747, 0.4994258
        %v3749 = vmul.f32 %v3729, %v3748
        %v3750 = vadd.f32 %v3749, 1.0
        %v3751 = vrcp.pop %v3750
        %v3752 = vmul.f32 %v3750, %v3751
        %v3753 = vsub.f32 1.0, %v3752
        %v3754 = vmul.f32 %v3751, %v3753
        %v3755 = vadd.f32 %v3751, %v3754
        %vm3756 = vweird.f32 %v3750
        %vm3757 = vweird.f32 %v3751
        %vm3758 = vmor %vm3756, %vm3757
        %v3759 = vsel %vm3758, %v3751, %v3755
        %v3760 = vand.u32 2147483647, %v3750
        %vm3761 = vcmp.eq.f32.partialorder %v3760, 8.507059e+37
        %v3762 = vand.u32 %v3750, 2147483648
        %v3763 = vor.u32 1.1754944e-38, %v3762
        %v3764 = vsel %vm3761, %v3763, %v3759
        %v3765 = vmul.f32 %v3740, %v3764
        %v3766 = vmin.f32 %v3765, 1.0
        %v3767 = vmax.f32 %v3766, -1.0
        %v3768 = vmul.f32 %v3284, %v3284
        %v3769 = vmin.f32 16.0, %v3768
        %v3770 = vmul.f32 %v3769, 2.1237322e-06
        %v3771 = vadd.f32 %v3770, 0.00028619796
        %v3772 = vmul.f32 %v3769, %v3771
        %v3773 = vadd.f32 %v3772, 0.0036580483
        %v3774 = vmul.f32 %v3769, %v3773
        %v3775 = vadd.f32 %v3774, 0.05243302
        %v3776 = vmul.f32 %v3769, %v3775
        %v3777 = vadd.f32 %v3776, 0.18741608
        %v3778 = vmul.f32 %v3769, %v3777
        %v3779 = vadd.f32 %v3778, 1.1283791
        %v3780 = vmul.f32 %v3284, %v3779
        %v3781 = vmul.f32 %v3769, 3.8918573e-05
        %v3782 = vadd.f32 %v3781, 0.001143296
        %v3783 = vmul.f32 %v3769, %v3782
        %v3784 = vadd.f32 %v3783, 0.014752088
        %v3785 = vmul.f32 %v3769, %v3784
        %v3786 = vadd.f32 %v3785, 0.112945676
        %v3787 = vmul.f32 %v3769, %v3786
        %v3788 = vadd.f32 %v3787, 0.4994258
        %v3789 = vmul.f32 %v3769, %v3788
        %v3790 = vadd.f32 %v3789, 1.0
        %v3791 = vrcp.pop %v3790
        %v3792 = vmul.f32 %v3790, %v3791
        %v3793 = vsub.f32 1.0, %v3792
        %v3794 = vmul.f32 %v3791, %v3793
        %v3795 = vadd.f32 %v3791, %v3794
        %vm3796 = vweird.f32 %v3790
        %vm3797 = vweird.f32 %v3791
        %vm3798 = vmor %vm3796, %vm3797
        %v3799 = vsel %vm3798, %v3791, %v3795
        %v3800 = vand.u32 2147483647, %v3790
        %vm3801 = vcmp.eq.f32.partialorder %v3800, 8.507059e+37
        %v3802 = vand.u32 %v3790, 2147483648
        %v3803 = vor.u32 1.1754944e-38, %v3802
        %v3804 = vsel %vm3801, %v3803, %v3799
        %v3805 = vmul.f32 %v3780, %v3804
        %v3806 = vmin.f32 %v3805, 1.0
        %v3807 = vmax.f32 %v3806, -1.0
        %v3808 = vmul.f32 %v3285, %v3285
        %v3809 = vmin.f32 16.0, %v3808
        %v3810 = vmul.f32 %v3809, 2.1237322e-06
        %v3811 = vadd.f32 %v3810, 0.00028619796
        %v3812 = vmul.f32 %v3809, %v3811
        %v3813 = vadd.f32 %v3812, 0.0036580483
        %v3814 = vmul.f32 %v3809, %v3813
        %v3815 = vadd.f32 %v3814, 0.05243302
        %v3816 = vmul.f32 %v3809, %v3815
        %v3817 = vadd.f32 %v3816, 0.18741608
        %v3818 = vmul.f32 %v3809, %v3817
        %v3819 = vadd.f32 %v3818, 1.1283791
        %v3820 = vmul.f32 %v3285, %v3819
        %v3821 = vmul.f32 %v3809, 3.8918573e-05
        %v3822 = vadd.f32 %v3821, 0.001143296
        %v3823 = vmul.f32 %v3809, %v3822
        %v3824 = vadd.f32 %v3823, 0.014752088
        %v3825 = vmul.f32 %v3809, %v3824
        %v3826 = vadd.f32 %v3825, 0.112945676
        %v3827 = vmul.f32 %v3809, %v3826
        %v3828 = vadd.f32 %v3827, 0.4994258
        %v3829 = vmul.f32 %v3809, %v3828
        %v3830 = vadd.f32 %v3829, 1.0
        %v3831 = vrcp.pop %v3830
        %v3832 = vmul.f32 %v3830, %v3831
        %v3833 = vsub.f32 1.0, %v3832
        %v3834 = vmul.f32 %v3831, %v3833
        %v3835 = vadd.f32 %v3831, %v3834
        %vm3836 = vweird.f32 %v3830
        %vm3837 = vweird.f32 %v3831
        %vm3838 = vmor %vm3836, %vm3837
        %v3839 = vsel %vm3838, %v3831, %v3835
        %v3840 = vand.u32 2147483647, %v3830
        %vm3841 = vcmp.eq.f32.partialorder %v3840, 8.507059e+37
        %v3842 = vand.u32 %v3830, 2147483648
        %v3843 = vor.u32 1.1754944e-38, %v3842
        %v3844 = vsel %vm3841, %v3843, %v3839
        %v3845 = vmul.f32 %v3820, %v3844
        %v3846 = vmin.f32 %v3845, 1.0
        %v3847 = vmax.f32 %v3846, -1.0
        %v3848 = vmul.f32 %v3286, %v3286
        %v3849 = vmin.f32 16.0, %v3848
        %v3850 = vmul.f32 %v3849, 2.1237322e-06
        %v3851 = vadd.f32 %v3850, 0.00028619796
        %v3852 = vmul.f32 %v3849, %v3851
        %v3853 = vadd.f32 %v3852, 0.0036580483
        %v3854 = vmul.f32 %v3849, %v3853
        %v3855 = vadd.f32 %v3854, 0.05243302
        %v3856 = vmul.f32 %v3849, %v3855
        %v3857 = vadd.f32 %v3856, 0.18741608
        %v3858 = vmul.f32 %v3849, %v3857
        %v3859 = vadd.f32 %v3858, 1.1283791
        %v3860 = vmul.f32 %v3286, %v3859
        %v3861 = vmul.f32 %v3849, 3.8918573e-05
        %v3862 = vadd.f32 %v3861, 0.001143296
        %v3863 = vmul.f32 %v3849, %v3862
        %v3864 = vadd.f32 %v3863, 0.014752088
        %v3865 = vmul.f32 %v3849, %v3864
        %v3866 = vadd.f32 %v3865, 0.112945676
        %v3867 = vmul.f32 %v3849, %v3866
        %v3868 = vadd.f32 %v3867, 0.4994258
        %v3869 = vmul.f32 %v3849, %v3868
        %v3870 = vadd.f32 %v3869, 1.0
        %v3871 = vrcp.pop %v3870
        %v3872 = vmul.f32 %v3870, %v3871
        %v3873 = vsub.f32 1.0, %v3872
        %v3874 = vmul.f32 %v3871, %v3873
        %v3875 = vadd.f32 %v3871, %v3874
        %vm3876 = vweird.f32 %v3870
        %vm3877 = vweird.f32 %v3871
        %vm3878 = vmor %vm3876, %vm3877
        %v3879 = vsel %vm3878, %v3871, %v3875
        %v3880 = vand.u32 2147483647, %v3870
        %vm3881 = vcmp.eq.f32.partialorder %v3880, 8.507059e+37
        %v3882 = vand.u32 %v3870, 2147483648
        %v3883 = vor.u32 1.1754944e-38, %v3882
        %v3884 = vsel %vm3881, %v3883, %v3879
        %v3885 = vmul.f32 %v3860, %v3884
        %v3886 = vmin.f32 %v3885, 1.0
        %v3887 = vmax.f32 %v3886, -1.0
        %v3888 = vmul.f32 %v3287, %v3287
        %v3889 = vmin.f32 16.0, %v3888
        %v3890 = vmul.f32 %v3889, 2.1237322e-06
        %v3891 = vadd.f32 %v3890, 0.00028619796
        %v3892 = vmul.f32 %v3889, %v3891
        %v3893 = vadd.f32 %v3892, 0.0036580483
        %v3894 = vmul.f32 %v3889, %v3893
        %v3895 = vadd.f32 %v3894, 0.05243302
        %v3896 = vmul.f32 %v3889, %v3895
        %v3897 = vadd.f32 %v3896, 0.18741608
        %v3898 = vmul.f32 %v3889, %v3897
        %v3899 = vadd.f32 %v3898, 1.1283791
        %v3900 = vmul.f32 %v3287, %v3899
        %v3901 = vmul.f32 %v3889, 3.8918573e-05
        %v3902 = vadd.f32 %v3901, 0.001143296
        %v3903 = vmul.f32 %v3889, %v3902
        %v3904 = vadd.f32 %v3903, 0.014752088
        %v3905 = vmul.f32 %v3889, %v3904
        %v3906 = vadd.f32 %v3905, 0.112945676
        %v3907 = vmul.f32 %v3889, %v3906
        %v3908 = vadd.f32 %v3907, 0.4994258
        %v3909 = vmul.f32 %v3889, %v3908
        %v3910 = vadd.f32 %v3909, 1.0
        %v3911 = vrcp.pop %v3910
        %v3912 = vmul.f32 %v3910, %v3911
        %v3913 = vsub.f32 1.0, %v3912
        %v3914 = vmul.f32 %v3911, %v3913
        %v3915 = vadd.f32 %v3911, %v3914
        %vm3916 = vweird.f32 %v3910
        %vm3917 = vweird.f32 %v3911
        %vm3918 = vmor %vm3916, %vm3917
        %v3919 = vsel %vm3918, %v3911, %v3915
        %v3920 = vand.u32 2147483647, %v3910
        %vm3921 = vcmp.eq.f32.partialorder %v3920, 8.507059e+37
        %v3922 = vand.u32 %v3910, 2147483648
        %v3923 = vor.u32 1.1754944e-38, %v3922
        %v3924 = vsel %vm3921, %v3923, %v3919
        %v3925 = vmul.f32 %v3900, %v3924
        %v3926 = vmin.f32 %v3925, 1.0
        %v3927 = vmax.f32 %v3926, -1.0
        %v3928 = vadd.f32 %v3327, 1.0
        %v3929 = vadd.f32 %v3367, 1.0
        %v3930 = vadd.f32 %v3407, 1.0
        %v3931 = vadd.f32 %v3447, 1.0
        %v3932 = vadd.f32 %v3487, 1.0
        %v3933 = vadd.f32 %v3527, 1.0
        %v3934 = vadd.f32 %v3567, 1.0
        %v3935 = vadd.f32 %v3607, 1.0
        %v3936 = vadd.f32 %v3647, 1.0
        %v3937 = vadd.f32 %v3687, 1.0
        %v3938 = vadd.f32 %v3727, 1.0
        %v3939 = vadd.f32 %v3767, 1.0
        %v3940 = vadd.f32 %v3807, 1.0
        %v3941 = vadd.f32 %v3847, 1.0
        %v3942 = vadd.f32 %v3887, 1.0
        %v3943 = vadd.f32 %v3927, 1.0
        %v3944 = vmul.f32 %v3256, %v3928
        %v3945 = vmul.f32 %v3257, %v3929
        %v3946 = vmul.f32 %v3258, %v3930
        %v3947 = vmul.f32 %v3259, %v3931
        %v3948 = vmul.f32 %v3260, %v3932
        %v3949 = vmul.f32 %v3261, %v3933
        %v3950 = vmul.f32 %v3262, %v3934
        %v3951 = vmul.f32 %v3263, %v3935
        %v3952 = vmul.f32 %v3264, %v3936
        %v3953 = vmul.f32 %v3265, %v3937
        %v3954 = vmul.f32 %v3266, %v3938
        %v3955 = vmul.f32 %v3267, %v3939
        %v3956 = vmul.f32 %v3268, %v3940
        %v3957 = vmul.f32 %v3269, %v3941
        %v3958 = vmul.f32 %v3270, %v3942
        %v3959 = vmul.f32 %v3271, %v3943
        %v3960 = vpack.c.bf16 %v3945, %v3944
        %v3961 = vpack.c.bf16 %v3947, %v3946
        %v3962 = vpack.c.bf16 %v3949, %v3948
        %v3963 = vpack.c.bf16 %v3951, %v3950
        %v3964 = vpack.c.bf16 %v3953, %v3952
        %v3965 = vpack.c.bf16 %v3955, %v3954
        %v3966 = vpack.c.bf16 %v3957, %v3956
        %v3967 = vpack.c.bf16 %v3959, %v3958
        %v3968 = vld [vmem:[%s8] sm:$0xf]
        %v3969 = vld [vmem:[%s8 + $0x4] sm:$0xf]
        %v3970 = vld [vmem:[%s8 + $0x8] sm:$0xf]
        %v3971 = vld [vmem:[%s8 + $0xc] sm:$0xf]
        %v3972 = vld [vmem:[%s8 + $0x10] sm:$0xf]
        %v3973 = vld [vmem:[%s8 + $0x14] sm:$0xf]
        %v3974 = vld [vmem:[%s8 + $0x18] sm:$0xf]
        %v3975 = vld [vmem:[%s8 + $0x1c] sm:$0xf]
        %v3976 = vld [vmem:[%s8 + $0x20] sm:$0xf]
        %v3977 = vld [vmem:[%s8 + $0x24] sm:$0xf]
        %v3978 = vld [vmem:[%s8 + $0x28] sm:$0xf]
        %v3979 = vld [vmem:[%s8 + $0x2c] sm:$0xf]
        %v3980 = vld [vmem:[%s8 + $0x30] sm:$0xf]
        %v3981 = vld [vmem:[%s8 + $0x34] sm:$0xf]
        %v3982 = vld [vmem:[%s8 + $0x38] sm:$0xf]
        %v3983 = vld [vmem:[%s8 + $0x3c] sm:$0xf]
        %v3984 = vld [vmem:[%s9] sm:$0x1]
        %v3986 = vperm.slane %v3984, 0
        %v4004 = vunpack.c.l.b16 %v3968
        %v4005 = vunpack.c.l.b16 %v3969
        %v4006 = vunpack.c.l.b16 %v3970
        %v4007 = vunpack.c.l.b16 %v3971
        %v4008 = vunpack.c.l.b16 %v3972
        %v4009 = vunpack.c.l.b16 %v3973
        %v4010 = vunpack.c.l.b16 %v3974
        %v4011 = vunpack.c.l.b16 %v3975
        %v4012 = vunpack.c.l.b16 %v3976
        %v4013 = vunpack.c.l.b16 %v3977
        %v4014 = vunpack.c.l.b16 %v3978
        %v4015 = vunpack.c.l.b16 %v3979
        %v4016 = vunpack.c.l.b16 %v3980
        %v4017 = vunpack.c.l.b16 %v3981
        %v4018 = vunpack.c.l.b16 %v3982
        %v4019 = vunpack.c.l.b16 %v3983
        %v4020 = vpack.c.b16 %v4005, %v4004
        %v4021 = vpack.c.b16 %v4007, %v4006
        %v4022 = vpack.c.b16 %v4009, %v4008
        %v4023 = vpack.c.b16 %v4011, %v4010
        %v4024 = vpack.c.b16 %v4013, %v4012
        %v4025 = vpack.c.b16 %v4015, %v4014
        %v4026 = vpack.c.b16 %v4017, %v4016
        %v4027 = vpack.c.b16 %v4019, %v4018
        %4036 = vmatpush.bf16.msra.mxu0 %v4027
        %4037 = vmatpush.bf16.msra.mxu0 %v4026
        %4038 = vmatpush.bf16.msra.mxu0 %v4025
        %4039 = vmatpush.bf16.msra.mxu0 %v4024
        %4040 = vmatpush.bf16.msra.mxu0 %v4023
        %4041 = vmatpush.bf16.msra.mxu0 %v4022
        %4042 = vmatpush.bf16.msra.mxu0 %v4021
        %4043 = vmatpush.bf16.msra.mxu0 %v4020
        %4044 = vmatmul.bf16.gmra.mxu0 %v3960
        %v4045 = vpop.f32.mrf.mxu0
        %v4046 = vadd.f32 %v3986, %v4045
        %v4047 = vpop.f32.mrf.mxu0
        %v4048 = vadd.f32 %v3986, %v4047
        %4049 = vmatmul.bf16.gmra.mxu0 %v3961
        %v4050 = vpop.f32.mrf.mxu0
        %v4051 = vadd.f32 %v3986, %v4050
        %v4052 = vpop.f32.mrf.mxu0
        %v4053 = vadd.f32 %v3986, %v4052
        %4054 = vmatmul.bf16.gmra.mxu0 %v3962
        %v4055 = vpop.f32.mrf.mxu0
        %v4056 = vadd.f32 %v3986, %v4055
        %v4057 = vpop.f32.mrf.mxu0
        %v4058 = vadd.f32 %v3986, %v4057
        %4059 = vmatmul.bf16.gmra.mxu0 %v3963
        %v4060 = vpop.f32.mrf.mxu0
        %v4061 = vadd.f32 %v3986, %v4060
        %v4062 = vpop.f32.mrf.mxu0
        %v4063 = vadd.f32 %v3986, %v4062
        %4064 = vmatmul.bf16.gmra.mxu0 %v3964
        %v4065 = vpop.f32.mrf.mxu0
        %v4066 = vadd.f32 %v3986, %v4065
        %v4067 = vpop.f32.mrf.mxu0
        %v4068 = vadd.f32 %v3986, %v4067
        %4069 = vmatmul.bf16.gmra.mxu0 %v3965
        %v4070 = vpop.f32.mrf.mxu0
        %v4071 = vadd.f32 %v3986, %v4070
        %v4072 = vpop.f32.mrf.mxu0
        %v4073 = vadd.f32 %v3986, %v4072
        %4074 = vmatmul.bf16.gmra.mxu0 %v3966
        %v4075 = vpop.f32.mrf.mxu0
        %v4076 = vadd.f32 %v3986, %v4075
        %v4077 = vpop.f32.mrf.mxu0
        %v4078 = vadd.f32 %v3986, %v4077
        %4079 = vmatmul.bf16.gmra.mxu0 %v3967
        %v4080 = vpop.f32.mrf.mxu0
        %v4081 = vadd.f32 %v3986, %v4080
        %v4082 = vpop.f32.mrf.mxu0
        %v4083 = vadd.f32 %v3986, %v4082
        %4084 = vdwg.mxu0
        %v4085 = vmul.f32 %v4046, 0.5
        %v4086 = vmul.f32 %v4048, 0.5
        %v4087 = vmul.f32 %v4051, 0.5
        %v4088 = vmul.f32 %v4053, 0.5
        %v4089 = vmul.f32 %v4056, 0.5
        %v4090 = vmul.f32 %v4058, 0.5
        %v4091 = vmul.f32 %v4061, 0.5
        %v4092 = vmul.f32 %v4063, 0.5
        %v4093 = vmul.f32 %v4066, 0.5
        %v4094 = vmul.f32 %v4068, 0.5
        %v4095 = vmul.f32 %v4071, 0.5
        %v4096 = vmul.f32 %v4073, 0.5
        %v4097 = vmul.f32 %v4076, 0.5
        %v4098 = vmul.f32 %v4078, 0.5
        %v4099 = vmul.f32 %v4081, 0.5
        %v4100 = vmul.f32 %v4083, 0.5
        %v4101 = vmul.f32 %v4046, 0.70710677
        %v4102 = vmul.f32 %v4048, 0.70710677
        %v4103 = vmul.f32 %v4051, 0.70710677
        %v4104 = vmul.f32 %v4053, 0.70710677
        %v4105 = vmul.f32 %v4056, 0.70710677
        %v4106 = vmul.f32 %v4058, 0.70710677
        %v4107 = vmul.f32 %v4061, 0.70710677
        %v4108 = vmul.f32 %v4063, 0.70710677
        %v4109 = vmul.f32 %v4066, 0.70710677
        %v4110 = vmul.f32 %v4068, 0.70710677
        %v4111 = vmul.f32 %v4071, 0.70710677
        %v4112 = vmul.f32 %v4073, 0.70710677
        %v4113 = vmul.f32 %v4076, 0.70710677
        %v4114 = vmul.f32 %v4078, 0.70710677
        %v4115 = vmul.f32 %v4081, 0.70710677
        %v4116 = vmul.f32 %v4083, 0.70710677
        %v4117 = vmul.f32 %v4101, %v4101
        %v4118 = vmin.f32 16.0, %v4117
        %v4119 = vmul.f32 %v4118, 2.1237322e-06
        %v4120 = vadd.f32 %v4119, 0.00028619796
        %v4121 = vmul.f32 %v4118, %v4120
        %v4122 = vadd.f32 %v4121, 0.0036580483
        %v4123 = vmul.f32 %v4118, %v4122
        %v4124 = vadd.f32 %v4123, 0.05243302
        %v4125 = vmul.f32 %v4118, %v4124
        %v4126 = vadd.f32 %v4125, 0.18741608
        %v4127 = vmul.f32 %v4118, %v4126
        %v4128 = vadd.f32 %v4127, 1.1283791
        %v4129 = vmul.f32 %v4101, %v4128
        %v4130 = vmul.f32 %v4118, 3.8918573e-05
        %v4131 = vadd.f32 %v4130, 0.001143296
        %v4132 = vmul.f32 %v4118, %v4131
        %v4133 = vadd.f32 %v4132, 0.014752088
        %v4134 = vmul.f32 %v4118, %v4133
        %v4135 = vadd.f32 %v4134, 0.112945676
        %v4136 = vmul.f32 %v4118, %v4135
        %v4137 = vadd.f32 %v4136, 0.4994258
        %v4138 = vmul.f32 %v4118, %v4137
        %v4139 = vadd.f32 %v4138, 1.0
        %v4140 = vrcp.pop %v4139
        %v4141 = vmul.f32 %v4139, %v4140
        %v4142 = vsub.f32 1.0, %v4141
        %v4143 = vmul.f32 %v4140, %v4142
        %v4144 = vadd.f32 %v4140, %v4143
        %vm4145 = vweird.f32 %v4139
        %vm4146 = vweird.f32 %v4140
        %vm4147 = vmor %vm4145, %vm4146
        %v4148 = vsel %vm4147, %v4140, %v4144
        %v4149 = vand.u32 2147483647, %v4139
        %vm4150 = vcmp.eq.f32.partialorder %v4149, 8.507059e+37
        %v4151 = vand.u32 %v4139, 2147483648
        %v4152 = vor.u32 1.1754944e-38, %v4151
        %v4153 = vsel %vm4150, %v4152, %v4148
        %v4154 = vmul.f32 %v4129, %v4153
        %v4155 = vmin.f32 %v4154, 1.0
        %v4156 = vmax.f32 %v4155, -1.0
        %v4157 = vmul.f32 %v4102, %v4102
        %v4158 = vmin.f32 16.0, %v4157
        %v4159 = vmul.f32 %v4158, 2.1237322e-06
        %v4160 = vadd.f32 %v4159, 0.00028619796
        %v4161 = vmul.f32 %v4158, %v4160
        %v4162 = vadd.f32 %v4161, 0.0036580483
        %v4163 = vmul.f32 %v4158, %v4162
        %v4164 = vadd.f32 %v4163, 0.05243302
        %v4165 = vmul.f32 %v4158, %v4164
        %v4166 = vadd.f32 %v4165, 0.18741608
        %v4167 = vmul.f32 %v4158, %v4166
        %v4168 = vadd.f32 %v4167, 1.1283791
        %v4169 = vmul.f32 %v4102, %v4168
        %v4170 = vmul.f32 %v4158, 3.8918573e-05
        %v4171 = vadd.f32 %v4170, 0.001143296
        %v4172 = vmul.f32 %v4158, %v4171
        %v4173 = vadd.f32 %v4172, 0.014752088
        %v4174 = vmul.f32 %v4158, %v4173
        %v4175 = vadd.f32 %v4174, 0.112945676
        %v4176 = vmul.f32 %v4158, %v4175
        %v4177 = vadd.f32 %v4176, 0.4994258
        %v4178 = vmul.f32 %v4158, %v4177
        %v4179 = vadd.f32 %v4178, 1.0
        %v4180 = vrcp.pop %v4179
        %v4181 = vmul.f32 %v4179, %v4180
        %v4182 = vsub.f32 1.0, %v4181
        %v4183 = vmul.f32 %v4180, %v4182
        %v4184 = vadd.f32 %v4180, %v4183
        %vm4185 = vweird.f32 %v4179
        %vm4186 = vweird.f32 %v4180
        %vm4187 = vmor %vm4185, %vm4186
        %v4188 = vsel %vm4187, %v4180, %v4184
        %v4189 = vand.u32 2147483647, %v4179
        %vm4190 = vcmp.eq.f32.partialorder %v4189, 8.507059e+37
        %v4191 = vand.u32 %v4179, 2147483648
        %v4192 = vor.u32 1.1754944e-38, %v4191
        %v4193 = vsel %vm4190, %v4192, %v4188
        %v4194 = vmul.f32 %v4169, %v4193
        %v4195 = vmin.f32 %v4194, 1.0
        %v4196 = vmax.f32 %v4195, -1.0
        %v4197 = vmul.f32 %v4103, %v4103
        %v4198 = vmin.f32 16.0, %v4197
        %v4199 = vmul.f32 %v4198, 2.1237322e-06
        %v4200 = vadd.f32 %v4199, 0.00028619796
        %v4201 = vmul.f32 %v4198, %v4200
        %v4202 = vadd.f32 %v4201, 0.0036580483
        %v4203 = vmul.f32 %v4198, %v4202
        %v4204 = vadd.f32 %v4203, 0.05243302
        %v4205 = vmul.f32 %v4198, %v4204
        %v4206 = vadd.f32 %v4205, 0.18741608
        %v4207 = vmul.f32 %v4198, %v4206
        %v4208 = vadd.f32 %v4207, 1.1283791
        %v4209 = vmul.f32 %v4103, %v4208
        %v4210 = vmul.f32 %v4198, 3.8918573e-05
        %v4211 = vadd.f32 %v4210, 0.001143296
        %v4212 = vmul.f32 %v4198, %v4211
        %v4213 = vadd.f32 %v4212, 0.014752088
        %v4214 = vmul.f32 %v4198, %v4213
        %v4215 = vadd.f32 %v4214, 0.112945676
        %v4216 = vmul.f32 %v4198, %v4215
        %v4217 = vadd.f32 %v4216, 0.4994258
        %v4218 = vmul.f32 %v4198, %v4217
        %v4219 = vadd.f32 %v4218, 1.0
        %v4220 = vrcp.pop %v4219
        %v4221 = vmul.f32 %v4219, %v4220
        %v4222 = vsub.f32 1.0, %v4221
        %v4223 = vmul.f32 %v4220, %v4222
        %v4224 = vadd.f32 %v4220, %v4223
        %vm4225 = vweird.f32 %v4219
        %vm4226 = vweird.f32 %v4220
        %vm4227 = vmor %vm4225, %vm4226
        %v4228 = vsel %vm4227, %v4220, %v4224
        %v4229 = vand.u32 2147483647, %v4219
        %vm4230 = vcmp.eq.f32.partialorder %v4229, 8.507059e+37
        %v4231 = vand.u32 %v4219, 2147483648
        %v4232 = vor.u32 1.1754944e-38, %v4231
        %v4233 = vsel %vm4230, %v4232, %v4228
        %v4234 = vmul.f32 %v4209, %v4233
        %v4235 = vmin.f32 %v4234, 1.0
        %v4236 = vmax.f32 %v4235, -1.0
        %v4237 = vmul.f32 %v4104, %v4104
        %v4238 = vmin.f32 16.0, %v4237
        %v4239 = vmul.f32 %v4238, 2.1237322e-06
        %v4240 = vadd.f32 %v4239, 0.00028619796
        %v4241 = vmul.f32 %v4238, %v4240
        %v4242 = vadd.f32 %v4241, 0.0036580483
        %v4243 = vmul.f32 %v4238, %v4242
        %v4244 = vadd.f32 %v4243, 0.05243302
        %v4245 = vmul.f32 %v4238, %v4244
        %v4246 = vadd.f32 %v4245, 0.18741608
        %v4247 = vmul.f32 %v4238, %v4246
        %v4248 = vadd.f32 %v4247, 1.1283791
        %v4249 = vmul.f32 %v4104, %v4248
        %v4250 = vmul.f32 %v4238, 3.8918573e-05
        %v4251 = vadd.f32 %v4250, 0.001143296
        %v4252 = vmul.f32 %v4238, %v4251
        %v4253 = vadd.f32 %v4252, 0.014752088
        %v4254 = vmul.f32 %v4238, %v4253
        %v4255 = vadd.f32 %v4254, 0.112945676
        %v4256 = vmul.f32 %v4238, %v4255
        %v4257 = vadd.f32 %v4256, 0.4994258
        %v4258 = vmul.f32 %v4238, %v4257
        %v4259 = vadd.f32 %v4258, 1.0
        %v4260 = vrcp.pop %v4259
        %v4261 = vmul.f32 %v4259, %v4260
        %v4262 = vsub.f32 1.0, %v4261
        %v4263 = vmul.f32 %v4260, %v4262
        %v4264 = vadd.f32 %v4260, %v4263
        %vm4265 = vweird.f32 %v4259
        %vm4266 = vweird.f32 %v4260
        %vm4267 = vmor %vm4265, %vm4266
        %v4268 = vsel %vm4267, %v4260, %v4264
        %v4269 = vand.u32 2147483647, %v4259
        %vm4270 = vcmp.eq.f32.partialorder %v4269, 8.507059e+37
        %v4271 = vand.u32 %v4259, 2147483648
        %v4272 = vor.u32 1.1754944e-38, %v4271
        %v4273 = vsel %vm4270, %v4272, %v4268
        %v4274 = vmul.f32 %v4249, %v4273
        %v4275 = vmin.f32 %v4274, 1.0
        %v4276 = vmax.f32 %v4275, -1.0
        %v4277 = vmul.f32 %v4105, %v4105
        %v4278 = vmin.f32 16.0, %v4277
        %v4279 = vmul.f32 %v4278, 2.1237322e-06
        %v4280 = vadd.f32 %v4279, 0.00028619796
        %v4281 = vmul.f32 %v4278, %v4280
        %v4282 = vadd.f32 %v4281, 0.0036580483
        %v4283 = vmul.f32 %v4278, %v4282
        %v4284 = vadd.f32 %v4283, 0.05243302
        %v4285 = vmul.f32 %v4278, %v4284
        %v4286 = vadd.f32 %v4285, 0.18741608
        %v4287 = vmul.f32 %v4278, %v4286
        %v4288 = vadd.f32 %v4287, 1.1283791
        %v4289 = vmul.f32 %v4105, %v4288
        %v4290 = vmul.f32 %v4278, 3.8918573e-05
        %v4291 = vadd.f32 %v4290, 0.001143296
        %v4292 = vmul.f32 %v4278, %v4291
        %v4293 = vadd.f32 %v4292, 0.014752088
        %v4294 = vmul.f32 %v4278, %v4293
        %v4295 = vadd.f32 %v4294, 0.112945676
        %v4296 = vmul.f32 %v4278, %v4295
        %v4297 = vadd.f32 %v4296, 0.4994258
        %v4298 = vmul.f32 %v4278, %v4297
        %v4299 = vadd.f32 %v4298, 1.0
        %v4300 = vrcp.pop %v4299
        %v4301 = vmul.f32 %v4299, %v4300
        %v4302 = vsub.f32 1.0, %v4301
        %v4303 = vmul.f32 %v4300, %v4302
        %v4304 = vadd.f32 %v4300, %v4303
        %vm4305 = vweird.f32 %v4299
        %vm4306 = vweird.f32 %v4300
        %vm4307 = vmor %vm4305, %vm4306
        %v4308 = vsel %vm4307, %v4300, %v4304
        %v4309 = vand.u32 2147483647, %v4299
        %vm4310 = vcmp.eq.f32.partialorder %v4309, 8.507059e+37
        %v4311 = vand.u32 %v4299, 2147483648
        %v4312 = vor.u32 1.1754944e-38, %v4311
        %v4313 = vsel %vm4310, %v4312, %v4308
        %v4314 = vmul.f32 %v4289, %v4313
        %v4315 = vmin.f32 %v4314, 1.0
        %v4316 = vmax.f32 %v4315, -1.0
        %v4317 = vmul.f32 %v4106, %v4106
        %v4318 = vmin.f32 16.0, %v4317
        %v4319 = vmul.f32 %v4318, 2.1237322e-06
        %v4320 = vadd.f32 %v4319, 0.00028619796
        %v4321 = vmul.f32 %v4318, %v4320
        %v4322 = vadd.f32 %v4321, 0.0036580483
        %v4323 = vmul.f32 %v4318, %v4322
        %v4324 = vadd.f32 %v4323, 0.05243302
        %v4325 = vmul.f32 %v4318, %v4324
        %v4326 = vadd.f32 %v4325, 0.18741608
        %v4327 = vmul.f32 %v4318, %v4326
        %v4328 = vadd.f32 %v4327, 1.1283791
        %v4329 = vmul.f32 %v4106, %v4328
        %v4330 = vmul.f32 %v4318, 3.8918573e-05
        %v4331 = vadd.f32 %v4330, 0.001143296
        %v4332 = vmul.f32 %v4318, %v4331
        %v4333 = vadd.f32 %v4332, 0.014752088
        %v4334 = vmul.f32 %v4318, %v4333
        %v4335 = vadd.f32 %v4334, 0.112945676
        %v4336 = vmul.f32 %v4318, %v4335
        %v4337 = vadd.f32 %v4336, 0.4994258
        %v4338 = vmul.f32 %v4318, %v4337
        %v4339 = vadd.f32 %v4338, 1.0
        %v4340 = vrcp.pop %v4339
        %v4341 = vmul.f32 %v4339, %v4340
        %v4342 = vsub.f32 1.0, %v4341
        %v4343 = vmul.f32 %v4340, %v4342
        %v4344 = vadd.f32 %v4340, %v4343
        %vm4345 = vweird.f32 %v4339
        %vm4346 = vweird.f32 %v4340
        %vm4347 = vmor %vm4345, %vm4346
        %v4348 = vsel %vm4347, %v4340, %v4344
        %v4349 = vand.u32 2147483647, %v4339
        %vm4350 = vcmp.eq.f32.partialorder %v4349, 8.507059e+37
        %v4351 = vand.u32 %v4339, 2147483648
        %v4352 = vor.u32 1.1754944e-38, %v4351
        %v4353 = vsel %vm4350, %v4352, %v4348
        %v4354 = vmul.f32 %v4329, %v4353
        %v4355 = vmin.f32 %v4354, 1.0
        %v4356 = vmax.f32 %v4355, -1.0
        %v4357 = vmul.f32 %v4107, %v4107
        %v4358 = vmin.f32 16.0, %v4357
        %v4359 = vmul.f32 %v4358, 2.1237322e-06
        %v4360 = vadd.f32 %v4359, 0.00028619796
        %v4361 = vmul.f32 %v4358, %v4360
        %v4362 = vadd.f32 %v4361, 0.0036580483
        %v4363 = vmul.f32 %v4358, %v4362
        %v4364 = vadd.f32 %v4363, 0.05243302
        %v4365 = vmul.f32 %v4358, %v4364
        %v4366 = vadd.f32 %v4365, 0.18741608
        %v4367 = vmul.f32 %v4358, %v4366
        %v4368 = vadd.f32 %v4367, 1.1283791
        %v4369 = vmul.f32 %v4107, %v4368
        %v4370 = vmul.f32 %v4358, 3.8918573e-05
        %v4371 = vadd.f32 %v4370, 0.001143296
        %v4372 = vmul.f32 %v4358, %v4371
        %v4373 = vadd.f32 %v4372, 0.014752088
        %v4374 = vmul.f32 %v4358, %v4373
        %v4375 = vadd.f32 %v4374, 0.112945676
        %v4376 = vmul.f32 %v4358, %v4375
        %v4377 = vadd.f32 %v4376, 0.4994258
        %v4378 = vmul.f32 %v4358, %v4377
        %v4379 = vadd.f32 %v4378, 1.0
        %v4380 = vrcp.pop %v4379
        %v4381 = vmul.f32 %v4379, %v4380
        %v4382 = vsub.f32 1.0, %v4381
        %v4383 = vmul.f32 %v4380, %v4382
        %v4384 = vadd.f32 %v4380, %v4383
        %vm4385 = vweird.f32 %v4379
        %vm4386 = vweird.f32 %v4380
        %vm4387 = vmor %vm4385, %vm4386
        %v4388 = vsel %vm4387, %v4380, %v4384
        %v4389 = vand.u32 2147483647, %v4379
        %vm4390 = vcmp.eq.f32.partialorder %v4389, 8.507059e+37
        %v4391 = vand.u32 %v4379, 2147483648
        %v4392 = vor.u32 1.1754944e-38, %v4391
        %v4393 = vsel %vm4390, %v4392, %v4388
        %v4394 = vmul.f32 %v4369, %v4393
        %v4395 = vmin.f32 %v4394, 1.0
        %v4396 = vmax.f32 %v4395, -1.0
        %v4397 = vmul.f32 %v4108, %v4108
        %v4398 = vmin.f32 16.0, %v4397
        %v4399 = vmul.f32 %v4398, 2.1237322e-06
        %v4400 = vadd.f32 %v4399, 0.00028619796
        %v4401 = vmul.f32 %v4398, %v4400
        %v4402 = vadd.f32 %v4401, 0.0036580483
        %v4403 = vmul.f32 %v4398, %v4402
        %v4404 = vadd.f32 %v4403, 0.05243302
        %v4405 = vmul.f32 %v4398, %v4404
        %v4406 = vadd.f32 %v4405, 0.18741608
        %v4407 = vmul.f32 %v4398, %v4406
        %v4408 = vadd.f32 %v4407, 1.1283791
        %v4409 = vmul.f32 %v4108, %v4408
        %v4410 = vmul.f32 %v4398, 3.8918573e-05
        %v4411 = vadd.f32 %v4410, 0.001143296
        %v4412 = vmul.f32 %v4398, %v4411
        %v4413 = vadd.f32 %v4412, 0.014752088
        %v4414 = vmul.f32 %v4398, %v4413
        %v4415 = vadd.f32 %v4414, 0.112945676
        %v4416 = vmul.f32 %v4398, %v4415
        %v4417 = vadd.f32 %v4416, 0.4994258
        %v4418 = vmul.f32 %v4398, %v4417
        %v4419 = vadd.f32 %v4418, 1.0
        %v4420 = vrcp.pop %v4419
        %v4421 = vmul.f32 %v4419, %v4420
        %v4422 = vsub.f32 1.0, %v4421
        %v4423 = vmul.f32 %v4420, %v4422
        %v4424 = vadd.f32 %v4420, %v4423
        %vm4425 = vweird.f32 %v4419
        %vm4426 = vweird.f32 %v4420
        %vm4427 = vmor %vm4425, %vm4426
        %v4428 = vsel %vm4427, %v4420, %v4424
        %v4429 = vand.u32 2147483647, %v4419
        %vm4430 = vcmp.eq.f32.partialorder %v4429, 8.507059e+37
        %v4431 = vand.u32 %v4419, 2147483648
        %v4432 = vor.u32 1.1754944e-38, %v4431
        %v4433 = vsel %vm4430, %v4432, %v4428
        %v4434 = vmul.f32 %v4409, %v4433
        %v4435 = vmin.f32 %v4434, 1.0
        %v4436 = vmax.f32 %v4435, -1.0
        %v4437 = vmul.f32 %v4109, %v4109
        %v4438 = vmin.f32 16.0, %v4437
        %v4439 = vmul.f32 %v4438, 2.1237322e-06
        %v4440 = vadd.f32 %v4439, 0.00028619796
        %v4441 = vmul.f32 %v4438, %v4440
        %v4442 = vadd.f32 %v4441, 0.0036580483
        %v4443 = vmul.f32 %v4438, %v4442
        %v4444 = vadd.f32 %v4443, 0.05243302
        %v4445 = vmul.f32 %v4438, %v4444
        %v4446 = vadd.f32 %v4445, 0.18741608
        %v4447 = vmul.f32 %v4438, %v4446
        %v4448 = vadd.f32 %v4447, 1.1283791
        %v4449 = vmul.f32 %v4109, %v4448
        %v4450 = vmul.f32 %v4438, 3.8918573e-05
        %v4451 = vadd.f32 %v4450, 0.001143296
        %v4452 = vmul.f32 %v4438, %v4451
        %v4453 = vadd.f32 %v4452, 0.014752088
        %v4454 = vmul.f32 %v4438, %v4453
        %v4455 = vadd.f32 %v4454, 0.112945676
        %v4456 = vmul.f32 %v4438, %v4455
        %v4457 = vadd.f32 %v4456, 0.4994258
        %v4458 = vmul.f32 %v4438, %v4457
        %v4459 = vadd.f32 %v4458, 1.0
        %v4460 = vrcp.pop %v4459
        %v4461 = vmul.f32 %v4459, %v4460
        %v4462 = vsub.f32 1.0, %v4461
        %v4463 = vmul.f32 %v4460, %v4462
        %v4464 = vadd.f32 %v4460, %v4463
        %vm4465 = vweird.f32 %v4459
        %vm4466 = vweird.f32 %v4460
        %vm4467 = vmor %vm4465, %vm4466
        %v4468 = vsel %vm4467, %v4460, %v4464
        %v4469 = vand.u32 2147483647, %v4459
        %vm4470 = vcmp.eq.f32.partialorder %v4469, 8.507059e+37
        %v4471 = vand.u32 %v4459, 2147483648
        %v4472 = vor.u32 1.1754944e-38, %v4471
        %v4473 = vsel %vm4470, %v4472, %v4468
        %v4474 = vmul.f32 %v4449, %v4473
        %v4475 = vmin.f32 %v4474, 1.0
        %v4476 = vmax.f32 %v4475, -1.0
        %v4477 = vmul.f32 %v4110, %v4110
        %v4478 = vmin.f32 16.0, %v4477
        %v4479 = vmul.f32 %v4478, 2.1237322e-06
        %v4480 = vadd.f32 %v4479, 0.00028619796
        %v4481 = vmul.f32 %v4478, %v4480
        %v4482 = vadd.f32 %v4481, 0.0036580483
        %v4483 = vmul.f32 %v4478, %v4482
        %v4484 = vadd.f32 %v4483, 0.05243302
        %v4485 = vmul.f32 %v4478, %v4484
        %v4486 = vadd.f32 %v4485, 0.18741608
        %v4487 = vmul.f32 %v4478, %v4486
        %v4488 = vadd.f32 %v4487, 1.1283791
        %v4489 = vmul.f32 %v4110, %v4488
        %v4490 = vmul.f32 %v4478, 3.8918573e-05
        %v4491 = vadd.f32 %v4490, 0.001143296
        %v4492 = vmul.f32 %v4478, %v4491
        %v4493 = vadd.f32 %v4492, 0.014752088
        %v4494 = vmul.f32 %v4478, %v4493
        %v4495 = vadd.f32 %v4494, 0.112945676
        %v4496 = vmul.f32 %v4478, %v4495
        %v4497 = vadd.f32 %v4496, 0.4994258
        %v4498 = vmul.f32 %v4478, %v4497
        %v4499 = vadd.f32 %v4498, 1.0
        %v4500 = vrcp.pop %v4499
        %v4501 = vmul.f32 %v4499, %v4500
        %v4502 = vsub.f32 1.0, %v4501
        %v4503 = vmul.f32 %v4500, %v4502
        %v4504 = vadd.f32 %v4500, %v4503
        %vm4505 = vweird.f32 %v4499
        %vm4506 = vweird.f32 %v4500
        %vm4507 = vmor %vm4505, %vm4506
        %v4508 = vsel %vm4507, %v4500, %v4504
        %v4509 = vand.u32 2147483647, %v4499
        %vm4510 = vcmp.eq.f32.partialorder %v4509, 8.507059e+37
        %v4511 = vand.u32 %v4499, 2147483648
        %v4512 = vor.u32 1.1754944e-38, %v4511
        %v4513 = vsel %vm4510, %v4512, %v4508
        %v4514 = vmul.f32 %v4489, %v4513
        %v4515 = vmin.f32 %v4514, 1.0
        %v4516 = vmax.f32 %v4515, -1.0
        %v4517 = vmul.f32 %v4111, %v4111
        %v4518 = vmin.f32 16.0, %v4517
        %v4519 = vmul.f32 %v4518, 2.1237322e-06
        %v4520 = vadd.f32 %v4519, 0.00028619796
        %v4521 = vmul.f32 %v4518, %v4520
        %v4522 = vadd.f32 %v4521, 0.0036580483
        %v4523 = vmul.f32 %v4518, %v4522
        %v4524 = vadd.f32 %v4523, 0.05243302
        %v4525 = vmul.f32 %v4518, %v4524
        %v4526 = vadd.f32 %v4525, 0.18741608
        %v4527 = vmul.f32 %v4518, %v4526
        %v4528 = vadd.f32 %v4527, 1.1283791
        %v4529 = vmul.f32 %v4111, %v4528
        %v4530 = vmul.f32 %v4518, 3.8918573e-05
        %v4531 = vadd.f32 %v4530, 0.001143296
        %v4532 = vmul.f32 %v4518, %v4531
        %v4533 = vadd.f32 %v4532, 0.014752088
        %v4534 = vmul.f32 %v4518, %v4533
        %v4535 = vadd.f32 %v4534, 0.112945676
        %v4536 = vmul.f32 %v4518, %v4535
        %v4537 = vadd.f32 %v4536, 0.4994258
        %v4538 = vmul.f32 %v4518, %v4537
        %v4539 = vadd.f32 %v4538, 1.0
        %v4540 = vrcp.pop %v4539
        %v4541 = vmul.f32 %v4539, %v4540
        %v4542 = vsub.f32 1.0, %v4541
        %v4543 = vmul.f32 %v4540, %v4542
        %v4544 = vadd.f32 %v4540, %v4543
        %vm4545 = vweird.f32 %v4539
        %vm4546 = vweird.f32 %v4540
        %vm4547 = vmor %vm4545, %vm4546
        %v4548 = vsel %vm4547, %v4540, %v4544
        %v4549 = vand.u32 2147483647, %v4539
        %vm4550 = vcmp.eq.f32.partialorder %v4549, 8.507059e+37
        %v4551 = vand.u32 %v4539, 2147483648
        %v4552 = vor.u32 1.1754944e-38, %v4551
        %v4553 = vsel %vm4550, %v4552, %v4548
        %v4554 = vmul.f32 %v4529, %v4553
        %v4555 = vmin.f32 %v4554, 1.0
        %v4556 = vmax.f32 %v4555, -1.0
        %v4557 = vmul.f32 %v4112, %v4112
        %v4558 = vmin.f32 16.0, %v4557
        %v4559 = vmul.f32 %v4558, 2.1237322e-06
        %v4560 = vadd.f32 %v4559, 0.00028619796
        %v4561 = vmul.f32 %v4558, %v4560
        %v4562 = vadd.f32 %v4561, 0.0036580483
        %v4563 = vmul.f32 %v4558, %v4562
        %v4564 = vadd.f32 %v4563, 0.05243302
        %v4565 = vmul.f32 %v4558, %v4564
        %v4566 = vadd.f32 %v4565, 0.18741608
        %v4567 = vmul.f32 %v4558, %v4566
        %v4568 = vadd.f32 %v4567, 1.1283791
        %v4569 = vmul.f32 %v4112, %v4568
        %v4570 = vmul.f32 %v4558, 3.8918573e-05
        %v4571 = vadd.f32 %v4570, 0.001143296
        %v4572 = vmul.f32 %v4558, %v4571
        %v4573 = vadd.f32 %v4572, 0.014752088
        %v4574 = vmul.f32 %v4558, %v4573
        %v4575 = vadd.f32 %v4574, 0.112945676
        %v4576 = vmul.f32 %v4558, %v4575
        %v4577 = vadd.f32 %v4576, 0.4994258
        %v4578 = vmul.f32 %v4558, %v4577
        %v4579 = vadd.f32 %v4578, 1.0
        %v4580 = vrcp.pop %v4579
        %v4581 = vmul.f32 %v4579, %v4580
        %v4582 = vsub.f32 1.0, %v4581
        %v4583 = vmul.f32 %v4580, %v4582
        %v4584 = vadd.f32 %v4580, %v4583
        %vm4585 = vweird.f32 %v4579
        %vm4586 = vweird.f32 %v4580
        %vm4587 = vmor %vm4585, %vm4586
        %v4588 = vsel %vm4587, %v4580, %v4584
        %v4589 = vand.u32 2147483647, %v4579
        %vm4590 = vcmp.eq.f32.partialorder %v4589, 8.507059e+37
        %v4591 = vand.u32 %v4579, 2147483648
        %v4592 = vor.u32 1.1754944e-38, %v4591
        %v4593 = vsel %vm4590, %v4592, %v4588
        %v4594 = vmul.f32 %v4569, %v4593
        %v4595 = vmin.f32 %v4594, 1.0
        %v4596 = vmax.f32 %v4595, -1.0
        %v4597 = vmul.f32 %v4113, %v4113
        %v4598 = vmin.f32 16.0, %v4597
        %v4599 = vmul.f32 %v4598, 2.1237322e-06
        %v4600 = vadd.f32 %v4599, 0.00028619796
        %v4601 = vmul.f32 %v4598, %v4600
        %v4602 = vadd.f32 %v4601, 0.0036580483
        %v4603 = vmul.f32 %v4598, %v4602
        %v4604 = vadd.f32 %v4603, 0.05243302
        %v4605 = vmul.f32 %v4598, %v4604
        %v4606 = vadd.f32 %v4605, 0.18741608
        %v4607 = vmul.f32 %v4598, %v4606
        %v4608 = vadd.f32 %v4607, 1.1283791
        %v4609 = vmul.f32 %v4113, %v4608
        %v4610 = vmul.f32 %v4598, 3.8918573e-05
        %v4611 = vadd.f32 %v4610, 0.001143296
        %v4612 = vmul.f32 %v4598, %v4611
        %v4613 = vadd.f32 %v4612, 0.014752088
        %v4614 = vmul.f32 %v4598, %v4613
        %v4615 = vadd.f32 %v4614, 0.112945676
        %v4616 = vmul.f32 %v4598, %v4615
        %v4617 = vadd.f32 %v4616, 0.4994258
        %v4618 = vmul.f32 %v4598, %v4617
        %v4619 = vadd.f32 %v4618, 1.0
        %v4620 = vrcp.pop %v4619
        %v4621 = vmul.f32 %v4619, %v4620
        %v4622 = vsub.f32 1.0, %v4621
        %v4623 = vmul.f32 %v4620, %v4622
        %v4624 = vadd.f32 %v4620, %v4623
        %vm4625 = vweird.f32 %v4619
        %vm4626 = vweird.f32 %v4620
        %vm4627 = vmor %vm4625, %vm4626
        %v4628 = vsel %vm4627, %v4620, %v4624
        %v4629 = vand.u32 2147483647, %v4619
        %vm4630 = vcmp.eq.f32.partialorder %v4629, 8.507059e+37
        %v4631 = vand.u32 %v4619, 2147483648
        %v4632 = vor.u32 1.1754944e-38, %v4631
        %v4633 = vsel %vm4630, %v4632, %v4628
        %v4634 = vmul.f32 %v4609, %v4633
        %v4635 = vmin.f32 %v4634, 1.0
        %v4636 = vmax.f32 %v4635, -1.0
        %v4637 = vmul.f32 %v4114, %v4114
        %v4638 = vmin.f32 16.0, %v4637
        %v4639 = vmul.f32 %v4638, 2.1237322e-06
        %v4640 = vadd.f32 %v4639, 0.00028619796
        %v4641 = vmul.f32 %v4638, %v4640
        %v4642 = vadd.f32 %v4641, 0.0036580483
        %v4643 = vmul.f32 %v4638, %v4642
        %v4644 = vadd.f32 %v4643, 0.05243302
        %v4645 = vmul.f32 %v4638, %v4644
        %v4646 = vadd.f32 %v4645, 0.18741608
        %v4647 = vmul.f32 %v4638, %v4646
        %v4648 = vadd.f32 %v4647, 1.1283791
        %v4649 = vmul.f32 %v4114, %v4648
        %v4650 = vmul.f32 %v4638, 3.8918573e-05
        %v4651 = vadd.f32 %v4650, 0.001143296
        %v4652 = vmul.f32 %v4638, %v4651
        %v4653 = vadd.f32 %v4652, 0.014752088
        %v4654 = vmul.f32 %v4638, %v4653
        %v4655 = vadd.f32 %v4654, 0.112945676
        %v4656 = vmul.f32 %v4638, %v4655
        %v4657 = vadd.f32 %v4656, 0.4994258
        %v4658 = vmul.f32 %v4638, %v4657
        %v4659 = vadd.f32 %v4658, 1.0
        %v4660 = vrcp.pop %v4659
        %v4661 = vmul.f32 %v4659, %v4660
        %v4662 = vsub.f32 1.0, %v4661
        %v4663 = vmul.f32 %v4660, %v4662
        %v4664 = vadd.f32 %v4660, %v4663
        %vm4665 = vweird.f32 %v4659
        %vm4666 = vweird.f32 %v4660
        %vm4667 = vmor %vm4665, %vm4666
        %v4668 = vsel %vm4667, %v4660, %v4664
        %v4669 = vand.u32 2147483647, %v4659
        %vm4670 = vcmp.eq.f32.partialorder %v4669, 8.507059e+37
        %v4671 = vand.u32 %v4659, 2147483648
        %v4672 = vor.u32 1.1754944e-38, %v4671
        %v4673 = vsel %vm4670, %v4672, %v4668
        %v4674 = vmul.f32 %v4649, %v4673
        %v4675 = vmin.f32 %v4674, 1.0
        %v4676 = vmax.f32 %v4675, -1.0
        %v4677 = vmul.f32 %v4115, %v4115
        %v4678 = vmin.f32 16.0, %v4677
        %v4679 = vmul.f32 %v4678, 2.1237322e-06
        %v4680 = vadd.f32 %v4679, 0.00028619796
        %v4681 = vmul.f32 %v4678, %v4680
        %v4682 = vadd.f32 %v4681, 0.0036580483
        %v4683 = vmul.f32 %v4678, %v4682
        %v4684 = vadd.f32 %v4683, 0.05243302
        %v4685 = vmul.f32 %v4678, %v4684
        %v4686 = vadd.f32 %v4685, 0.18741608
        %v4687 = vmul.f32 %v4678, %v4686
        %v4688 = vadd.f32 %v4687, 1.1283791
        %v4689 = vmul.f32 %v4115, %v4688
        %v4690 = vmul.f32 %v4678, 3.8918573e-05
        %v4691 = vadd.f32 %v4690, 0.001143296
        %v4692 = vmul.f32 %v4678, %v4691
        %v4693 = vadd.f32 %v4692, 0.014752088
        %v4694 = vmul.f32 %v4678, %v4693
        %v4695 = vadd.f32 %v4694, 0.112945676
        %v4696 = vmul.f32 %v4678, %v4695
        %v4697 = vadd.f32 %v4696, 0.4994258
        %v4698 = vmul.f32 %v4678, %v4697
        %v4699 = vadd.f32 %v4698, 1.0
        %v4700 = vrcp.pop %v4699
        %v4701 = vmul.f32 %v4699, %v4700
        %v4702 = vsub.f32 1.0, %v4701
        %v4703 = vmul.f32 %v4700, %v4702
        %v4704 = vadd.f32 %v4700, %v4703
        %vm4705 = vweird.f32 %v4699
        %vm4706 = vweird.f32 %v4700
        %vm4707 = vmor %vm4705, %vm4706
        %v4708 = vsel %vm4707, %v4700, %v4704
        %v4709 = vand.u32 2147483647, %v4699
        %vm4710 = vcmp.eq.f32.partialorder %v4709, 8.507059e+37
        %v4711 = vand.u32 %v4699, 2147483648
        %v4712 = vor.u32 1.1754944e-38, %v4711
        %v4713 = vsel %vm4710, %v4712, %v4708
        %v4714 = vmul.f32 %v4689, %v4713
        %v4715 = vmin.f32 %v4714, 1.0
        %v4716 = vmax.f32 %v4715, -1.0
        %v4717 = vmul.f32 %v4116, %v4116
        %v4718 = vmin.f32 16.0, %v4717
        %v4719 = vmul.f32 %v4718, 2.1237322e-06
        %v4720 = vadd.f32 %v4719, 0.00028619796
        %v4721 = vmul.f32 %v4718, %v4720
        %v4722 = vadd.f32 %v4721, 0.0036580483
        %v4723 = vmul.f32 %v4718, %v4722
        %v4724 = vadd.f32 %v4723, 0.05243302
        %v4725 = vmul.f32 %v4718, %v4724
        %v4726 = vadd.f32 %v4725, 0.18741608
        %v4727 = vmul.f32 %v4718, %v4726
        %v4728 = vadd.f32 %v4727, 1.1283791
        %v4729 = vmul.f32 %v4116, %v4728
        %v4730 = vmul.f32 %v4718, 3.8918573e-05
        %v4731 = vadd.f32 %v4730, 0.001143296
        %v4732 = vmul.f32 %v4718, %v4731
        %v4733 = vadd.f32 %v4732, 0.014752088
        %v4734 = vmul.f32 %v4718, %v4733
        %v4735 = vadd.f32 %v4734, 0.112945676
        %v4736 = vmul.f32 %v4718, %v4735
        %v4737 = vadd.f32 %v4736, 0.4994258
        %v4738 = vmul.f32 %v4718, %v4737
        %v4739 = vadd.f32 %v4738, 1.0
        %v4740 = vrcp.pop %v4739
        %v4741 = vmul.f32 %v4739, %v4740
        %v4742 = vsub.f32 1.0, %v4741
        %v4743 = vmul.f32 %v4740, %v4742
        %v4744 = vadd.f32 %v4740, %v4743
        %vm4745 = vweird.f32 %v4739
        %vm4746 = vweird.f32 %v4740
        %vm4747 = vmor %vm4745, %vm4746
        %v4748 = vsel %vm4747, %v4740, %v4744
        %v4749 = vand.u32 2147483647, %v4739
        %vm4750 = vcmp.eq.f32.partialorder %v4749, 8.507059e+37
        %v4751 = vand.u32 %v4739, 2147483648
        %v4752 = vor.u32 1.1754944e-38, %v4751
        %v4753 = vsel %vm4750, %v4752, %v4748
        %v4754 = vmul.f32 %v4729, %v4753
        %v4755 = vmin.f32 %v4754, 1.0
        %v4756 = vmax.f32 %v4755, -1.0
        %v4757 = vadd.f32 %v4156, 1.0
        %v4758 = vadd.f32 %v4196, 1.0
        %v4759 = vadd.f32 %v4236, 1.0
        %v4760 = vadd.f32 %v4276, 1.0
        %v4761 = vadd.f32 %v4316, 1.0
        %v4762 = vadd.f32 %v4356, 1.0
        %v4763 = vadd.f32 %v4396, 1.0
        %v4764 = vadd.f32 %v4436, 1.0
        %v4765 = vadd.f32 %v4476, 1.0
        %v4766 = vadd.f32 %v4516, 1.0
        %v4767 = vadd.f32 %v4556, 1.0
        %v4768 = vadd.f32 %v4596, 1.0
        %v4769 = vadd.f32 %v4636, 1.0
        %v4770 = vadd.f32 %v4676, 1.0
        %v4771 = vadd.f32 %v4716, 1.0
        %v4772 = vadd.f32 %v4756, 1.0
        %v4773 = vmul.f32 %v4085, %v4757
        %v4774 = vmul.f32 %v4086, %v4758
        %v4775 = vmul.f32 %v4087, %v4759
        %v4776 = vmul.f32 %v4088, %v4760
        %v4777 = vmul.f32 %v4089, %v4761
        %v4778 = vmul.f32 %v4090, %v4762
        %v4779 = vmul.f32 %v4091, %v4763
        %v4780 = vmul.f32 %v4092, %v4764
        %v4781 = vmul.f32 %v4093, %v4765
        %v4782 = vmul.f32 %v4094, %v4766
        %v4783 = vmul.f32 %v4095, %v4767
        %v4784 = vmul.f32 %v4096, %v4768
        %v4785 = vmul.f32 %v4097, %v4769
        %v4786 = vmul.f32 %v4098, %v4770
        %v4787 = vmul.f32 %v4099, %v4771
        %v4788 = vmul.f32 %v4100, %v4772
        %v4789 = vld [vmem:[%s10] sm:$0x1]
        %v4790 = vpack.c.bf16 %v4774, %v4773
        %v4791 = vpack.c.bf16 %v4776, %v4775
        %v4792 = vpack.c.bf16 %v4778, %v4777
        %v4793 = vpack.c.bf16 %v4780, %v4779
        %v4794 = vpack.c.bf16 %v4782, %v4781
        %v4795 = vpack.c.bf16 %v4784, %v4783
        %v4796 = vpack.c.bf16 %v4786, %v4785
        %v4797 = vpack.c.bf16 %v4788, %v4787
        %v4798 = vld [vmem:[%s11] sm:$0x3]
        %4800 = vset.pattern.permute.xlu0 0
        %4801 = vperm.xlu0 %4800, %v4798
        %v4802 = vpop.permute.xlu0 %4801
        %vm4804 = vcmask 523264
        %v4806 = vsel %vm4804, %v4789, 0
        %v4809 = vsel %vm4804, %v4790, 0
        %v4812 = vsel %vm4804, %v4791, 0
        %v4815 = vsel %vm4804, %v4792, 0
        %v4818 = vsel %vm4804, %v4793, 0
        %v4821 = vsel %vm4804, %v4794, 0
        %v4824 = vsel %vm4804, %v4795, 0
        %v4827 = vsel %vm4804, %v4796, 0
        %v4830 = vsel %vm4804, %v4797, 0
        %4832 = vmatpush.bf16.xpose.msra.mxu0 %v4830
        %4833 = vmatpush.bf16.xpose.msra.mxu0 %v4827
        %4834 = vmatpush.bf16.xpose.msra.mxu0 %v4824
        %4835 = vmatpush.bf16.xpose.msra.mxu0 %v4821
        %4836 = vmatpush.bf16.xpose.msra.mxu0 %v4818
        %4837 = vmatpush.bf16.xpose.msra.mxu0 %v4815
        %4838 = vmatpush.bf16.xpose.msra.mxu0 %v4812
        %4839 = vmatpush.bf16.xpose.msra.mxu0 %v4809
        %4840 = vmatmul.bf16.gmra.mxu0 %v4806
        %v4841 = vpop.f32.mrf.mxu0
        %v4842 = vadd.f32 %v4802, %v4841
        %v4843 = vpop.f32.mrf.mxu0
        %4844 = vdwg.mxu0
        %v4846 = vrot.slane %v4842, 1
        %v4848 = vmax.f32 %v4842, %v4846
        %v4849 = vsub.f32 %v4842, %v4848
        %v4850 = vmul.f32 %v4849, 1.442695
        %v4851 = vpow.pop %v4850
        %v4853 = vrot.slane %v4848, 7
        %v4855 = vsub.f32 %v4842, %v4853
        %v4856 = vmul.f32 %v4855, 1.442695
        %v4857 = vpow.pop %v4856
        %v4859 = vrot.slane %v4857, 1
        %v4861 = vadd.f32 %v4851, %v4859
        %v4862 = vlog2.pop %v4861
        %v4863 = vmul.f32 %v4862, 0.6931472
        %v4864 = vadd.f32 %v4848, %v4863
        %v4865 = vperm.slane %v4864, 0
        %v4866 = vsub.f32 %v4842, %v4865
        %4867 = vst [vmem:[%s465] sm:$0x3] %v4866
        %s4868 = sand.u32 %s300, 1
        %s4869 = scalar_lea.sflag [#allocation4], %s4868
        %s4870 = sand.u32 %s300, 1
        %s4871 = smul.addr %s4870, 2
        %s4872 = scalar_lea.vmem [#allocation7], %s4871
        // Predicated region
        $region77: #{tpu_custom_call.1} parent=67 // pred_check
          %p4873 = pneg %p310
        $region78: #{tpu_custom_call.1} parent=67 // pred_check_branch
          %4875 = sbr.rel (%p4873) target = $region80
        $region79: #{tpu_custom_call.1} parent=67 // pred_region
          %4877 = vsyncadd %s4869, 0
          %s4878 = smul.addr %s30, 2
          %s4879 = scalar_lea.hbm %s12, %s4878
          %s4881 = sshll.u32 %s4872, 4
          %s4882 = int_to_ptr.vmem [resolvable:$true] %s4881
          %s4883 = sshll.u32 %s4879, 4
          %s4884 = int_to_ptr.hbm [resolvable:$true] %s4883
          %4886 = dma.vmem_to_hbm [thread:$0]  %s4882, 32, %s4884, %s4869
        $region80: #{tpu_custom_call.1} parent=67 // pred_fallthru
          _
      $region68: #{tpu_custom_call.1} parent=5 // pred_fallthru
        _
      %p4887 = scmp.le.s32.totalorder 2, %s25
      // Predicated region
      $region81: #{tpu_custom_call.1} parent=5 // pred_check
        %p4888 = pneg %p4887
      $region82: #{tpu_custom_call.1} parent=5 // pred_check_branch
        %4890 = sbr.rel (%p4888) target = $region84
      $region83: #{tpu_custom_call.1} parent=5 // pred_region
        %s4891 = ssub.s32 %s25, 2
        // Predicated region
        $region85: #{tpu_custom_call.1} parent=83 // pred_check
          %p4892 = pneg %p316
        $region86: #{tpu_custom_call.1} parent=83 // pred_check_branch
          %4894 = sbr.rel (%p4892) target = $region88
        $region87: #{tpu_custom_call.1} parent=83 // pred_region
          %s4895 = sand.u32 %s301, 1
          %s4896 = scalar_lea.sflag [#allocation4], %s4895
          %s4897 = sand.u32 %s301, 1
          %s4898 = smul.addr %s4897, 2
          %s4899 = scalar_lea.vmem [#allocation7], %s4898
          %4901 = dma.done %s4896, 32
        $region88: #{tpu_custom_call.1} parent=83 // pred_fallthru
          _
      $region84: #{tpu_custom_call.1} parent=5 // pred_fallthru
        _
    $region6: #{tpu_custom_call.1} parent=1 // loop_footer
      %s29 = sadd.s32 1, %s25
    $region7: #{tpu_custom_call.1} parent=1 // loop_footer_branch
      %24 = sbr.rel target = $region3
    $region8: #{tpu_custom_call.1} parent=1 // loop_exit
      _
    %4902 = vsyncpa [#allocation3], 1
    %s4903 = scalar_lea.sflag [#allocation3], 1
    %4904 = vsyncpa %s4903, 1
    %4905 = vsyncpa [#allocation6], 1
    %4906 = vsyncpa [#allocation4], 1
    %s4907 = scalar_lea.sflag [#allocation4], 1
    %4908 = vsyncpa %s4907, 1

</llo_original>
